<compile_context>
chip_gen: v6e
topology: v6e:2x2x1
jax: 0.10.0
libtpu: 0.0.40
codegen_flags: <defaults>
</compile_context>

<pallas_src>
import functools

import jax
import jax.numpy as jnp
from jax.experimental import pallas as pl
from jax.experimental.pallas import tpu as pltpu

# ----------------------------- configuration -------------------------------
NOISE_DIM = 16          # args.noise_dim
LATENT_DIM = 32         # args.latent_dim
HIDDEN_DIM = 32         # args.hidden_dim
NUM_RNN_LAYER = 2       # args.num_rnn_layer
DATA_SIZE = 28 * 28     # data_size (forward hard-codes the 28*28 reshape)
E_DIM = DATA_SIZE * 128 + 128 * 128 + 128 + 128 + 128 + 1   # 117121


# --------------------- fused small hyper-network kernel ---------------------
def _hypernet_small_kernel(*refs, num_layers):
    """Fused: tanh init linears -> single-step multi-layer LSTM -> down1/down2.

    Everything is tiny (M=1, K<=32, N<=128) so the whole chain lives in one
    grid=(1,) kernel; only the final (1,32) activation and the (L,32) h/c
    states leave VMEM.
    """
    z_ref, wh, bh, wc, bc, wi, bi = refs[:7]
    rest = refs[7:]
    lstm_refs = rest[:3 * num_layers]
    wd1, bd1, wd2, bd2 = rest[3 * num_layers:3 * num_layers + 4]
    t_ref, h_out_ref, c_out_ref = rest[3 * num_layers + 4:]

    z = z_ref[...]
    # PyTorch: hidden = (stack of tanh(init_lin_h(z)), stack of tanh(init_lin_c(z)))
    # i.e. h_0 and c_0 are the SAME value for every layer.
    h0 = jnp.tanh(jnp.dot(z, wh[...], preferred_element_type=jnp.float32) + bh[...])
    c0 = jnp.tanh(jnp.dot(z, wc[...], preferred_element_type=jnp.float32) + bc[...])
    x = jnp.tanh(jnp.dot(z, wi[...], preferred_element_type=jnp.float32) + bi[...])

    H = LATENT_DIM
    h_list, c_list = [], []
    for l in range(num_layers):
        wih = lstm_refs[3 * l]
        whh = lstm_refs[3 * l + 1]
        b = lstm_refs[3 * l + 2]
        gates = (jnp.dot(x, wih[...], preferred_element_type=jnp.float32)
                 + jnp.dot(h0, whh[...], preferred_element_type=jnp.float32)
                 + b[...])
        i = jax.nn.sigmoid(gates[:, 0:H])
        f = jax.nn.sigmoid(gates[:, H:2 * H])
        g = jnp.tanh(gates[:, 2 * H:3 * H])
        o = jax.nn.sigmoid(gates[:, 3 * H:4 * H])
        c_new = f * c0 + i * g
        h_new = o * jnp.tanh(c_new)
        h_list.append(h_new)
        c_list.append(c_new)
        x = h_new                                    # feed next layer

    h_out_ref[...] = jnp.concatenate(h_list, axis=0)  # (L, LATENT_DIM)
    c_out_ref[...] = jnp.concatenate(c_list, axis=0)

    # lin_transform_down[0:4]: Linear+ReLU, Linear+ReLU
    t1 = jnp.maximum(
        jnp.dot(x, wd1[...], preferred_element_type=jnp.float32) + bd1[...], 0.0)
    t2 = jnp.maximum(
        jnp.dot(t1, wd2[...], preferred_element_type=jnp.float32) + bd2[...], 0.0)
    t_ref[...] = t2


def pallas_hypernet_small(z, params):
    wh, bh = params["init_lin_h"]
    wc, bc = params["init_lin_c"]
    wi, bi = params["init_input"]
    wd1, bd1 = params["down1"]
    wd2, bd2 = params["down2"]

    args = [z, wh, bh.reshape(1, -1), wc, bc.reshape(1, -1), wi, bi.reshape(1, -1)]
    for (wih_t, whh_t, b_l) in params["lstm"]:
        args += [wih_t, whh_t, b_l.reshape(1, -1)]
    args += [wd1, bd1.reshape(1, -1), wd2, bd2.reshape(1, -1)]

    def full(shape):
        shape = tuple(shape)
        return pl.BlockSpec(shape, lambda i, n=len(shape): (0,) * n)

    t, h_stack, c_stack = pl.pallas_call(
        functools.partial(_hypernet_small_kernel, num_layers=NUM_RNN_LAYER),
        out_shape=(jax.ShapeDtypeStruct((1, HIDDEN_DIM), jnp.float32),
                   jax.ShapeDtypeStruct((NUM_RNN_LAYER, LATENT_DIM), jnp.float32),
                   jax.ShapeDtypeStruct((NUM_RNN_LAYER, LATENT_DIM), jnp.float32)),
        grid=(1,),
        in_specs=[full(a.shape) for a in args],
        out_specs=(full((1, HIDDEN_DIM)),
                   full((NUM_RNN_LAYER, LATENT_DIM)),
                   full((NUM_RNN_LAYER, LATENT_DIM))),
    )(*args)
    return t, h_stack, c_stack


# ------------------------- wide (down3) linear kernel ------------------------
def _big_linear_kernel(x_ref, wt_ref, b_ref, o_ref):
    """One output-column tile of y = x @ W^T + b (the huge E-producing layer)."""
    o_ref[...] = (jnp.dot(x_ref[...], wt_ref[...],
                          preferred_element_type=jnp.float32) + b_ref[...])


def pallas_linear_wide(x, w_t, b, tile_n=16384):
    """Linear with a very wide output dim, tiled over output columns.

    No in-jit padding / output slicing: Pallas masks the partial last tile.
    Garbage in the out-of-bounds weight columns only affects out-of-bounds
    output columns, which are dropped by the masked write-back.
    """
    M, K = x.shape
    N = w_t.shape[1]
    grid_n = pl.cdiv(N, tile_n)
    # TODO(synk): on bandwidth-poor v5e, optionally store w_t/b as bfloat16 to
    # halve the ~15 MB HBM read (accuracy drift in the generated MLP).
    return pl.pallas_call(
        _big_linear_kernel,
        out_shape=jax.ShapeDtypeStruct((M, N), jnp.float32),
        grid=(grid_n,),
        in_specs=[pl.BlockSpec((M, K), lambda j: (0, 0)),
                  pl.BlockSpec((K, tile_n), lambda j: (0, j)),
                  pl.BlockSpec((1, tile_n), lambda j: (0, j))],
        out_specs=pl.BlockSpec((M, tile_n), lambda j: (0, j)),
        compiler_params=pltpu.CompilerParams(
            dimension_semantics=("parallel",)),
    )(x, w_t, b.reshape(1, N))


# ------------------------- generated-MLP (prednet) kernel --------------------
def _prednet_kernel(x_ref, m1_ref, b1_ref, m2_ref, b2_ref, m3_ref, b3_ref,
                    o_ref):
    """Fused generated MLP: relu(X m1 + b1) -> relu(.. m2 + b2) -> sigmoid(.. m3 + b3)."""
    h1 = jnp.maximum(
        jnp.dot(x_ref[...], m1_ref[...],
                preferred_element_type=jnp.float32) + b1_ref[...], 0.0)
    h2 = jnp.maximum(
        jnp.dot(h1, m2_ref[...],
                preferred_element_type=jnp.float32) + b2_ref[...], 0.0)
    o_ref[...] = jax.nn.sigmoid(
        jnp.dot(h2, m3_ref[...],
                preferred_element_type=jnp.float32) + b3_ref[...])


def pallas_prednet(x_flat, m1, b1, m2, b2, m3, b3):
    B, D = x_flat.shape

    def full(shape):
        shape = tuple(shape)
        return pl.BlockSpec(shape, lambda i, n=len(shape): (0,) * n)

    return pl.pallas_call(
        _prednet_kernel,
        out_shape=jax.ShapeDtypeStruct((B, 1), jnp.float32),
        grid=(1,),
        in_specs=[full((B, D)), full(m1.shape), full(b1.shape),
                  full(m2.shape), full(b2.shape), full(m3.shape),
                  full(b3.shape)],
        out_specs=full((B, 1)),
    )(x_flat, m1, b1, m2, b2, m3, b3)


# ---------------------------- parameter init --------------------------------
def init_params(key):
    def lin(k, fan_in, fan_out):
        k1, k2 = jax.random.split(k)
        bound = 1.0 / float(fan_in) ** 0.5
        w_t = jax.random.uniform(k1, (fan_in, fan_out), jnp.float32,
                                 -bound, bound)          # stored as W^T
        b = jax.random.uniform(k2, (fan_out,), jnp.float32, -bound, bound)
        return w_t, b

    keys = jax.random.split(key, 16)
    p = {}
    p["init_lin_h"] = lin(keys[0], NOISE_DIM, LATENT_DIM)
    p["init_lin_c"] = lin(keys[1], NOISE_DIM, LATENT_DIM)
    p["init_input"] = lin(keys[2], NOISE_DIM, LATENT_DIM)
    lstm = []
    for l in range(NUM_RNN_LAYER):
        w_ih_t, b_ih = lin(keys[3 + 2 * l], LATENT_DIM, 4 * LATENT_DIM)
        w_hh_t, b_hh = lin(keys[4 + 2 * l], LATENT_DIM, 4 * LATENT_DIM)
        lstm.append((w_ih_t, w_hh_t, b_ih + b_hh))   # fold b_ih + b_hh
    p["lstm"] = lstm
    p["down1"] = lin(keys[8], LATENT_DIM, HIDDEN_DIM)
    p["down2"] = lin(keys[9], HIDDEN_DIM, HIDDEN_DIM)
    p["down3"] = lin(keys[10], HIDDEN_DIM, E_DIM)
    # TODO(synk): lin_transform_up is only used in the E!=None continuation
    # branch; the default forward path (E=None, hidden=None) never calls it.
    return p


# -------------------------------- forward -----------------------------------
def rnn_forward(params, X, z):
    # hidden == None and E == None branch, fully fused small-tensor stack:
    # h0/c0/inputs -> 2-layer single-step LSTM -> down1 -> down2.
    t, h_stack, c_stack = pallas_hypernet_small(z, params)
    hidden = (h_stack[:, None, :], c_stack[:, None, :])  # (L, 1, LATENT_DIM)

    # last lin_transform_down layer (HIDDEN_DIM -> E_DIM), column-tiled
    E = pallas_linear_wide(t, *params["down3"])           # (1, E_DIM)

    # nn_construction (weight slicing of E)
    off1 = DATA_SIZE * 128
    off2 = off1 + 128 * 128
    m1 = E[:, :off1].reshape(-1, 128)                 # (784, 128)
    m2 = E[:, off1:off2].reshape(-1, 128)             # (128, 128)
    m3 = E[:, off2:off2 + 128].reshape(-1, 1)         # (128, 1)
    b1 = E[:, off2 + 128:off2 + 256].reshape(-1, 128) # (1, 128)
    b2 = E[:, off2 + 256:off2 + 384].reshape(-1, 128) # (1, 128)
    b3 = E[:, -1:]                                    # (1, 1)

    batch = X.shape[0]
    x_flat = X.reshape(batch, 28 * 28)
    pred = pallas_prednet(x_flat, m1, b1, m2, b2, m3, b3)   # (batch, 1)
    return E, hidden, pred


# --------------------------------- main --------------------------------------
if __name__ == "__main__":
    key = jax.random.PRNGKey(0)
    kp, kx, kz = jax.random.split(key, 3)
    params = init_params(kp)

    X = jax.random.normal(kx, (8, 1, 28, 28), jnp.float32)   # NCHW input
    z = jax.random.normal(kz, (1, NOISE_DIM), jnp.float32)   # noise (batch 1)

    E, hidden, pred = jax.jit(rnn_forward)(params, X, z)
    jax.block_until_ready((E, hidden, pred))

    assert E.shape == (1, E_DIM)
    assert hidden[0].shape == (NUM_RNN_LAYER, 1, LATENT_DIM)
    assert hidden[1].shape == (NUM_RNN_LAYER, 1, LATENT_DIM)
    assert pred.shape == (8, 1)
    assert bool(jnp.all(jnp.isfinite(E)))
    assert bool(jnp.all((pred >= 0.0) & (pred <= 1.0)))
    print("KERNEL_OK")
</pallas_src>

<mosaic_0001>
module attributes {stable_mosaic.version = 11 : i64} {
  func.func @_hypernet_small_kernel(%arg0: i32, %arg1: memref<1x16xf32, #tpu.memory_space<vmem>>, %arg2: memref<16x32xf32, #tpu.memory_space<vmem>>, %arg3: memref<1x32xf32, #tpu.memory_space<vmem>>, %arg4: memref<16x32xf32, #tpu.memory_space<vmem>>, %arg5: memref<1x32xf32, #tpu.memory_space<vmem>>, %arg6: memref<16x32xf32, #tpu.memory_space<vmem>>, %arg7: memref<1x32xf32, #tpu.memory_space<vmem>>, %arg8: memref<32x128xf32, #tpu.memory_space<vmem>>, %arg9: memref<32x128xf32, #tpu.memory_space<vmem>>, %arg10: memref<1x128xf32, #tpu.memory_space<vmem>>, %arg11: memref<32x128xf32, #tpu.memory_space<vmem>>, %arg12: memref<32x128xf32, #tpu.memory_space<vmem>>, %arg13: memref<1x128xf32, #tpu.memory_space<vmem>>, %arg14: memref<32x32xf32, #tpu.memory_space<vmem>>, %arg15: memref<1x32xf32, #tpu.memory_space<vmem>>, %arg16: memref<32x32xf32, #tpu.memory_space<vmem>>, %arg17: memref<1x32xf32, #tpu.memory_space<vmem>>, %arg18: memref<1x32xf32, #tpu.memory_space<vmem>>, %arg19: memref<2x32xf32, #tpu.memory_space<vmem>>, %arg20: memref<2x32xf32, #tpu.memory_space<vmem>>) attributes {dimension_semantics = [#tpu.dimension_semantics<arbitrary>], iteration_bounds = array<i64: 1>, scalar_prefetch = 0 : i64, scratch_operands = 0 : i64, tpu.core_type = #tpu.core_type<tc>, window_params = [{pipeline_mode = #tpu.pipeline_mode<synchronous>, transform_indices = @transform_0, window_bounds = array<i64: 1, 16>}, {pipeline_mode = #tpu.pipeline_mode<synchronous>, transform_indices = @transform_1, window_bounds = array<i64: 16, 32>}, {pipeline_mode = #tpu.pipeline_mode<synchronous>, transform_indices = @transform_2, window_bounds = array<i64: 1, 32>}, {pipeline_mode = #tpu.pipeline_mode<synchronous>, transform_indices = @transform_3, window_bounds = array<i64: 16, 32>}, {pipeline_mode = #tpu.pipeline_mode<synchronous>, transform_indices = @transform_4, window_bounds = array<i64: 1, 32>}, {pipeline_mode = #tpu.pipeline_mode<synchronous>, transform_indices = @transform_5, window_bounds = array<i64: 16, 32>}, {pipeline_mode = #tpu.pipeline_mode<synchronous>, transform_indices = @transform_6, window_bounds = array<i64: 1, 32>}, {pipeline_mode = #tpu.pipeline_mode<synchronous>, transform_indices = @transform_7, window_bounds = array<i64: 32, 128>}, {pipeline_mode = #tpu.pipeline_mode<synchronous>, transform_indices = @transform_8, window_bounds = array<i64: 32, 128>}, {pipeline_mode = #tpu.pipeline_mode<synchronous>, transform_indices = @transform_9, window_bounds = array<i64: 1, 128>}, {pipeline_mode = #tpu.pipeline_mode<synchronous>, transform_indices = @transform_10, window_bounds = array<i64: 32, 128>}, {pipeline_mode = #tpu.pipeline_mode<synchronous>, transform_indices = @transform_11, window_bounds = array<i64: 32, 128>}, {pipeline_mode = #tpu.pipeline_mode<synchronous>, transform_indices = @transform_12, window_bounds = array<i64: 1, 128>}, {pipeline_mode = #tpu.pipeline_mode<synchronous>, transform_indices = @transform_13, window_bounds = array<i64: 32, 32>}, {pipeline_mode = #tpu.pipeline_mode<synchronous>, transform_indices = @transform_14, window_bounds = array<i64: 1, 32>}, {pipeline_mode = #tpu.pipeline_mode<synchronous>, transform_indices = @transform_15, window_bounds = array<i64: 32, 32>}, {pipeline_mode = #tpu.pipeline_mode<synchronous>, transform_indices = @transform_16, window_bounds = array<i64: 1, 32>}, {pipeline_mode = #tpu.pipeline_mode<synchronous>, transform_indices = @transform_17, window_bounds = array<i64: 1, 32>}, {pipeline_mode = #tpu.pipeline_mode<synchronous>, transform_indices = @transform_18, window_bounds = array<i64: 2, 32>}, {pipeline_mode = #tpu.pipeline_mode<synchronous>, transform_indices = @transform_19, window_bounds = array<i64: 2, 32>}]} {
    %c0 = arith.constant 0 : index
    %c0_0 = arith.constant 0 : index
    %0 = vector.load %arg1[%c0, %c0_0] : memref<1x16xf32, #tpu.memory_space<vmem>>, vector<1x16xf32>
    %c0_1 = arith.constant 0 : index
    %c0_2 = arith.constant 0 : index
    %1 = vector.load %arg2[%c0_1, %c0_2] : memref<16x32xf32, #tpu.memory_space<vmem>>, vector<16x32xf32>
    %cst = arith.constant dense<0.000000e+00> : vector<1x32xf32>
    %2 = tpu.matmul %0, %1, %cst {dimension_numbers = #tpu.dot_dimension_numbers<[1], [0], [0], [1], [0, 0, 1, 1], [], []>} : vector<1x16xf32>, vector<16x32xf32>, vector<1x32xf32> -> vector<1x32xf32>
    %c0_3 = arith.constant 0 : index
    %c0_4 = arith.constant 0 : index
    %3 = vector.load %arg3[%c0_3, %c0_4] : memref<1x32xf32, #tpu.memory_space<vmem>>, vector<1x32xf32>
    %4 = arith.addf %2, %3 : vector<1x32xf32>
    %5 = math.tanh %4 : vector<1x32xf32>
    %c0_5 = arith.constant 0 : index
    %c0_6 = arith.constant 0 : index
    %6 = vector.load %arg4[%c0_5, %c0_6] : memref<16x32xf32, #tpu.memory_space<vmem>>, vector<16x32xf32>
    %cst_7 = arith.constant dense<0.000000e+00> : vector<1x32xf32>
    %7 = tpu.matmul %0, %6, %cst_7 {dimension_numbers = #tpu.dot_dimension_numbers<[1], [0], [0], [1], [0, 0, 1, 1], [], []>} : vector<1x16xf32>, vector<16x32xf32>, vector<1x32xf32> -> vector<1x32xf32>
    %c0_8 = arith.constant 0 : index
    %c0_9 = arith.constant 0 : index
    %8 = vector.load %arg5[%c0_8, %c0_9] : memref<1x32xf32, #tpu.memory_space<vmem>>, vector<1x32xf32>
    %9 = arith.addf %7, %8 : vector<1x32xf32>
    %10 = math.tanh %9 : vector<1x32xf32>
    %c0_10 = arith.constant 0 : index
    %c0_11 = arith.constant 0 : index
    %11 = vector.load %arg6[%c0_10, %c0_11] : memref<16x32xf32, #tpu.memory_space<vmem>>, vector<16x32xf32>
    %cst_12 = arith.constant dense<0.000000e+00> : vector<1x32xf32>
    %12 = tpu.matmul %0, %11, %cst_12 {dimension_numbers = #tpu.dot_dimension_numbers<[1], [0], [0], [1], [0, 0, 1, 1], [], []>} : vector<1x16xf32>, vector<16x32xf32>, vector<1x32xf32> -> vector<1x32xf32>
    %c0_13 = arith.constant 0 : index
    %c0_14 = arith.constant 0 : index
    %13 = vector.load %arg7[%c0_13, %c0_14] : memref<1x32xf32, #tpu.memory_space<vmem>>, vector<1x32xf32>
    %14 = arith.addf %12, %13 : vector<1x32xf32>
    %15 = math.tanh %14 : vector<1x32xf32>
    %c0_15 = arith.constant 0 : index
    %c0_16 = arith.constant 0 : index
    %16 = vector.load %arg8[%c0_15, %c0_16] : memref<32x128xf32, #tpu.memory_space<vmem>>, vector<32x128xf32>
    %cst_17 = arith.constant dense<0.000000e+00> : vector<1x128xf32>
    %17 = tpu.matmul %15, %16, %cst_17 {dimension_numbers = #tpu.dot_dimension_numbers<[1], [0], [0], [1], [0, 0, 1, 1], [], []>} : vector<1x32xf32>, vector<32x128xf32>, vector<1x128xf32> -> vector<1x128xf32>
    %c0_18 = arith.constant 0 : index
    %c0_19 = arith.constant 0 : index
    %18 = vector.load %arg9[%c0_18, %c0_19] : memref<32x128xf32, #tpu.memory_space<vmem>>, vector<32x128xf32>
    %cst_20 = arith.constant dense<0.000000e+00> : vector<1x128xf32>
    %19 = tpu.matmul %5, %18, %cst_20 {dimension_numbers = #tpu.dot_dimension_numbers<[1], [0], [0], [1], [0, 0, 1, 1], [], []>} : vector<1x32xf32>, vector<32x128xf32>, vector<1x128xf32> -> vector<1x128xf32>
    %20 = arith.addf %17, %19 : vector<1x128xf32>
    %c0_21 = arith.constant 0 : index
    %c0_22 = arith.constant 0 : index
    %21 = vector.load %arg10[%c0_21, %c0_22] : memref<1x128xf32, #tpu.memory_space<vmem>>, vector<1x128xf32>
    %22 = arith.addf %20, %21 : vector<1x128xf32>
    %23 = vector.extract_strided_slice %22 {offsets = [0, 0], sizes = [1, 32], strides = [1, 1]} : vector<1x128xf32> to vector<1x32xf32>
    %24 = arith.negf %23 : vector<1x32xf32>
    %25 = math.exp %24 : vector<1x32xf32>
    %cst_23 = arith.constant 1.000000e+00 : f32
    %26 = vector.broadcast %cst_23 : f32 to vector<1x32xf32>
    %27 = arith.addf %26, %25 : vector<1x32xf32>
    %28 = arith.divf %26, %27 : vector<1x32xf32>
    %29 = vector.extract_strided_slice %22 {offsets = [0, 32], sizes = [1, 32], strides = [1, 1]} : vector<1x128xf32> to vector<1x32xf32>
    %30 = arith.negf %29 : vector<1x32xf32>
    %31 = math.exp %30 : vector<1x32xf32>
    %cst_24 = arith.constant 1.000000e+00 : f32
    %32 = vector.broadcast %cst_24 : f32 to vector<1x32xf32>
    %33 = arith.addf %32, %31 : vector<1x32xf32>
    %34 = arith.divf %32, %33 : vector<1x32xf32>
    %35 = vector.extract_strided_slice %22 {offsets = [0, 64], sizes = [1, 32], strides = [1, 1]} : vector<1x128xf32> to vector<1x32xf32>
    %36 = math.tanh %35 : vector<1x32xf32>
    %37 = vector.extract_strided_slice %22 {offsets = [0, 96], sizes = [1, 32], strides = [1, 1]} : vector<1x128xf32> to vector<1x32xf32>
    %38 = arith.negf %37 : vector<1x32xf32>
    %39 = math.exp %38 : vector<1x32xf32>
    %cst_25 = arith.constant 1.000000e+00 : f32
    %40 = vector.broadcast %cst_25 : f32 to vector<1x32xf32>
    %41 = arith.addf %40, %39 : vector<1x32xf32>
    %42 = arith.divf %40, %41 : vector<1x32xf32>
    %43 = arith.mulf %34, %10 : vector<1x32xf32>
    %44 = arith.mulf %28, %36 : vector<1x32xf32>
    %45 = arith.addf %43, %44 : vector<1x32xf32>
    %46 = math.tanh %45 : vector<1x32xf32>
    %47 = arith.mulf %42, %46 : vector<1x32xf32>
    %c0_26 = arith.constant 0 : index
    %c0_27 = arith.constant 0 : index
    %48 = vector.load %arg11[%c0_26, %c0_27] : memref<32x128xf32, #tpu.memory_space<vmem>>, vector<32x128xf32>
    %cst_28 = arith.constant dense<0.000000e+00> : vector<1x128xf32>
    %49 = tpu.matmul %47, %48, %cst_28 {dimension_numbers = #tpu.dot_dimension_numbers<[1], [0], [0], [1], [0, 0, 1, 1], [], []>} : vector<1x32xf32>, vector<32x128xf32>, vector<1x128xf32> -> vector<1x128xf32>
    %c0_29 = arith.constant 0 : index
    %c0_30 = arith.constant 0 : index
    %50 = vector.load %arg12[%c0_29, %c0_30] : memref<32x128xf32, #tpu.memory_space<vmem>>, vector<32x128xf32>
    %cst_31 = arith.constant dense<0.000000e+00> : vector<1x128xf32>
    %51 = tpu.matmul %5, %50, %cst_31 {dimension_numbers = #tpu.dot_dimension_numbers<[1], [0], [0], [1], [0, 0, 1, 1], [], []>} : vector<1x32xf32>, vector<32x128xf32>, vector<1x128xf32> -> vector<1x128xf32>
    %52 = arith.addf %49, %51 : vector<1x128xf32>
    %c0_32 = arith.constant 0 : index
    %c0_33 = arith.constant 0 : index
    %53 = vector.load %arg13[%c0_32, %c0_33] : memref<1x128xf32, #tpu.memory_space<vmem>>, vector<1x128xf32>
    %54 = arith.addf %52, %53 : vector<1x128xf32>
    %55 = vector.extract_strided_slice %54 {offsets = [0, 0], sizes = [1, 32], strides = [1, 1]} : vector<1x128xf32> to vector<1x32xf32>
    %56 = arith.negf %55 : vector<1x32xf32>
    %57 = math.exp %56 : vector<1x32xf32>
    %cst_34 = arith.constant 1.000000e+00 : f32
    %58 = vector.broadcast %cst_34 : f32 to vector<1x32xf32>
    %59 = arith.addf %58, %57 : vector<1x32xf32>
    %60 = arith.divf %58, %59 : vector<1x32xf32>
    %61 = vector.extract_strided_slice %54 {offsets = [0, 32], sizes = [1, 32], strides = [1, 1]} : vector<1x128xf32> to vector<1x32xf32>
    %62 = arith.negf %61 : vector<1x32xf32>
    %63 = math.exp %62 : vector<1x32xf32>
    %cst_35 = arith.constant 1.000000e+00 : f32
    %64 = vector.broadcast %cst_35 : f32 to vector<1x32xf32>
    %65 = arith.addf %64, %63 : vector<1x32xf32>
    %66 = arith.divf %64, %65 : vector<1x32xf32>
    %67 = vector.extract_strided_slice %54 {offsets = [0, 64], sizes = [1, 32], strides = [1, 1]} : vector<1x128xf32> to vector<1x32xf32>
    %68 = math.tanh %67 : vector<1x32xf32>
    %69 = vector.extract_strided_slice %54 {offsets = [0, 96], sizes = [1, 32], strides = [1, 1]} : vector<1x128xf32> to vector<1x32xf32>
    %70 = arith.negf %69 : vector<1x32xf32>
    %71 = math.exp %70 : vector<1x32xf32>
    %cst_36 = arith.constant 1.000000e+00 : f32
    %72 = vector.broadcast %cst_36 : f32 to vector<1x32xf32>
    %73 = arith.addf %72, %71 : vector<1x32xf32>
    %74 = arith.divf %72, %73 : vector<1x32xf32>
    %75 = arith.mulf %66, %10 : vector<1x32xf32>
    %76 = arith.mulf %60, %68 : vector<1x32xf32>
    %77 = arith.addf %75, %76 : vector<1x32xf32>
    %78 = math.tanh %77 : vector<1x32xf32>
    %79 = arith.mulf %74, %78 : vector<1x32xf32>
    %80 = tpu.concatenate %47, %79 in 0 : vector<1x32xf32>, vector<1x32xf32> -> vector<2x32xf32>
    %c0_37 = arith.constant 0 : index
    %c0_38 = arith.constant 0 : index
    %81 = vector.load %arg19[%c0_37, %c0_38] : memref<2x32xf32, #tpu.memory_space<vmem>>, vector<2x32xf32>
    tpu.vector_store %arg19[%c0_37, %c0_38], %80 {strides = array<i32>} : memref<2x32xf32, #tpu.memory_space<vmem>>, vector<2x32xf32>,
    %82 = tpu.concatenate %45, %77 in 0 : vector<1x32xf32>, vector<1x32xf32> -> vector<2x32xf32>
    %c0_39 = arith.constant 0 : index
    %c0_40 = arith.constant 0 : index
    %83 = vector.load %arg20[%c0_39, %c0_40] : memref<2x32xf32, #tpu.memory_space<vmem>>, vector<2x32xf32>
    tpu.vector_store %arg20[%c0_39, %c0_40], %82 {strides = array<i32>} : memref<2x32xf32, #tpu.memory_space<vmem>>, vector<2x32xf32>,
    %c0_41 = arith.constant 0 : index
    %c0_42 = arith.constant 0 : index
    %84 = vector.load %arg14[%c0_41, %c0_42] : memref<32x32xf32, #tpu.memory_space<vmem>>, vector<32x32xf32>
    %cst_43 = arith.constant dense<0.000000e+00> : vector<1x32xf32>
    %85 = tpu.matmul %79, %84, %cst_43 {dimension_numbers = #tpu.dot_dimension_numbers<[1], [0], [0], [1], [0, 0, 1, 1], [], []>} : vector<1x32xf32>, vector<32x32xf32>, vector<1x32xf32> -> vector<1x32xf32>
    %c0_44 = arith.constant 0 : index
    %c0_45 = arith.constant 0 : index
    %86 = vector.load %arg15[%c0_44, %c0_45] : memref<1x32xf32, #tpu.memory_space<vmem>>, vector<1x32xf32>
    %87 = arith.addf %85, %86 : vector<1x32xf32>
    %cst_46 = arith.constant 0.000000e+00 : f32
    %88 = vector.broadcast %cst_46 : f32 to vector<1x32xf32>
    %89 = arith.maximumf %87, %88 : vector<1x32xf32>
    %c0_47 = arith.constant 0 : index
    %c0_48 = arith.constant 0 : index
    %90 = vector.load %arg16[%c0_47, %c0_48] : memref<32x32xf32, #tpu.memory_space<vmem>>, vector<32x32xf32>
    %cst_49 = arith.constant dense<0.000000e+00> : vector<1x32xf32>
    %91 = tpu.matmul %89, %90, %cst_49 {dimension_numbers = #tpu.dot_dimension_numbers<[1], [0], [0], [1], [0, 0, 1, 1], [], []>} : vector<1x32xf32>, vector<32x32xf32>, vector<1x32xf32> -> vector<1x32xf32>
    %c0_50 = arith.constant 0 : index
    %c0_51 = arith.constant 0 : index
    %92 = vector.load %arg17[%c0_50, %c0_51] : memref<1x32xf32, #tpu.memory_space<vmem>>, vector<1x32xf32>
    %93 = arith.addf %91, %92 : vector<1x32xf32>
    %cst_52 = arith.constant 0.000000e+00 : f32
    %94 = vector.broadcast %cst_52 : f32 to vector<1x32xf32>
    %95 = arith.maximumf %93, %94 : vector<1x32xf32>
    %c0_53 = arith.constant 0 : index
    %c0_54 = arith.constant 0 : index
    %96 = vector.load %arg18[%c0_53, %c0_54] : memref<1x32xf32, #tpu.memory_space<vmem>>, vector<1x32xf32>
    tpu.vector_store %arg18[%c0_53, %c0_54], %95 {strides = array<i32>} : memref<1x32xf32, #tpu.memory_space<vmem>>, vector<1x32xf32>,
    return
  }
  func.func @transform_0(%arg0: i32) -> (i32, i32) {
    %c0_i32 = arith.constant 0 : i32
    %c0_i32_0 = arith.constant 0 : i32
    %c0_i32_1 = arith.constant 0 : i32
    return %c0_i32, %c0_i32_0 : i32, i32
  }
  func.func @transform_1(%arg0: i32) -> (i32, i32) {
    %c0_i32 = arith.constant 0 : i32
    %c0_i32_0 = arith.constant 0 : i32
    %c0_i32_1 = arith.constant 0 : i32
    return %c0_i32, %c0_i32_0 : i32, i32
  }
  func.func @transform_2(%arg0: i32) -> (i32, i32) {
    %c0_i32 = arith.constant 0 : i32
    %c0_i32_0 = arith.constant 0 : i32
    %c0_i32_1 = arith.constant 0 : i32
    return %c0_i32, %c0_i32_0 : i32, i32
  }
  func.func @transform_3(%arg0: i32) -> (i32, i32) {
    %c0_i32 = arith.constant 0 : i32
    %c0_i32_0 = arith.constant 0 : i32
    %c0_i32_1 = arith.constant 0 : i32
    return %c0_i32, %c0_i32_0 : i32, i32
  }
  func.func @transform_4(%arg0: i32) -> (i32, i32) {
    %c0_i32 = arith.constant 0 : i32
    %c0_i32_0 = arith.constant 0 : i32
    %c0_i32_1 = arith.constant 0 : i32
    return %c0_i32, %c0_i32_0 : i32, i32
  }
  func.func @transform_5(%arg0: i32) -> (i32, i32) {
    %c0_i32 = arith.constant 0 : i32
    %c0_i32_0 = arith.constant 0 : i32
    %c0_i32_1 = arith.constant 0 : i32
    return %c0_i32, %c0_i32_0 : i32, i32
  }
  func.func @transform_6(%arg0: i32) -> (i32, i32) {
    %c0_i32 = arith.constant 0 : i32
    %c0_i32_0 = arith.constant 0 : i32
    %c0_i32_1 = arith.constant 0 : i32
    return %c0_i32, %c0_i32_0 : i32, i32
  }
  func.func @transform_7(%arg0: i32) -> (i32, i32) {
    %c0_i32 = arith.constant 0 : i32
    %c0_i32_0 = arith.constant 0 : i32
    %c0_i32_1 = arith.constant 0 : i32
    return %c0_i32, %c0_i32_0 : i32, i32
  }
  func.func @transform_8(%arg0: i32) -> (i32, i32) {
    %c0_i32 = arith.constant 0 : i32
    %c0_i32_0 = arith.constant 0 : i32
    %c0_i32_1 = arith.constant 0 : i32
    return %c0_i32, %c0_i32_0 : i32, i32
  }
  func.func @transform_9(%arg0: i32) -> (i32, i32) {
    %c0_i32 = arith.constant 0 : i32
    %c0_i32_0 = arith.constant 0 : i32
    %c0_i32_1 = arith.constant 0 : i32
    return %c0_i32, %c0_i32_0 : i32, i32
  }
  func.func @transform_10(%arg0: i32) -> (i32, i32) {
    %c0_i32 = arith.constant 0 : i32
    %c0_i32_0 = arith.constant 0 : i32
    %c0_i32_1 = arith.constant 0 : i32
    return %c0_i32, %c0_i32_0 : i32, i32
  }
  func.func @transform_11(%arg0: i32) -> (i32, i32) {
    %c0_i32 = arith.constant 0 : i32
    %c0_i32_0 = arith.constant 0 : i32
    %c0_i32_1 = arith.constant 0 : i32
    return %c0_i32, %c0_i32_0 : i32, i32
  }
  func.func @transform_12(%arg0: i32) -> (i32, i32) {
    %c0_i32 = arith.constant 0 : i32
    %c0_i32_0 = arith.constant 0 : i32
    %c0_i32_1 = arith.constant 0 : i32
    return %c0_i32, %c0_i32_0 : i32, i32
  }
  func.func @transform_13(%arg0: i32) -> (i32, i32) {
    %c0_i32 = arith.constant 0 : i32
    %c0_i32_0 = arith.constant 0 : i32
    %c0_i32_1 = arith.constant 0 : i32
    return %c0_i32, %c0_i32_0 : i32, i32
  }
  func.func @transform_14(%arg0: i32) -> (i32, i32) {
    %c0_i32 = arith.constant 0 : i32
    %c0_i32_0 = arith.constant 0 : i32
    %c0_i32_1 = arith.constant 0 : i32
    return %c0_i32, %c0_i32_0 : i32, i32
  }
  func.func @transform_15(%arg0: i32) -> (i32, i32) {
    %c0_i32 = arith.constant 0 : i32
    %c0_i32_0 = arith.constant 0 : i32
    %c0_i32_1 = arith.constant 0 : i32
    return %c0_i32, %c0_i32_0 : i32, i32
  }
  func.func @transform_16(%arg0: i32) -> (i32, i32) {
    %c0_i32 = arith.constant 0 : i32
    %c0_i32_0 = arith.constant 0 : i32
    %c0_i32_1 = arith.constant 0 : i32
    return %c0_i32, %c0_i32_0 : i32, i32
  }
  func.func @transform_17(%arg0: i32) -> (i32, i32) {
    %c0_i32 = arith.constant 0 : i32
    %c0_i32_0 = arith.constant 0 : i32
    %c0_i32_1 = arith.constant 0 : i32
    return %c0_i32, %c0_i32_0 : i32, i32
  }
  func.func @transform_18(%arg0: i32) -> (i32, i32) {
    %c0_i32 = arith.constant 0 : i32
    %c0_i32_0 = arith.constant 0 : i32
    %c0_i32_1 = arith.constant 0 : i32
    return %c0_i32, %c0_i32_0 : i32, i32
  }
  func.func @transform_19(%arg0: i32) -> (i32, i32) {
    %c0_i32 = arith.constant 0 : i32
    %c0_i32_0 = arith.constant 0 : i32
    %c0_i32_1 = arith.constant 0 : i32
    return %c0_i32, %c0_i32_0 : i32, i32
  }
}

module attributes {stable_mosaic.version = 11 : i64} {
  func.func @_big_linear_kernel(%arg0: i32, %arg1: memref<1x32xf32, #tpu.memory_space<vmem>>, %arg2: memref<32x16384xf32, #tpu.memory_space<vmem>>, %arg3: memref<1x16384xf32, #tpu.memory_space<vmem>>, %arg4: memref<1x16384xf32, #tpu.memory_space<vmem>>) attributes {dimension_semantics = [#tpu.dimension_semantics<parallel>], iteration_bounds = array<i64: 8>, scalar_prefetch = 0 : i64, scratch_operands = 0 : i64, tpu.core_type = #tpu.core_type<tc>, window_params = [{pipeline_mode = #tpu.pipeline_mode<synchronous>, transform_indices = @transform_0, window_bounds = array<i64: 1, 32>}, {transform_indices = @transform_1, window_bounds = array<i64: 32, 16384>}, {transform_indices = @transform_2, window_bounds = array<i64: 1, 16384>}, {transform_indices = @transform_3, window_bounds = array<i64: 1, 16384>}]} {
    %c0 = arith.constant 0 : index
    %c0_0 = arith.constant 0 : index
    %0 = vector.load %arg1[%c0, %c0_0] : memref<1x32xf32, #tpu.memory_space<vmem>>, vector<1x32xf32>
    %c0_1 = arith.constant 0 : index
    %c0_2 = arith.constant 0 : index
    %1 = vector.load %arg2[%c0_1, %c0_2] : memref<32x16384xf32, #tpu.memory_space<vmem>>, vector<32x16384xf32>
    %cst = arith.constant dense<0.000000e+00> : vector<1x16384xf32>
    %2 = tpu.matmul %0, %1, %cst {dimension_numbers = #tpu.dot_dimension_numbers<[1], [0], [0], [1], [0, 0, 1, 1], [], []>} : vector<1x32xf32>, vector<32x16384xf32>, vector<1x16384xf32> -> vector<1x16384xf32>
    %c0_3 = arith.constant 0 : index
    %c0_4 = arith.constant 0 : index
    %3 = vector.load %arg3[%c0_3, %c0_4] : memref<1x16384xf32, #tpu.memory_space<vmem>>, vector<1x16384xf32>
    %4 = arith.addf %2, %3 : vector<1x16384xf32>
    %c0_5 = arith.constant 0 : index
    %c0_6 = arith.constant 0 : index
    %5 = vector.load %arg4[%c0_5, %c0_6] : memref<1x16384xf32, #tpu.memory_space<vmem>>, vector<1x16384xf32>
    tpu.vector_store %arg4[%c0_5, %c0_6], %4 {strides = array<i32>} : memref<1x16384xf32, #tpu.memory_space<vmem>>, vector<1x16384xf32>,
    return
  }
  func.func @transform_0(%arg0: i32) -> (i32, i32) {
    %c0_i32 = arith.constant 0 : i32
    %c0_i32_0 = arith.constant 0 : i32
    %c0_i32_1 = arith.constant 0 : i32
    return %c0_i32, %c0_i32_0 : i32, i32
  }
  func.func @transform_1(%arg0: i32) -> (i32, i32) {
    %c0_i32 = arith.constant 0 : i32
    %c0_i32_0 = arith.constant 0 : i32
    return %c0_i32, %arg0 : i32, i32
  }
  func.func @transform_2(%arg0: i32) -> (i32, i32) {
    %c0_i32 = arith.constant 0 : i32
    %c0_i32_0 = arith.constant 0 : i32
    return %c0_i32, %arg0 : i32, i32
  }
  func.func @transform_3(%arg0: i32) -> (i32, i32) {
    %c0_i32 = arith.constant 0 : i32
    %c0_i32_0 = arith.constant 0 : i32
    return %c0_i32, %arg0 : i32, i32
  }
}

module attributes {stable_mosaic.version = 11 : i64} {
  func.func @_prednet_kernel(%arg0: i32, %arg1: memref<8x784xf32, #tpu.memory_space<vmem>>, %arg2: memref<784x128xf32, #tpu.memory_space<vmem>>, %arg3: memref<1x128xf32, #tpu.memory_space<vmem>>, %arg4: memref<128x128xf32, #tpu.memory_space<vmem>>, %arg5: memref<1x128xf32, #tpu.memory_space<vmem>>, %arg6: memref<128x1xf32, #tpu.memory_space<vmem>>, %arg7: memref<1x1xf32, #tpu.memory_space<vmem>>, %arg8: memref<8x1xf32, #tpu.memory_space<vmem>>) attributes {dimension_semantics = [#tpu.dimension_semantics<arbitrary>], iteration_bounds = array<i64: 1>, scalar_prefetch = 0 : i64, scratch_operands = 0 : i64, tpu.core_type = #tpu.core_type<tc>, window_params = [{pipeline_mode = #tpu.pipeline_mode<synchronous>, transform_indices = @transform_0, window_bounds = array<i64: 8, 784>}, {pipeline_mode = #tpu.pipeline_mode<synchronous>, transform_indices = @transform_1, window_bounds = array<i64: 784, 128>}, {pipeline_mode = #tpu.pipeline_mode<synchronous>, transform_indices = @transform_2, window_bounds = array<i64: 1, 128>}, {pipeline_mode = #tpu.pipeline_mode<synchronous>, transform_indices = @transform_3, window_bounds = array<i64: 128, 128>}, {pipeline_mode = #tpu.pipeline_mode<synchronous>, transform_indices = @transform_4, window_bounds = array<i64: 1, 128>}, {pipeline_mode = #tpu.pipeline_mode<synchronous>, transform_indices = @transform_5, window_bounds = array<i64: 128, 1>}, {pipeline_mode = #tpu.pipeline_mode<synchronous>, transform_indices = @transform_6, window_bounds = array<i64: 1, 1>}, {pipeline_mode = #tpu.pipeline_mode<synchronous>, transform_indices = @transform_7, window_bounds = array<i64: 8, 1>}]} {
    %c0 = arith.constant 0 : index
    %c0_0 = arith.constant 0 : index
    %0 = vector.load %arg1[%c0, %c0_0] : memref<8x784xf32, #tpu.memory_space<vmem>>, vector<8x784xf32>
    %c0_1 = arith.constant 0 : index
    %c0_2 = arith.constant 0 : index
    %1 = vector.load %arg2[%c0_1, %c0_2] : memref<784x128xf32, #tpu.memory_space<vmem>>, vector<784x128xf32>
    %cst = arith.constant dense<0.000000e+00> : vector<8x128xf32>
    %2 = tpu.matmul %0, %1, %cst {dimension_numbers = #tpu.dot_dimension_numbers<[1], [0], [0], [1], [0, 0, 1, 1], [], []>} : vector<8x784xf32>, vector<784x128xf32>, vector<8x128xf32> -> vector<8x128xf32>
    %c0_3 = arith.constant 0 : index
    %c0_4 = arith.constant 0 : index
    %3 = vector.load %arg3[%c0_3, %c0_4] : memref<1x128xf32, #tpu.memory_space<vmem>>, vector<1x128xf32>
    %4 = vector.broadcast %3 : vector<1x128xf32> to vector<8x128xf32>
    %5 = arith.addf %2, %4 : vector<8x128xf32>
    %cst_5 = arith.constant 0.000000e+00 : f32
    %6 = vector.broadcast %cst_5 : f32 to vector<8x128xf32>
    %7 = arith.maximumf %5, %6 : vector<8x128xf32>
    %c0_6 = arith.constant 0 : index
    %c0_7 = arith.constant 0 : index
    %8 = vector.load %arg4[%c0_6, %c0_7] : memref<128x128xf32, #tpu.memory_space<vmem>>, vector<128x128xf32>
    %cst_8 = arith.constant dense<0.000000e+00> : vector<8x128xf32>
    %9 = tpu.matmul %7, %8, %cst_8 {dimension_numbers = #tpu.dot_dimension_numbers<[1], [0], [0], [1], [0, 0, 1, 1], [], []>} : vector<8x128xf32>, vector<128x128xf32>, vector<8x128xf32> -> vector<8x128xf32>
    %c0_9 = arith.constant 0 : index
    %c0_10 = arith.constant 0 : index
    %10 = vector.load %arg5[%c0_9, %c0_10] : memref<1x128xf32, #tpu.memory_space<vmem>>, vector<1x128xf32>
    %11 = vector.broadcast %10 : vector<1x128xf32> to vector<8x128xf32>
    %12 = arith.addf %9, %11 : vector<8x128xf32>
    %cst_11 = arith.constant 0.000000e+00 : f32
    %13 = vector.broadcast %cst_11 : f32 to vector<8x128xf32>
    %14 = arith.maximumf %12, %13 : vector<8x128xf32>
    %c0_12 = arith.constant 0 : index
    %c0_13 = arith.constant 0 : index
    %15 = vector.load %arg6[%c0_12, %c0_13] : memref<128x1xf32, #tpu.memory_space<vmem>>, vector<128x1xf32>
    %cst_14 = arith.constant dense<0.000000e+00> : vector<8x1xf32>
    %16 = tpu.matmul %14, %15, %cst_14 {dimension_numbers = #tpu.dot_dimension_numbers<[1], [0], [0], [1], [0, 0, 1, 1], [], []>} : vector<8x128xf32>, vector<128x1xf32>, vector<8x1xf32> -> vector<8x1xf32>
    %c0_15 = arith.constant 0 : index
    %c0_16 = arith.constant 0 : index
    %17 = vector.load %arg7[%c0_15, %c0_16] : memref<1x1xf32, #tpu.memory_space<vmem>>, vector<1x1xf32>
    %18 = vector.broadcast %17 : vector<1x1xf32> to vector<8x1xf32>
    %19 = arith.addf %16, %18 : vector<8x1xf32>
    %20 = arith.negf %19 : vector<8x1xf32>
    %21 = math.exp %20 : vector<8x1xf32>
    %cst_17 = arith.constant 1.000000e+00 : f32
    %22 = vector.broadcast %cst_17 : f32 to vector<8x1xf32>
    %23 = arith.addf %22, %21 : vector<8x1xf32>
    %24 = arith.divf %22, %23 : vector<8x1xf32>
    %c0_18 = arith.constant 0 : index
    %c0_19 = arith.constant 0 : index
    %25 = vector.load %arg8[%c0_18, %c0_19] : memref<8x1xf32, #tpu.memory_space<vmem>>, vector<8x1xf32>
    tpu.vector_store %arg8[%c0_18, %c0_19], %24 {strides = array<i32>} : memref<8x1xf32, #tpu.memory_space<vmem>>, vector<8x1xf32>,
    return
  }
  func.func @transform_0(%arg0: i32) -> (i32, i32) {
    %c0_i32 = arith.constant 0 : i32
    %c0_i32_0 = arith.constant 0 : i32
    %c0_i32_1 = arith.constant 0 : i32
    return %c0_i32, %c0_i32_0 : i32, i32
  }
  func.func @transform_1(%arg0: i32) -> (i32, i32) {
    %c0_i32 = arith.constant 0 : i32
    %c0_i32_0 = arith.constant 0 : i32
    %c0_i32_1 = arith.constant 0 : i32
    return %c0_i32, %c0_i32_0 : i32, i32
  }
  func.func @transform_2(%arg0: i32) -> (i32, i32) {
    %c0_i32 = arith.constant 0 : i32
    %c0_i32_0 = arith.constant 0 : i32
    %c0_i32_1 = arith.constant 0 : i32
    return %c0_i32, %c0_i32_0 : i32, i32
  }
  func.func @transform_3(%arg0: i32) -> (i32, i32) {
    %c0_i32 = arith.constant 0 : i32
    %c0_i32_0 = arith.constant 0 : i32
    %c0_i32_1 = arith.constant 0 : i32
    return %c0_i32, %c0_i32_0 : i32, i32
  }
  func.func @transform_4(%arg0: i32) -> (i32, i32) {
    %c0_i32 = arith.constant 0 : i32
    %c0_i32_0 = arith.constant 0 : i32
    %c0_i32_1 = arith.constant 0 : i32
    return %c0_i32, %c0_i32_0 : i32, i32
  }
  func.func @transform_5(%arg0: i32) -> (i32, i32) {
    %c0_i32 = arith.constant 0 : i32
    %c0_i32_0 = arith.constant 0 : i32
    %c0_i32_1 = arith.constant 0 : i32
    return %c0_i32, %c0_i32_0 : i32, i32
  }
  func.func @transform_6(%arg0: i32) -> (i32, i32) {
    %c0_i32 = arith.constant 0 : i32
    %c0_i32_0 = arith.constant 0 : i32
    %c0_i32_1 = arith.constant 0 : i32
    return %c0_i32, %c0_i32_0 : i32, i32
  }
  func.func @transform_7(%arg0: i32) -> (i32, i32) {
    %c0_i32 = arith.constant 0 : i32
    %c0_i32_0 = arith.constant 0 : i32
    %c0_i32_1 = arith.constant 0 : i32
    return %c0_i32, %c0_i32_0 : i32, i32
  }
}

</mosaic_0001>

<llo_original>
// kernel: rnn_forward.3
$region0: #{rnn_forward.3}
  #allocation0 [shape = 'u32[]', space=smem, size = 0x4, offset = 0x4, fixed_abs, tag = 'smem constant byte address 0x4 - core index']
  #allocation1 [shape = 'u32[144,128]{1,0:T(1,128)}', space=vmem, size = 0x12000, scoped, tag = 'internal scratch']
  %s0 = inlined_call_operand.hbm [shape: f32[1,16], index: 0, kind: input, shape index: {}]
  %s1 = inlined_call_operand.hbm [shape: f32[16,32], index: 1, kind: input, shape index: {}]
  %s2 = inlined_call_operand.hbm [shape: f32[1,32], index: 2, kind: input, shape index: {}]
  %s3 = inlined_call_operand.hbm [shape: f32[16,32], index: 3, kind: input, shape index: {}]
  %s4 = inlined_call_operand.hbm [shape: f32[1,32], index: 4, kind: input, shape index: {}]
  %s5 = inlined_call_operand.hbm [shape: f32[16,32], index: 5, kind: input, shape index: {}]
  %s6 = inlined_call_operand.hbm [shape: f32[1,32], index: 6, kind: input, shape index: {}]
  %s7 = inlined_call_operand.hbm [shape: f32[32,128], index: 7, kind: input, shape index: {}]
  %s8 = inlined_call_operand.hbm [shape: f32[32,128], index: 8, kind: input, shape index: {}]
  %s9 = inlined_call_operand.hbm [shape: f32[1,128], index: 9, kind: input, shape index: {}]
  %s10 = inlined_call_operand.hbm [shape: f32[32,128], index: 10, kind: input, shape index: {}]
  %s11 = inlined_call_operand.hbm [shape: f32[32,128], index: 11, kind: input, shape index: {}]
  %s12 = inlined_call_operand.hbm [shape: f32[1,128], index: 12, kind: input, shape index: {}]
  %s13 = inlined_call_operand.hbm [shape: f32[32,32], index: 13, kind: input, shape index: {}]
  %s14 = inlined_call_operand.hbm [shape: f32[1,32], index: 14, kind: input, shape index: {}]
  %s15 = inlined_call_operand.hbm [shape: f32[32,32], index: 15, kind: input, shape index: {}]
  %s16 = inlined_call_operand.hbm [shape: f32[1,32], index: 16, kind: input, shape index: {}]
  %s17 = inlined_call_operand.vmem [shape: f32[1,32], index: 17, kind: output, shape index: {0}]
  %s18 = inlined_call_operand.hbm [shape: f32[2,32], index: 18, kind: output, shape index: {1}]
  %s19 = inlined_call_operand.hbm [shape: f32[2,32], index: 19, kind: output, shape index: {2}]
  %20 = xla_tuple %s17, %s18, %s19
  %s21 = sld [smem:[#allocation0]]
  $region162: #{rnn_forward.3} parent=0
    _
  %s23 = ssub.s32 1, %s21
  %s24 = scalar_select 0, %s23, %s21
  $region1: #{rnn_forward.3} parent=0
    #allocation2 [shape = 'u8[512]{0}', space=vmem, size = 0x400, scoped, tag = 'input window, operand 0, single buffered']
    #allocation3 [shape = 's32[1]{0}', space=sflag, size = 0x4, scoped, tag = 'scoped memory for rnn_forward.3']
    #allocation4 [shape = 's32[1]{0}', space=sflag, size = 0x4, scoped, tag = 'scoped memory for rnn_forward.3']
    #allocation5 [shape = 'u8[8192]{0}', space=vmem, size = 0x2000, scoped, tag = 'input window, operand 1, single buffered']
    #allocation6 [shape = 's32[1]{0}', space=sflag, size = 0x4, scoped, tag = 'scoped memory for rnn_forward.3']
    #allocation7 [shape = 'u8[512]{0}', space=vmem, size = 0x400, scoped, tag = 'input window, operand 2, single buffered']
    #allocation8 [shape = 'u8[8192]{0}', space=vmem, size = 0x2000, scoped, tag = 'input window, operand 3, single buffered']
    #allocation9 [shape = 's32[1]{0}', space=sflag, size = 0x4, scoped, tag = 'scoped memory for rnn_forward.3']
    #allocation10 [shape = 'u8[512]{0}', space=vmem, size = 0x400, scoped, tag = 'input window, operand 4, single buffered']
    #allocation11 [shape = 'u8[8192]{0}', space=vmem, size = 0x2000, scoped, tag = 'input window, operand 5, single buffered']
    #allocation12 [shape = 's32[1]{0}', space=sflag, size = 0x4, scoped, tag = 'scoped memory for rnn_forward.3']
    #allocation13 [shape = 'u8[512]{0}', space=vmem, size = 0x400, scoped, tag = 'input window, operand 6, single buffered']
    #allocation14 [shape = 'u8[16384]{0}', space=vmem, size = 0x4000, scoped, tag = 'input window, operand 7, single buffered']
    #allocation15 [shape = 's32[1]{0}', space=sflag, size = 0x4, scoped, tag = 'scoped memory for rnn_forward.3']
    #allocation16 [shape = 'u8[16384]{0}', space=vmem, size = 0x4000, scoped, tag = 'input window, operand 8, single buffered']
    #allocation17 [shape = 'u8[512]{0}', space=vmem, size = 0x400, scoped, tag = 'input window, operand 9, single buffered']
    #allocation18 [shape = 's32[1]{0}', space=sflag, size = 0x4, scoped, tag = 'scoped memory for rnn_forward.3']
    #allocation19 [shape = 'u8[16384]{0}', space=vmem, size = 0x4000, scoped, tag = 'input window, operand 10, single buffered']
    #allocation20 [shape = 'u8[16384]{0}', space=vmem, size = 0x4000, scoped, tag = 'input window, operand 11, single buffered']
    #allocation21 [shape = 's32[1]{0}', space=sflag, size = 0x4, scoped, tag = 'scoped memory for rnn_forward.3']
    #allocation22 [shape = 'u8[512]{0}', space=vmem, size = 0x400, scoped, tag = 'input window, operand 12, single buffered']
    #allocation23 [shape = 'u8[16384]{0}', space=vmem, size = 0x4000, scoped, tag = 'input window, operand 13, single buffered']
    #allocation24 [shape = 's32[1]{0}', space=sflag, size = 0x4, scoped, tag = 'scoped memory for rnn_forward.3']
    #allocation25 [shape = 'u8[512]{0}', space=vmem, size = 0x400, scoped, tag = 'input window, operand 14, single buffered']
    #allocation26 [shape = 'u8[16384]{0}', space=vmem, size = 0x4000, scoped, tag = 'input window, operand 15, single buffered']
    #allocation27 [shape = 's32[1]{0}', space=sflag, size = 0x4, scoped, tag = 'scoped memory for rnn_forward.3']
    #allocation28 [shape = 'u8[512]{0}', space=vmem, size = 0x400, scoped, tag = 'input window, operand 16, single buffered']
    #allocation29 [shape = 'u8[1024]{0}', space=vmem, size = 0x400, scoped, tag = 'output window, operand 1, single buffered']
    #allocation30 [shape = 'u8[1024]{0}', space=vmem, size = 0x400, scoped, tag = 'output window, operand 2, single buffered']
    #allocation31 [shape = 's32[1]{0}', space=sflag, size = 0x4, scoped, tag = 'scoped memory for rnn_forward.3']
    %25 = vsyncpa [#allocation3], 0
    %26 = vsyncpa [#allocation6], 0
    %27 = vsyncpa [#allocation9], 0
    %28 = vsyncpa [#allocation12], 0
    %29 = vsyncpa [#allocation15], 0
    %30 = vsyncpa [#allocation18], 0
    %31 = vsyncpa [#allocation21], 0
    %32 = vsyncpa [#allocation24], 0
    %33 = vsyncpa [#allocation27], 0
    %34 = vsyncpa [#allocation4], 0
    %35 = vsyncpa [#allocation31], 0
    // Predicated region
    $region2: #{rnn_forward.3} parent=1 // pred_check
      _
    $region3: #{rnn_forward.3} parent=1 // pred_check_branch
      %37 = sbr.rel (0) target = $region5
    $region4: #{rnn_forward.3} parent=1 // pred_region
      %s39 = ssub.s32 16, 16
      %40 = vsyncadd [#allocation3], %s39
      %s42 = sshll.u32 [#allocation2], 4
      %s43 = int_to_ptr.vmem [resolvable:$true] %s42
      %45 = dma.hbm_to_vmem [thread:$0]  %s0, 16, %s43, [#allocation3]
    $region5: #{rnn_forward.3} parent=1 // pred_fallthru
      _
    // Predicated region
    $region6: #{rnn_forward.3} parent=1 // pred_check
      _
    $region7: #{rnn_forward.3} parent=1 // pred_check_branch
      %47 = sbr.rel (0) target = $region9
    $region8: #{rnn_forward.3} parent=1 // pred_region
      %s49 = ssub.s32 256, 256
      %50 = vsyncadd [#allocation6], %s49
      %s51 = sshll.u32 [#allocation5], 4
      %s52 = int_to_ptr.vmem [resolvable:$true] %s51
      %57 = dma.hbm_to_vmem [thread:$0]  %s1, 256, %s52, [#allocation6], 128, 128, 8
    $region9: #{rnn_forward.3} parent=1 // pred_fallthru
      _
    // Predicated region
    $region10: #{rnn_forward.3} parent=1 // pred_check
      _
    $region11: #{rnn_forward.3} parent=1 // pred_check_branch
      %59 = sbr.rel (0) target = $region13
    $region12: #{rnn_forward.3} parent=1 // pred_region
      %s61 = ssub.s32 16, 16
      %62 = vsyncadd [#allocation6], %s61
      %s64 = sshll.u32 [#allocation7], 4
      %s65 = int_to_ptr.vmem [resolvable:$true] %s64
      %67 = dma.hbm_to_vmem [thread:$0]  %s2, 16, %s65, [#allocation6]
    $region13: #{rnn_forward.3} parent=1 // pred_fallthru
      _
    // Predicated region
    $region14: #{rnn_forward.3} parent=1 // pred_check
      _
    $region15: #{rnn_forward.3} parent=1 // pred_check_branch
      %69 = sbr.rel (0) target = $region17
    $region16: #{rnn_forward.3} parent=1 // pred_region
      %s71 = ssub.s32 256, 256
      %72 = vsyncadd [#allocation9], %s71
      %s73 = sshll.u32 [#allocation8], 4
      %s74 = int_to_ptr.vmem [resolvable:$true] %s73
      %79 = dma.hbm_to_vmem [thread:$0]  %s3, 256, %s74, [#allocation9], 128, 128, 8
    $region17: #{rnn_forward.3} parent=1 // pred_fallthru
      _
    // Predicated region
    $region18: #{rnn_forward.3} parent=1 // pred_check
      _
    $region19: #{rnn_forward.3} parent=1 // pred_check_branch
      %81 = sbr.rel (0) target = $region21
    $region20: #{rnn_forward.3} parent=1 // pred_region
      %s83 = ssub.s32 16, 16
      %84 = vsyncadd [#allocation9], %s83
      %s86 = sshll.u32 [#allocation10], 4
      %s87 = int_to_ptr.vmem [resolvable:$true] %s86
      %89 = dma.hbm_to_vmem [thread:$0]  %s4, 16, %s87, [#allocation9]
    $region21: #{rnn_forward.3} parent=1 // pred_fallthru
      _
    // Predicated region
    $region22: #{rnn_forward.3} parent=1 // pred_check
      _
    $region23: #{rnn_forward.3} parent=1 // pred_check_branch
      %91 = sbr.rel (0) target = $region25
    $region24: #{rnn_forward.3} parent=1 // pred_region
      %s93 = ssub.s32 256, 256
      %94 = vsyncadd [#allocation12], %s93
      %s95 = sshll.u32 [#allocation11], 4
      %s96 = int_to_ptr.vmem [resolvable:$true] %s95
      %101 = dma.hbm_to_vmem [thread:$0]  %s5, 256, %s96, [#allocation12], 128, 128, 8
    $region25: #{rnn_forward.3} parent=1 // pred_fallthru
      _
    // Predicated region
    $region26: #{rnn_forward.3} parent=1 // pred_check
      _
    $region27: #{rnn_forward.3} parent=1 // pred_check_branch
      %103 = sbr.rel (0) target = $region29
    $region28: #{rnn_forward.3} parent=1 // pred_region
      %s105 = ssub.s32 16, 16
      %106 = vsyncadd [#allocation12], %s105
      %s108 = sshll.u32 [#allocation13], 4
      %s109 = int_to_ptr.vmem [resolvable:$true] %s108
      %111 = dma.hbm_to_vmem [thread:$0]  %s6, 16, %s109, [#allocation12]
    $region29: #{rnn_forward.3} parent=1 // pred_fallthru
      _
    // Predicated region
    $region30: #{rnn_forward.3} parent=1 // pred_check
      _
    $region31: #{rnn_forward.3} parent=1 // pred_check_branch
      %113 = sbr.rel (0) target = $region33
    $region32: #{rnn_forward.3} parent=1 // pred_region
      %s115 = ssub.s32 512, 512
      %116 = vsyncadd [#allocation15], %s115
      %s117 = sshll.u32 [#allocation14], 4
      %s118 = int_to_ptr.vmem [resolvable:$true] %s117
      %123 = dma.hbm_to_vmem [thread:$0]  %s7, 512, %s118, [#allocation15], 128, 128, 8
    $region33: #{rnn_forward.3} parent=1 // pred_fallthru
      _
    // Predicated region
    $region34: #{rnn_forward.3} parent=1 // pred_check
      _
    $region35: #{rnn_forward.3} parent=1 // pred_check_branch
      %125 = sbr.rel (0) target = $region37
    $region36: #{rnn_forward.3} parent=1 // pred_region
      %s127 = ssub.s32 512, 512
      %128 = vsyncadd [#allocation15], %s127
      %s129 = sshll.u32 [#allocation16], 4
      %s130 = int_to_ptr.vmem [resolvable:$true] %s129
      %135 = dma.hbm_to_vmem [thread:$0]  %s8, 512, %s130, [#allocation15], 128, 128, 8
    $region37: #{rnn_forward.3} parent=1 // pred_fallthru
      _
    // Predicated region
    $region38: #{rnn_forward.3} parent=1 // pred_check
      _
    $region39: #{rnn_forward.3} parent=1 // pred_check_branch
      %137 = sbr.rel (0) target = $region41
    $region40: #{rnn_forward.3} parent=1 // pred_region
      %s139 = ssub.s32 16, 16
      %140 = vsyncadd [#allocation18], %s139
      %s142 = sshll.u32 [#allocation17], 4
      %s143 = int_to_ptr.vmem [resolvable:$true] %s142
      %145 = dma.hbm_to_vmem [thread:$0]  %s9, 16, %s143, [#allocation18]
    $region41: #{rnn_forward.3} parent=1 // pred_fallthru
      _
    // Predicated region
    $region42: #{rnn_forward.3} parent=1 // pred_check
      _
    $region43: #{rnn_forward.3} parent=1 // pred_check_branch
      %147 = sbr.rel (0) target = $region45
    $region44: #{rnn_forward.3} parent=1 // pred_region
      %s149 = ssub.s32 512, 512
      %150 = vsyncadd [#allocation18], %s149
      %s151 = sshll.u32 [#allocation19], 4
      %s152 = int_to_ptr.vmem [resolvable:$true] %s151
      %157 = dma.hbm_to_vmem [thread:$0]  %s10, 512, %s152, [#allocation18], 128, 128, 8
    $region45: #{rnn_forward.3} parent=1 // pred_fallthru
      _
    // Predicated region
    $region46: #{rnn_forward.3} parent=1 // pred_check
      _
    $region47: #{rnn_forward.3} parent=1 // pred_check_branch
      %159 = sbr.rel (0) target = $region49
    $region48: #{rnn_forward.3} parent=1 // pred_region
      %s161 = ssub.s32 512, 512
      %162 = vsyncadd [#allocation21], %s161
      %s163 = sshll.u32 [#allocation20], 4
      %s164 = int_to_ptr.vmem [resolvable:$true] %s163
      %169 = dma.hbm_to_vmem [thread:$0]  %s11, 512, %s164, [#allocation21], 128, 128, 8
    $region49: #{rnn_forward.3} parent=1 // pred_fallthru
      _
    // Predicated region
    $region50: #{rnn_forward.3} parent=1 // pred_check
      _
    $region51: #{rnn_forward.3} parent=1 // pred_check_branch
      %171 = sbr.rel (0) target = $region53
    $region52: #{rnn_forward.3} parent=1 // pred_region
      %s173 = ssub.s32 16, 16
      %174 = vsyncadd [#allocation21], %s173
      %s176 = sshll.u32 [#allocation22], 4
      %s177 = int_to_ptr.vmem [resolvable:$true] %s176
      %179 = dma.hbm_to_vmem [thread:$0]  %s12, 16, %s177, [#allocation21]
    $region53: #{rnn_forward.3} parent=1 // pred_fallthru
      _
    // Predicated region
    $region54: #{rnn_forward.3} parent=1 // pred_check
      _
    $region55: #{rnn_forward.3} parent=1 // pred_check_branch
      %181 = sbr.rel (0) target = $region57
    $region56: #{rnn_forward.3} parent=1 // pred_region
      %s183 = ssub.s32 512, 512
      %184 = vsyncadd [#allocation24], %s183
      %s185 = sshll.u32 [#allocation23], 4
      %s186 = int_to_ptr.vmem [resolvable:$true] %s185
      %191 = dma.hbm_to_vmem [thread:$0]  %s13, 512, %s186, [#allocation24], 128, 128, 8
    $region57: #{rnn_forward.3} parent=1 // pred_fallthru
      _
    // Predicated region
    $region58: #{rnn_forward.3} parent=1 // pred_check
      _
    $region59: #{rnn_forward.3} parent=1 // pred_check_branch
      %193 = sbr.rel (0) target = $region61
    $region60: #{rnn_forward.3} parent=1 // pred_region
      %s195 = ssub.s32 16, 16
      %196 = vsyncadd [#allocation24], %s195
      %s198 = sshll.u32 [#allocation25], 4
      %s199 = int_to_ptr.vmem [resolvable:$true] %s198
      %201 = dma.hbm_to_vmem [thread:$0]  %s14, 16, %s199, [#allocation24]
    $region61: #{rnn_forward.3} parent=1 // pred_fallthru
      _
    // Predicated region
    $region62: #{rnn_forward.3} parent=1 // pred_check
      _
    $region63: #{rnn_forward.3} parent=1 // pred_check_branch
      %203 = sbr.rel (0) target = $region65
    $region64: #{rnn_forward.3} parent=1 // pred_region
      %s205 = ssub.s32 512, 512
      %206 = vsyncadd [#allocation27], %s205
      %s207 = sshll.u32 [#allocation26], 4
      %s208 = int_to_ptr.vmem [resolvable:$true] %s207
      %213 = dma.hbm_to_vmem [thread:$0]  %s15, 512, %s208, [#allocation27], 128, 128, 8
    $region65: #{rnn_forward.3} parent=1 // pred_fallthru
      _
    // Predicated region
    $region66: #{rnn_forward.3} parent=1 // pred_check
      _
    $region67: #{rnn_forward.3} parent=1 // pred_check_branch
      %215 = sbr.rel (0) target = $region69
    $region68: #{rnn_forward.3} parent=1 // pred_region
      %s217 = ssub.s32 16, 16
      %218 = vsyncadd [#allocation27], %s217
      %s220 = sshll.u32 [#allocation28], 4
      %s221 = int_to_ptr.vmem [resolvable:$true] %s220
      %223 = dma.hbm_to_vmem [thread:$0]  %s16, 16, %s221, [#allocation27]
    $region69: #{rnn_forward.3} parent=1 // pred_fallthru
      _
    // Predicated region
    $region70: #{rnn_forward.3} parent=1 // pred_check
      _
    $region71: #{rnn_forward.3} parent=1 // pred_check_branch
      %225 = sbr.rel (0) target = $region73
    $region72: #{rnn_forward.3} parent=1 // pred_region
      %226 = dma.done [#allocation3], 16
    $region73: #{rnn_forward.3} parent=1 // pred_fallthru
      _
    // Predicated region
    $region74: #{rnn_forward.3} parent=1 // pred_check
      _
    $region75: #{rnn_forward.3} parent=1 // pred_check_branch
      %228 = sbr.rel (0) target = $region77
    $region76: #{rnn_forward.3} parent=1 // pred_region
      %229 = dma.done [#allocation6], 256
    $region77: #{rnn_forward.3} parent=1 // pred_fallthru
      _
    // Predicated region
    $region78: #{rnn_forward.3} parent=1 // pred_check
      _
    $region79: #{rnn_forward.3} parent=1 // pred_check_branch
      %231 = sbr.rel (0) target = $region81
    $region80: #{rnn_forward.3} parent=1 // pred_region
      %232 = dma.done [#allocation6], 16
    $region81: #{rnn_forward.3} parent=1 // pred_fallthru
      _
    // Predicated region
    $region82: #{rnn_forward.3} parent=1 // pred_check
      _
    $region83: #{rnn_forward.3} parent=1 // pred_check_branch
      %234 = sbr.rel (0) target = $region85
    $region84: #{rnn_forward.3} parent=1 // pred_region
      %235 = dma.done [#allocation9], 256
    $region85: #{rnn_forward.3} parent=1 // pred_fallthru
      _
    // Predicated region
    $region86: #{rnn_forward.3} parent=1 // pred_check
      _
    $region87: #{rnn_forward.3} parent=1 // pred_check_branch
      %237 = sbr.rel (0) target = $region89
    $region88: #{rnn_forward.3} parent=1 // pred_region
      %238 = dma.done [#allocation9], 16
    $region89: #{rnn_forward.3} parent=1 // pred_fallthru
      _
    // Predicated region
    $region90: #{rnn_forward.3} parent=1 // pred_check
      _
    $region91: #{rnn_forward.3} parent=1 // pred_check_branch
      %240 = sbr.rel (0) target = $region93
    $region92: #{rnn_forward.3} parent=1 // pred_region
      %241 = dma.done [#allocation12], 256
    $region93: #{rnn_forward.3} parent=1 // pred_fallthru
      _
    // Predicated region
    $region94: #{rnn_forward.3} parent=1 // pred_check
      _
    $region95: #{rnn_forward.3} parent=1 // pred_check_branch
      %243 = sbr.rel (0) target = $region97
    $region96: #{rnn_forward.3} parent=1 // pred_region
      %244 = dma.done [#allocation12], 16
    $region97: #{rnn_forward.3} parent=1 // pred_fallthru
      _
    // Predicated region
    $region98: #{rnn_forward.3} parent=1 // pred_check
      _
    $region99: #{rnn_forward.3} parent=1 // pred_check_branch
      %246 = sbr.rel (0) target = $region101
    $region100: #{rnn_forward.3} parent=1 // pred_region
      %247 = dma.done [#allocation15], 512
    $region101: #{rnn_forward.3} parent=1 // pred_fallthru
      _
    // Predicated region
    $region102: #{rnn_forward.3} parent=1 // pred_check
      _
    $region103: #{rnn_forward.3} parent=1 // pred_check_branch
      %249 = sbr.rel (0) target = $region105
    $region104: #{rnn_forward.3} parent=1 // pred_region
      %250 = dma.done [#allocation15], 512
    $region105: #{rnn_forward.3} parent=1 // pred_fallthru
      _
    // Predicated region
    $region106: #{rnn_forward.3} parent=1 // pred_check
      _
    $region107: #{rnn_forward.3} parent=1 // pred_check_branch
      %252 = sbr.rel (0) target = $region109
    $region108: #{rnn_forward.3} parent=1 // pred_region
      %253 = dma.done [#allocation18], 16
    $region109: #{rnn_forward.3} parent=1 // pred_fallthru
      _
    // Predicated region
    $region110: #{rnn_forward.3} parent=1 // pred_check
      _
    $region111: #{rnn_forward.3} parent=1 // pred_check_branch
      %255 = sbr.rel (0) target = $region113
    $region112: #{rnn_forward.3} parent=1 // pred_region
      %256 = dma.done [#allocation18], 512
    $region113: #{rnn_forward.3} parent=1 // pred_fallthru
      _
    // Predicated region
    $region114: #{rnn_forward.3} parent=1 // pred_check
      _
    $region115: #{rnn_forward.3} parent=1 // pred_check_branch
      %258 = sbr.rel (0) target = $region117
    $region116: #{rnn_forward.3} parent=1 // pred_region
      %259 = dma.done [#allocation21], 512
    $region117: #{rnn_forward.3} parent=1 // pred_fallthru
      _
    // Predicated region
    $region118: #{rnn_forward.3} parent=1 // pred_check
      _
    $region119: #{rnn_forward.3} parent=1 // pred_check_branch
      %261 = sbr.rel (0) target = $region121
    $region120: #{rnn_forward.3} parent=1 // pred_region
      %262 = dma.done [#allocation21], 16
    $region121: #{rnn_forward.3} parent=1 // pred_fallthru
      _
    // Predicated region
    $region122: #{rnn_forward.3} parent=1 // pred_check
      _
    $region123: #{rnn_forward.3} parent=1 // pred_check_branch
      %264 = sbr.rel (0) target = $region125
    $region124: #{rnn_forward.3} parent=1 // pred_region
      %265 = dma.done [#allocation24], 512
    $region125: #{rnn_forward.3} parent=1 // pred_fallthru
      _
    // Predicated region
    $region126: #{rnn_forward.3} parent=1 // pred_check
      _
    $region127: #{rnn_forward.3} parent=1 // pred_check_branch
      %267 = sbr.rel (0) target = $region129
    $region128: #{rnn_forward.3} parent=1 // pred_region
      %268 = dma.done [#allocation24], 16
    $region129: #{rnn_forward.3} parent=1 // pred_fallthru
      _
    // Predicated region
    $region130: #{rnn_forward.3} parent=1 // pred_check
      _
    $region131: #{rnn_forward.3} parent=1 // pred_check_branch
      %270 = sbr.rel (0) target = $region133
    $region132: #{rnn_forward.3} parent=1 // pred_region
      %271 = dma.done [#allocation27], 512
    $region133: #{rnn_forward.3} parent=1 // pred_fallthru
      _
    // Predicated region
    $region134: #{rnn_forward.3} parent=1 // pred_check
      _
    $region135: #{rnn_forward.3} parent=1 // pred_check_branch
      %273 = sbr.rel (0) target = $region137
    $region136: #{rnn_forward.3} parent=1 // pred_region
      %274 = dma.done [#allocation27], 16
    $region137: #{rnn_forward.3} parent=1 // pred_fallthru
      _
    %v275 = vld [vmem:[#allocation2] sm:$0x1]
    %v276 = vld [vmem:[#allocation5] sm:$0xff]
    %v277 = vld [vmem:[#allocation5 + $0x8] sm:$0xff]
    %v278 = vld [vmem:[#allocation7] sm:$0x1]
    %vm279 = vcmask 130048
    %v281 = vsel %vm279, %v275, 0
    %283 = vmatprep.subr.mxu0 0.0
    %284 = vmatpush1.msra.mxu0 0.0
    %285 = vmatprep.subr.mxu0 0.0
    %286 = vmatpush1.msra.mxu0 0.0
    %287 = vmatprep.subr.mxu0 0.0
    %288 = vmatpush1.msra.mxu0 0.0
    %289 = vmatprep.subr.mxu0 0.0
    %290 = vmatpush1.msra.mxu0 0.0
    %291 = vmatprep.subr.mxu0 0.0
    %292 = vmatpush1.msra.mxu0 0.0
    %293 = vmatprep.subr.mxu0 0.0
    %294 = vmatpush1.msra.mxu0 0.0
    %295 = vmatprep.subr.mxu0 0.0
    %296 = vmatpush1.msra.mxu0 0.0
    %297 = vmatprep.subr.mxu0 0.0
    %298 = vmatpush1.msra.mxu0 0.0
    %299 = vmatprep.subr.mxu0 0.0
    %300 = vmatpush1.msra.mxu0 0.0
    %301 = vmatprep.subr.mxu0 0.0
    %302 = vmatpush1.msra.mxu0 0.0
    %303 = vmatprep.subr.mxu0 0.0
    %304 = vmatpush1.msra.mxu0 0.0
    %305 = vmatprep.subr.mxu0 0.0
    %306 = vmatpush1.msra.mxu0 0.0
    %307 = vmatprep.subr.mxu0 0.0
    %308 = vmatpush1.msra.mxu0 0.0
    %309 = vmatprep.subr.mxu0 0.0
    %310 = vmatpush1.msra.mxu0 0.0
    %311 = vmatprep.subr.mxu0 0.0
    %312 = vmatpush1.msra.mxu0 %v277
    %313 = vmatprep.subr.mxu0 0.0
    %314 = vmatpush1.msra.mxu0 %v276
    %315 = vmatprep.subr.mxu0 0.0
    %316 = vmatpush2.msra.mxu0 0.0
    %317 = vmatprep.subr.mxu0 0.0
    %318 = vmatpush2.msra.mxu0 0.0
    %319 = vmatprep.subr.mxu0 0.0
    %320 = vmatpush2.msra.mxu0 0.0
    %321 = vmatprep.subr.mxu0 0.0
    %322 = vmatpush2.msra.mxu0 0.0
    %323 = vmatprep.subr.mxu0 0.0
    %324 = vmatpush2.msra.mxu0 0.0
    %325 = vmatprep.subr.mxu0 0.0
    %326 = vmatpush2.msra.mxu0 0.0
    %327 = vmatprep.subr.mxu0 0.0
    %328 = vmatpush2.msra.mxu0 0.0
    %329 = vmatprep.subr.mxu0 0.0
    %330 = vmatpush2.msra.mxu0 0.0
    %331 = vmatprep.subr.mxu0 0.0
    %332 = vmatpush2.msra.mxu0 0.0
    %333 = vmatprep.subr.mxu0 0.0
    %334 = vmatpush2.msra.mxu0 0.0
    %335 = vmatprep.subr.mxu0 0.0
    %336 = vmatpush2.msra.mxu0 0.0
    %337 = vmatprep.subr.mxu0 0.0
    %338 = vmatpush2.msra.mxu0 0.0
    %339 = vmatprep.subr.mxu0 0.0
    %340 = vmatpush2.msra.mxu0 0.0
    %341 = vmatprep.subr.mxu0 0.0
    %342 = vmatpush2.msra.mxu0 0.0
    %343 = vmatprep.subr.mxu0 0.0
    %344 = vmatpush2.msra.mxu0 0.0
    %345 = vmatprep.subr.mxu0 0.0
    %346 = vmatpush2.msra.mxu0 0.0
    %347 = vmatprep.mubr.f32.mxu0 0.0
    %348 = vmatmul.mubr.f32.gmra.mxu0 %v281
    %v349 = vpop.f32.mrf.mxu0
    %v350 = vadd.f32 %v278, %v349
    %v351 = vpop.f32.mrf.mxu0
    %352 = vdwg.mxu0
    %v353 = vtanh.pop %v350
    %v354 = vld [vmem:[#allocation8] sm:$0xff]
    %v355 = vld [vmem:[#allocation8 + $0x8] sm:$0xff]
    %v356 = vld [vmem:[#allocation10] sm:$0x1]
    %357 = vmatprep.subr.mxu0 0.0
    %358 = vmatpush1.msra.mxu0 0.0
    %359 = vmatprep.subr.mxu0 0.0
    %360 = vmatpush1.msra.mxu0 0.0
    %361 = vmatprep.subr.mxu0 0.0
    %362 = vmatpush1.msra.mxu0 0.0
    %363 = vmatprep.subr.mxu0 0.0
    %364 = vmatpush1.msra.mxu0 0.0
    %365 = vmatprep.subr.mxu0 0.0
    %366 = vmatpush1.msra.mxu0 0.0
    %367 = vmatprep.subr.mxu0 0.0
    %368 = vmatpush1.msra.mxu0 0.0
    %369 = vmatprep.subr.mxu0 0.0
    %370 = vmatpush1.msra.mxu0 0.0
    %371 = vmatprep.subr.mxu0 0.0
    %372 = vmatpush1.msra.mxu0 0.0
    %373 = vmatprep.subr.mxu0 0.0
    %374 = vmatpush1.msra.mxu0 0.0
    %375 = vmatprep.subr.mxu0 0.0
    %376 = vmatpush1.msra.mxu0 0.0
    %377 = vmatprep.subr.mxu0 0.0
    %378 = vmatpush1.msra.mxu0 0.0
    %379 = vmatprep.subr.mxu0 0.0
    %380 = vmatpush1.msra.mxu0 0.0
    %381 = vmatprep.subr.mxu0 0.0
    %382 = vmatpush1.msra.mxu0 0.0
    %383 = vmatprep.subr.mxu0 0.0
    %384 = vmatpush1.msra.mxu0 0.0
    %385 = vmatprep.subr.mxu0 0.0
    %386 = vmatpush1.msra.mxu0 %v355
    %387 = vmatprep.subr.mxu0 0.0
    %388 = vmatpush1.msra.mxu0 %v354
    %389 = vmatprep.subr.mxu0 0.0
    %390 = vmatpush2.msra.mxu0 0.0
    %391 = vmatprep.subr.mxu0 0.0
    %392 = vmatpush2.msra.mxu0 0.0
    %393 = vmatprep.subr.mxu0 0.0
    %394 = vmatpush2.msra.mxu0 0.0
    %395 = vmatprep.subr.mxu0 0.0
    %396 = vmatpush2.msra.mxu0 0.0
    %397 = vmatprep.subr.mxu0 0.0
    %398 = vmatpush2.msra.mxu0 0.0
    %399 = vmatprep.subr.mxu0 0.0
    %400 = vmatpush2.msra.mxu0 0.0
    %401 = vmatprep.subr.mxu0 0.0
    %402 = vmatpush2.msra.mxu0 0.0
    %403 = vmatprep.subr.mxu0 0.0
    %404 = vmatpush2.msra.mxu0 0.0
    %405 = vmatprep.subr.mxu0 0.0
    %406 = vmatpush2.msra.mxu0 0.0
    %407 = vmatprep.subr.mxu0 0.0
    %408 = vmatpush2.msra.mxu0 0.0
    %409 = vmatprep.subr.mxu0 0.0
    %410 = vmatpush2.msra.mxu0 0.0
    %411 = vmatprep.subr.mxu0 0.0
    %412 = vmatpush2.msra.mxu0 0.0
    %413 = vmatprep.subr.mxu0 0.0
    %414 = vmatpush2.msra.mxu0 0.0
    %415 = vmatprep.subr.mxu0 0.0
    %416 = vmatpush2.msra.mxu0 0.0
    %417 = vmatprep.subr.mxu0 0.0
    %418 = vmatpush2.msra.mxu0 0.0
    %419 = vmatprep.subr.mxu0 0.0
    %420 = vmatpush2.msra.mxu0 0.0
    %421 = vmatprep.mubr.f32.mxu0 0.0
    %422 = vmatmul.mubr.f32.gmra.mxu0 %v281
    %v423 = vpop.f32.mrf.mxu0
    %v424 = vadd.f32 %v356, %v423
    %v425 = vpop.f32.mrf.mxu0
    %426 = vdwg.mxu0
    %v427 = vtanh.pop %v424
    %v428 = vld [vmem:[#allocation11] sm:$0xff]
    %v429 = vld [vmem:[#allocation11 + $0x8] sm:$0xff]
    %v430 = vld [vmem:[#allocation13] sm:$0x1]
    %431 = vmatprep.subr.mxu0 0.0
    %432 = vmatpush1.msra.mxu0 0.0
    %433 = vmatprep.subr.mxu0 0.0
    %434 = vmatpush1.msra.mxu0 0.0
    %435 = vmatprep.subr.mxu0 0.0
    %436 = vmatpush1.msra.mxu0 0.0
    %437 = vmatprep.subr.mxu0 0.0
    %438 = vmatpush1.msra.mxu0 0.0
    %439 = vmatprep.subr.mxu0 0.0
    %440 = vmatpush1.msra.mxu0 0.0
    %441 = vmatprep.subr.mxu0 0.0
    %442 = vmatpush1.msra.mxu0 0.0
    %443 = vmatprep.subr.mxu0 0.0
    %444 = vmatpush1.msra.mxu0 0.0
    %445 = vmatprep.subr.mxu0 0.0
    %446 = vmatpush1.msra.mxu0 0.0
    %447 = vmatprep.subr.mxu0 0.0
    %448 = vmatpush1.msra.mxu0 0.0
    %449 = vmatprep.subr.mxu0 0.0
    %450 = vmatpush1.msra.mxu0 0.0
    %451 = vmatprep.subr.mxu0 0.0
    %452 = vmatpush1.msra.mxu0 0.0
    %453 = vmatprep.subr.mxu0 0.0
    %454 = vmatpush1.msra.mxu0 0.0
    %455 = vmatprep.subr.mxu0 0.0
    %456 = vmatpush1.msra.mxu0 0.0
    %457 = vmatprep.subr.mxu0 0.0
    %458 = vmatpush1.msra.mxu0 0.0
    %459 = vmatprep.subr.mxu0 0.0
    %460 = vmatpush1.msra.mxu0 %v429
    %461 = vmatprep.subr.mxu0 0.0
    %462 = vmatpush1.msra.mxu0 %v428
    %463 = vmatprep.subr.mxu0 0.0
    %464 = vmatpush2.msra.mxu0 0.0
    %465 = vmatprep.subr.mxu0 0.0
    %466 = vmatpush2.msra.mxu0 0.0
    %467 = vmatprep.subr.mxu0 0.0
    %468 = vmatpush2.msra.mxu0 0.0
    %469 = vmatprep.subr.mxu0 0.0
    %470 = vmatpush2.msra.mxu0 0.0
    %471 = vmatprep.subr.mxu0 0.0
    %472 = vmatpush2.msra.mxu0 0.0
    %473 = vmatprep.subr.mxu0 0.0
    %474 = vmatpush2.msra.mxu0 0.0
    %475 = vmatprep.subr.mxu0 0.0
    %476 = vmatpush2.msra.mxu0 0.0
    %477 = vmatprep.subr.mxu0 0.0
    %478 = vmatpush2.msra.mxu0 0.0
    %479 = vmatprep.subr.mxu0 0.0
    %480 = vmatpush2.msra.mxu0 0.0
    %481 = vmatprep.subr.mxu0 0.0
    %482 = vmatpush2.msra.mxu0 0.0
    %483 = vmatprep.subr.mxu0 0.0
    %484 = vmatpush2.msra.mxu0 0.0
    %485 = vmatprep.subr.mxu0 0.0
    %486 = vmatpush2.msra.mxu0 0.0
    %487 = vmatprep.subr.mxu0 0.0
    %488 = vmatpush2.msra.mxu0 0.0
    %489 = vmatprep.subr.mxu0 0.0
    %490 = vmatpush2.msra.mxu0 0.0
    %491 = vmatprep.subr.mxu0 0.0
    %492 = vmatpush2.msra.mxu0 0.0
    %493 = vmatprep.subr.mxu0 0.0
    %494 = vmatpush2.msra.mxu0 0.0
    %495 = vmatprep.mubr.f32.mxu0 0.0
    %496 = vmatmul.mubr.f32.gmra.mxu0 %v281
    %v497 = vpop.f32.mrf.mxu0
    %v498 = vadd.f32 %v430, %v497
    %v499 = vpop.f32.mrf.mxu0
    %500 = vdwg.mxu0
    %v501 = vtanh.pop %v498
    %v502 = vld [vmem:[#allocation14] sm:$0xff]
    %v503 = vld [vmem:[#allocation14 + $0x8] sm:$0xff]
    %v504 = vld [vmem:[#allocation14 + $0x10] sm:$0xff]
    %v505 = vld [vmem:[#allocation14 + $0x18] sm:$0xff]
    %v506 = vld [vmem:[#allocation16] sm:$0xff]
    %v507 = vld [vmem:[#allocation16 + $0x8] sm:$0xff]
    %v508 = vld [vmem:[#allocation16 + $0x10] sm:$0xff]
    %v509 = vld [vmem:[#allocation16 + $0x18] sm:$0xff]
    %vm510 = vcmask 261120
    %v512 = vsel %vm510, %v353, 0
    %514 = vmatprep.subr.mxu0 0.0
    %515 = vmatpush1.msra.mxu0 0.0
    %516 = vmatprep.subr.mxu0 0.0
    %517 = vmatpush1.msra.mxu0 0.0
    %518 = vmatprep.subr.mxu0 0.0
    %519 = vmatpush1.msra.mxu0 0.0
    %520 = vmatprep.subr.mxu0 0.0
    %521 = vmatpush1.msra.mxu0 0.0
    %522 = vmatprep.subr.mxu0 0.0
    %523 = vmatpush1.msra.mxu0 0.0
    %524 = vmatprep.subr.mxu0 0.0
    %525 = vmatpush1.msra.mxu0 0.0
    %526 = vmatprep.subr.mxu0 0.0
    %527 = vmatpush1.msra.mxu0 0.0
    %528 = vmatprep.subr.mxu0 0.0
    %529 = vmatpush1.msra.mxu0 0.0
    %530 = vmatprep.subr.mxu0 0.0
    %531 = vmatpush1.msra.mxu0 0.0
    %532 = vmatprep.subr.mxu0 0.0
    %533 = vmatpush1.msra.mxu0 0.0
    %534 = vmatprep.subr.mxu0 0.0
    %535 = vmatpush1.msra.mxu0 0.0
    %536 = vmatprep.subr.mxu0 0.0
    %537 = vmatpush1.msra.mxu0 0.0
    %538 = vmatprep.subr.mxu0 0.0
    %539 = vmatpush1.msra.mxu0 %v509
    %540 = vmatprep.subr.mxu0 0.0
    %541 = vmatpush1.msra.mxu0 %v508
    %542 = vmatprep.subr.mxu0 0.0
    %543 = vmatpush1.msra.mxu0 %v507
    %544 = vmatprep.subr.mxu0 0.0
    %545 = vmatpush1.msra.mxu0 %v506
    %546 = vmatprep.subr.mxu0 0.0
    %547 = vmatpush2.msra.mxu0 0.0
    %548 = vmatprep.subr.mxu0 0.0
    %549 = vmatpush2.msra.mxu0 0.0
    %550 = vmatprep.subr.mxu0 0.0
    %551 = vmatpush2.msra.mxu0 0.0
    %552 = vmatprep.subr.mxu0 0.0
    %553 = vmatpush2.msra.mxu0 0.0
    %554 = vmatprep.subr.mxu0 0.0
    %555 = vmatpush2.msra.mxu0 0.0
    %556 = vmatprep.subr.mxu0 0.0
    %557 = vmatpush2.msra.mxu0 0.0
    %558 = vmatprep.subr.mxu0 0.0
    %559 = vmatpush2.msra.mxu0 0.0
    %560 = vmatprep.subr.mxu0 0.0
    %561 = vmatpush2.msra.mxu0 0.0
    %562 = vmatprep.subr.mxu0 0.0
    %563 = vmatpush2.msra.mxu0 0.0
    %564 = vmatprep.subr.mxu0 0.0
    %565 = vmatpush2.msra.mxu0 0.0
    %566 = vmatprep.subr.mxu0 0.0
    %567 = vmatpush2.msra.mxu0 0.0
    %568 = vmatprep.subr.mxu0 0.0
    %569 = vmatpush2.msra.mxu0 0.0
    %570 = vmatprep.subr.mxu0 0.0
    %571 = vmatpush2.msra.mxu0 0.0
    %572 = vmatprep.subr.mxu0 0.0
    %573 = vmatpush2.msra.mxu0 0.0
    %574 = vmatprep.subr.mxu0 0.0
    %575 = vmatpush2.msra.mxu0 0.0
    %576 = vmatprep.subr.mxu0 0.0
    %577 = vmatpush2.msra.mxu0 0.0
    %578 = vmatprep.mubr.f32.mxu0 0.0
    %579 = vmatmul.mubr.f32.gmra.mxu0 %v512
    %v580 = vpop.f32.mrf.mxu0
    %v581 = vadd.f32 0.0, %v580
    %v582 = vpop.f32.mrf.mxu0
    %583 = vdwg.mxu0
    %v585 = vsel %vm510, %v501, 0
    %587 = vmatprep.subr.mxu0 0.0
    %588 = vmatpush1.msra.mxu0 0.0
    %589 = vmatprep.subr.mxu0 0.0
    %590 = vmatpush1.msra.mxu0 0.0
    %591 = vmatprep.subr.mxu0 0.0
    %592 = vmatpush1.msra.mxu0 0.0
    %593 = vmatprep.subr.mxu0 0.0
    %594 = vmatpush1.msra.mxu0 0.0
    %595 = vmatprep.subr.mxu0 0.0
    %596 = vmatpush1.msra.mxu0 0.0
    %597 = vmatprep.subr.mxu0 0.0
    %598 = vmatpush1.msra.mxu0 0.0
    %599 = vmatprep.subr.mxu0 0.0
    %600 = vmatpush1.msra.mxu0 0.0
    %601 = vmatprep.subr.mxu0 0.0
    %602 = vmatpush1.msra.mxu0 0.0
    %603 = vmatprep.subr.mxu0 0.0
    %604 = vmatpush1.msra.mxu0 0.0
    %605 = vmatprep.subr.mxu0 0.0
    %606 = vmatpush1.msra.mxu0 0.0
    %607 = vmatprep.subr.mxu0 0.0
    %608 = vmatpush1.msra.mxu0 0.0
    %609 = vmatprep.subr.mxu0 0.0
    %610 = vmatpush1.msra.mxu0 0.0
    %611 = vmatprep.subr.mxu0 0.0
    %612 = vmatpush1.msra.mxu0 %v505
    %613 = vmatprep.subr.mxu0 0.0
    %614 = vmatpush1.msra.mxu0 %v504
    %615 = vmatprep.subr.mxu0 0.0
    %616 = vmatpush1.msra.mxu0 %v503
    %617 = vmatprep.subr.mxu0 0.0
    %618 = vmatpush1.msra.mxu0 %v502
    %619 = vmatprep.subr.mxu0 0.0
    %620 = vmatpush2.msra.mxu0 0.0
    %621 = vmatprep.subr.mxu0 0.0
    %622 = vmatpush2.msra.mxu0 0.0
    %623 = vmatprep.subr.mxu0 0.0
    %624 = vmatpush2.msra.mxu0 0.0
    %625 = vmatprep.subr.mxu0 0.0
    %626 = vmatpush2.msra.mxu0 0.0
    %627 = vmatprep.subr.mxu0 0.0
    %628 = vmatpush2.msra.mxu0 0.0
    %629 = vmatprep.subr.mxu0 0.0
    %630 = vmatpush2.msra.mxu0 0.0
    %631 = vmatprep.subr.mxu0 0.0
    %632 = vmatpush2.msra.mxu0 0.0
    %633 = vmatprep.subr.mxu0 0.0
    %634 = vmatpush2.msra.mxu0 0.0
    %635 = vmatprep.subr.mxu0 0.0
    %636 = vmatpush2.msra.mxu0 0.0
    %637 = vmatprep.subr.mxu0 0.0
    %638 = vmatpush2.msra.mxu0 0.0
    %639 = vmatprep.subr.mxu0 0.0
    %640 = vmatpush2.msra.mxu0 0.0
    %641 = vmatprep.subr.mxu0 0.0
    %642 = vmatpush2.msra.mxu0 0.0
    %643 = vmatprep.subr.mxu0 0.0
    %644 = vmatpush2.msra.mxu0 0.0
    %645 = vmatprep.subr.mxu0 0.0
    %646 = vmatpush2.msra.mxu0 0.0
    %647 = vmatprep.subr.mxu0 0.0
    %648 = vmatpush2.msra.mxu0 0.0
    %649 = vmatprep.subr.mxu0 0.0
    %650 = vmatpush2.msra.mxu0 0.0
    %651 = vmatprep.mubr.f32.mxu0 0.0
    %652 = vmatmul.mubr.f32.gmra.mxu0 %v585
    %v653 = vpop.f32.mrf.mxu0
    %v654 = vadd.f32 %v581, %v653
    %v655 = vpop.f32.mrf.mxu0
    %656 = vdwg.mxu0
    %v657 = vld [vmem:[#allocation17] sm:$0x1]
    %v658 = vadd.f32 %v654, %v657
    %v659 = vxor.u32 %v658, 2147483648
    %v660 = vmul.f32 %v659, 1.442695
    %v661 = vpow.pop %v660
    %v662 = vadd.f32 %v661, 1.0
    %v663 = vrcp.pop %v662
    %v664 = vmul.f32 1.0, %v663
    %v665 = vtanh.pop %v658
    %667 = vrot.lane.b32.xlu0 %v427, 32
    %v668 = vpop.permute.xlu0 %667
    %v670 = vmul.f32 %v664, %v668
    %672 = vrot.lane.b32.xlu0 %v665, 64
    %v673 = vpop.permute.xlu0 %672
    %v675 = vmul.f32 %v664, %v673
    %677 = vrot.lane.b32.xlu0 %v675, 32
    %v678 = vpop.permute.xlu0 %677
    %v680 = vadd.f32 %v670, %v678
    %v681 = vtanh.pop %v680
    %683 = vrot.lane.b32.xlu0 %v681, 64
    %v684 = vpop.permute.xlu0 %683
    %v686 = vmul.f32 %v664, %v684
    %v687 = vld [vmem:[#allocation19] sm:$0xff]
    %v688 = vld [vmem:[#allocation19 + $0x8] sm:$0xff]
    %v689 = vld [vmem:[#allocation19 + $0x10] sm:$0xff]
    %v690 = vld [vmem:[#allocation19 + $0x18] sm:$0xff]
    %v691 = vld [vmem:[#allocation20] sm:$0xff]
    %v692 = vld [vmem:[#allocation20 + $0x8] sm:$0xff]
    %v693 = vld [vmem:[#allocation20 + $0x10] sm:$0xff]
    %v694 = vld [vmem:[#allocation20 + $0x18] sm:$0xff]
    %695 = vmatprep.subr.mxu0 0.0
    %696 = vmatpush1.msra.mxu0 0.0
    %697 = vmatprep.subr.mxu0 0.0
    %698 = vmatpush1.msra.mxu0 0.0
    %699 = vmatprep.subr.mxu0 0.0
    %700 = vmatpush1.msra.mxu0 0.0
    %701 = vmatprep.subr.mxu0 0.0
    %702 = vmatpush1.msra.mxu0 0.0
    %703 = vmatprep.subr.mxu0 0.0
    %704 = vmatpush1.msra.mxu0 0.0
    %705 = vmatprep.subr.mxu0 0.0
    %706 = vmatpush1.msra.mxu0 0.0
    %707 = vmatprep.subr.mxu0 0.0
    %708 = vmatpush1.msra.mxu0 0.0
    %709 = vmatprep.subr.mxu0 0.0
    %710 = vmatpush1.msra.mxu0 0.0
    %711 = vmatprep.subr.mxu0 0.0
    %712 = vmatpush1.msra.mxu0 0.0
    %713 = vmatprep.subr.mxu0 0.0
    %714 = vmatpush1.msra.mxu0 0.0
    %715 = vmatprep.subr.mxu0 0.0
    %716 = vmatpush1.msra.mxu0 0.0
    %717 = vmatprep.subr.mxu0 0.0
    %718 = vmatpush1.msra.mxu0 0.0
    %719 = vmatprep.subr.mxu0 0.0
    %720 = vmatpush1.msra.mxu0 %v694
    %721 = vmatprep.subr.mxu0 0.0
    %722 = vmatpush1.msra.mxu0 %v693
    %723 = vmatprep.subr.mxu0 0.0
    %724 = vmatpush1.msra.mxu0 %v692
    %725 = vmatprep.subr.mxu0 0.0
    %726 = vmatpush1.msra.mxu0 %v691
    %727 = vmatprep.subr.mxu0 0.0
    %728 = vmatpush2.msra.mxu0 0.0
    %729 = vmatprep.subr.mxu0 0.0
    %730 = vmatpush2.msra.mxu0 0.0
    %731 = vmatprep.subr.mxu0 0.0
    %732 = vmatpush2.msra.mxu0 0.0
    %733 = vmatprep.subr.mxu0 0.0
    %734 = vmatpush2.msra.mxu0 0.0
    %735 = vmatprep.subr.mxu0 0.0
    %736 = vmatpush2.msra.mxu0 0.0
    %737 = vmatprep.subr.mxu0 0.0
    %738 = vmatpush2.msra.mxu0 0.0
    %739 = vmatprep.subr.mxu0 0.0
    %740 = vmatpush2.msra.mxu0 0.0
    %741 = vmatprep.subr.mxu0 0.0
    %742 = vmatpush2.msra.mxu0 0.0
    %743 = vmatprep.subr.mxu0 0.0
    %744 = vmatpush2.msra.mxu0 0.0
    %745 = vmatprep.subr.mxu0 0.0
    %746 = vmatpush2.msra.mxu0 0.0
    %747 = vmatprep.subr.mxu0 0.0
    %748 = vmatpush2.msra.mxu0 0.0
    %749 = vmatprep.subr.mxu0 0.0
    %750 = vmatpush2.msra.mxu0 0.0
    %751 = vmatprep.subr.mxu0 0.0
    %752 = vmatpush2.msra.mxu0 0.0
    %753 = vmatprep.subr.mxu0 0.0
    %754 = vmatpush2.msra.mxu0 0.0
    %755 = vmatprep.subr.mxu0 0.0
    %756 = vmatpush2.msra.mxu0 0.0
    %757 = vmatprep.subr.mxu0 0.0
    %758 = vmatpush2.msra.mxu0 0.0
    %759 = vmatprep.mubr.f32.mxu0 0.0
    %760 = vmatmul.mubr.f32.gmra.mxu0 %v512
    %v761 = vpop.f32.mrf.mxu0
    %v762 = vadd.f32 0.0, %v761
    %v763 = vpop.f32.mrf.mxu0
    %764 = vdwg.mxu0
    %766 = vrot.lane.b32.xlu0 %v686, 32
    %v767 = vpop.permute.xlu0 %766
    %v768 = vsel %vm510, %v767, 0
    %770 = vmatprep.subr.mxu0 0.0
    %771 = vmatpush1.msra.mxu0 0.0
    %772 = vmatprep.subr.mxu0 0.0
    %773 = vmatpush1.msra.mxu0 0.0
    %774 = vmatprep.subr.mxu0 0.0
    %775 = vmatpush1.msra.mxu0 0.0
    %776 = vmatprep.subr.mxu0 0.0
    %777 = vmatpush1.msra.mxu0 0.0
    %778 = vmatprep.subr.mxu0 0.0
    %779 = vmatpush1.msra.mxu0 0.0
    %780 = vmatprep.subr.mxu0 0.0
    %781 = vmatpush1.msra.mxu0 0.0
    %782 = vmatprep.subr.mxu0 0.0
    %783 = vmatpush1.msra.mxu0 0.0
    %784 = vmatprep.subr.mxu0 0.0
    %785 = vmatpush1.msra.mxu0 0.0
    %786 = vmatprep.subr.mxu0 0.0
    %787 = vmatpush1.msra.mxu0 0.0
    %788 = vmatprep.subr.mxu0 0.0
    %789 = vmatpush1.msra.mxu0 0.0
    %790 = vmatprep.subr.mxu0 0.0
    %791 = vmatpush1.msra.mxu0 0.0
    %792 = vmatprep.subr.mxu0 0.0
    %793 = vmatpush1.msra.mxu0 0.0
    %794 = vmatprep.subr.mxu0 0.0
    %795 = vmatpush1.msra.mxu0 %v690
    %796 = vmatprep.subr.mxu0 0.0
    %797 = vmatpush1.msra.mxu0 %v689
    %798 = vmatprep.subr.mxu0 0.0
    %799 = vmatpush1.msra.mxu0 %v688
    %800 = vmatprep.subr.mxu0 0.0
    %801 = vmatpush1.msra.mxu0 %v687
    %802 = vmatprep.subr.mxu0 0.0
    %803 = vmatpush2.msra.mxu0 0.0
    %804 = vmatprep.subr.mxu0 0.0
    %805 = vmatpush2.msra.mxu0 0.0
    %806 = vmatprep.subr.mxu0 0.0
    %807 = vmatpush2.msra.mxu0 0.0
    %808 = vmatprep.subr.mxu0 0.0
    %809 = vmatpush2.msra.mxu0 0.0
    %810 = vmatprep.subr.mxu0 0.0
    %811 = vmatpush2.msra.mxu0 0.0
    %812 = vmatprep.subr.mxu0 0.0
    %813 = vmatpush2.msra.mxu0 0.0
    %814 = vmatprep.subr.mxu0 0.0
    %815 = vmatpush2.msra.mxu0 0.0
    %816 = vmatprep.subr.mxu0 0.0
    %817 = vmatpush2.msra.mxu0 0.0
    %818 = vmatprep.subr.mxu0 0.0
    %819 = vmatpush2.msra.mxu0 0.0
    %820 = vmatprep.subr.mxu0 0.0
    %821 = vmatpush2.msra.mxu0 0.0
    %822 = vmatprep.subr.mxu0 0.0
    %823 = vmatpush2.msra.mxu0 0.0
    %824 = vmatprep.subr.mxu0 0.0
    %825 = vmatpush2.msra.mxu0 0.0
    %826 = vmatprep.subr.mxu0 0.0
    %827 = vmatpush2.msra.mxu0 0.0
    %828 = vmatprep.subr.mxu0 0.0
    %829 = vmatpush2.msra.mxu0 0.0
    %830 = vmatprep.subr.mxu0 0.0
    %831 = vmatpush2.msra.mxu0 0.0
    %832 = vmatprep.subr.mxu0 0.0
    %833 = vmatpush2.msra.mxu0 0.0
    %834 = vmatprep.mubr.f32.mxu0 0.0
    %835 = vmatmul.mubr.f32.gmra.mxu0 %v768
    %v836 = vpop.f32.mrf.mxu0
    %v837 = vadd.f32 %v762, %v836
    %v838 = vpop.f32.mrf.mxu0
    %839 = vdwg.mxu0
    %v840 = vld [vmem:[#allocation22] sm:$0x1]
    %v841 = vadd.f32 %v837, %v840
    %v842 = vxor.u32 %v841, 2147483648
    %v843 = vmul.f32 %v842, 1.442695
    %v844 = vpow.pop %v843
    %v845 = vadd.f32 %v844, 1.0
    %v846 = vrcp.pop %v845
    %v847 = vmul.f32 1.0, %v846
    %v848 = vtanh.pop %v841
    %v849 = vmul.f32 %v847, %v668
    %851 = vrot.lane.b32.xlu0 %v848, 64
    %v852 = vpop.permute.xlu0 %851
    %v854 = vmul.f32 %v847, %v852
    %856 = vrot.lane.b32.xlu0 %v854, 32
    %v857 = vpop.permute.xlu0 %856
    %v859 = vadd.f32 %v849, %v857
    %v860 = vtanh.pop %v859
    %862 = vrot.lane.b32.xlu0 %v860, 64
    %v863 = vpop.permute.xlu0 %862
    %v865 = vmul.f32 %v847, %v863
    %v867 = vrot.slane %v865, 7
    %vm869 = vcmask 1040384
    %v870 = vsel %vm869, %v686, %v867
    %872 = vrot.lane.b32.xlu0 %v870, 32
    %v873 = vpop.permute.xlu0 %872
    %vm875 = vcmask 254976
    %876 = vst.msk [vmem:[#allocation29] sm:$0x3] %vm875, %v873
    %v878 = vrot.slane %v859, 7
    %v880 = vsel %vm869, %v680, %v878
    %882 = vrot.lane.b32.xlu0 %v880, 96
    %v883 = vpop.permute.xlu0 %882
    %885 = vst.msk [vmem:[#allocation30] sm:$0x3] %vm875, %v883
    %v886 = vld [vmem:[#allocation23] sm:$0xff]
    %v887 = vld [vmem:[#allocation23 + $0x8] sm:$0xff]
    %v888 = vld [vmem:[#allocation23 + $0x10] sm:$0xff]
    %v889 = vld [vmem:[#allocation23 + $0x18] sm:$0xff]
    %v890 = vld [vmem:[#allocation25] sm:$0x1]
    %891 = vrot.lane.b32.xlu0 %v865, 32
    %v892 = vpop.permute.xlu0 %891
    %v893 = vsel %vm510, %v892, 0
    %895 = vmatprep.subr.mxu0 0.0
    %896 = vmatpush1.msra.mxu0 0.0
    %897 = vmatprep.subr.mxu0 0.0
    %898 = vmatpush1.msra.mxu0 0.0
    %899 = vmatprep.subr.mxu0 0.0
    %900 = vmatpush1.msra.mxu0 0.0
    %901 = vmatprep.subr.mxu0 0.0
    %902 = vmatpush1.msra.mxu0 0.0
    %903 = vmatprep.subr.mxu0 0.0
    %904 = vmatpush1.msra.mxu0 0.0
    %905 = vmatprep.subr.mxu0 0.0
    %906 = vmatpush1.msra.mxu0 0.0
    %907 = vmatprep.subr.mxu0 0.0
    %908 = vmatpush1.msra.mxu0 0.0
    %909 = vmatprep.subr.mxu0 0.0
    %910 = vmatpush1.msra.mxu0 0.0
    %911 = vmatprep.subr.mxu0 0.0
    %912 = vmatpush1.msra.mxu0 0.0
    %913 = vmatprep.subr.mxu0 0.0
    %914 = vmatpush1.msra.mxu0 0.0
    %915 = vmatprep.subr.mxu0 0.0
    %916 = vmatpush1.msra.mxu0 0.0
    %917 = vmatprep.subr.mxu0 0.0
    %918 = vmatpush1.msra.mxu0 0.0
    %919 = vmatprep.subr.mxu0 0.0
    %920 = vmatpush1.msra.mxu0 %v889
    %921 = vmatprep.subr.mxu0 0.0
    %922 = vmatpush1.msra.mxu0 %v888
    %923 = vmatprep.subr.mxu0 0.0
    %924 = vmatpush1.msra.mxu0 %v887
    %925 = vmatprep.subr.mxu0 0.0
    %926 = vmatpush1.msra.mxu0 %v886
    %927 = vmatprep.subr.mxu0 0.0
    %928 = vmatpush2.msra.mxu0 0.0
    %929 = vmatprep.subr.mxu0 0.0
    %930 = vmatpush2.msra.mxu0 0.0
    %931 = vmatprep.subr.mxu0 0.0
    %932 = vmatpush2.msra.mxu0 0.0
    %933 = vmatprep.subr.mxu0 0.0
    %934 = vmatpush2.msra.mxu0 0.0
    %935 = vmatprep.subr.mxu0 0.0
    %936 = vmatpush2.msra.mxu0 0.0
    %937 = vmatprep.subr.mxu0 0.0
    %938 = vmatpush2.msra.mxu0 0.0
    %939 = vmatprep.subr.mxu0 0.0
    %940 = vmatpush2.msra.mxu0 0.0
    %941 = vmatprep.subr.mxu0 0.0
    %942 = vmatpush2.msra.mxu0 0.0
    %943 = vmatprep.subr.mxu0 0.0
    %944 = vmatpush2.msra.mxu0 0.0
    %945 = vmatprep.subr.mxu0 0.0
    %946 = vmatpush2.msra.mxu0 0.0
    %947 = vmatprep.subr.mxu0 0.0
    %948 = vmatpush2.msra.mxu0 0.0
    %949 = vmatprep.subr.mxu0 0.0
    %950 = vmatpush2.msra.mxu0 0.0
    %951 = vmatprep.subr.mxu0 0.0
    %952 = vmatpush2.msra.mxu0 0.0
    %953 = vmatprep.subr.mxu0 0.0
    %954 = vmatpush2.msra.mxu0 0.0
    %955 = vmatprep.subr.mxu0 0.0
    %956 = vmatpush2.msra.mxu0 0.0
    %957 = vmatprep.subr.mxu0 0.0
    %958 = vmatpush2.msra.mxu0 0.0
    %959 = vmatprep.mubr.f32.mxu0 0.0
    %960 = vmatmul.mubr.f32.gmra.mxu0 %v893
    %v961 = vpop.f32.mrf.mxu0
    %v962 = vadd.f32 %v890, %v961
    %v963 = vpop.f32.mrf.mxu0
    %964 = vdwg.mxu0
    %v965 = vmax.f32 %v962, 0.0
    %v966 = vld [vmem:[#allocation26] sm:$0xff]
    %v967 = vld [vmem:[#allocation26 + $0x8] sm:$0xff]
    %v968 = vld [vmem:[#allocation26 + $0x10] sm:$0xff]
    %v969 = vld [vmem:[#allocation26 + $0x18] sm:$0xff]
    %v970 = vld [vmem:[#allocation28] sm:$0x1]
    %v972 = vsel %vm510, %v965, 0
    %974 = vmatprep.subr.mxu0 0.0
    %975 = vmatpush1.msra.mxu0 0.0
    %976 = vmatprep.subr.mxu0 0.0
    %977 = vmatpush1.msra.mxu0 0.0
    %978 = vmatprep.subr.mxu0 0.0
    %979 = vmatpush1.msra.mxu0 0.0
    %980 = vmatprep.subr.mxu0 0.0
    %981 = vmatpush1.msra.mxu0 0.0
    %982 = vmatprep.subr.mxu0 0.0
    %983 = vmatpush1.msra.mxu0 0.0
    %984 = vmatprep.subr.mxu0 0.0
    %985 = vmatpush1.msra.mxu0 0.0
    %986 = vmatprep.subr.mxu0 0.0
    %987 = vmatpush1.msra.mxu0 0.0
    %988 = vmatprep.subr.mxu0 0.0
    %989 = vmatpush1.msra.mxu0 0.0
    %990 = vmatprep.subr.mxu0 0.0
    %991 = vmatpush1.msra.mxu0 0.0
    %992 = vmatprep.subr.mxu0 0.0
    %993 = vmatpush1.msra.mxu0 0.0
    %994 = vmatprep.subr.mxu0 0.0
    %995 = vmatpush1.msra.mxu0 0.0
    %996 = vmatprep.subr.mxu0 0.0
    %997 = vmatpush1.msra.mxu0 0.0
    %998 = vmatprep.subr.mxu0 0.0
    %999 = vmatpush1.msra.mxu0 %v969
    %1000 = vmatprep.subr.mxu0 0.0
    %1001 = vmatpush1.msra.mxu0 %v968
    %1002 = vmatprep.subr.mxu0 0.0
    %1003 = vmatpush1.msra.mxu0 %v967
    %1004 = vmatprep.subr.mxu0 0.0
    %1005 = vmatpush1.msra.mxu0 %v966
    %1006 = vmatprep.subr.mxu0 0.0
    %1007 = vmatpush2.msra.mxu0 0.0
    %1008 = vmatprep.subr.mxu0 0.0
    %1009 = vmatpush2.msra.mxu0 0.0
    %1010 = vmatprep.subr.mxu0 0.0
    %1011 = vmatpush2.msra.mxu0 0.0
    %1012 = vmatprep.subr.mxu0 0.0
    %1013 = vmatpush2.msra.mxu0 0.0
    %1014 = vmatprep.subr.mxu0 0.0
    %1015 = vmatpush2.msra.mxu0 0.0
    %1016 = vmatprep.subr.mxu0 0.0
    %1017 = vmatpush2.msra.mxu0 0.0
    %1018 = vmatprep.subr.mxu0 0.0
    %1019 = vmatpush2.msra.mxu0 0.0
    %1020 = vmatprep.subr.mxu0 0.0
    %1021 = vmatpush2.msra.mxu0 0.0
    %1022 = vmatprep.subr.mxu0 0.0
    %1023 = vmatpush2.msra.mxu0 0.0
    %1024 = vmatprep.subr.mxu0 0.0
    %1025 = vmatpush2.msra.mxu0 0.0
    %1026 = vmatprep.subr.mxu0 0.0
    %1027 = vmatpush2.msra.mxu0 0.0
    %1028 = vmatprep.subr.mxu0 0.0
    %1029 = vmatpush2.msra.mxu0 0.0
    %1030 = vmatprep.subr.mxu0 0.0
    %1031 = vmatpush2.msra.mxu0 0.0
    %1032 = vmatprep.subr.mxu0 0.0
    %1033 = vmatpush2.msra.mxu0 0.0
    %1034 = vmatprep.subr.mxu0 0.0
    %1035 = vmatpush2.msra.mxu0 0.0
    %1036 = vmatprep.subr.mxu0 0.0
    %1037 = vmatpush2.msra.mxu0 0.0
    %1038 = vmatprep.mubr.f32.mxu0 0.0
    %1039 = vmatmul.mubr.f32.gmra.mxu0 %v972
    %v1040 = vpop.f32.mrf.mxu0
    %v1041 = vadd.f32 %v970, %v1040
    %v1042 = vpop.f32.mrf.mxu0
    %1043 = vdwg.mxu0
    %v1044 = vmax.f32 %v1041, 0.0
    %vm1045 = vcmask 253952
    %1046 = vst.msk [vmem:[%s17] sm:$0x1] %vm1045, %v1044
    // Predicated region
    $region138: #{rnn_forward.3} parent=1 // pred_check
      _
    $region139: #{rnn_forward.3} parent=1 // pred_check_branch
      %1048 = sbr.rel (0) target = $region141
    $region140: #{rnn_forward.3} parent=1 // pred_region
      _
    $region141: #{rnn_forward.3} parent=1 // pred_fallthru
      _
    // Predicated region
    $region142: #{rnn_forward.3} parent=1 // pred_check
      _
    $region143: #{rnn_forward.3} parent=1 // pred_check_branch
      %1050 = sbr.rel (0) target = $region145
    $region144: #{rnn_forward.3} parent=1 // pred_region
      %s1052 = ssub.s32 32, 32
      %1053 = vsyncadd [#allocation4], %s1052
      %s1055 = sshll.u32 [#allocation29], 4
      %s1056 = int_to_ptr.vmem [resolvable:$true] %s1055
      %1058 = dma.vmem_to_hbm [thread:$0]  %s1056, 32, %s18, [#allocation4]
    $region145: #{rnn_forward.3} parent=1 // pred_fallthru
      _
    // Predicated region
    $region146: #{rnn_forward.3} parent=1 // pred_check
      _
    $region147: #{rnn_forward.3} parent=1 // pred_check_branch
      %1060 = sbr.rel (0) target = $region149
    $region148: #{rnn_forward.3} parent=1 // pred_region
      %s1062 = ssub.s32 32, 32
      %1063 = vsyncadd [#allocation31], %s1062
      %s1065 = sshll.u32 [#allocation30], 4
      %s1066 = int_to_ptr.vmem [resolvable:$true] %s1065
      %1068 = dma.vmem_to_hbm [thread:$0]  %s1066, 32, %s19, [#allocation31]
    $region149: #{rnn_forward.3} parent=1 // pred_fallthru
      _
    // Predicated region
    $region150: #{rnn_forward.3} parent=1 // pred_check
      _
    $region151: #{rnn_forward.3} parent=1 // pred_check_branch
      %1070 = sbr.rel (0) target = $region153
    $region152: #{rnn_forward.3} parent=1 // pred_region
      _
    $region153: #{rnn_forward.3} parent=1 // pred_fallthru
      _
    // Predicated region
    $region154: #{rnn_forward.3} parent=1 // pred_check
      _
    $region155: #{rnn_forward.3} parent=1 // pred_check_branch
      %1072 = sbr.rel (0) target = $region157
    $region156: #{rnn_forward.3} parent=1 // pred_region
      %1073 = dma.done [#allocation4], 32
    $region157: #{rnn_forward.3} parent=1 // pred_fallthru
      _
    // Predicated region
    $region158: #{rnn_forward.3} parent=1 // pred_check
      _
    $region159: #{rnn_forward.3} parent=1 // pred_check_branch
      %1075 = sbr.rel (0) target = $region161
    $region160: #{rnn_forward.3} parent=1 // pred_region
      %1076 = dma.done [#allocation31], 32
    $region161: #{rnn_forward.3} parent=1 // pred_fallthru
      _
    %1077 = vsyncpa [#allocation3], 1
    %1078 = vsyncpa [#allocation6], 1
    %1079 = vsyncpa [#allocation9], 1
    %1080 = vsyncpa [#allocation12], 1
    %1081 = vsyncpa [#allocation15], 1
    %1082 = vsyncpa [#allocation18], 1
    %1083 = vsyncpa [#allocation21], 1
    %1084 = vsyncpa [#allocation24], 1
    %1085 = vsyncpa [#allocation27], 1
    %1086 = vsyncpa [#allocation4], 1
    %1087 = vsyncpa [#allocation31], 1

// kernel: rnn_forward.5
$region0: #{rnn_forward.5}
  #allocation0 [shape = 'u32[]', space=smem, size = 0x4, offset = 0x4, fixed_abs, tag = 'smem constant byte address 0x4 - core index']
  #allocation1 [shape = 'u32[144,128]{1,0:T(1,128)}', space=vmem, size = 0x12000, scoped, tag = 'internal scratch']
  #allocation2 [shape = 'f32[1,1]{1,0:T(1,128)S(1)}', space=vmem, size = 0x200, scoped, tag = 'scoped memory for rnn_forward.5']
  %s0 = inlined_call_operand.vmem [shape: f32[8,784], index: 0, kind: input, shape index: {}]
  %s1 = inlined_call_operand.vmem [shape: f32[784,128], index: 1, kind: input, shape index: {}]
  %s2 = inlined_call_operand.vmem [shape: f32[1,128], index: 2, kind: input, shape index: {}]
  %s3 = inlined_call_operand.vmem [shape: f32[128,128], index: 3, kind: input, shape index: {}]
  %s4 = inlined_call_operand.vmem [shape: f32[1,128], index: 4, kind: input, shape index: {}]
  %s5 = inlined_call_operand.vmem [shape: f32[128,1], index: 5, kind: input, shape index: {}]
  %s6 = inlined_call_operand.<no memory space> [shape: f32[1,1], index: 6, kind: input, shape index: {}]
  %s7 = inlined_call_operand.vmem [shape: f32[8,1], index: 7, kind: output, shape index: {}]
  %s8 = sld [smem:[#allocation0]]
  $region38: #{rnn_forward.5} parent=0
    _
  %s10 = ssub.s32 1, %s8
  %s11 = scalar_select 0, %s10, %s8
  %v12 = vstv %s6
  %13 = vst [vmem:[#allocation2] sm:$0x1] %v12
  // Predicated region
  $region2: #{rnn_forward.5} parent=0 // pred_check
    _
  $region3: #{rnn_forward.5} parent=0 // pred_check_branch
    %15 = sbr.rel (0) target = $region5
  $region4: #{rnn_forward.5} parent=0 // pred_region
    _
  $region5: #{rnn_forward.5} parent=0 // pred_fallthru
    _
  // Predicated region
  $region6: #{rnn_forward.5} parent=0 // pred_check
    _
  $region7: #{rnn_forward.5} parent=0 // pred_check_branch
    %17 = sbr.rel (0) target = $region9
  $region8: #{rnn_forward.5} parent=0 // pred_region
    _
  $region9: #{rnn_forward.5} parent=0 // pred_fallthru
    _
  // Predicated region
  $region10: #{rnn_forward.5} parent=0 // pred_check
    _
  $region11: #{rnn_forward.5} parent=0 // pred_check_branch
    %19 = sbr.rel (0) target = $region13
  $region12: #{rnn_forward.5} parent=0 // pred_region
    _
  $region13: #{rnn_forward.5} parent=0 // pred_fallthru
    _
  // Predicated region
  $region14: #{rnn_forward.5} parent=0 // pred_check
    _
  $region15: #{rnn_forward.5} parent=0 // pred_check_branch
    %21 = sbr.rel (0) target = $region17
  $region16: #{rnn_forward.5} parent=0 // pred_region
    _
  $region17: #{rnn_forward.5} parent=0 // pred_fallthru
    _
  // Predicated region
  $region18: #{rnn_forward.5} parent=0 // pred_check
    _
  $region19: #{rnn_forward.5} parent=0 // pred_check_branch
    %23 = sbr.rel (0) target = $region21
  $region20: #{rnn_forward.5} parent=0 // pred_region
    _
  $region21: #{rnn_forward.5} parent=0 // pred_fallthru
    _
  // Predicated region
  $region22: #{rnn_forward.5} parent=0 // pred_check
    _
  $region23: #{rnn_forward.5} parent=0 // pred_check_branch
    %25 = sbr.rel (0) target = $region25
  $region24: #{rnn_forward.5} parent=0 // pred_region
    _
  $region25: #{rnn_forward.5} parent=0 // pred_fallthru
    _
  // Predicated region
  $region26: #{rnn_forward.5} parent=0 // pred_check
    _
  $region27: #{rnn_forward.5} parent=0 // pred_check_branch
    %27 = sbr.rel (0) target = $region29
  $region28: #{rnn_forward.5} parent=0 // pred_region
    _
  $region29: #{rnn_forward.5} parent=0 // pred_fallthru
    _
  %v28 = vld [vmem:[%s0] sm:$0xff]
  %v29 = vld [vmem:[%s0 + $0x8] sm:$0xff]
  %v30 = vld [vmem:[%s0 + $0x10] sm:$0xff]
  %v31 = vld [vmem:[%s0 + $0x18] sm:$0xff]
  %v32 = vld [vmem:[%s0 + $0x20] sm:$0xff]
  %v33 = vld [vmem:[%s0 + $0x28] sm:$0xff]
  %v34 = vld [vmem:[%s0 + $0x30] sm:$0xff]
  %v35 = vld [vmem:[%s1] sm:$0xff]
  %v36 = vld [vmem:[%s1 + $0x8] sm:$0xff]
  %v37 = vld [vmem:[%s1 + $0x10] sm:$0xff]
  %v38 = vld [vmem:[%s1 + $0x18] sm:$0xff]
  %v39 = vld [vmem:[%s1 + $0x20] sm:$0xff]
  %v40 = vld [vmem:[%s1 + $0x28] sm:$0xff]
  %v41 = vld [vmem:[%s1 + $0x30] sm:$0xff]
  %v42 = vld [vmem:[%s1 + $0x38] sm:$0xff]
  %v43 = vld [vmem:[%s1 + $0x40] sm:$0xff]
  %v44 = vld [vmem:[%s1 + $0x48] sm:$0xff]
  %v45 = vld [vmem:[%s1 + $0x50] sm:$0xff]
  %v46 = vld [vmem:[%s1 + $0x58] sm:$0xff]
  %v47 = vld [vmem:[%s1 + $0x60] sm:$0xff]
  %v48 = vld [vmem:[%s1 + $0x68] sm:$0xff]
  %v49 = vld [vmem:[%s1 + $0x70] sm:$0xff]
  %v50 = vld [vmem:[%s1 + $0x78] sm:$0xff]
  %v51 = vld [vmem:[%s1 + $0x80] sm:$0xff]
  %v52 = vld [vmem:[%s1 + $0x88] sm:$0xff]
  %v53 = vld [vmem:[%s1 + $0x90] sm:$0xff]
  %v54 = vld [vmem:[%s1 + $0x98] sm:$0xff]
  %v55 = vld [vmem:[%s1 + $0xa0] sm:$0xff]
  %v56 = vld [vmem:[%s1 + $0xa8] sm:$0xff]
  %v57 = vld [vmem:[%s1 + $0xb0] sm:$0xff]
  %v58 = vld [vmem:[%s1 + $0xb8] sm:$0xff]
  %v59 = vld [vmem:[%s1 + $0xc0] sm:$0xff]
  %v60 = vld [vmem:[%s1 + $0xc8] sm:$0xff]
  %v61 = vld [vmem:[%s1 + $0xd0] sm:$0xff]
  %v62 = vld [vmem:[%s1 + $0xd8] sm:$0xff]
  %v63 = vld [vmem:[%s1 + $0xe0] sm:$0xff]
  %v64 = vld [vmem:[%s1 + $0xe8] sm:$0xff]
  %v65 = vld [vmem:[%s1 + $0xf0] sm:$0xff]
  %v66 = vld [vmem:[%s1 + $0xf8] sm:$0xff]
  %v67 = vld [vmem:[%s1 + $0x100] sm:$0xff]
  %v68 = vld [vmem:[%s1 + $0x108] sm:$0xff]
  %v69 = vld [vmem:[%s1 + $0x110] sm:$0xff]
  %v70 = vld [vmem:[%s1 + $0x118] sm:$0xff]
  %v71 = vld [vmem:[%s1 + $0x120] sm:$0xff]
  %v72 = vld [vmem:[%s1 + $0x128] sm:$0xff]
  %v73 = vld [vmem:[%s1 + $0x130] sm:$0xff]
  %v74 = vld [vmem:[%s1 + $0x138] sm:$0xff]
  %v75 = vld [vmem:[%s1 + $0x140] sm:$0xff]
  %v76 = vld [vmem:[%s1 + $0x148] sm:$0xff]
  %v77 = vld [vmem:[%s1 + $0x150] sm:$0xff]
  %v78 = vld [vmem:[%s1 + $0x158] sm:$0xff]
  %v79 = vld [vmem:[%s1 + $0x160] sm:$0xff]
  %v80 = vld [vmem:[%s1 + $0x168] sm:$0xff]
  %v81 = vld [vmem:[%s1 + $0x170] sm:$0xff]
  %v82 = vld [vmem:[%s1 + $0x178] sm:$0xff]
  %v83 = vld [vmem:[%s1 + $0x180] sm:$0xff]
  %v84 = vld [vmem:[%s1 + $0x188] sm:$0xff]
  %v85 = vld [vmem:[%s1 + $0x190] sm:$0xff]
  %v86 = vld [vmem:[%s1 + $0x198] sm:$0xff]
  %v87 = vld [vmem:[%s1 + $0x1a0] sm:$0xff]
  %v88 = vld [vmem:[%s1 + $0x1a8] sm:$0xff]
  %v89 = vld [vmem:[%s1 + $0x1b0] sm:$0xff]
  %v90 = vld [vmem:[%s1 + $0x1b8] sm:$0xff]
  %v91 = vld [vmem:[%s1 + $0x1c0] sm:$0xff]
  %v92 = vld [vmem:[%s1 + $0x1c8] sm:$0xff]
  %v93 = vld [vmem:[%s1 + $0x1d0] sm:$0xff]
  %v94 = vld [vmem:[%s1 + $0x1d8] sm:$0xff]
  %v95 = vld [vmem:[%s1 + $0x1e0] sm:$0xff]
  %v96 = vld [vmem:[%s1 + $0x1e8] sm:$0xff]
  %v97 = vld [vmem:[%s1 + $0x1f0] sm:$0xff]
  %v98 = vld [vmem:[%s1 + $0x1f8] sm:$0xff]
  %v99 = vld [vmem:[%s1 + $0x200] sm:$0xff]
  %v100 = vld [vmem:[%s1 + $0x208] sm:$0xff]
  %v101 = vld [vmem:[%s1 + $0x210] sm:$0xff]
  %v102 = vld [vmem:[%s1 + $0x218] sm:$0xff]
  %v103 = vld [vmem:[%s1 + $0x220] sm:$0xff]
  %v104 = vld [vmem:[%s1 + $0x228] sm:$0xff]
  %v105 = vld [vmem:[%s1 + $0x230] sm:$0xff]
  %v106 = vld [vmem:[%s1 + $0x238] sm:$0xff]
  %v107 = vld [vmem:[%s1 + $0x240] sm:$0xff]
  %v108 = vld [vmem:[%s1 + $0x248] sm:$0xff]
  %v109 = vld [vmem:[%s1 + $0x250] sm:$0xff]
  %v110 = vld [vmem:[%s1 + $0x258] sm:$0xff]
  %v111 = vld [vmem:[%s1 + $0x260] sm:$0xff]
  %v112 = vld [vmem:[%s1 + $0x268] sm:$0xff]
  %v113 = vld [vmem:[%s1 + $0x270] sm:$0xff]
  %v114 = vld [vmem:[%s1 + $0x278] sm:$0xff]
  %v115 = vld [vmem:[%s1 + $0x280] sm:$0xff]
  %v116 = vld [vmem:[%s1 + $0x288] sm:$0xff]
  %v117 = vld [vmem:[%s1 + $0x290] sm:$0xff]
  %v118 = vld [vmem:[%s1 + $0x298] sm:$0xff]
  %v119 = vld [vmem:[%s1 + $0x2a0] sm:$0xff]
  %v120 = vld [vmem:[%s1 + $0x2a8] sm:$0xff]
  %v121 = vld [vmem:[%s1 + $0x2b0] sm:$0xff]
  %v122 = vld [vmem:[%s1 + $0x2b8] sm:$0xff]
  %v123 = vld [vmem:[%s1 + $0x2c0] sm:$0xff]
  %v124 = vld [vmem:[%s1 + $0x2c8] sm:$0xff]
  %v125 = vld [vmem:[%s1 + $0x2d0] sm:$0xff]
  %v126 = vld [vmem:[%s1 + $0x2d8] sm:$0xff]
  %v127 = vld [vmem:[%s1 + $0x2e0] sm:$0xff]
  %v128 = vld [vmem:[%s1 + $0x2e8] sm:$0xff]
  %v129 = vld [vmem:[%s1 + $0x2f0] sm:$0xff]
  %v130 = vld [vmem:[%s1 + $0x2f8] sm:$0xff]
  %v131 = vld [vmem:[%s1 + $0x300] sm:$0xff]
  %v132 = vld [vmem:[%s1 + $0x308] sm:$0xff]
  %v133 = vld [vmem:[%s2] sm:$0x1]
  %v135 = vlaneseq
  %v136 = vshrl.u32 %v135, 7
  %v137 = vsub.s32 0, %v136
  %v138 = vrot.slane %v133, %v137
  %vm140 = vcmask 130048
  %v142 = vsel %vm140, %v34, 0
  %144 = vmatprep.subr.mxu0 0.0
  %145 = vmatpush1.msra.mxu0 %v50
  %146 = vmatprep.subr.mxu0 0.0
  %147 = vmatpush1.msra.mxu0 %v49
  %148 = vmatprep.subr.mxu0 0.0
  %149 = vmatpush1.msra.mxu0 %v48
  %150 = vmatprep.subr.mxu0 0.0
  %151 = vmatpush1.msra.mxu0 %v47
  %152 = vmatprep.subr.mxu0 0.0
  %153 = vmatpush1.msra.mxu0 %v46
  %154 = vmatprep.subr.mxu0 0.0
  %155 = vmatpush1.msra.mxu0 %v45
  %156 = vmatprep.subr.mxu0 0.0
  %157 = vmatpush1.msra.mxu0 %v44
  %158 = vmatprep.subr.mxu0 0.0
  %159 = vmatpush1.msra.mxu0 %v43
  %160 = vmatprep.subr.mxu0 0.0
  %161 = vmatpush1.msra.mxu0 %v42
  %162 = vmatprep.subr.mxu0 0.0
  %163 = vmatpush1.msra.mxu0 %v41
  %164 = vmatprep.subr.mxu0 0.0
  %165 = vmatpush1.msra.mxu0 %v40
  %166 = vmatprep.subr.mxu0 0.0
  %167 = vmatpush1.msra.mxu0 %v39
  %168 = vmatprep.subr.mxu0 0.0
  %169 = vmatpush1.msra.mxu0 %v38
  %170 = vmatprep.subr.mxu0 0.0
  %171 = vmatpush1.msra.mxu0 %v37
  %172 = vmatprep.subr.mxu0 0.0
  %173 = vmatpush1.msra.mxu0 %v36
  %174 = vmatprep.subr.mxu0 0.0
  %175 = vmatpush1.msra.mxu0 %v35
  %176 = vmatprep.subr.mxu0 0.0
  %177 = vmatpush2.msra.mxu0 %v66
  %178 = vmatprep.subr.mxu0 0.0
  %179 = vmatpush2.msra.mxu0 %v65
  %180 = vmatprep.subr.mxu0 0.0
  %181 = vmatpush2.msra.mxu0 %v64
  %182 = vmatprep.subr.mxu0 0.0
  %183 = vmatpush2.msra.mxu0 %v63
  %184 = vmatprep.subr.mxu0 0.0
  %185 = vmatpush2.msra.mxu0 %v62
  %186 = vmatprep.subr.mxu0 0.0
  %187 = vmatpush2.msra.mxu0 %v61
  %188 = vmatprep.subr.mxu0 0.0
  %189 = vmatpush2.msra.mxu0 %v60
  %190 = vmatprep.subr.mxu0 0.0
  %191 = vmatpush2.msra.mxu0 %v59
  %192 = vmatprep.subr.mxu0 0.0
  %193 = vmatpush2.msra.mxu0 %v58
  %194 = vmatprep.subr.mxu0 0.0
  %195 = vmatpush2.msra.mxu0 %v57
  %196 = vmatprep.subr.mxu0 0.0
  %197 = vmatpush2.msra.mxu0 %v56
  %198 = vmatprep.subr.mxu0 0.0
  %199 = vmatpush2.msra.mxu0 %v55
  %200 = vmatprep.subr.mxu0 0.0
  %201 = vmatpush2.msra.mxu0 %v54
  %202 = vmatprep.subr.mxu0 0.0
  %203 = vmatpush2.msra.mxu0 %v53
  %204 = vmatprep.subr.mxu0 0.0
  %205 = vmatpush2.msra.mxu0 %v52
  %206 = vmatprep.subr.mxu0 0.0
  %207 = vmatpush2.msra.mxu0 %v51
  %208 = vmatprep.mubr.f32.mxu0 %v29
  %209 = vmatmul.mubr.f32.gmra.mxu0 %v28
  %v210 = vpop.f32.mrf.mxu0
  %v211 = vadd.f32 %v138, %v210
  %v212 = vpop.f32.mrf.mxu0
  %213 = vdwg.mxu0
  %214 = vmatprep.subr.mxu0 0.0
  %215 = vmatpush1.msra.mxu0 %v82
  %216 = vmatprep.subr.mxu0 0.0
  %217 = vmatpush1.msra.mxu0 %v81
  %218 = vmatprep.subr.mxu0 0.0
  %219 = vmatpush1.msra.mxu0 %v80
  %220 = vmatprep.subr.mxu0 0.0
  %221 = vmatpush1.msra.mxu0 %v79
  %222 = vmatprep.subr.mxu0 0.0
  %223 = vmatpush1.msra.mxu0 %v78
  %224 = vmatprep.subr.mxu0 0.0
  %225 = vmatpush1.msra.mxu0 %v77
  %226 = vmatprep.subr.mxu0 0.0
  %227 = vmatpush1.msra.mxu0 %v76
  %228 = vmatprep.subr.mxu0 0.0
  %229 = vmatpush1.msra.mxu0 %v75
  %230 = vmatprep.subr.mxu0 0.0
  %231 = vmatpush1.msra.mxu0 %v74
  %232 = vmatprep.subr.mxu0 0.0
  %233 = vmatpush1.msra.mxu0 %v73
  %234 = vmatprep.subr.mxu0 0.0
  %235 = vmatpush1.msra.mxu0 %v72
  %236 = vmatprep.subr.mxu0 0.0
  %237 = vmatpush1.msra.mxu0 %v71
  %238 = vmatprep.subr.mxu0 0.0
  %239 = vmatpush1.msra.mxu0 %v70
  %240 = vmatprep.subr.mxu0 0.0
  %241 = vmatpush1.msra.mxu0 %v69
  %242 = vmatprep.subr.mxu0 0.0
  %243 = vmatpush1.msra.mxu0 %v68
  %244 = vmatprep.subr.mxu0 0.0
  %245 = vmatpush1.msra.mxu0 %v67
  %246 = vmatprep.subr.mxu0 0.0
  %247 = vmatpush2.msra.mxu0 %v98
  %248 = vmatprep.subr.mxu0 0.0
  %249 = vmatpush2.msra.mxu0 %v97
  %250 = vmatprep.subr.mxu0 0.0
  %251 = vmatpush2.msra.mxu0 %v96
  %252 = vmatprep.subr.mxu0 0.0
  %253 = vmatpush2.msra.mxu0 %v95
  %254 = vmatprep.subr.mxu0 0.0
  %255 = vmatpush2.msra.mxu0 %v94
  %256 = vmatprep.subr.mxu0 0.0
  %257 = vmatpush2.msra.mxu0 %v93
  %258 = vmatprep.subr.mxu0 0.0
  %259 = vmatpush2.msra.mxu0 %v92
  %260 = vmatprep.subr.mxu0 0.0
  %261 = vmatpush2.msra.mxu0 %v91
  %262 = vmatprep.subr.mxu0 0.0
  %263 = vmatpush2.msra.mxu0 %v90
  %264 = vmatprep.subr.mxu0 0.0
  %265 = vmatpush2.msra.mxu0 %v89
  %266 = vmatprep.subr.mxu0 0.0
  %267 = vmatpush2.msra.mxu0 %v88
  %268 = vmatprep.subr.mxu0 0.0
  %269 = vmatpush2.msra.mxu0 %v87
  %270 = vmatprep.subr.mxu0 0.0
  %271 = vmatpush2.msra.mxu0 %v86
  %272 = vmatprep.subr.mxu0 0.0
  %273 = vmatpush2.msra.mxu0 %v85
  %274 = vmatprep.subr.mxu0 0.0
  %275 = vmatpush2.msra.mxu0 %v84
  %276 = vmatprep.subr.mxu0 0.0
  %277 = vmatpush2.msra.mxu0 %v83
  %278 = vmatprep.mubr.f32.mxu0 %v31
  %279 = vmatmul.mubr.f32.gmra.mxu0 %v30
  %v280 = vpop.f32.mrf.mxu0
  %v281 = vadd.f32 %v211, %v280
  %v282 = vpop.f32.mrf.mxu0
  %283 = vdwg.mxu0
  %284 = vmatprep.subr.mxu0 0.0
  %285 = vmatpush1.msra.mxu0 %v114
  %286 = vmatprep.subr.mxu0 0.0
  %287 = vmatpush1.msra.mxu0 %v113
  %288 = vmatprep.subr.mxu0 0.0
  %289 = vmatpush1.msra.mxu0 %v112
  %290 = vmatprep.subr.mxu0 0.0
  %291 = vmatpush1.msra.mxu0 %v111
  %292 = vmatprep.subr.mxu0 0.0
  %293 = vmatpush1.msra.mxu0 %v110
  %294 = vmatprep.subr.mxu0 0.0
  %295 = vmatpush1.msra.mxu0 %v109
  %296 = vmatprep.subr.mxu0 0.0
  %297 = vmatpush1.msra.mxu0 %v108
  %298 = vmatprep.subr.mxu0 0.0
  %299 = vmatpush1.msra.mxu0 %v107
  %300 = vmatprep.subr.mxu0 0.0
  %301 = vmatpush1.msra.mxu0 %v106
  %302 = vmatprep.subr.mxu0 0.0
  %303 = vmatpush1.msra.mxu0 %v105
  %304 = vmatprep.subr.mxu0 0.0
  %305 = vmatpush1.msra.mxu0 %v104
  %306 = vmatprep.subr.mxu0 0.0
  %307 = vmatpush1.msra.mxu0 %v103
  %308 = vmatprep.subr.mxu0 0.0
  %309 = vmatpush1.msra.mxu0 %v102
  %310 = vmatprep.subr.mxu0 0.0
  %311 = vmatpush1.msra.mxu0 %v101
  %312 = vmatprep.subr.mxu0 0.0
  %313 = vmatpush1.msra.mxu0 %v100
  %314 = vmatprep.subr.mxu0 0.0
  %315 = vmatpush1.msra.mxu0 %v99
  %316 = vmatprep.subr.mxu0 0.0
  %317 = vmatpush2.msra.mxu0 %v130
  %318 = vmatprep.subr.mxu0 0.0
  %319 = vmatpush2.msra.mxu0 %v129
  %320 = vmatprep.subr.mxu0 0.0
  %321 = vmatpush2.msra.mxu0 %v128
  %322 = vmatprep.subr.mxu0 0.0
  %323 = vmatpush2.msra.mxu0 %v127
  %324 = vmatprep.subr.mxu0 0.0
  %325 = vmatpush2.msra.mxu0 %v126
  %326 = vmatprep.subr.mxu0 0.0
  %327 = vmatpush2.msra.mxu0 %v125
  %328 = vmatprep.subr.mxu0 0.0
  %329 = vmatpush2.msra.mxu0 %v124
  %330 = vmatprep.subr.mxu0 0.0
  %331 = vmatpush2.msra.mxu0 %v123
  %332 = vmatprep.subr.mxu0 0.0
  %333 = vmatpush2.msra.mxu0 %v122
  %334 = vmatprep.subr.mxu0 0.0
  %335 = vmatpush2.msra.mxu0 %v121
  %336 = vmatprep.subr.mxu0 0.0
  %337 = vmatpush2.msra.mxu0 %v120
  %338 = vmatprep.subr.mxu0 0.0
  %339 = vmatpush2.msra.mxu0 %v119
  %340 = vmatprep.subr.mxu0 0.0
  %341 = vmatpush2.msra.mxu0 %v118
  %342 = vmatprep.subr.mxu0 0.0
  %343 = vmatpush2.msra.mxu0 %v117
  %344 = vmatprep.subr.mxu0 0.0
  %345 = vmatpush2.msra.mxu0 %v116
  %346 = vmatprep.subr.mxu0 0.0
  %347 = vmatpush2.msra.mxu0 %v115
  %348 = vmatprep.mubr.f32.mxu0 %v33
  %349 = vmatmul.mubr.f32.gmra.mxu0 %v32
  %v350 = vpop.f32.mrf.mxu0
  %v351 = vadd.f32 %v281, %v350
  %v352 = vpop.f32.mrf.mxu0
  %353 = vdwg.mxu0
  %354 = vmatprep.subr.mxu0 0.0
  %355 = vmatpush1.msra.mxu0 0.0
  %356 = vmatprep.subr.mxu0 0.0
  %357 = vmatpush1.msra.mxu0 0.0
  %358 = vmatprep.subr.mxu0 0.0
  %359 = vmatpush1.msra.mxu0 0.0
  %360 = vmatprep.subr.mxu0 0.0
  %361 = vmatpush1.msra.mxu0 0.0
  %362 = vmatprep.subr.mxu0 0.0
  %363 = vmatpush1.msra.mxu0 0.0
  %364 = vmatprep.subr.mxu0 0.0
  %365 = vmatpush1.msra.mxu0 0.0
  %366 = vmatprep.subr.mxu0 0.0
  %367 = vmatpush1.msra.mxu0 0.0
  %368 = vmatprep.subr.mxu0 0.0
  %369 = vmatpush1.msra.mxu0 0.0
  %370 = vmatprep.subr.mxu0 0.0
  %371 = vmatpush1.msra.mxu0 0.0
  %372 = vmatprep.subr.mxu0 0.0
  %373 = vmatpush1.msra.mxu0 0.0
  %374 = vmatprep.subr.mxu0 0.0
  %375 = vmatpush1.msra.mxu0 0.0
  %376 = vmatprep.subr.mxu0 0.0
  %377 = vmatpush1.msra.mxu0 0.0
  %378 = vmatprep.subr.mxu0 0.0
  %379 = vmatpush1.msra.mxu0 0.0
  %380 = vmatprep.subr.mxu0 0.0
  %381 = vmatpush1.msra.mxu0 0.0
  %382 = vmatprep.subr.mxu0 0.0
  %383 = vmatpush1.msra.mxu0 %v132
  %384 = vmatprep.subr.mxu0 0.0
  %385 = vmatpush1.msra.mxu0 %v131
  %386 = vmatprep.subr.mxu0 0.0
  %387 = vmatpush2.msra.mxu0 0.0
  %388 = vmatprep.subr.mxu0 0.0
  %389 = vmatpush2.msra.mxu0 0.0
  %390 = vmatprep.subr.mxu0 0.0
  %391 = vmatpush2.msra.mxu0 0.0
  %392 = vmatprep.subr.mxu0 0.0
  %393 = vmatpush2.msra.mxu0 0.0
  %394 = vmatprep.subr.mxu0 0.0
  %395 = vmatpush2.msra.mxu0 0.0
  %396 = vmatprep.subr.mxu0 0.0
  %397 = vmatpush2.msra.mxu0 0.0
  %398 = vmatprep.subr.mxu0 0.0
  %399 = vmatpush2.msra.mxu0 0.0
  %400 = vmatprep.subr.mxu0 0.0
  %401 = vmatpush2.msra.mxu0 0.0
  %402 = vmatprep.subr.mxu0 0.0
  %403 = vmatpush2.msra.mxu0 0.0
  %404 = vmatprep.subr.mxu0 0.0
  %405 = vmatpush2.msra.mxu0 0.0
  %406 = vmatprep.subr.mxu0 0.0
  %407 = vmatpush2.msra.mxu0 0.0
  %408 = vmatprep.subr.mxu0 0.0
  %409 = vmatpush2.msra.mxu0 0.0
  %410 = vmatprep.subr.mxu0 0.0
  %411 = vmatpush2.msra.mxu0 0.0
  %412 = vmatprep.subr.mxu0 0.0
  %413 = vmatpush2.msra.mxu0 0.0
  %414 = vmatprep.subr.mxu0 0.0
  %415 = vmatpush2.msra.mxu0 0.0
  %416 = vmatprep.subr.mxu0 0.0
  %417 = vmatpush2.msra.mxu0 0.0
  %418 = vmatprep.mubr.f32.mxu0 0.0
  %419 = vmatmul.mubr.f32.gmra.mxu0 %v142
  %v420 = vpop.f32.mrf.mxu0
  %v421 = vadd.f32 %v351, %v420
  %v422 = vpop.f32.mrf.mxu0
  %423 = vdwg.mxu0
  %v424 = vmax.f32 %v421, 0.0
  %v425 = vld [vmem:[%s3] sm:$0xff]
  %v426 = vld [vmem:[%s3 + $0x8] sm:$0xff]
  %v427 = vld [vmem:[%s3 + $0x10] sm:$0xff]
  %v428 = vld [vmem:[%s3 + $0x18] sm:$0xff]
  %v429 = vld [vmem:[%s3 + $0x20] sm:$0xff]
  %v430 = vld [vmem:[%s3 + $0x28] sm:$0xff]
  %v431 = vld [vmem:[%s3 + $0x30] sm:$0xff]
  %v432 = vld [vmem:[%s3 + $0x38] sm:$0xff]
  %v433 = vld [vmem:[%s3 + $0x40] sm:$0xff]
  %v434 = vld [vmem:[%s3 + $0x48] sm:$0xff]
  %v435 = vld [vmem:[%s3 + $0x50] sm:$0xff]
  %v436 = vld [vmem:[%s3 + $0x58] sm:$0xff]
  %v437 = vld [vmem:[%s3 + $0x60] sm:$0xff]
  %v438 = vld [vmem:[%s3 + $0x68] sm:$0xff]
  %v439 = vld [vmem:[%s3 + $0x70] sm:$0xff]
  %v440 = vld [vmem:[%s3 + $0x78] sm:$0xff]
  %v441 = vld [vmem:[%s4] sm:$0x1]
  %v443 = vlaneseq
  %v444 = vshrl.u32 %v443, 7
  %v445 = vsub.s32 0, %v444
  %v446 = vrot.slane %v441, %v445
  %448 = vmatprep.subr.mxu0 0.0
  %449 = vmatpush1.msra.mxu0 %v440
  %450 = vmatprep.subr.mxu0 0.0
  %451 = vmatpush1.msra.mxu0 %v439
  %452 = vmatprep.subr.mxu0 0.0
  %453 = vmatpush1.msra.mxu0 %v438
  %454 = vmatprep.subr.mxu0 0.0
  %455 = vmatpush1.msra.mxu0 %v437
  %456 = vmatprep.subr.mxu0 0.0
  %457 = vmatpush1.msra.mxu0 %v436
  %458 = vmatprep.subr.mxu0 0.0
  %459 = vmatpush1.msra.mxu0 %v435
  %460 = vmatprep.subr.mxu0 0.0
  %461 = vmatpush1.msra.mxu0 %v434
  %462 = vmatprep.subr.mxu0 0.0
  %463 = vmatpush1.msra.mxu0 %v433
  %464 = vmatprep.subr.mxu0 0.0
  %465 = vmatpush1.msra.mxu0 %v432
  %466 = vmatprep.subr.mxu0 0.0
  %467 = vmatpush1.msra.mxu0 %v431
  %468 = vmatprep.subr.mxu0 0.0
  %469 = vmatpush1.msra.mxu0 %v430
  %470 = vmatprep.subr.mxu0 0.0
  %471 = vmatpush1.msra.mxu0 %v429
  %472 = vmatprep.subr.mxu0 0.0
  %473 = vmatpush1.msra.mxu0 %v428
  %474 = vmatprep.subr.mxu0 0.0
  %475 = vmatpush1.msra.mxu0 %v427
  %476 = vmatprep.subr.mxu0 0.0
  %477 = vmatpush1.msra.mxu0 %v426
  %478 = vmatprep.subr.mxu0 0.0
  %479 = vmatpush1.msra.mxu0 %v425
  %480 = vmatprep.subr.mxu0 0.0
  %481 = vmatpush2.msra.mxu0 0.0
  %482 = vmatprep.subr.mxu0 0.0
  %483 = vmatpush2.msra.mxu0 0.0
  %484 = vmatprep.subr.mxu0 0.0
  %485 = vmatpush2.msra.mxu0 0.0
  %486 = vmatprep.subr.mxu0 0.0
  %487 = vmatpush2.msra.mxu0 0.0
  %488 = vmatprep.subr.mxu0 0.0
  %489 = vmatpush2.msra.mxu0 0.0
  %490 = vmatprep.subr.mxu0 0.0
  %491 = vmatpush2.msra.mxu0 0.0
  %492 = vmatprep.subr.mxu0 0.0
  %493 = vmatpush2.msra.mxu0 0.0
  %494 = vmatprep.subr.mxu0 0.0
  %495 = vmatpush2.msra.mxu0 0.0
  %496 = vmatprep.subr.mxu0 0.0
  %497 = vmatpush2.msra.mxu0 0.0
  %498 = vmatprep.subr.mxu0 0.0
  %499 = vmatpush2.msra.mxu0 0.0
  %500 = vmatprep.subr.mxu0 0.0
  %501 = vmatpush2.msra.mxu0 0.0
  %502 = vmatprep.subr.mxu0 0.0
  %503 = vmatpush2.msra.mxu0 0.0
  %504 = vmatprep.subr.mxu0 0.0
  %505 = vmatpush2.msra.mxu0 0.0
  %506 = vmatprep.subr.mxu0 0.0
  %507 = vmatpush2.msra.mxu0 0.0
  %508 = vmatprep.subr.mxu0 0.0
  %509 = vmatpush2.msra.mxu0 0.0
  %510 = vmatprep.subr.mxu0 0.0
  %511 = vmatpush2.msra.mxu0 0.0
  %512 = vmatprep.mubr.f32.mxu0 0.0
  %513 = vmatmul.mubr.f32.gmra.mxu0 %v424
  %v514 = vpop.f32.mrf.mxu0
  %v515 = vadd.f32 %v446, %v514
  %v516 = vpop.f32.mrf.mxu0
  %517 = vdwg.mxu0
  %v518 = vmax.f32 %v515, 0.0
  %v519 = vld [vmem:[%s5] sm:$0xff]
  %v520 = vld [vmem:[%s5 + $0x8] sm:$0xff]
  %v521 = vld [vmem:[%s5 + $0x10] sm:$0xff]
  %v522 = vld [vmem:[%s5 + $0x18] sm:$0xff]
  %v523 = vld [vmem:[%s5 + $0x20] sm:$0xff]
  %v524 = vld [vmem:[%s5 + $0x28] sm:$0xff]
  %v525 = vld [vmem:[%s5 + $0x30] sm:$0xff]
  %v526 = vld [vmem:[%s5 + $0x38] sm:$0xff]
  %v527 = vld [vmem:[%s5 + $0x40] sm:$0xff]
  %v528 = vld [vmem:[%s5 + $0x48] sm:$0xff]
  %v529 = vld [vmem:[%s5 + $0x50] sm:$0xff]
  %v530 = vld [vmem:[%s5 + $0x58] sm:$0xff]
  %v531 = vld [vmem:[%s5 + $0x60] sm:$0xff]
  %v532 = vld [vmem:[%s5 + $0x68] sm:$0xff]
  %v533 = vld [vmem:[%s5 + $0x70] sm:$0xff]
  %v534 = vld [vmem:[%s5 + $0x78] sm:$0xff]
  %v535 = vld [vmem:[#allocation2] sm:$0x1]
  %v537 = vlaneseq
  %v538 = vshrl.u32 %v537, 7
  %v539 = vsub.s32 0, %v538
  %v540 = vrot.slane %v535, %v539
  %542 = vmatprep.subr.mxu0 0.0
  %543 = vmatpush1.msra.mxu0 %v534
  %544 = vmatprep.subr.mxu0 0.0
  %545 = vmatpush1.msra.mxu0 %v533
  %546 = vmatprep.subr.mxu0 0.0
  %547 = vmatpush1.msra.mxu0 %v532
  %548 = vmatprep.subr.mxu0 0.0
  %549 = vmatpush1.msra.mxu0 %v531
  %550 = vmatprep.subr.mxu0 0.0
  %551 = vmatpush1.msra.mxu0 %v530
  %552 = vmatprep.subr.mxu0 0.0
  %553 = vmatpush1.msra.mxu0 %v529
  %554 = vmatprep.subr.mxu0 0.0
  %555 = vmatpush1.msra.mxu0 %v528
  %556 = vmatprep.subr.mxu0 0.0
  %557 = vmatpush1.msra.mxu0 %v527
  %558 = vmatprep.subr.mxu0 0.0
  %559 = vmatpush1.msra.mxu0 %v526
  %560 = vmatprep.subr.mxu0 0.0
  %561 = vmatpush1.msra.mxu0 %v525
  %562 = vmatprep.subr.mxu0 0.0
  %563 = vmatpush1.msra.mxu0 %v524
  %564 = vmatprep.subr.mxu0 0.0
  %565 = vmatpush1.msra.mxu0 %v523
  %566 = vmatprep.subr.mxu0 0.0
  %567 = vmatpush1.msra.mxu0 %v522
  %568 = vmatprep.subr.mxu0 0.0
  %569 = vmatpush1.msra.mxu0 %v521
  %570 = vmatprep.subr.mxu0 0.0
  %571 = vmatpush1.msra.mxu0 %v520
  %572 = vmatprep.subr.mxu0 0.0
  %573 = vmatpush1.msra.mxu0 %v519
  %574 = vmatprep.subr.mxu0 0.0
  %575 = vmatpush2.msra.mxu0 0.0
  %576 = vmatprep.subr.mxu0 0.0
  %577 = vmatpush2.msra.mxu0 0.0
  %578 = vmatprep.subr.mxu0 0.0
  %579 = vmatpush2.msra.mxu0 0.0
  %580 = vmatprep.subr.mxu0 0.0
  %581 = vmatpush2.msra.mxu0 0.0
  %582 = vmatprep.subr.mxu0 0.0
  %583 = vmatpush2.msra.mxu0 0.0
  %584 = vmatprep.subr.mxu0 0.0
  %585 = vmatpush2.msra.mxu0 0.0
  %586 = vmatprep.subr.mxu0 0.0
  %587 = vmatpush2.msra.mxu0 0.0
  %588 = vmatprep.subr.mxu0 0.0
  %589 = vmatpush2.msra.mxu0 0.0
  %590 = vmatprep.subr.mxu0 0.0
  %591 = vmatpush2.msra.mxu0 0.0
  %592 = vmatprep.subr.mxu0 0.0
  %593 = vmatpush2.msra.mxu0 0.0
  %594 = vmatprep.subr.mxu0 0.0
  %595 = vmatpush2.msra.mxu0 0.0
  %596 = vmatprep.subr.mxu0 0.0
  %597 = vmatpush2.msra.mxu0 0.0
  %598 = vmatprep.subr.mxu0 0.0
  %599 = vmatpush2.msra.mxu0 0.0
  %600 = vmatprep.subr.mxu0 0.0
  %601 = vmatpush2.msra.mxu0 0.0
  %602 = vmatprep.subr.mxu0 0.0
  %603 = vmatpush2.msra.mxu0 0.0
  %604 = vmatprep.subr.mxu0 0.0
  %605 = vmatpush2.msra.mxu0 0.0
  %606 = vmatprep.mubr.f32.mxu0 0.0
  %607 = vmatmul.mubr.f32.gmra.mxu0 %v518
  %v608 = vpop.f32.mrf.mxu0
  %v609 = vadd.f32 %v540, %v608
  %v610 = vpop.f32.mrf.mxu0
  %611 = vdwg.mxu0
  %v612 = vxor.u32 %v609, 2147483648
  %v613 = vmul.f32 %v612, 1.442695
  %v614 = vpow.pop %v613
  %v615 = vadd.f32 %v614, 1.0
  %v616 = vrcp.pop %v615
  %v617 = vmul.f32 1.0, %v616
  %vm618 = vcmask 7168
  %619 = vst.msk [vmem:[%s7] sm:$0xff] %vm618, %v617
  // Predicated region
  $region30: #{rnn_forward.5} parent=0 // pred_check
    _
  $region31: #{rnn_forward.5} parent=0 // pred_check_branch
    %621 = sbr.rel (0) target = $region33
  $region32: #{rnn_forward.5} parent=0 // pred_region
    _
  $region33: #{rnn_forward.5} parent=0 // pred_fallthru
    _
  // Predicated region
  $region34: #{rnn_forward.5} parent=0 // pred_check
    _
  $region35: #{rnn_forward.5} parent=0 // pred_check_branch
    %623 = sbr.rel (0) target = $region37
  $region36: #{rnn_forward.5} parent=0 // pred_region
    _
  $region37: #{rnn_forward.5} parent=0 // pred_fallthru
    _

// kernel: rnn_forward.4
$region0: #{rnn_forward.4}
  #allocation0 [shape = 'u32[]', space=smem, size = 0x4, offset = 0x4, fixed_abs, tag = 'smem constant byte address 0x4 - core index']
  #allocation1 [shape = 'u32[144,128]{1,0:T(1,128)}', space=vmem, size = 0x12000, scoped, tag = 'internal scratch']
  %s0 = inlined_call_operand.vmem [shape: f32[1,32], index: 0, kind: input, shape index: {}]
  %s1 = inlined_call_operand.hbm [shape: f32[32,117121], index: 1, kind: input, shape index: {}]
  %s2 = inlined_call_operand.vmem [shape: f32[1,117121], index: 2, kind: input, shape index: {}]
  %s3 = inlined_call_operand.vmem [shape: f32[1,117121], index: 3, kind: output, shape index: {}]
  %s4 = sld [smem:[#allocation0]]
  $region111: #{rnn_forward.4} parent=0
    _
  %s6 = ssub.s32 1, %s4
  %s7 = scalar_select 0, %s6, %s4
  $region1: #{rnn_forward.4} parent=0
    #allocation2 [shape = 'u8[4194304]{0}', space=vmem, size = 0x400000, scoped, tag = 'input window, operand 1']
    #allocation3 [shape = 's32[2]{0}', space=sflag, size = 0x8, scoped, tag = 'scoped memory for rnn_forward.4']
    #allocation4 [shape = 'u8[131072]{0}', space=vmem, size = 0x20000, scoped, tag = 'output window, operand 0']
    %8 = vsyncpa [#allocation3], 0
    %s9 = scalar_lea.sflag [#allocation3], 1
    %10 = vsyncpa %s9, 0
    loop: start=0, step=1, limit=10
    $region2: #{rnn_forward.4} parent=1 // loop_pre_header
      _
    $region3: #{rnn_forward.4} parent=1 // loop_header
      %s12 = sphi 0, %s16
      %p13 = scmp.ge.s32.totalorder %s12, 10
      %s20 = sphi 0, %s20
      %s22 = sphi 0, %s20
      %s23 = sphi 0, %s22
      %s37 = sphi 0, %s23
      %s43 = sphi 0, %s45
      %s46 = sphi 0, %s43
      %s47 = sphi 0, %s46
      %s63 = sphi 0, %s47
      %s69 = sphi 0, %s71
      %s72 = sphi 0, %s69
      %s73 = sphi 0, %s72
      %s89 = sphi 0, %s73
      %s95 = sphi 0, %s97
      %s98 = sphi 0, %s95
      %s99 = sphi 0, %s98
      %s115 = sphi 0, %s99
    $region4: #{rnn_forward.4} parent=1 // loop_header_branch
      %15 = sbr.rel (%p13) target = $region8
    $region5: #{rnn_forward.4} parent=1 // loop_body
      %s17 = ssub.s32 %s12, 1
      %s18 = ssub.s32 %s12, 2
      %s19 = sadd.s32 %s12, 1
      %s21 = sadd.s32 %s20, 1
      %p24 = scmp.eq.s32.totalorder %s12, 7
      %p25 = scmp.ne.s32.totalorder %s20, %s22
      %p26 = scmp.eq.s32.totalorder %s12, 0
      %p27 = por %p25, %p26
      %p28 = scmp.ne.s32.totalorder %s20, %s22
      %p29 = scmp.eq.s32.totalorder %s17, 7
      %p30 = por %p28, %p29
      %p31 = scmp.ne.s32.totalorder %s22, %s23
      %p32 = scmp.eq.s32.totalorder %s17, 0
      %p33 = por %p31, %p32
      %p34 = scmp.ne.s32.totalorder %s22, %s23
      %p35 = scmp.eq.s32.totalorder %s18, 7
      %p36 = por %p34, %p35
      %p38 = scmp.ne.s32.totalorder %s23, %s37
      %p39 = scmp.eq.s32.totalorder %s18, 0
      %p40 = por %p38, %p39
      %s41 = ssub.s32 %s12, %s19
      %p42 = scmp.eq.s32.totalorder %s41, 0
      %s44 = sadd.s32 %s43, 1
      %s45 = scalar_select %p42, %s43, %s44
      %p48 = pneg %p42
      %p49 = scmp.eq.s32.totalorder %s12, 7
      %p50 = por %p48, %p49
      %p51 = scmp.ne.s32.totalorder %s43, %s46
      %p52 = scmp.eq.s32.totalorder %s12, 0
      %p53 = por %p51, %p52
      %p54 = scmp.ne.s32.totalorder %s43, %s46
      %p55 = scmp.eq.s32.totalorder %s17, 7
      %p56 = por %p54, %p55
      %p57 = scmp.ne.s32.totalorder %s46, %s47
      %p58 = scmp.eq.s32.totalorder %s17, 0
      %p59 = por %p57, %p58
      %p60 = scmp.ne.s32.totalorder %s46, %s47
      %p61 = scmp.eq.s32.totalorder %s18, 7
      %p62 = por %p60, %p61
      %p64 = scmp.ne.s32.totalorder %s47, %s63
      %p65 = scmp.eq.s32.totalorder %s18, 0
      %p66 = por %p64, %p65
      %s67 = ssub.s32 %s12, %s19
      %p68 = scmp.eq.s32.totalorder %s67, 0
      %s70 = sadd.s32 %s69, 1
      %s71 = scalar_select %p68, %s69, %s70
      %p74 = pneg %p68
      %p75 = scmp.eq.s32.totalorder %s12, 7
      %p76 = por %p74, %p75
      %p77 = scmp.ne.s32.totalorder %s69, %s72
      %p78 = scmp.eq.s32.totalorder %s12, 0
      %p79 = por %p77, %p78
      %p80 = scmp.ne.s32.totalorder %s69, %s72
      %p81 = scmp.eq.s32.totalorder %s17, 7
      %p82 = por %p80, %p81
      %p83 = scmp.ne.s32.totalorder %s72, %s73
      %p84 = scmp.eq.s32.totalorder %s17, 0
      %p85 = por %p83, %p84
      %p86 = scmp.ne.s32.totalorder %s72, %s73
      %p87 = scmp.eq.s32.totalorder %s18, 7
      %p88 = por %p86, %p87
      %p90 = scmp.ne.s32.totalorder %s73, %s89
      %p91 = scmp.eq.s32.totalorder %s18, 0
      %p92 = por %p90, %p91
      %s93 = ssub.s32 %s12, %s19
      %p94 = scmp.eq.s32.totalorder %s93, 0
      %s96 = sadd.s32 %s95, 1
      %s97 = scalar_select %p94, %s95, %s96
      %p100 = pneg %p94
      %p101 = scmp.eq.s32.totalorder %s12, 7
      %p102 = por %p100, %p101
      %p103 = scmp.ne.s32.totalorder %s95, %s98
      %p104 = scmp.eq.s32.totalorder %s12, 0
      %p105 = por %p103, %p104
      %p106 = scmp.ne.s32.totalorder %s95, %s98
      %p107 = scmp.eq.s32.totalorder %s17, 7
      %p108 = por %p106, %p107
      %p109 = scmp.ne.s32.totalorder %s98, %s99
      %p110 = scmp.eq.s32.totalorder %s17, 0
      %p111 = por %p109, %p110
      %p112 = scmp.ne.s32.totalorder %s98, %s99
      %p113 = scmp.eq.s32.totalorder %s18, 7
      %p114 = por %p112, %p113
      %p116 = scmp.ne.s32.totalorder %s99, %s115
      %p117 = scmp.eq.s32.totalorder %s18, 0
      %p118 = por %p116, %p117
      %p119 = scmp.le.s32.totalorder 1, %s12
      %p120 = scmp.lt.s32.totalorder %s12, 9
      %p121 = pnand %p119, %p120
      %p122 = pneg %p121
      // Predicated region
      $region9: #{rnn_forward.4} parent=5 // pred_check
        _
      $region10: #{rnn_forward.4} parent=5 // pred_check_branch
        %124 = sbr.rel (%p121) target = $region12
      $region11: #{rnn_forward.4} parent=5 // pred_region
        %s125 = ssub.s32 %s12, 1
        // Predicated region
        $region13: #{rnn_forward.4} parent=11 // pred_check
          %p126 = pneg %p33
        $region14: #{rnn_forward.4} parent=11 // pred_check_branch
          %128 = sbr.rel (%p126) target = $region16
        $region15: #{rnn_forward.4} parent=11 // pred_region
          _
        $region16: #{rnn_forward.4} parent=11 // pred_fallthru
          _
      $region12: #{rnn_forward.4} parent=5 // pred_fallthru
        _
      %p129 = scmp.lt.s32.totalorder %s12, 8
      // Predicated region
      $region17: #{rnn_forward.4} parent=5 // pred_check
        %p130 = pneg %p129
      $region18: #{rnn_forward.4} parent=5 // pred_check_branch
        %132 = sbr.rel (%p130) target = $region20
      $region19: #{rnn_forward.4} parent=5 // pred_region
        // Predicated region
        $region21: #{rnn_forward.4} parent=19 // pred_check
          %p133 = pneg %p53
        $region22: #{rnn_forward.4} parent=19 // pred_check_branch
          %135 = sbr.rel (%p133) target = $region24
        $region23: #{rnn_forward.4} parent=19 // pred_region
          %s136 = sand.u32 %s43, 1
          %s137 = scalar_lea.sflag [#allocation3], %s136
          %s138 = sand.u32 %s43, 1
          %s139 = smul.addr %s138, 4096
          %s140 = scalar_lea.vmem [#allocation2], %s139
          %s141 = smul.u32 128, %s12
          %s142 = ssub.s32 916, %s141
          %p143 = scmp.lt.s32.totalorder %s142, 128
          %s144 = scalar_select %p143, %s142, 128
          %s145 = smul.u32 512, %s144
          %s147 = ssub.s32 65536, %s145
          %148 = vsyncadd %s137, %s147
          %p149 = scmp.ne.s32.totalorder 0, %s145
          %s150 = smul.addr %s141, 128
          %s151 = scalar_lea.hbm %s1, %s150
          %s152 = smul.u32 %s144, 8
          %s153 = smul.u32 %s152, 4
          %s154 = sshll.u32 %s140, 4
          %s155 = int_to_ptr.vmem [resolvable:$true] %s154
          %s156 = sshll.u32 %s153, 4
          %160 = dma.hbm_to_vmem [thread:$0]  (%p149), %s151, %s156, %s155, %s137, 117248, 16384, %s152
        $region24: #{rnn_forward.4} parent=19 // pred_fallthru
          _
        // Predicated region
        $region25: #{rnn_forward.4} parent=19 // pred_check
          %p161 = pneg %p79
        $region26: #{rnn_forward.4} parent=19 // pred_check_branch
          %163 = sbr.rel (%p161) target = $region28
        $region27: #{rnn_forward.4} parent=19 // pred_region
          %s164 = smul.u32 128, %s12
          %s165 = ssub.s32 916, %s164
          %p166 = scmp.lt.s32.totalorder %s165, 128
          %s167 = scalar_select %p166, %s165, 128
          %s168 = smul.u32 16, %s167
          %p169 = scmp.lt.s32.totalorder %s164, 915
          %s170 = scalar_select %p169, %s164, 915
          %s171 = scalar_lea.vmem %s2, %s170
          %s172 = smul.u32 128, %s12
          %s173 = ssub.s32 916, %s172
          %p174 = scmp.lt.s32.totalorder %s173, 128
          %s175 = scalar_select %p174, %s173, 128
          %s176 = smul.u32 16, %s175
        $region28: #{rnn_forward.4} parent=19 // pred_fallthru
          _
      $region20: #{rnn_forward.4} parent=5 // pred_fallthru
        _
      %p177 = scmp.le.s32.totalorder 1, %s12
      %p178 = scmp.lt.s32.totalorder %s12, 9
      %p179 = pnand %p177, %p178
      %p180 = pneg %p179
      // Predicated region
      $region29: #{rnn_forward.4} parent=5 // pred_check
        _
      $region30: #{rnn_forward.4} parent=5 // pred_check_branch
        %182 = sbr.rel (%p179) target = $region32
      $region31: #{rnn_forward.4} parent=5 // pred_region
        %s183 = ssub.s32 %s12, 1
        %s184 = sand.u32 %s46, 1
        %s185 = scalar_lea.sflag [#allocation3], %s184
        %s186 = sand.u32 %s46, 1
        %s187 = smul.addr %s186, 4096
        %s188 = scalar_lea.vmem [#allocation2], %s187
        // Predicated region
        $region33: #{rnn_forward.4} parent=31 // pred_check
          %p189 = pneg %p59
        $region34: #{rnn_forward.4} parent=31 // pred_check_branch
          %191 = sbr.rel (%p189) target = $region36
        $region35: #{rnn_forward.4} parent=31 // pred_region
          %192 = dma.done %s185, 65536
        $region36: #{rnn_forward.4} parent=31 // pred_fallthru
          _
        %p193 = pneg %p33
        %p194 = pneg %p30
        %s195 = sand.u32 %s46, 1
        %s196 = scalar_lea.sflag [#allocation3], %s195
        %s197 = sand.u32 %s46, 1
        %s198 = smul.addr %s197, 4096
        %s199 = scalar_lea.vmem [#allocation2], %s198
        %p200 = pneg %p59
        %p201 = pneg %p56
        %s202 = smul.u32 128, %s17
        %s203 = ssub.s32 916, %s202
        %p204 = scmp.lt.s32.totalorder %s203, 128
        %s205 = scalar_select %p204, %s203, 128
        %s206 = smul.u32 16, %s205
        %p207 = scmp.lt.s32.totalorder %s202, 915
        %s208 = scalar_select %p207, %s202, 915
        %s209 = scalar_lea.vmem %s2, %s208
        %p210 = pneg %p85
        %p211 = pneg %p82
        %p212 = pneg %p111
        %p213 = pneg %p108
        %s214 = sand.u32 %s98, 1
        %s215 = sand.u32 %s98, 1
        %s216 = smul.addr %s215, 128
        %s217 = scalar_lea.vmem [#allocation4], %s216
        %s218 = smul.u32 128, %s17
        %s219 = ssub.s32 916, %s218
        %p220 = scmp.lt.s32.totalorder %s219, 128
        %s221 = scalar_select %p220, %s219, 128
        %s222 = smul.u32 512, %s221
        %s223 = smul.u32 128, %s17
        %s224 = ssub.s32 916, %s223
        %p225 = scmp.lt.s32.totalorder %s224, 128
        %s226 = scalar_select %p225, %s224, 128
        %s227 = smul.u32 16, %s226
        %p228 = scmp.lt.s32.totalorder %s223, 915
        %s229 = scalar_select %p228, %s223, 915
        %s230 = scalar_lea.vmem %s2, %s229
        %s231 = smul.u32 128, %s17
        %s232 = ssub.s32 916, %s231
        %p233 = scmp.lt.s32.totalorder %s232, 128
        %s234 = scalar_select %p233, %s232, 128
        %s235 = smul.u32 16, %s234
        %s236 = smul.u32 128, %s17
        %s237 = ssub.s32 916, %s236
        %p238 = scmp.lt.s32.totalorder %s237, 128
        %s239 = scalar_select %p238, %s237, 128
        %s240 = smul.u32 16, %s239
        %v241 = vld [vmem:[%s0] sm:$0x1]
        %v242 = vld [vmem:[%s188] sm:$0xff]
        %v243 = vld [vmem:[%s188 + $0x8] sm:$0xff]
        %v244 = vld [vmem:[%s188 + $0x10] sm:$0xff]
        %v245 = vld [vmem:[%s188 + $0x18] sm:$0xff]
        %v246 = vld [vmem:[%s188 + $0x20] sm:$0xff]
        %v247 = vld [vmem:[%s188 + $0x28] sm:$0xff]
        %v248 = vld [vmem:[%s188 + $0x30] sm:$0xff]
        %v249 = vld [vmem:[%s188 + $0x38] sm:$0xff]
        %v250 = vld [vmem:[%s188 + $0x40] sm:$0xff]
        %v251 = vld [vmem:[%s188 + $0x48] sm:$0xff]
        %v252 = vld [vmem:[%s188 + $0x50] sm:$0xff]
        %v253 = vld [vmem:[%s188 + $0x58] sm:$0xff]
        %v254 = vld [vmem:[%s188 + $0x60] sm:$0xff]
        %v255 = vld [vmem:[%s188 + $0x68] sm:$0xff]
        %v256 = vld [vmem:[%s188 + $0x70] sm:$0xff]
        %v257 = vld [vmem:[%s188 + $0x78] sm:$0xff]
        %v258 = vld [vmem:[%s188 + $0x80] sm:$0xff]
        %v259 = vld [vmem:[%s188 + $0x88] sm:$0xff]
        %v260 = vld [vmem:[%s188 + $0x90] sm:$0xff]
        %v261 = vld [vmem:[%s188 + $0x98] sm:$0xff]
        %v262 = vld [vmem:[%s188 + $0xa0] sm:$0xff]
        %v263 = vld [vmem:[%s188 + $0xa8] sm:$0xff]
        %v264 = vld [vmem:[%s188 + $0xb0] sm:$0xff]
        %v265 = vld [vmem:[%s188 + $0xb8] sm:$0xff]
        %v266 = vld [vmem:[%s188 + $0xc0] sm:$0xff]
        %v267 = vld [vmem:[%s188 + $0xc8] sm:$0xff]
        %v268 = vld [vmem:[%s188 + $0xd0] sm:$0xff]
        %v269 = vld [vmem:[%s188 + $0xd8] sm:$0xff]
        %v270 = vld [vmem:[%s188 + $0xe0] sm:$0xff]
        %v271 = vld [vmem:[%s188 + $0xe8] sm:$0xff]
        %v272 = vld [vmem:[%s188 + $0xf0] sm:$0xff]
        %v273 = vld [vmem:[%s188 + $0xf8] sm:$0xff]
        %v274 = vld [vmem:[%s188 + $0x100] sm:$0xff]
        %v275 = vld [vmem:[%s188 + $0x108] sm:$0xff]
        %v276 = vld [vmem:[%s188 + $0x110] sm:$0xff]
        %v277 = vld [vmem:[%s188 + $0x118] sm:$0xff]
        %v278 = vld [vmem:[%s188 + $0x120] sm:$0xff]
        %v279 = vld [vmem:[%s188 + $0x128] sm:$0xff]
        %v280 = vld [vmem:[%s188 + $0x130] sm:$0xff]
        %v281 = vld [vmem:[%s188 + $0x138] sm:$0xff]
        %v282 = vld [vmem:[%s188 + $0x140] sm:$0xff]
        %v283 = vld [vmem:[%s188 + $0x148] sm:$0xff]
        %v284 = vld [vmem:[%s188 + $0x150] sm:$0xff]
        %v285 = vld [vmem:[%s188 + $0x158] sm:$0xff]
        %v286 = vld [vmem:[%s188 + $0x160] sm:$0xff]
        %v287 = vld [vmem:[%s188 + $0x168] sm:$0xff]
        %v288 = vld [vmem:[%s188 + $0x170] sm:$0xff]
        %v289 = vld [vmem:[%s188 + $0x178] sm:$0xff]
        %v290 = vld [vmem:[%s188 + $0x180] sm:$0xff]
        %v291 = vld [vmem:[%s188 + $0x188] sm:$0xff]
        %v292 = vld [vmem:[%s188 + $0x190] sm:$0xff]
        %v293 = vld [vmem:[%s188 + $0x198] sm:$0xff]
        %v294 = vld [vmem:[%s188 + $0x1a0] sm:$0xff]
        %v295 = vld [vmem:[%s188 + $0x1a8] sm:$0xff]
        %v296 = vld [vmem:[%s188 + $0x1b0] sm:$0xff]
        %v297 = vld [vmem:[%s188 + $0x1b8] sm:$0xff]
        %v298 = vld [vmem:[%s188 + $0x1c0] sm:$0xff]
        %v299 = vld [vmem:[%s188 + $0x1c8] sm:$0xff]
        %v300 = vld [vmem:[%s188 + $0x1d0] sm:$0xff]
        %v301 = vld [vmem:[%s188 + $0x1d8] sm:$0xff]
        %v302 = vld [vmem:[%s188 + $0x1e0] sm:$0xff]
        %v303 = vld [vmem:[%s188 + $0x1e8] sm:$0xff]
        %v304 = vld [vmem:[%s188 + $0x1f0] sm:$0xff]
        %v305 = vld [vmem:[%s188 + $0x1f8] sm:$0xff]
        %v306 = vld [vmem:[%s188 + $0x200] sm:$0xff]
        %v307 = vld [vmem:[%s188 + $0x208] sm:$0xff]
        %v308 = vld [vmem:[%s188 + $0x210] sm:$0xff]
        %v309 = vld [vmem:[%s188 + $0x218] sm:$0xff]
        %v310 = vld [vmem:[%s188 + $0x220] sm:$0xff]
        %v311 = vld [vmem:[%s188 + $0x228] sm:$0xff]
        %v312 = vld [vmem:[%s188 + $0x230] sm:$0xff]
        %v313 = vld [vmem:[%s188 + $0x238] sm:$0xff]
        %v314 = vld [vmem:[%s188 + $0x240] sm:$0xff]
        %v315 = vld [vmem:[%s188 + $0x248] sm:$0xff]
        %v316 = vld [vmem:[%s188 + $0x250] sm:$0xff]
        %v317 = vld [vmem:[%s188 + $0x258] sm:$0xff]
        %v318 = vld [vmem:[%s188 + $0x260] sm:$0xff]
        %v319 = vld [vmem:[%s188 + $0x268] sm:$0xff]
        %v320 = vld [vmem:[%s188 + $0x270] sm:$0xff]
        %v321 = vld [vmem:[%s188 + $0x278] sm:$0xff]
        %v322 = vld [vmem:[%s188 + $0x280] sm:$0xff]
        %v323 = vld [vmem:[%s188 + $0x288] sm:$0xff]
        %v324 = vld [vmem:[%s188 + $0x290] sm:$0xff]
        %v325 = vld [vmem:[%s188 + $0x298] sm:$0xff]
        %v326 = vld [vmem:[%s188 + $0x2a0] sm:$0xff]
        %v327 = vld [vmem:[%s188 + $0x2a8] sm:$0xff]
        %v328 = vld [vmem:[%s188 + $0x2b0] sm:$0xff]
        %v329 = vld [vmem:[%s188 + $0x2b8] sm:$0xff]
        %v330 = vld [vmem:[%s188 + $0x2c0] sm:$0xff]
        %v331 = vld [vmem:[%s188 + $0x2c8] sm:$0xff]
        %v332 = vld [vmem:[%s188 + $0x2d0] sm:$0xff]
        %v333 = vld [vmem:[%s188 + $0x2d8] sm:$0xff]
        %v334 = vld [vmem:[%s188 + $0x2e0] sm:$0xff]
        %v335 = vld [vmem:[%s188 + $0x2e8] sm:$0xff]
        %v336 = vld [vmem:[%s188 + $0x2f0] sm:$0xff]
        %v337 = vld [vmem:[%s188 + $0x2f8] sm:$0xff]
        %v338 = vld [vmem:[%s188 + $0x300] sm:$0xff]
        %v339 = vld [vmem:[%s188 + $0x308] sm:$0xff]
        %v340 = vld [vmem:[%s188 + $0x310] sm:$0xff]
        %v341 = vld [vmem:[%s188 + $0x318] sm:$0xff]
        %v342 = vld [vmem:[%s188 + $0x320] sm:$0xff]
        %v343 = vld [vmem:[%s188 + $0x328] sm:$0xff]
        %v344 = vld [vmem:[%s188 + $0x330] sm:$0xff]
        %v345 = vld [vmem:[%s188 + $0x338] sm:$0xff]
        %v346 = vld [vmem:[%s188 + $0x340] sm:$0xff]
        %v347 = vld [vmem:[%s188 + $0x348] sm:$0xff]
        %v348 = vld [vmem:[%s188 + $0x350] sm:$0xff]
        %v349 = vld [vmem:[%s188 + $0x358] sm:$0xff]
        %v350 = vld [vmem:[%s188 + $0x360] sm:$0xff]
        %v351 = vld [vmem:[%s188 + $0x368] sm:$0xff]
        %v352 = vld [vmem:[%s188 + $0x370] sm:$0xff]
        %v353 = vld [vmem:[%s188 + $0x378] sm:$0xff]
        %v354 = vld [vmem:[%s188 + $0x380] sm:$0xff]
        %v355 = vld [vmem:[%s188 + $0x388] sm:$0xff]
        %v356 = vld [vmem:[%s188 + $0x390] sm:$0xff]
        %v357 = vld [vmem:[%s188 + $0x398] sm:$0xff]
        %v358 = vld [vmem:[%s188 + $0x3a0] sm:$0xff]
        %v359 = vld [vmem:[%s188 + $0x3a8] sm:$0xff]
        %v360 = vld [vmem:[%s188 + $0x3b0] sm:$0xff]
        %v361 = vld [vmem:[%s188 + $0x3b8] sm:$0xff]
        %v362 = vld [vmem:[%s188 + $0x3c0] sm:$0xff]
        %v363 = vld [vmem:[%s188 + $0x3c8] sm:$0xff]
        %v364 = vld [vmem:[%s188 + $0x3d0] sm:$0xff]
        %v365 = vld [vmem:[%s188 + $0x3d8] sm:$0xff]
        %v366 = vld [vmem:[%s188 + $0x3e0] sm:$0xff]
        %v367 = vld [vmem:[%s188 + $0x3e8] sm:$0xff]
        %v368 = vld [vmem:[%s188 + $0x3f0] sm:$0xff]
        %v369 = vld [vmem:[%s188 + $0x3f8] sm:$0xff]
        %v370 = vld [vmem:[%s188 + $0x400] sm:$0xff]
        %v371 = vld [vmem:[%s188 + $0x408] sm:$0xff]
        %v372 = vld [vmem:[%s188 + $0x410] sm:$0xff]
        %v373 = vld [vmem:[%s188 + $0x418] sm:$0xff]
        %v374 = vld [vmem:[%s188 + $0x420] sm:$0xff]
        %v375 = vld [vmem:[%s188 + $0x428] sm:$0xff]
        %v376 = vld [vmem:[%s188 + $0x430] sm:$0xff]
        %v377 = vld [vmem:[%s188 + $0x438] sm:$0xff]
        %v378 = vld [vmem:[%s188 + $0x440] sm:$0xff]
        %v379 = vld [vmem:[%s188 + $0x448] sm:$0xff]
        %v380 = vld [vmem:[%s188 + $0x450] sm:$0xff]
        %v381 = vld [vmem:[%s188 + $0x458] sm:$0xff]
        %v382 = vld [vmem:[%s188 + $0x460] sm:$0xff]
        %v383 = vld [vmem:[%s188 + $0x468] sm:$0xff]
        %v384 = vld [vmem:[%s188 + $0x470] sm:$0xff]
        %v385 = vld [vmem:[%s188 + $0x478] sm:$0xff]
        %v386 = vld [vmem:[%s188 + $0x480] sm:$0xff]
        %v387 = vld [vmem:[%s188 + $0x488] sm:$0xff]
        %v388 = vld [vmem:[%s188 + $0x490] sm:$0xff]
        %v389 = vld [vmem:[%s188 + $0x498] sm:$0xff]
        %v390 = vld [vmem:[%s188 + $0x4a0] sm:$0xff]
        %v391 = vld [vmem:[%s188 + $0x4a8] sm:$0xff]
        %v392 = vld [vmem:[%s188 + $0x4b0] sm:$0xff]
        %v393 = vld [vmem:[%s188 + $0x4b8] sm:$0xff]
        %v394 = vld [vmem:[%s188 + $0x4c0] sm:$0xff]
        %v395 = vld [vmem:[%s188 + $0x4c8] sm:$0xff]
        %v396 = vld [vmem:[%s188 + $0x4d0] sm:$0xff]
        %v397 = vld [vmem:[%s188 + $0x4d8] sm:$0xff]
        %v398 = vld [vmem:[%s188 + $0x4e0] sm:$0xff]
        %v399 = vld [vmem:[%s188 + $0x4e8] sm:$0xff]
        %v400 = vld [vmem:[%s188 + $0x4f0] sm:$0xff]
        %v401 = vld [vmem:[%s188 + $0x4f8] sm:$0xff]
        %v402 = vld [vmem:[%s188 + $0x500] sm:$0xff]
        %v403 = vld [vmem:[%s188 + $0x508] sm:$0xff]
        %v404 = vld [vmem:[%s188 + $0x510] sm:$0xff]
        %v405 = vld [vmem:[%s188 + $0x518] sm:$0xff]
        %v406 = vld [vmem:[%s188 + $0x520] sm:$0xff]
        %v407 = vld [vmem:[%s188 + $0x528] sm:$0xff]
        %v408 = vld [vmem:[%s188 + $0x530] sm:$0xff]
        %v409 = vld [vmem:[%s188 + $0x538] sm:$0xff]
        %v410 = vld [vmem:[%s188 + $0x540] sm:$0xff]
        %v411 = vld [vmem:[%s188 + $0x548] sm:$0xff]
        %v412 = vld [vmem:[%s188 + $0x550] sm:$0xff]
        %v413 = vld [vmem:[%s188 + $0x558] sm:$0xff]
        %v414 = vld [vmem:[%s188 + $0x560] sm:$0xff]
        %v415 = vld [vmem:[%s188 + $0x568] sm:$0xff]
        %v416 = vld [vmem:[%s188 + $0x570] sm:$0xff]
        %v417 = vld [vmem:[%s188 + $0x578] sm:$0xff]
        %v418 = vld [vmem:[%s188 + $0x580] sm:$0xff]
        %v419 = vld [vmem:[%s188 + $0x588] sm:$0xff]
        %v420 = vld [vmem:[%s188 + $0x590] sm:$0xff]
        %v421 = vld [vmem:[%s188 + $0x598] sm:$0xff]
        %v422 = vld [vmem:[%s188 + $0x5a0] sm:$0xff]
        %v423 = vld [vmem:[%s188 + $0x5a8] sm:$0xff]
        %v424 = vld [vmem:[%s188 + $0x5b0] sm:$0xff]
        %v425 = vld [vmem:[%s188 + $0x5b8] sm:$0xff]
        %v426 = vld [vmem:[%s188 + $0x5c0] sm:$0xff]
        %v427 = vld [vmem:[%s188 + $0x5c8] sm:$0xff]
        %v428 = vld [vmem:[%s188 + $0x5d0] sm:$0xff]
        %v429 = vld [vmem:[%s188 + $0x5d8] sm:$0xff]
        %v430 = vld [vmem:[%s188 + $0x5e0] sm:$0xff]
        %v431 = vld [vmem:[%s188 + $0x5e8] sm:$0xff]
        %v432 = vld [vmem:[%s188 + $0x5f0] sm:$0xff]
        %v433 = vld [vmem:[%s188 + $0x5f8] sm:$0xff]
        %v434 = vld [vmem:[%s188 + $0x600] sm:$0xff]
        %v435 = vld [vmem:[%s188 + $0x608] sm:$0xff]
        %v436 = vld [vmem:[%s188 + $0x610] sm:$0xff]
        %v437 = vld [vmem:[%s188 + $0x618] sm:$0xff]
        %v438 = vld [vmem:[%s188 + $0x620] sm:$0xff]
        %v439 = vld [vmem:[%s188 + $0x628] sm:$0xff]
        %v440 = vld [vmem:[%s188 + $0x630] sm:$0xff]
        %v441 = vld [vmem:[%s188 + $0x638] sm:$0xff]
        %v442 = vld [vmem:[%s188 + $0x640] sm:$0xff]
        %v443 = vld [vmem:[%s188 + $0x648] sm:$0xff]
        %v444 = vld [vmem:[%s188 + $0x650] sm:$0xff]
        %v445 = vld [vmem:[%s188 + $0x658] sm:$0xff]
        %v446 = vld [vmem:[%s188 + $0x660] sm:$0xff]
        %v447 = vld [vmem:[%s188 + $0x668] sm:$0xff]
        %v448 = vld [vmem:[%s188 + $0x670] sm:$0xff]
        %v449 = vld [vmem:[%s188 + $0x678] sm:$0xff]
        %v450 = vld [vmem:[%s188 + $0x680] sm:$0xff]
        %v451 = vld [vmem:[%s188 + $0x688] sm:$0xff]
        %v452 = vld [vmem:[%s188 + $0x690] sm:$0xff]
        %v453 = vld [vmem:[%s188 + $0x698] sm:$0xff]
        %v454 = vld [vmem:[%s188 + $0x6a0] sm:$0xff]
        %v455 = vld [vmem:[%s188 + $0x6a8] sm:$0xff]
        %v456 = vld [vmem:[%s188 + $0x6b0] sm:$0xff]
        %v457 = vld [vmem:[%s188 + $0x6b8] sm:$0xff]
        %v458 = vld [vmem:[%s188 + $0x6c0] sm:$0xff]
        %v459 = vld [vmem:[%s188 + $0x6c8] sm:$0xff]
        %v460 = vld [vmem:[%s188 + $0x6d0] sm:$0xff]
        %v461 = vld [vmem:[%s188 + $0x6d8] sm:$0xff]
        %v462 = vld [vmem:[%s188 + $0x6e0] sm:$0xff]
        %v463 = vld [vmem:[%s188 + $0x6e8] sm:$0xff]
        %v464 = vld [vmem:[%s188 + $0x6f0] sm:$0xff]
        %v465 = vld [vmem:[%s188 + $0x6f8] sm:$0xff]
        %v466 = vld [vmem:[%s188 + $0x700] sm:$0xff]
        %v467 = vld [vmem:[%s188 + $0x708] sm:$0xff]
        %v468 = vld [vmem:[%s188 + $0x710] sm:$0xff]
        %v469 = vld [vmem:[%s188 + $0x718] sm:$0xff]
        %v470 = vld [vmem:[%s188 + $0x720] sm:$0xff]
        %v471 = vld [vmem:[%s188 + $0x728] sm:$0xff]
        %v472 = vld [vmem:[%s188 + $0x730] sm:$0xff]
        %v473 = vld [vmem:[%s188 + $0x738] sm:$0xff]
        %v474 = vld [vmem:[%s188 + $0x740] sm:$0xff]
        %v475 = vld [vmem:[%s188 + $0x748] sm:$0xff]
        %v476 = vld [vmem:[%s188 + $0x750] sm:$0xff]
        %v477 = vld [vmem:[%s188 + $0x758] sm:$0xff]
        %v478 = vld [vmem:[%s188 + $0x760] sm:$0xff]
        %v479 = vld [vmem:[%s188 + $0x768] sm:$0xff]
        %v480 = vld [vmem:[%s188 + $0x770] sm:$0xff]
        %v481 = vld [vmem:[%s188 + $0x778] sm:$0xff]
        %v482 = vld [vmem:[%s188 + $0x780] sm:$0xff]
        %v483 = vld [vmem:[%s188 + $0x788] sm:$0xff]
        %v484 = vld [vmem:[%s188 + $0x790] sm:$0xff]
        %v485 = vld [vmem:[%s188 + $0x798] sm:$0xff]
        %v486 = vld [vmem:[%s188 + $0x7a0] sm:$0xff]
        %v487 = vld [vmem:[%s188 + $0x7a8] sm:$0xff]
        %v488 = vld [vmem:[%s188 + $0x7b0] sm:$0xff]
        %v489 = vld [vmem:[%s188 + $0x7b8] sm:$0xff]
        %v490 = vld [vmem:[%s188 + $0x7c0] sm:$0xff]
        %v491 = vld [vmem:[%s188 + $0x7c8] sm:$0xff]
        %v492 = vld [vmem:[%s188 + $0x7d0] sm:$0xff]
        %v493 = vld [vmem:[%s188 + $0x7d8] sm:$0xff]
        %v494 = vld [vmem:[%s188 + $0x7e0] sm:$0xff]
        %v495 = vld [vmem:[%s188 + $0x7e8] sm:$0xff]
        %v496 = vld [vmem:[%s188 + $0x7f0] sm:$0xff]
        %v497 = vld [vmem:[%s188 + $0x7f8] sm:$0xff]
        %v498 = vld [vmem:[%s188 + $0x800] sm:$0xff]
        %v499 = vld [vmem:[%s188 + $0x808] sm:$0xff]
        %v500 = vld [vmem:[%s188 + $0x810] sm:$0xff]
        %v501 = vld [vmem:[%s188 + $0x818] sm:$0xff]
        %v502 = vld [vmem:[%s188 + $0x820] sm:$0xff]
        %v503 = vld [vmem:[%s188 + $0x828] sm:$0xff]
        %v504 = vld [vmem:[%s188 + $0x830] sm:$0xff]
        %v505 = vld [vmem:[%s188 + $0x838] sm:$0xff]
        %v506 = vld [vmem:[%s188 + $0x840] sm:$0xff]
        %v507 = vld [vmem:[%s188 + $0x848] sm:$0xff]
        %v508 = vld [vmem:[%s188 + $0x850] sm:$0xff]
        %v509 = vld [vmem:[%s188 + $0x858] sm:$0xff]
        %v510 = vld [vmem:[%s188 + $0x860] sm:$0xff]
        %v511 = vld [vmem:[%s188 + $0x868] sm:$0xff]
        %v512 = vld [vmem:[%s188 + $0x870] sm:$0xff]
        %v513 = vld [vmem:[%s188 + $0x878] sm:$0xff]
        %v514 = vld [vmem:[%s188 + $0x880] sm:$0xff]
        %v515 = vld [vmem:[%s188 + $0x888] sm:$0xff]
        %v516 = vld [vmem:[%s188 + $0x890] sm:$0xff]
        %v517 = vld [vmem:[%s188 + $0x898] sm:$0xff]
        %v518 = vld [vmem:[%s188 + $0x8a0] sm:$0xff]
        %v519 = vld [vmem:[%s188 + $0x8a8] sm:$0xff]
        %v520 = vld [vmem:[%s188 + $0x8b0] sm:$0xff]
        %v521 = vld [vmem:[%s188 + $0x8b8] sm:$0xff]
        %v522 = vld [vmem:[%s188 + $0x8c0] sm:$0xff]
        %v523 = vld [vmem:[%s188 + $0x8c8] sm:$0xff]
        %v524 = vld [vmem:[%s188 + $0x8d0] sm:$0xff]
        %v525 = vld [vmem:[%s188 + $0x8d8] sm:$0xff]
        %v526 = vld [vmem:[%s188 + $0x8e0] sm:$0xff]
        %v527 = vld [vmem:[%s188 + $0x8e8] sm:$0xff]
        %v528 = vld [vmem:[%s188 + $0x8f0] sm:$0xff]
        %v529 = vld [vmem:[%s188 + $0x8f8] sm:$0xff]
        %v530 = vld [vmem:[%s188 + $0x900] sm:$0xff]
        %v531 = vld [vmem:[%s188 + $0x908] sm:$0xff]
        %v532 = vld [vmem:[%s188 + $0x910] sm:$0xff]
        %v533 = vld [vmem:[%s188 + $0x918] sm:$0xff]
        %v534 = vld [vmem:[%s188 + $0x920] sm:$0xff]
        %v535 = vld [vmem:[%s188 + $0x928] sm:$0xff]
        %v536 = vld [vmem:[%s188 + $0x930] sm:$0xff]
        %v537 = vld [vmem:[%s188 + $0x938] sm:$0xff]
        %v538 = vld [vmem:[%s188 + $0x940] sm:$0xff]
        %v539 = vld [vmem:[%s188 + $0x948] sm:$0xff]
        %v540 = vld [vmem:[%s188 + $0x950] sm:$0xff]
        %v541 = vld [vmem:[%s188 + $0x958] sm:$0xff]
        %v542 = vld [vmem:[%s188 + $0x960] sm:$0xff]
        %v543 = vld [vmem:[%s188 + $0x968] sm:$0xff]
        %v544 = vld [vmem:[%s188 + $0x970] sm:$0xff]
        %v545 = vld [vmem:[%s188 + $0x978] sm:$0xff]
        %v546 = vld [vmem:[%s188 + $0x980] sm:$0xff]
        %v547 = vld [vmem:[%s188 + $0x988] sm:$0xff]
        %v548 = vld [vmem:[%s188 + $0x990] sm:$0xff]
        %v549 = vld [vmem:[%s188 + $0x998] sm:$0xff]
        %v550 = vld [vmem:[%s188 + $0x9a0] sm:$0xff]
        %v551 = vld [vmem:[%s188 + $0x9a8] sm:$0xff]
        %v552 = vld [vmem:[%s188 + $0x9b0] sm:$0xff]
        %v553 = vld [vmem:[%s188 + $0x9b8] sm:$0xff]
        %v554 = vld [vmem:[%s188 + $0x9c0] sm:$0xff]
        %v555 = vld [vmem:[%s188 + $0x9c8] sm:$0xff]
        %v556 = vld [vmem:[%s188 + $0x9d0] sm:$0xff]
        %v557 = vld [vmem:[%s188 + $0x9d8] sm:$0xff]
        %v558 = vld [vmem:[%s188 + $0x9e0] sm:$0xff]
        %v559 = vld [vmem:[%s188 + $0x9e8] sm:$0xff]
        %v560 = vld [vmem:[%s188 + $0x9f0] sm:$0xff]
        %v561 = vld [vmem:[%s188 + $0x9f8] sm:$0xff]
        %v562 = vld [vmem:[%s188 + $0xa00] sm:$0xff]
        %v563 = vld [vmem:[%s188 + $0xa08] sm:$0xff]
        %v564 = vld [vmem:[%s188 + $0xa10] sm:$0xff]
        %v565 = vld [vmem:[%s188 + $0xa18] sm:$0xff]
        %v566 = vld [vmem:[%s188 + $0xa20] sm:$0xff]
        %v567 = vld [vmem:[%s188 + $0xa28] sm:$0xff]
        %v568 = vld [vmem:[%s188 + $0xa30] sm:$0xff]
        %v569 = vld [vmem:[%s188 + $0xa38] sm:$0xff]
        %v570 = vld [vmem:[%s188 + $0xa40] sm:$0xff]
        %v571 = vld [vmem:[%s188 + $0xa48] sm:$0xff]
        %v572 = vld [vmem:[%s188 + $0xa50] sm:$0xff]
        %v573 = vld [vmem:[%s188 + $0xa58] sm:$0xff]
        %v574 = vld [vmem:[%s188 + $0xa60] sm:$0xff]
        %v575 = vld [vmem:[%s188 + $0xa68] sm:$0xff]
        %v576 = vld [vmem:[%s188 + $0xa70] sm:$0xff]
        %v577 = vld [vmem:[%s188 + $0xa78] sm:$0xff]
        %v578 = vld [vmem:[%s188 + $0xa80] sm:$0xff]
        %v579 = vld [vmem:[%s188 + $0xa88] sm:$0xff]
        %v580 = vld [vmem:[%s188 + $0xa90] sm:$0xff]
        %v581 = vld [vmem:[%s188 + $0xa98] sm:$0xff]
        %v582 = vld [vmem:[%s188 + $0xaa0] sm:$0xff]
        %v583 = vld [vmem:[%s188 + $0xaa8] sm:$0xff]
        %v584 = vld [vmem:[%s188 + $0xab0] sm:$0xff]
        %v585 = vld [vmem:[%s188 + $0xab8] sm:$0xff]
        %v586 = vld [vmem:[%s188 + $0xac0] sm:$0xff]
        %v587 = vld [vmem:[%s188 + $0xac8] sm:$0xff]
        %v588 = vld [vmem:[%s188 + $0xad0] sm:$0xff]
        %v589 = vld [vmem:[%s188 + $0xad8] sm:$0xff]
        %v590 = vld [vmem:[%s188 + $0xae0] sm:$0xff]
        %v591 = vld [vmem:[%s188 + $0xae8] sm:$0xff]
        %v592 = vld [vmem:[%s188 + $0xaf0] sm:$0xff]
        %v593 = vld [vmem:[%s188 + $0xaf8] sm:$0xff]
        %v594 = vld [vmem:[%s188 + $0xb00] sm:$0xff]
        %v595 = vld [vmem:[%s188 + $0xb08] sm:$0xff]
        %v596 = vld [vmem:[%s188 + $0xb10] sm:$0xff]
        %v597 = vld [vmem:[%s188 + $0xb18] sm:$0xff]
        %v598 = vld [vmem:[%s188 + $0xb20] sm:$0xff]
        %v599 = vld [vmem:[%s188 + $0xb28] sm:$0xff]
        %v600 = vld [vmem:[%s188 + $0xb30] sm:$0xff]
        %v601 = vld [vmem:[%s188 + $0xb38] sm:$0xff]
        %v602 = vld [vmem:[%s188 + $0xb40] sm:$0xff]
        %v603 = vld [vmem:[%s188 + $0xb48] sm:$0xff]
        %v604 = vld [vmem:[%s188 + $0xb50] sm:$0xff]
        %v605 = vld [vmem:[%s188 + $0xb58] sm:$0xff]
        %v606 = vld [vmem:[%s188 + $0xb60] sm:$0xff]
        %v607 = vld [vmem:[%s188 + $0xb68] sm:$0xff]
        %v608 = vld [vmem:[%s188 + $0xb70] sm:$0xff]
        %v609 = vld [vmem:[%s188 + $0xb78] sm:$0xff]
        %v610 = vld [vmem:[%s188 + $0xb80] sm:$0xff]
        %v611 = vld [vmem:[%s188 + $0xb88] sm:$0xff]
        %v612 = vld [vmem:[%s188 + $0xb90] sm:$0xff]
        %v613 = vld [vmem:[%s188 + $0xb98] sm:$0xff]
        %v614 = vld [vmem:[%s188 + $0xba0] sm:$0xff]
        %v615 = vld [vmem:[%s188 + $0xba8] sm:$0xff]
        %v616 = vld [vmem:[%s188 + $0xbb0] sm:$0xff]
        %v617 = vld [vmem:[%s188 + $0xbb8] sm:$0xff]
        %v618 = vld [vmem:[%s188 + $0xbc0] sm:$0xff]
        %v619 = vld [vmem:[%s188 + $0xbc8] sm:$0xff]
        %v620 = vld [vmem:[%s188 + $0xbd0] sm:$0xff]
        %v621 = vld [vmem:[%s188 + $0xbd8] sm:$0xff]
        %v622 = vld [vmem:[%s188 + $0xbe0] sm:$0xff]
        %v623 = vld [vmem:[%s188 + $0xbe8] sm:$0xff]
        %v624 = vld [vmem:[%s188 + $0xbf0] sm:$0xff]
        %v625 = vld [vmem:[%s188 + $0xbf8] sm:$0xff]
        %v626 = vld [vmem:[%s188 + $0xc00] sm:$0xff]
        %v627 = vld [vmem:[%s188 + $0xc08] sm:$0xff]
        %v628 = vld [vmem:[%s188 + $0xc10] sm:$0xff]
        %v629 = vld [vmem:[%s188 + $0xc18] sm:$0xff]
        %v630 = vld [vmem:[%s188 + $0xc20] sm:$0xff]
        %v631 = vld [vmem:[%s188 + $0xc28] sm:$0xff]
        %v632 = vld [vmem:[%s188 + $0xc30] sm:$0xff]
        %v633 = vld [vmem:[%s188 + $0xc38] sm:$0xff]
        %v634 = vld [vmem:[%s188 + $0xc40] sm:$0xff]
        %v635 = vld [vmem:[%s188 + $0xc48] sm:$0xff]
        %v636 = vld [vmem:[%s188 + $0xc50] sm:$0xff]
        %v637 = vld [vmem:[%s188 + $0xc58] sm:$0xff]
        %v638 = vld [vmem:[%s188 + $0xc60] sm:$0xff]
        %v639 = vld [vmem:[%s188 + $0xc68] sm:$0xff]
        %v640 = vld [vmem:[%s188 + $0xc70] sm:$0xff]
        %v641 = vld [vmem:[%s188 + $0xc78] sm:$0xff]
        %v642 = vld [vmem:[%s188 + $0xc80] sm:$0xff]
        %v643 = vld [vmem:[%s188 + $0xc88] sm:$0xff]
        %v644 = vld [vmem:[%s188 + $0xc90] sm:$0xff]
        %v645 = vld [vmem:[%s188 + $0xc98] sm:$0xff]
        %v646 = vld [vmem:[%s188 + $0xca0] sm:$0xff]
        %v647 = vld [vmem:[%s188 + $0xca8] sm:$0xff]
        %v648 = vld [vmem:[%s188 + $0xcb0] sm:$0xff]
        %v649 = vld [vmem:[%s188 + $0xcb8] sm:$0xff]
        %v650 = vld [vmem:[%s188 + $0xcc0] sm:$0xff]
        %v651 = vld [vmem:[%s188 + $0xcc8] sm:$0xff]
        %v652 = vld [vmem:[%s188 + $0xcd0] sm:$0xff]
        %v653 = vld [vmem:[%s188 + $0xcd8] sm:$0xff]
        %v654 = vld [vmem:[%s188 + $0xce0] sm:$0xff]
        %v655 = vld [vmem:[%s188 + $0xce8] sm:$0xff]
        %v656 = vld [vmem:[%s188 + $0xcf0] sm:$0xff]
        %v657 = vld [vmem:[%s188 + $0xcf8] sm:$0xff]
        %v658 = vld [vmem:[%s188 + $0xd00] sm:$0xff]
        %v659 = vld [vmem:[%s188 + $0xd08] sm:$0xff]
        %v660 = vld [vmem:[%s188 + $0xd10] sm:$0xff]
        %v661 = vld [vmem:[%s188 + $0xd18] sm:$0xff]
        %v662 = vld [vmem:[%s188 + $0xd20] sm:$0xff]
        %v663 = vld [vmem:[%s188 + $0xd28] sm:$0xff]
        %v664 = vld [vmem:[%s188 + $0xd30] sm:$0xff]
        %v665 = vld [vmem:[%s188 + $0xd38] sm:$0xff]
        %v666 = vld [vmem:[%s188 + $0xd40] sm:$0xff]
        %v667 = vld [vmem:[%s188 + $0xd48] sm:$0xff]
        %v668 = vld [vmem:[%s188 + $0xd50] sm:$0xff]
        %v669 = vld [vmem:[%s188 + $0xd58] sm:$0xff]
        %v670 = vld [vmem:[%s188 + $0xd60] sm:$0xff]
        %v671 = vld [vmem:[%s188 + $0xd68] sm:$0xff]
        %v672 = vld [vmem:[%s188 + $0xd70] sm:$0xff]
        %v673 = vld [vmem:[%s188 + $0xd78] sm:$0xff]
        %v674 = vld [vmem:[%s188 + $0xd80] sm:$0xff]
        %v675 = vld [vmem:[%s188 + $0xd88] sm:$0xff]
        %v676 = vld [vmem:[%s188 + $0xd90] sm:$0xff]
        %v677 = vld [vmem:[%s188 + $0xd98] sm:$0xff]
        %v678 = vld [vmem:[%s188 + $0xda0] sm:$0xff]
        %v679 = vld [vmem:[%s188 + $0xda8] sm:$0xff]
        %v680 = vld [vmem:[%s188 + $0xdb0] sm:$0xff]
        %v681 = vld [vmem:[%s188 + $0xdb8] sm:$0xff]
        %v682 = vld [vmem:[%s188 + $0xdc0] sm:$0xff]
        %v683 = vld [vmem:[%s188 + $0xdc8] sm:$0xff]
        %v684 = vld [vmem:[%s188 + $0xdd0] sm:$0xff]
        %v685 = vld [vmem:[%s188 + $0xdd8] sm:$0xff]
        %v686 = vld [vmem:[%s188 + $0xde0] sm:$0xff]
        %v687 = vld [vmem:[%s188 + $0xde8] sm:$0xff]
        %v688 = vld [vmem:[%s188 + $0xdf0] sm:$0xff]
        %v689 = vld [vmem:[%s188 + $0xdf8] sm:$0xff]
        %v690 = vld [vmem:[%s188 + $0xe00] sm:$0xff]
        %v691 = vld [vmem:[%s188 + $0xe08] sm:$0xff]
        %v692 = vld [vmem:[%s188 + $0xe10] sm:$0xff]
        %v693 = vld [vmem:[%s188 + $0xe18] sm:$0xff]
        %v694 = vld [vmem:[%s188 + $0xe20] sm:$0xff]
        %v695 = vld [vmem:[%s188 + $0xe28] sm:$0xff]
        %v696 = vld [vmem:[%s188 + $0xe30] sm:$0xff]
        %v697 = vld [vmem:[%s188 + $0xe38] sm:$0xff]
        %v698 = vld [vmem:[%s188 + $0xe40] sm:$0xff]
        %v699 = vld [vmem:[%s188 + $0xe48] sm:$0xff]
        %v700 = vld [vmem:[%s188 + $0xe50] sm:$0xff]
        %v701 = vld [vmem:[%s188 + $0xe58] sm:$0xff]
        %v702 = vld [vmem:[%s188 + $0xe60] sm:$0xff]
        %v703 = vld [vmem:[%s188 + $0xe68] sm:$0xff]
        %v704 = vld [vmem:[%s188 + $0xe70] sm:$0xff]
        %v705 = vld [vmem:[%s188 + $0xe78] sm:$0xff]
        %v706 = vld [vmem:[%s188 + $0xe80] sm:$0xff]
        %v707 = vld [vmem:[%s188 + $0xe88] sm:$0xff]
        %v708 = vld [vmem:[%s188 + $0xe90] sm:$0xff]
        %v709 = vld [vmem:[%s188 + $0xe98] sm:$0xff]
        %v710 = vld [vmem:[%s188 + $0xea0] sm:$0xff]
        %v711 = vld [vmem:[%s188 + $0xea8] sm:$0xff]
        %v712 = vld [vmem:[%s188 + $0xeb0] sm:$0xff]
        %v713 = vld [vmem:[%s188 + $0xeb8] sm:$0xff]
        %v714 = vld [vmem:[%s188 + $0xec0] sm:$0xff]
        %v715 = vld [vmem:[%s188 + $0xec8] sm:$0xff]
        %v716 = vld [vmem:[%s188 + $0xed0] sm:$0xff]
        %v717 = vld [vmem:[%s188 + $0xed8] sm:$0xff]
        %v718 = vld [vmem:[%s188 + $0xee0] sm:$0xff]
        %v719 = vld [vmem:[%s188 + $0xee8] sm:$0xff]
        %v720 = vld [vmem:[%s188 + $0xef0] sm:$0xff]
        %v721 = vld [vmem:[%s188 + $0xef8] sm:$0xff]
        %v722 = vld [vmem:[%s188 + $0xf00] sm:$0xff]
        %v723 = vld [vmem:[%s188 + $0xf08] sm:$0xff]
        %v724 = vld [vmem:[%s188 + $0xf10] sm:$0xff]
        %v725 = vld [vmem:[%s188 + $0xf18] sm:$0xff]
        %v726 = vld [vmem:[%s188 + $0xf20] sm:$0xff]
        %v727 = vld [vmem:[%s188 + $0xf28] sm:$0xff]
        %v728 = vld [vmem:[%s188 + $0xf30] sm:$0xff]
        %v729 = vld [vmem:[%s188 + $0xf38] sm:$0xff]
        %v730 = vld [vmem:[%s188 + $0xf40] sm:$0xff]
        %v731 = vld [vmem:[%s188 + $0xf48] sm:$0xff]
        %v732 = vld [vmem:[%s188 + $0xf50] sm:$0xff]
        %v733 = vld [vmem:[%s188 + $0xf58] sm:$0xff]
        %v734 = vld [vmem:[%s188 + $0xf60] sm:$0xff]
        %v735 = vld [vmem:[%s188 + $0xf68] sm:$0xff]
        %v736 = vld [vmem:[%s188 + $0xf70] sm:$0xff]
        %v737 = vld [vmem:[%s188 + $0xf78] sm:$0xff]
        %v738 = vld [vmem:[%s188 + $0xf80] sm:$0xff]
        %v739 = vld [vmem:[%s188 + $0xf88] sm:$0xff]
        %v740 = vld [vmem:[%s188 + $0xf90] sm:$0xff]
        %v741 = vld [vmem:[%s188 + $0xf98] sm:$0xff]
        %v742 = vld [vmem:[%s188 + $0xfa0] sm:$0xff]
        %v743 = vld [vmem:[%s188 + $0xfa8] sm:$0xff]
        %v744 = vld [vmem:[%s188 + $0xfb0] sm:$0xff]
        %v745 = vld [vmem:[%s188 + $0xfb8] sm:$0xff]
        %v746 = vld [vmem:[%s188 + $0xfc0] sm:$0xff]
        %v747 = vld [vmem:[%s188 + $0xfc8] sm:$0xff]
        %v748 = vld [vmem:[%s188 + $0xfd0] sm:$0xff]
        %v749 = vld [vmem:[%s188 + $0xfd8] sm:$0xff]
        %v750 = vld [vmem:[%s188 + $0xfe0] sm:$0xff]
        %v751 = vld [vmem:[%s188 + $0xfe8] sm:$0xff]
        %v752 = vld [vmem:[%s188 + $0xff0] sm:$0xff]
        %v753 = vld [vmem:[%s188 + $0xff8] sm:$0xff]
        %v754 = vld [vmem:[%s230] sm:$0xff]
        %v755 = vld [vmem:[%s230 + $0x8] sm:$0xff]
        %v756 = vld [vmem:[%s230 + $0x10] sm:$0xff]
        %v757 = vld [vmem:[%s230 + $0x18] sm:$0xff]
        %v758 = vld [vmem:[%s230 + $0x20] sm:$0xff]
        %v759 = vld [vmem:[%s230 + $0x28] sm:$0xff]
        %v760 = vld [vmem:[%s230 + $0x30] sm:$0xff]
        %v761 = vld [vmem:[%s230 + $0x38] sm:$0xff]
        %v762 = vld [vmem:[%s230 + $0x40] sm:$0xff]
        %v763 = vld [vmem:[%s230 + $0x48] sm:$0xff]
        %v764 = vld [vmem:[%s230 + $0x50] sm:$0xff]
        %v765 = vld [vmem:[%s230 + $0x58] sm:$0xff]
        %v766 = vld [vmem:[%s230 + $0x60] sm:$0xff]
        %v767 = vld [vmem:[%s230 + $0x68] sm:$0xff]
        %v768 = vld [vmem:[%s230 + $0x70] sm:$0xff]
        %v769 = vld [vmem:[%s230 + $0x78] sm:$0xff]
        %v786 = vlaneseq
        %v787 = vshrl.u32 %v786, 7
        %v788 = vsub.s32 0, %v787
        %v789 = vrot.slane %v754, %v788
        %v790 = vlaneseq
        %v791 = vshrl.u32 %v790, 7
        %v792 = vsub.s32 1, %v791
        %v793 = vrot.slane %v754, %v792
        %v794 = vlaneseq
        %v795 = vshrl.u32 %v794, 7
        %v796 = vsub.s32 2, %v795
        %v797 = vrot.slane %v754, %v796
        %v798 = vlaneseq
        %v799 = vshrl.u32 %v798, 7
        %v800 = vsub.s32 3, %v799
        %v801 = vrot.slane %v754, %v800
        %v802 = vlaneseq
        %v803 = vshrl.u32 %v802, 7
        %v804 = vsub.s32 4, %v803
        %v805 = vrot.slane %v754, %v804
        %v806 = vlaneseq
        %v807 = vshrl.u32 %v806, 7
        %v808 = vsub.s32 5, %v807
        %v809 = vrot.slane %v754, %v808
        %v810 = vlaneseq
        %v811 = vshrl.u32 %v810, 7
        %v812 = vsub.s32 6, %v811
        %v813 = vrot.slane %v754, %v812
        %v814 = vlaneseq
        %v815 = vshrl.u32 %v814, 7
        %v816 = vsub.s32 7, %v815
        %v817 = vrot.slane %v754, %v816
        %v818 = vlaneseq
        %v819 = vshrl.u32 %v818, 7
        %v820 = vsub.s32 0, %v819
        %v821 = vrot.slane %v755, %v820
        %v822 = vlaneseq
        %v823 = vshrl.u32 %v822, 7
        %v824 = vsub.s32 1, %v823
        %v825 = vrot.slane %v755, %v824
        %v826 = vlaneseq
        %v827 = vshrl.u32 %v826, 7
        %v828 = vsub.s32 2, %v827
        %v829 = vrot.slane %v755, %v828
        %v830 = vlaneseq
        %v831 = vshrl.u32 %v830, 7
        %v832 = vsub.s32 3, %v831
        %v833 = vrot.slane %v755, %v832
        %v834 = vlaneseq
        %v835 = vshrl.u32 %v834, 7
        %v836 = vsub.s32 4, %v835
        %v837 = vrot.slane %v755, %v836
        %v838 = vlaneseq
        %v839 = vshrl.u32 %v838, 7
        %v840 = vsub.s32 5, %v839
        %v841 = vrot.slane %v755, %v840
        %v842 = vlaneseq
        %v843 = vshrl.u32 %v842, 7
        %v844 = vsub.s32 6, %v843
        %v845 = vrot.slane %v755, %v844
        %v846 = vlaneseq
        %v847 = vshrl.u32 %v846, 7
        %v848 = vsub.s32 7, %v847
        %v849 = vrot.slane %v755, %v848
        %v850 = vlaneseq
        %v851 = vshrl.u32 %v850, 7
        %v852 = vsub.s32 0, %v851
        %v853 = vrot.slane %v756, %v852
        %v854 = vlaneseq
        %v855 = vshrl.u32 %v854, 7
        %v856 = vsub.s32 1, %v855
        %v857 = vrot.slane %v756, %v856
        %v858 = vlaneseq
        %v859 = vshrl.u32 %v858, 7
        %v860 = vsub.s32 2, %v859
        %v861 = vrot.slane %v756, %v860
        %v862 = vlaneseq
        %v863 = vshrl.u32 %v862, 7
        %v864 = vsub.s32 3, %v863
        %v865 = vrot.slane %v756, %v864
        %v866 = vlaneseq
        %v867 = vshrl.u32 %v866, 7
        %v868 = vsub.s32 4, %v867
        %v869 = vrot.slane %v756, %v868
        %v870 = vlaneseq
        %v871 = vshrl.u32 %v870, 7
        %v872 = vsub.s32 5, %v871
        %v873 = vrot.slane %v756, %v872
        %v874 = vlaneseq
        %v875 = vshrl.u32 %v874, 7
        %v876 = vsub.s32 6, %v875
        %v877 = vrot.slane %v756, %v876
        %v878 = vlaneseq
        %v879 = vshrl.u32 %v878, 7
        %v880 = vsub.s32 7, %v879
        %v881 = vrot.slane %v756, %v880
        %v882 = vlaneseq
        %v883 = vshrl.u32 %v882, 7
        %v884 = vsub.s32 0, %v883
        %v885 = vrot.slane %v757, %v884
        %v886 = vlaneseq
        %v887 = vshrl.u32 %v886, 7
        %v888 = vsub.s32 1, %v887
        %v889 = vrot.slane %v757, %v888
        %v890 = vlaneseq
        %v891 = vshrl.u32 %v890, 7
        %v892 = vsub.s32 2, %v891
        %v893 = vrot.slane %v757, %v892
        %v894 = vlaneseq
        %v895 = vshrl.u32 %v894, 7
        %v896 = vsub.s32 3, %v895
        %v897 = vrot.slane %v757, %v896
        %v898 = vlaneseq
        %v899 = vshrl.u32 %v898, 7
        %v900 = vsub.s32 4, %v899
        %v901 = vrot.slane %v757, %v900
        %v902 = vlaneseq
        %v903 = vshrl.u32 %v902, 7
        %v904 = vsub.s32 5, %v903
        %v905 = vrot.slane %v757, %v904
        %v906 = vlaneseq
        %v907 = vshrl.u32 %v906, 7
        %v908 = vsub.s32 6, %v907
        %v909 = vrot.slane %v757, %v908
        %v910 = vlaneseq
        %v911 = vshrl.u32 %v910, 7
        %v912 = vsub.s32 7, %v911
        %v913 = vrot.slane %v757, %v912
        %v914 = vlaneseq
        %v915 = vshrl.u32 %v914, 7
        %v916 = vsub.s32 0, %v915
        %v917 = vrot.slane %v758, %v916
        %v918 = vlaneseq
        %v919 = vshrl.u32 %v918, 7
        %v920 = vsub.s32 1, %v919
        %v921 = vrot.slane %v758, %v920
        %v922 = vlaneseq
        %v923 = vshrl.u32 %v922, 7
        %v924 = vsub.s32 2, %v923
        %v925 = vrot.slane %v758, %v924
        %v926 = vlaneseq
        %v927 = vshrl.u32 %v926, 7
        %v928 = vsub.s32 3, %v927
        %v929 = vrot.slane %v758, %v928
        %v930 = vlaneseq
        %v931 = vshrl.u32 %v930, 7
        %v932 = vsub.s32 4, %v931
        %v933 = vrot.slane %v758, %v932
        %v934 = vlaneseq
        %v935 = vshrl.u32 %v934, 7
        %v936 = vsub.s32 5, %v935
        %v937 = vrot.slane %v758, %v936
        %v938 = vlaneseq
        %v939 = vshrl.u32 %v938, 7
        %v940 = vsub.s32 6, %v939
        %v941 = vrot.slane %v758, %v940
        %v942 = vlaneseq
        %v943 = vshrl.u32 %v942, 7
        %v944 = vsub.s32 7, %v943
        %v945 = vrot.slane %v758, %v944
        %v946 = vlaneseq
        %v947 = vshrl.u32 %v946, 7
        %v948 = vsub.s32 0, %v947
        %v949 = vrot.slane %v759, %v948
        %v950 = vlaneseq
        %v951 = vshrl.u32 %v950, 7
        %v952 = vsub.s32 1, %v951
        %v953 = vrot.slane %v759, %v952
        %v954 = vlaneseq
        %v955 = vshrl.u32 %v954, 7
        %v956 = vsub.s32 2, %v955
        %v957 = vrot.slane %v759, %v956
        %v958 = vlaneseq
        %v959 = vshrl.u32 %v958, 7
        %v960 = vsub.s32 3, %v959
        %v961 = vrot.slane %v759, %v960
        %v962 = vlaneseq
        %v963 = vshrl.u32 %v962, 7
        %v964 = vsub.s32 4, %v963
        %v965 = vrot.slane %v759, %v964
        %v966 = vlaneseq
        %v967 = vshrl.u32 %v966, 7
        %v968 = vsub.s32 5, %v967
        %v969 = vrot.slane %v759, %v968
        %v970 = vlaneseq
        %v971 = vshrl.u32 %v970, 7
        %v972 = vsub.s32 6, %v971
        %v973 = vrot.slane %v759, %v972
        %v974 = vlaneseq
        %v975 = vshrl.u32 %v974, 7
        %v976 = vsub.s32 7, %v975
        %v977 = vrot.slane %v759, %v976
        %v978 = vlaneseq
        %v979 = vshrl.u32 %v978, 7
        %v980 = vsub.s32 0, %v979
        %v981 = vrot.slane %v760, %v980
        %v982 = vlaneseq
        %v983 = vshrl.u32 %v982, 7
        %v984 = vsub.s32 1, %v983
        %v985 = vrot.slane %v760, %v984
        %v986 = vlaneseq
        %v987 = vshrl.u32 %v986, 7
        %v988 = vsub.s32 2, %v987
        %v989 = vrot.slane %v760, %v988
        %v990 = vlaneseq
        %v991 = vshrl.u32 %v990, 7
        %v992 = vsub.s32 3, %v991
        %v993 = vrot.slane %v760, %v992
        %v994 = vlaneseq
        %v995 = vshrl.u32 %v994, 7
        %v996 = vsub.s32 4, %v995
        %v997 = vrot.slane %v760, %v996
        %v998 = vlaneseq
        %v999 = vshrl.u32 %v998, 7
        %v1000 = vsub.s32 5, %v999
        %v1001 = vrot.slane %v760, %v1000
        %v1002 = vlaneseq
        %v1003 = vshrl.u32 %v1002, 7
        %v1004 = vsub.s32 6, %v1003
        %v1005 = vrot.slane %v760, %v1004
        %v1006 = vlaneseq
        %v1007 = vshrl.u32 %v1006, 7
        %v1008 = vsub.s32 7, %v1007
        %v1009 = vrot.slane %v760, %v1008
        %v1010 = vlaneseq
        %v1011 = vshrl.u32 %v1010, 7
        %v1012 = vsub.s32 0, %v1011
        %v1013 = vrot.slane %v761, %v1012
        %v1014 = vlaneseq
        %v1015 = vshrl.u32 %v1014, 7
        %v1016 = vsub.s32 1, %v1015
        %v1017 = vrot.slane %v761, %v1016
        %v1018 = vlaneseq
        %v1019 = vshrl.u32 %v1018, 7
        %v1020 = vsub.s32 2, %v1019
        %v1021 = vrot.slane %v761, %v1020
        %v1022 = vlaneseq
        %v1023 = vshrl.u32 %v1022, 7
        %v1024 = vsub.s32 3, %v1023
        %v1025 = vrot.slane %v761, %v1024
        %v1026 = vlaneseq
        %v1027 = vshrl.u32 %v1026, 7
        %v1028 = vsub.s32 4, %v1027
        %v1029 = vrot.slane %v761, %v1028
        %v1030 = vlaneseq
        %v1031 = vshrl.u32 %v1030, 7
        %v1032 = vsub.s32 5, %v1031
        %v1033 = vrot.slane %v761, %v1032
        %v1034 = vlaneseq
        %v1035 = vshrl.u32 %v1034, 7
        %v1036 = vsub.s32 6, %v1035
        %v1037 = vrot.slane %v761, %v1036
        %v1038 = vlaneseq
        %v1039 = vshrl.u32 %v1038, 7
        %v1040 = vsub.s32 7, %v1039
        %v1041 = vrot.slane %v761, %v1040
        %v1042 = vlaneseq
        %v1043 = vshrl.u32 %v1042, 7
        %v1044 = vsub.s32 0, %v1043
        %v1045 = vrot.slane %v762, %v1044
        %v1046 = vlaneseq
        %v1047 = vshrl.u32 %v1046, 7
        %v1048 = vsub.s32 1, %v1047
        %v1049 = vrot.slane %v762, %v1048
        %v1050 = vlaneseq
        %v1051 = vshrl.u32 %v1050, 7
        %v1052 = vsub.s32 2, %v1051
        %v1053 = vrot.slane %v762, %v1052
        %v1054 = vlaneseq
        %v1055 = vshrl.u32 %v1054, 7
        %v1056 = vsub.s32 3, %v1055
        %v1057 = vrot.slane %v762, %v1056
        %v1058 = vlaneseq
        %v1059 = vshrl.u32 %v1058, 7
        %v1060 = vsub.s32 4, %v1059
        %v1061 = vrot.slane %v762, %v1060
        %v1062 = vlaneseq
        %v1063 = vshrl.u32 %v1062, 7
        %v1064 = vsub.s32 5, %v1063
        %v1065 = vrot.slane %v762, %v1064
        %v1066 = vlaneseq
        %v1067 = vshrl.u32 %v1066, 7
        %v1068 = vsub.s32 6, %v1067
        %v1069 = vrot.slane %v762, %v1068
        %v1070 = vlaneseq
        %v1071 = vshrl.u32 %v1070, 7
        %v1072 = vsub.s32 7, %v1071
        %v1073 = vrot.slane %v762, %v1072
        %v1074 = vlaneseq
        %v1075 = vshrl.u32 %v1074, 7
        %v1076 = vsub.s32 0, %v1075
        %v1077 = vrot.slane %v763, %v1076
        %v1078 = vlaneseq
        %v1079 = vshrl.u32 %v1078, 7
        %v1080 = vsub.s32 1, %v1079
        %v1081 = vrot.slane %v763, %v1080
        %v1082 = vlaneseq
        %v1083 = vshrl.u32 %v1082, 7
        %v1084 = vsub.s32 2, %v1083
        %v1085 = vrot.slane %v763, %v1084
        %v1086 = vlaneseq
        %v1087 = vshrl.u32 %v1086, 7
        %v1088 = vsub.s32 3, %v1087
        %v1089 = vrot.slane %v763, %v1088
        %v1090 = vlaneseq
        %v1091 = vshrl.u32 %v1090, 7
        %v1092 = vsub.s32 4, %v1091
        %v1093 = vrot.slane %v763, %v1092
        %v1094 = vlaneseq
        %v1095 = vshrl.u32 %v1094, 7
        %v1096 = vsub.s32 5, %v1095
        %v1097 = vrot.slane %v763, %v1096
        %v1098 = vlaneseq
        %v1099 = vshrl.u32 %v1098, 7
        %v1100 = vsub.s32 6, %v1099
        %v1101 = vrot.slane %v763, %v1100
        %v1102 = vlaneseq
        %v1103 = vshrl.u32 %v1102, 7
        %v1104 = vsub.s32 7, %v1103
        %v1105 = vrot.slane %v763, %v1104
        %v1106 = vlaneseq
        %v1107 = vshrl.u32 %v1106, 7
        %v1108 = vsub.s32 0, %v1107
        %v1109 = vrot.slane %v764, %v1108
        %v1110 = vlaneseq
        %v1111 = vshrl.u32 %v1110, 7
        %v1112 = vsub.s32 1, %v1111
        %v1113 = vrot.slane %v764, %v1112
        %v1114 = vlaneseq
        %v1115 = vshrl.u32 %v1114, 7
        %v1116 = vsub.s32 2, %v1115
        %v1117 = vrot.slane %v764, %v1116
        %v1118 = vlaneseq
        %v1119 = vshrl.u32 %v1118, 7
        %v1120 = vsub.s32 3, %v1119
        %v1121 = vrot.slane %v764, %v1120
        %v1122 = vlaneseq
        %v1123 = vshrl.u32 %v1122, 7
        %v1124 = vsub.s32 4, %v1123
        %v1125 = vrot.slane %v764, %v1124
        %v1126 = vlaneseq
        %v1127 = vshrl.u32 %v1126, 7
        %v1128 = vsub.s32 5, %v1127
        %v1129 = vrot.slane %v764, %v1128
        %v1130 = vlaneseq
        %v1131 = vshrl.u32 %v1130, 7
        %v1132 = vsub.s32 6, %v1131
        %v1133 = vrot.slane %v764, %v1132
        %v1134 = vlaneseq
        %v1135 = vshrl.u32 %v1134, 7
        %v1136 = vsub.s32 7, %v1135
        %v1137 = vrot.slane %v764, %v1136
        %v1138 = vlaneseq
        %v1139 = vshrl.u32 %v1138, 7
        %v1140 = vsub.s32 0, %v1139
        %v1141 = vrot.slane %v765, %v1140
        %v1142 = vlaneseq
        %v1143 = vshrl.u32 %v1142, 7
        %v1144 = vsub.s32 1, %v1143
        %v1145 = vrot.slane %v765, %v1144
        %v1146 = vlaneseq
        %v1147 = vshrl.u32 %v1146, 7
        %v1148 = vsub.s32 2, %v1147
        %v1149 = vrot.slane %v765, %v1148
        %v1150 = vlaneseq
        %v1151 = vshrl.u32 %v1150, 7
        %v1152 = vsub.s32 3, %v1151
        %v1153 = vrot.slane %v765, %v1152
        %v1154 = vlaneseq
        %v1155 = vshrl.u32 %v1154, 7
        %v1156 = vsub.s32 4, %v1155
        %v1157 = vrot.slane %v765, %v1156
        %v1158 = vlaneseq
        %v1159 = vshrl.u32 %v1158, 7
        %v1160 = vsub.s32 5, %v1159
        %v1161 = vrot.slane %v765, %v1160
        %v1162 = vlaneseq
        %v1163 = vshrl.u32 %v1162, 7
        %v1164 = vsub.s32 6, %v1163
        %v1165 = vrot.slane %v765, %v1164
        %v1166 = vlaneseq
        %v1167 = vshrl.u32 %v1166, 7
        %v1168 = vsub.s32 7, %v1167
        %v1169 = vrot.slane %v765, %v1168
        %v1170 = vlaneseq
        %v1171 = vshrl.u32 %v1170, 7
        %v1172 = vsub.s32 0, %v1171
        %v1173 = vrot.slane %v766, %v1172
        %v1174 = vlaneseq
        %v1175 = vshrl.u32 %v1174, 7
        %v1176 = vsub.s32 1, %v1175
        %v1177 = vrot.slane %v766, %v1176
        %v1178 = vlaneseq
        %v1179 = vshrl.u32 %v1178, 7
        %v1180 = vsub.s32 2, %v1179
        %v1181 = vrot.slane %v766, %v1180
        %v1182 = vlaneseq
        %v1183 = vshrl.u32 %v1182, 7
        %v1184 = vsub.s32 3, %v1183
        %v1185 = vrot.slane %v766, %v1184
        %v1186 = vlaneseq
        %v1187 = vshrl.u32 %v1186, 7
        %v1188 = vsub.s32 4, %v1187
        %v1189 = vrot.slane %v766, %v1188
        %v1190 = vlaneseq
        %v1191 = vshrl.u32 %v1190, 7
        %v1192 = vsub.s32 5, %v1191
        %v1193 = vrot.slane %v766, %v1192
        %v1194 = vlaneseq
        %v1195 = vshrl.u32 %v1194, 7
        %v1196 = vsub.s32 6, %v1195
        %v1197 = vrot.slane %v766, %v1196
        %v1198 = vlaneseq
        %v1199 = vshrl.u32 %v1198, 7
        %v1200 = vsub.s32 7, %v1199
        %v1201 = vrot.slane %v766, %v1200
        %v1202 = vlaneseq
        %v1203 = vshrl.u32 %v1202, 7
        %v1204 = vsub.s32 0, %v1203
        %v1205 = vrot.slane %v767, %v1204
        %v1206 = vlaneseq
        %v1207 = vshrl.u32 %v1206, 7
        %v1208 = vsub.s32 1, %v1207
        %v1209 = vrot.slane %v767, %v1208
        %v1210 = vlaneseq
        %v1211 = vshrl.u32 %v1210, 7
        %v1212 = vsub.s32 2, %v1211
        %v1213 = vrot.slane %v767, %v1212
        %v1214 = vlaneseq
        %v1215 = vshrl.u32 %v1214, 7
        %v1216 = vsub.s32 3, %v1215
        %v1217 = vrot.slane %v767, %v1216
        %v1218 = vlaneseq
        %v1219 = vshrl.u32 %v1218, 7
        %v1220 = vsub.s32 4, %v1219
        %v1221 = vrot.slane %v767, %v1220
        %v1222 = vlaneseq
        %v1223 = vshrl.u32 %v1222, 7
        %v1224 = vsub.s32 5, %v1223
        %v1225 = vrot.slane %v767, %v1224
        %v1226 = vlaneseq
        %v1227 = vshrl.u32 %v1226, 7
        %v1228 = vsub.s32 6, %v1227
        %v1229 = vrot.slane %v767, %v1228
        %v1230 = vlaneseq
        %v1231 = vshrl.u32 %v1230, 7
        %v1232 = vsub.s32 7, %v1231
        %v1233 = vrot.slane %v767, %v1232
        %v1234 = vlaneseq
        %v1235 = vshrl.u32 %v1234, 7
        %v1236 = vsub.s32 0, %v1235
        %v1237 = vrot.slane %v768, %v1236
        %v1238 = vlaneseq
        %v1239 = vshrl.u32 %v1238, 7
        %v1240 = vsub.s32 1, %v1239
        %v1241 = vrot.slane %v768, %v1240
        %v1242 = vlaneseq
        %v1243 = vshrl.u32 %v1242, 7
        %v1244 = vsub.s32 2, %v1243
        %v1245 = vrot.slane %v768, %v1244
        %v1246 = vlaneseq
        %v1247 = vshrl.u32 %v1246, 7
        %v1248 = vsub.s32 3, %v1247
        %v1249 = vrot.slane %v768, %v1248
        %v1250 = vlaneseq
        %v1251 = vshrl.u32 %v1250, 7
        %v1252 = vsub.s32 4, %v1251
        %v1253 = vrot.slane %v768, %v1252
        %v1254 = vlaneseq
        %v1255 = vshrl.u32 %v1254, 7
        %v1256 = vsub.s32 5, %v1255
        %v1257 = vrot.slane %v768, %v1256
        %v1258 = vlaneseq
        %v1259 = vshrl.u32 %v1258, 7
        %v1260 = vsub.s32 6, %v1259
        %v1261 = vrot.slane %v768, %v1260
        %v1262 = vlaneseq
        %v1263 = vshrl.u32 %v1262, 7
        %v1264 = vsub.s32 7, %v1263
        %v1265 = vrot.slane %v768, %v1264
        %v1266 = vlaneseq
        %v1267 = vshrl.u32 %v1266, 7
        %v1268 = vsub.s32 0, %v1267
        %v1269 = vrot.slane %v769, %v1268
        %v1270 = vlaneseq
        %v1271 = vshrl.u32 %v1270, 7
        %v1272 = vsub.s32 1, %v1271
        %v1273 = vrot.slane %v769, %v1272
        %v1274 = vlaneseq
        %v1275 = vshrl.u32 %v1274, 7
        %v1276 = vsub.s32 2, %v1275
        %v1277 = vrot.slane %v769, %v1276
        %v1278 = vlaneseq
        %v1279 = vshrl.u32 %v1278, 7
        %v1280 = vsub.s32 3, %v1279
        %v1281 = vrot.slane %v769, %v1280
        %v1282 = vlaneseq
        %v1283 = vshrl.u32 %v1282, 7
        %v1284 = vsub.s32 4, %v1283
        %v1285 = vrot.slane %v769, %v1284
        %v1286 = vlaneseq
        %v1287 = vshrl.u32 %v1286, 7
        %v1288 = vsub.s32 5, %v1287
        %v1289 = vrot.slane %v769, %v1288
        %v1290 = vlaneseq
        %v1291 = vshrl.u32 %v1290, 7
        %v1292 = vsub.s32 6, %v1291
        %v1293 = vrot.slane %v769, %v1292
        %v1294 = vlaneseq
        %v1295 = vshrl.u32 %v1294, 7
        %v1296 = vsub.s32 7, %v1295
        %v1297 = vrot.slane %v769, %v1296
        %vm1426 = vcmask 261120
        %v1428 = vsel %vm1426, %v241, 0
        %1430 = vmatprep.subr.mxu0 0.0
        %1431 = vmatpush1.msra.mxu0 0.0
        %1432 = vmatprep.subr.mxu0 0.0
        %1433 = vmatpush1.msra.mxu0 0.0
        %1434 = vmatprep.subr.mxu0 0.0
        %1435 = vmatpush1.msra.mxu0 0.0
        %1436 = vmatprep.subr.mxu0 0.0
        %1437 = vmatpush1.msra.mxu0 0.0
        %1438 = vmatprep.subr.mxu0 0.0
        %1439 = vmatpush1.msra.mxu0 0.0
        %1440 = vmatprep.subr.mxu0 0.0
        %1441 = vmatpush1.msra.mxu0 0.0
        %1442 = vmatprep.subr.mxu0 0.0
        %1443 = vmatpush1.msra.mxu0 0.0
        %1444 = vmatprep.subr.mxu0 0.0
        %1445 = vmatpush1.msra.mxu0 0.0
        %1446 = vmatprep.subr.mxu0 0.0
        %1447 = vmatpush1.msra.mxu0 0.0
        %1448 = vmatprep.subr.mxu0 0.0
        %1449 = vmatpush1.msra.mxu0 0.0
        %1450 = vmatprep.subr.mxu0 0.0
        %1451 = vmatpush1.msra.mxu0 0.0
        %1452 = vmatprep.subr.mxu0 0.0
        %1453 = vmatpush1.msra.mxu0 0.0
        %1454 = vmatprep.subr.mxu0 %v627
        %1455 = vmatpush1.msra.mxu0 %v626
        %1456 = vmatprep.subr.mxu0 %v499
        %1457 = vmatpush1.msra.mxu0 %v498
        %1458 = vmatprep.subr.mxu0 %v371
        %1459 = vmatpush1.msra.mxu0 %v370
        %1460 = vmatprep.subr.mxu0 %v243
        %1461 = vmatpush1.msra.mxu0 %v242
        %1462 = vmatprep.subr.mxu0 0.0
        %1463 = vmatpush2.msra.mxu0 0.0
        %1464 = vmatprep.subr.mxu0 0.0
        %1465 = vmatpush2.msra.mxu0 0.0
        %1466 = vmatprep.subr.mxu0 0.0
        %1467 = vmatpush2.msra.mxu0 0.0
        %1468 = vmatprep.subr.mxu0 0.0
        %1469 = vmatpush2.msra.mxu0 0.0
        %1470 = vmatprep.subr.mxu0 0.0
        %1471 = vmatpush2.msra.mxu0 0.0
        %1472 = vmatprep.subr.mxu0 0.0
        %1473 = vmatpush2.msra.mxu0 0.0
        %1474 = vmatprep.subr.mxu0 0.0
        %1475 = vmatpush2.msra.mxu0 0.0
        %1476 = vmatprep.subr.mxu0 0.0
        %1477 = vmatpush2.msra.mxu0 0.0
        %1478 = vmatprep.subr.mxu0 0.0
        %1479 = vmatpush2.msra.mxu0 0.0
        %1480 = vmatprep.subr.mxu0 0.0
        %1481 = vmatpush2.msra.mxu0 0.0
        %1482 = vmatprep.subr.mxu0 0.0
        %1483 = vmatpush2.msra.mxu0 0.0
        %1484 = vmatprep.subr.mxu0 0.0
        %1485 = vmatpush2.msra.mxu0 0.0
        %1486 = vmatprep.subr.mxu0 0.0
        %1487 = vmatpush2.msra.mxu0 0.0
        %1488 = vmatprep.subr.mxu0 0.0
        %1489 = vmatpush2.msra.mxu0 0.0
        %1490 = vmatprep.subr.mxu0 0.0
        %1491 = vmatpush2.msra.mxu0 0.0
        %1492 = vmatprep.subr.mxu0 0.0
        %1493 = vmatpush2.msra.mxu0 0.0
        %1494 = vmatprep.mubr.f32.mxu0 0.0
        %1495 = vmatmul.mubr.f32.gmra.mxu0 %v1428
        %v1496 = vpop.f32.mrf.mxu0
        %v1497 = vadd.f32 %v789, %v1496
        %v1498 = vpop.f32.mrf.mxu0
        %v1499 = vadd.f32 %v793, %v1498
        %1500 = vdwg.mxu0
        %1501 = vmatprep.subr.mxu0 0.0
        %1502 = vmatpush1.msra.mxu0 0.0
        %1503 = vmatprep.subr.mxu0 0.0
        %1504 = vmatpush1.msra.mxu0 0.0
        %1505 = vmatprep.subr.mxu0 0.0
        %1506 = vmatpush1.msra.mxu0 0.0
        %1507 = vmatprep.subr.mxu0 0.0
        %1508 = vmatpush1.msra.mxu0 0.0
        %1509 = vmatprep.subr.mxu0 0.0
        %1510 = vmatpush1.msra.mxu0 0.0
        %1511 = vmatprep.subr.mxu0 0.0
        %1512 = vmatpush1.msra.mxu0 0.0
        %1513 = vmatprep.subr.mxu0 0.0
        %1514 = vmatpush1.msra.mxu0 0.0
        %1515 = vmatprep.subr.mxu0 0.0
        %1516 = vmatpush1.msra.mxu0 0.0
        %1517 = vmatprep.subr.mxu0 0.0
        %1518 = vmatpush1.msra.mxu0 0.0
        %1519 = vmatprep.subr.mxu0 0.0
        %1520 = vmatpush1.msra.mxu0 0.0
        %1521 = vmatprep.subr.mxu0 0.0
        %1522 = vmatpush1.msra.mxu0 0.0
        %1523 = vmatprep.subr.mxu0 0.0
        %1524 = vmatpush1.msra.mxu0 0.0
        %1525 = vmatprep.subr.mxu0 %v629
        %1526 = vmatpush1.msra.mxu0 %v628
        %1527 = vmatprep.subr.mxu0 %v501
        %1528 = vmatpush1.msra.mxu0 %v500
        %1529 = vmatprep.subr.mxu0 %v373
        %1530 = vmatpush1.msra.mxu0 %v372
        %1531 = vmatprep.subr.mxu0 %v245
        %1532 = vmatpush1.msra.mxu0 %v244
        %1533 = vmatprep.subr.mxu0 0.0
        %1534 = vmatpush2.msra.mxu0 0.0
        %1535 = vmatprep.subr.mxu0 0.0
        %1536 = vmatpush2.msra.mxu0 0.0
        %1537 = vmatprep.subr.mxu0 0.0
        %1538 = vmatpush2.msra.mxu0 0.0
        %1539 = vmatprep.subr.mxu0 0.0
        %1540 = vmatpush2.msra.mxu0 0.0
        %1541 = vmatprep.subr.mxu0 0.0
        %1542 = vmatpush2.msra.mxu0 0.0
        %1543 = vmatprep.subr.mxu0 0.0
        %1544 = vmatpush2.msra.mxu0 0.0
        %1545 = vmatprep.subr.mxu0 0.0
        %1546 = vmatpush2.msra.mxu0 0.0
        %1547 = vmatprep.subr.mxu0 0.0
        %1548 = vmatpush2.msra.mxu0 0.0
        %1549 = vmatprep.subr.mxu0 0.0
        %1550 = vmatpush2.msra.mxu0 0.0
        %1551 = vmatprep.subr.mxu0 0.0
        %1552 = vmatpush2.msra.mxu0 0.0
        %1553 = vmatprep.subr.mxu0 0.0
        %1554 = vmatpush2.msra.mxu0 0.0
        %1555 = vmatprep.subr.mxu0 0.0
        %1556 = vmatpush2.msra.mxu0 0.0
        %1557 = vmatprep.subr.mxu0 0.0
        %1558 = vmatpush2.msra.mxu0 0.0
        %1559 = vmatprep.subr.mxu0 0.0
        %1560 = vmatpush2.msra.mxu0 0.0
        %1561 = vmatprep.subr.mxu0 0.0
        %1562 = vmatpush2.msra.mxu0 0.0
        %1563 = vmatprep.subr.mxu0 0.0
        %1564 = vmatpush2.msra.mxu0 0.0
        %1565 = vmatprep.mubr.f32.mxu0 0.0
        %1566 = vmatmul.mubr.f32.gmra.mxu0 %v1428
        %v1567 = vpop.f32.mrf.mxu0
        %v1568 = vadd.f32 %v797, %v1567
        %v1569 = vpop.f32.mrf.mxu0
        %v1570 = vadd.f32 %v801, %v1569
        %1571 = vdwg.mxu0
        %1572 = vmatprep.subr.mxu0 0.0
        %1573 = vmatpush1.msra.mxu0 0.0
        %1574 = vmatprep.subr.mxu0 0.0
        %1575 = vmatpush1.msra.mxu0 0.0
        %1576 = vmatprep.subr.mxu0 0.0
        %1577 = vmatpush1.msra.mxu0 0.0
        %1578 = vmatprep.subr.mxu0 0.0
        %1579 = vmatpush1.msra.mxu0 0.0
        %1580 = vmatprep.subr.mxu0 0.0
        %1581 = vmatpush1.msra.mxu0 0.0
        %1582 = vmatprep.subr.mxu0 0.0
        %1583 = vmatpush1.msra.mxu0 0.0
        %1584 = vmatprep.subr.mxu0 0.0
        %1585 = vmatpush1.msra.mxu0 0.0
        %1586 = vmatprep.subr.mxu0 0.0
        %1587 = vmatpush1.msra.mxu0 0.0
        %1588 = vmatprep.subr.mxu0 0.0
        %1589 = vmatpush1.msra.mxu0 0.0
        %1590 = vmatprep.subr.mxu0 0.0
        %1591 = vmatpush1.msra.mxu0 0.0
        %1592 = vmatprep.subr.mxu0 0.0
        %1593 = vmatpush1.msra.mxu0 0.0
        %1594 = vmatprep.subr.mxu0 0.0
        %1595 = vmatpush1.msra.mxu0 0.0
        %1596 = vmatprep.subr.mxu0 %v631
        %1597 = vmatpush1.msra.mxu0 %v630
        %1598 = vmatprep.subr.mxu0 %v503
        %1599 = vmatpush1.msra.mxu0 %v502
        %1600 = vmatprep.subr.mxu0 %v375
        %1601 = vmatpush1.msra.mxu0 %v374
        %1602 = vmatprep.subr.mxu0 %v247
        %1603 = vmatpush1.msra.mxu0 %v246
        %1604 = vmatprep.subr.mxu0 0.0
        %1605 = vmatpush2.msra.mxu0 0.0
        %1606 = vmatprep.subr.mxu0 0.0
        %1607 = vmatpush2.msra.mxu0 0.0
        %1608 = vmatprep.subr.mxu0 0.0
        %1609 = vmatpush2.msra.mxu0 0.0
        %1610 = vmatprep.subr.mxu0 0.0
        %1611 = vmatpush2.msra.mxu0 0.0
        %1612 = vmatprep.subr.mxu0 0.0
        %1613 = vmatpush2.msra.mxu0 0.0
        %1614 = vmatprep.subr.mxu0 0.0
        %1615 = vmatpush2.msra.mxu0 0.0
        %1616 = vmatprep.subr.mxu0 0.0
        %1617 = vmatpush2.msra.mxu0 0.0
        %1618 = vmatprep.subr.mxu0 0.0
        %1619 = vmatpush2.msra.mxu0 0.0
        %1620 = vmatprep.subr.mxu0 0.0
        %1621 = vmatpush2.msra.mxu0 0.0
        %1622 = vmatprep.subr.mxu0 0.0
        %1623 = vmatpush2.msra.mxu0 0.0
        %1624 = vmatprep.subr.mxu0 0.0
        %1625 = vmatpush2.msra.mxu0 0.0
        %1626 = vmatprep.subr.mxu0 0.0
        %1627 = vmatpush2.msra.mxu0 0.0
        %1628 = vmatprep.subr.mxu0 0.0
        %1629 = vmatpush2.msra.mxu0 0.0
        %1630 = vmatprep.subr.mxu0 0.0
        %1631 = vmatpush2.msra.mxu0 0.0
        %1632 = vmatprep.subr.mxu0 0.0
        %1633 = vmatpush2.msra.mxu0 0.0
        %1634 = vmatprep.subr.mxu0 0.0
        %1635 = vmatpush2.msra.mxu0 0.0
        %1636 = vmatprep.mubr.f32.mxu0 0.0
        %1637 = vmatmul.mubr.f32.gmra.mxu0 %v1428
        %v1638 = vpop.f32.mrf.mxu0
        %v1639 = vadd.f32 %v805, %v1638
        %v1640 = vpop.f32.mrf.mxu0
        %v1641 = vadd.f32 %v809, %v1640
        %1642 = vdwg.mxu0
        %1643 = vmatprep.subr.mxu0 0.0
        %1644 = vmatpush1.msra.mxu0 0.0
        %1645 = vmatprep.subr.mxu0 0.0
        %1646 = vmatpush1.msra.mxu0 0.0
        %1647 = vmatprep.subr.mxu0 0.0
        %1648 = vmatpush1.msra.mxu0 0.0
        %1649 = vmatprep.subr.mxu0 0.0
        %1650 = vmatpush1.msra.mxu0 0.0
        %1651 = vmatprep.subr.mxu0 0.0
        %1652 = vmatpush1.msra.mxu0 0.0
        %1653 = vmatprep.subr.mxu0 0.0
        %1654 = vmatpush1.msra.mxu0 0.0
        %1655 = vmatprep.subr.mxu0 0.0
        %1656 = vmatpush1.msra.mxu0 0.0
        %1657 = vmatprep.subr.mxu0 0.0
        %1658 = vmatpush1.msra.mxu0 0.0
        %1659 = vmatprep.subr.mxu0 0.0
        %1660 = vmatpush1.msra.mxu0 0.0
        %1661 = vmatprep.subr.mxu0 0.0
        %1662 = vmatpush1.msra.mxu0 0.0
        %1663 = vmatprep.subr.mxu0 0.0
        %1664 = vmatpush1.msra.mxu0 0.0
        %1665 = vmatprep.subr.mxu0 0.0
        %1666 = vmatpush1.msra.mxu0 0.0
        %1667 = vmatprep.subr.mxu0 %v633
        %1668 = vmatpush1.msra.mxu0 %v632
        %1669 = vmatprep.subr.mxu0 %v505
        %1670 = vmatpush1.msra.mxu0 %v504
        %1671 = vmatprep.subr.mxu0 %v377
        %1672 = vmatpush1.msra.mxu0 %v376
        %1673 = vmatprep.subr.mxu0 %v249
        %1674 = vmatpush1.msra.mxu0 %v248
        %1675 = vmatprep.subr.mxu0 0.0
        %1676 = vmatpush2.msra.mxu0 0.0
        %1677 = vmatprep.subr.mxu0 0.0
        %1678 = vmatpush2.msra.mxu0 0.0
        %1679 = vmatprep.subr.mxu0 0.0
        %1680 = vmatpush2.msra.mxu0 0.0
        %1681 = vmatprep.subr.mxu0 0.0
        %1682 = vmatpush2.msra.mxu0 0.0
        %1683 = vmatprep.subr.mxu0 0.0
        %1684 = vmatpush2.msra.mxu0 0.0
        %1685 = vmatprep.subr.mxu0 0.0
        %1686 = vmatpush2.msra.mxu0 0.0
        %1687 = vmatprep.subr.mxu0 0.0
        %1688 = vmatpush2.msra.mxu0 0.0
        %1689 = vmatprep.subr.mxu0 0.0
        %1690 = vmatpush2.msra.mxu0 0.0
        %1691 = vmatprep.subr.mxu0 0.0
        %1692 = vmatpush2.msra.mxu0 0.0
        %1693 = vmatprep.subr.mxu0 0.0
        %1694 = vmatpush2.msra.mxu0 0.0
        %1695 = vmatprep.subr.mxu0 0.0
        %1696 = vmatpush2.msra.mxu0 0.0
        %1697 = vmatprep.subr.mxu0 0.0
        %1698 = vmatpush2.msra.mxu0 0.0
        %1699 = vmatprep.subr.mxu0 0.0
        %1700 = vmatpush2.msra.mxu0 0.0
        %1701 = vmatprep.subr.mxu0 0.0
        %1702 = vmatpush2.msra.mxu0 0.0
        %1703 = vmatprep.subr.mxu0 0.0
        %1704 = vmatpush2.msra.mxu0 0.0
        %1705 = vmatprep.subr.mxu0 0.0
        %1706 = vmatpush2.msra.mxu0 0.0
        %1707 = vmatprep.mubr.f32.mxu0 0.0
        %1708 = vmatmul.mubr.f32.gmra.mxu0 %v1428
        %v1709 = vpop.f32.mrf.mxu0
        %v1710 = vadd.f32 %v813, %v1709
        %v1711 = vpop.f32.mrf.mxu0
        %v1712 = vadd.f32 %v817, %v1711
        %1713 = vdwg.mxu0
        %1714 = vmatprep.subr.mxu0 0.0
        %1715 = vmatpush1.msra.mxu0 0.0
        %1716 = vmatprep.subr.mxu0 0.0
        %1717 = vmatpush1.msra.mxu0 0.0
        %1718 = vmatprep.subr.mxu0 0.0
        %1719 = vmatpush1.msra.mxu0 0.0
        %1720 = vmatprep.subr.mxu0 0.0
        %1721 = vmatpush1.msra.mxu0 0.0
        %1722 = vmatprep.subr.mxu0 0.0
        %1723 = vmatpush1.msra.mxu0 0.0
        %1724 = vmatprep.subr.mxu0 0.0
        %1725 = vmatpush1.msra.mxu0 0.0
        %1726 = vmatprep.subr.mxu0 0.0
        %1727 = vmatpush1.msra.mxu0 0.0
        %1728 = vmatprep.subr.mxu0 0.0
        %1729 = vmatpush1.msra.mxu0 0.0
        %1730 = vmatprep.subr.mxu0 0.0
        %1731 = vmatpush1.msra.mxu0 0.0
        %1732 = vmatprep.subr.mxu0 0.0
        %1733 = vmatpush1.msra.mxu0 0.0
        %1734 = vmatprep.subr.mxu0 0.0
        %1735 = vmatpush1.msra.mxu0 0.0
        %1736 = vmatprep.subr.mxu0 0.0
        %1737 = vmatpush1.msra.mxu0 0.0
        %1738 = vmatprep.subr.mxu0 %v635
        %1739 = vmatpush1.msra.mxu0 %v634
        %1740 = vmatprep.subr.mxu0 %v507
        %1741 = vmatpush1.msra.mxu0 %v506
        %1742 = vmatprep.subr.mxu0 %v379
        %1743 = vmatpush1.msra.mxu0 %v378
        %1744 = vmatprep.subr.mxu0 %v251
        %1745 = vmatpush1.msra.mxu0 %v250
        %1746 = vmatprep.subr.mxu0 0.0
        %1747 = vmatpush2.msra.mxu0 0.0
        %1748 = vmatprep.subr.mxu0 0.0
        %1749 = vmatpush2.msra.mxu0 0.0
        %1750 = vmatprep.subr.mxu0 0.0
        %1751 = vmatpush2.msra.mxu0 0.0
        %1752 = vmatprep.subr.mxu0 0.0
        %1753 = vmatpush2.msra.mxu0 0.0
        %1754 = vmatprep.subr.mxu0 0.0
        %1755 = vmatpush2.msra.mxu0 0.0
        %1756 = vmatprep.subr.mxu0 0.0
        %1757 = vmatpush2.msra.mxu0 0.0
        %1758 = vmatprep.subr.mxu0 0.0
        %1759 = vmatpush2.msra.mxu0 0.0
        %1760 = vmatprep.subr.mxu0 0.0
        %1761 = vmatpush2.msra.mxu0 0.0
        %1762 = vmatprep.subr.mxu0 0.0
        %1763 = vmatpush2.msra.mxu0 0.0
        %1764 = vmatprep.subr.mxu0 0.0
        %1765 = vmatpush2.msra.mxu0 0.0
        %1766 = vmatprep.subr.mxu0 0.0
        %1767 = vmatpush2.msra.mxu0 0.0
        %1768 = vmatprep.subr.mxu0 0.0
        %1769 = vmatpush2.msra.mxu0 0.0
        %1770 = vmatprep.subr.mxu0 0.0
        %1771 = vmatpush2.msra.mxu0 0.0
        %1772 = vmatprep.subr.mxu0 0.0
        %1773 = vmatpush2.msra.mxu0 0.0
        %1774 = vmatprep.subr.mxu0 0.0
        %1775 = vmatpush2.msra.mxu0 0.0
        %1776 = vmatprep.subr.mxu0 0.0
        %1777 = vmatpush2.msra.mxu0 0.0
        %1778 = vmatprep.mubr.f32.mxu0 0.0
        %1779 = vmatmul.mubr.f32.gmra.mxu0 %v1428
        %v1780 = vpop.f32.mrf.mxu0
        %v1781 = vadd.f32 %v821, %v1780
        %v1782 = vpop.f32.mrf.mxu0
        %v1783 = vadd.f32 %v825, %v1782
        %1784 = vdwg.mxu0
        %1785 = vmatprep.subr.mxu0 0.0
        %1786 = vmatpush1.msra.mxu0 0.0
        %1787 = vmatprep.subr.mxu0 0.0
        %1788 = vmatpush1.msra.mxu0 0.0
        %1789 = vmatprep.subr.mxu0 0.0
        %1790 = vmatpush1.msra.mxu0 0.0
        %1791 = vmatprep.subr.mxu0 0.0
        %1792 = vmatpush1.msra.mxu0 0.0
        %1793 = vmatprep.subr.mxu0 0.0
        %1794 = vmatpush1.msra.mxu0 0.0
        %1795 = vmatprep.subr.mxu0 0.0
        %1796 = vmatpush1.msra.mxu0 0.0
        %1797 = vmatprep.subr.mxu0 0.0
        %1798 = vmatpush1.msra.mxu0 0.0
        %1799 = vmatprep.subr.mxu0 0.0
        %1800 = vmatpush1.msra.mxu0 0.0
        %1801 = vmatprep.subr.mxu0 0.0
        %1802 = vmatpush1.msra.mxu0 0.0
        %1803 = vmatprep.subr.mxu0 0.0
        %1804 = vmatpush1.msra.mxu0 0.0
        %1805 = vmatprep.subr.mxu0 0.0
        %1806 = vmatpush1.msra.mxu0 0.0
        %1807 = vmatprep.subr.mxu0 0.0
        %1808 = vmatpush1.msra.mxu0 0.0
        %1809 = vmatprep.subr.mxu0 %v637
        %1810 = vmatpush1.msra.mxu0 %v636
        %1811 = vmatprep.subr.mxu0 %v509
        %1812 = vmatpush1.msra.mxu0 %v508
        %1813 = vmatprep.subr.mxu0 %v381
        %1814 = vmatpush1.msra.mxu0 %v380
        %1815 = vmatprep.subr.mxu0 %v253
        %1816 = vmatpush1.msra.mxu0 %v252
        %1817 = vmatprep.subr.mxu0 0.0
        %1818 = vmatpush2.msra.mxu0 0.0
        %1819 = vmatprep.subr.mxu0 0.0
        %1820 = vmatpush2.msra.mxu0 0.0
        %1821 = vmatprep.subr.mxu0 0.0
        %1822 = vmatpush2.msra.mxu0 0.0
        %1823 = vmatprep.subr.mxu0 0.0
        %1824 = vmatpush2.msra.mxu0 0.0
        %1825 = vmatprep.subr.mxu0 0.0
        %1826 = vmatpush2.msra.mxu0 0.0
        %1827 = vmatprep.subr.mxu0 0.0
        %1828 = vmatpush2.msra.mxu0 0.0
        %1829 = vmatprep.subr.mxu0 0.0
        %1830 = vmatpush2.msra.mxu0 0.0
        %1831 = vmatprep.subr.mxu0 0.0
        %1832 = vmatpush2.msra.mxu0 0.0
        %1833 = vmatprep.subr.mxu0 0.0
        %1834 = vmatpush2.msra.mxu0 0.0
        %1835 = vmatprep.subr.mxu0 0.0
        %1836 = vmatpush2.msra.mxu0 0.0
        %1837 = vmatprep.subr.mxu0 0.0
        %1838 = vmatpush2.msra.mxu0 0.0
        %1839 = vmatprep.subr.mxu0 0.0
        %1840 = vmatpush2.msra.mxu0 0.0
        %1841 = vmatprep.subr.mxu0 0.0
        %1842 = vmatpush2.msra.mxu0 0.0
        %1843 = vmatprep.subr.mxu0 0.0
        %1844 = vmatpush2.msra.mxu0 0.0
        %1845 = vmatprep.subr.mxu0 0.0
        %1846 = vmatpush2.msra.mxu0 0.0
        %1847 = vmatprep.subr.mxu0 0.0
        %1848 = vmatpush2.msra.mxu0 0.0
        %1849 = vmatprep.mubr.f32.mxu0 0.0
        %1850 = vmatmul.mubr.f32.gmra.mxu0 %v1428
        %v1851 = vpop.f32.mrf.mxu0
        %v1852 = vadd.f32 %v829, %v1851
        %v1853 = vpop.f32.mrf.mxu0
        %v1854 = vadd.f32 %v833, %v1853
        %1855 = vdwg.mxu0
        %1856 = vmatprep.subr.mxu0 0.0
        %1857 = vmatpush1.msra.mxu0 0.0
        %1858 = vmatprep.subr.mxu0 0.0
        %1859 = vmatpush1.msra.mxu0 0.0
        %1860 = vmatprep.subr.mxu0 0.0
        %1861 = vmatpush1.msra.mxu0 0.0
        %1862 = vmatprep.subr.mxu0 0.0
        %1863 = vmatpush1.msra.mxu0 0.0
        %1864 = vmatprep.subr.mxu0 0.0
        %1865 = vmatpush1.msra.mxu0 0.0
        %1866 = vmatprep.subr.mxu0 0.0
        %1867 = vmatpush1.msra.mxu0 0.0
        %1868 = vmatprep.subr.mxu0 0.0
        %1869 = vmatpush1.msra.mxu0 0.0
        %1870 = vmatprep.subr.mxu0 0.0
        %1871 = vmatpush1.msra.mxu0 0.0
        %1872 = vmatprep.subr.mxu0 0.0
        %1873 = vmatpush1.msra.mxu0 0.0
        %1874 = vmatprep.subr.mxu0 0.0
        %1875 = vmatpush1.msra.mxu0 0.0
        %1876 = vmatprep.subr.mxu0 0.0
        %1877 = vmatpush1.msra.mxu0 0.0
        %1878 = vmatprep.subr.mxu0 0.0
        %1879 = vmatpush1.msra.mxu0 0.0
        %1880 = vmatprep.subr.mxu0 %v639
        %1881 = vmatpush1.msra.mxu0 %v638
        %1882 = vmatprep.subr.mxu0 %v511
        %1883 = vmatpush1.msra.mxu0 %v510
        %1884 = vmatprep.subr.mxu0 %v383
        %1885 = vmatpush1.msra.mxu0 %v382
        %1886 = vmatprep.subr.mxu0 %v255
        %1887 = vmatpush1.msra.mxu0 %v254
        %1888 = vmatprep.subr.mxu0 0.0
        %1889 = vmatpush2.msra.mxu0 0.0
        %1890 = vmatprep.subr.mxu0 0.0
        %1891 = vmatpush2.msra.mxu0 0.0
        %1892 = vmatprep.subr.mxu0 0.0
        %1893 = vmatpush2.msra.mxu0 0.0
        %1894 = vmatprep.subr.mxu0 0.0
        %1895 = vmatpush2.msra.mxu0 0.0
        %1896 = vmatprep.subr.mxu0 0.0
        %1897 = vmatpush2.msra.mxu0 0.0
        %1898 = vmatprep.subr.mxu0 0.0
        %1899 = vmatpush2.msra.mxu0 0.0
        %1900 = vmatprep.subr.mxu0 0.0
        %1901 = vmatpush2.msra.mxu0 0.0
        %1902 = vmatprep.subr.mxu0 0.0
        %1903 = vmatpush2.msra.mxu0 0.0
        %1904 = vmatprep.subr.mxu0 0.0
        %1905 = vmatpush2.msra.mxu0 0.0
        %1906 = vmatprep.subr.mxu0 0.0
        %1907 = vmatpush2.msra.mxu0 0.0
        %1908 = vmatprep.subr.mxu0 0.0
        %1909 = vmatpush2.msra.mxu0 0.0
        %1910 = vmatprep.subr.mxu0 0.0
        %1911 = vmatpush2.msra.mxu0 0.0
        %1912 = vmatprep.subr.mxu0 0.0
        %1913 = vmatpush2.msra.mxu0 0.0
        %1914 = vmatprep.subr.mxu0 0.0
        %1915 = vmatpush2.msra.mxu0 0.0
        %1916 = vmatprep.subr.mxu0 0.0
        %1917 = vmatpush2.msra.mxu0 0.0
        %1918 = vmatprep.subr.mxu0 0.0
        %1919 = vmatpush2.msra.mxu0 0.0
        %1920 = vmatprep.mubr.f32.mxu0 0.0
        %1921 = vmatmul.mubr.f32.gmra.mxu0 %v1428
        %v1922 = vpop.f32.mrf.mxu0
        %v1923 = vadd.f32 %v837, %v1922
        %v1924 = vpop.f32.mrf.mxu0
        %v1925 = vadd.f32 %v841, %v1924
        %1926 = vdwg.mxu0
        %1927 = vmatprep.subr.mxu0 0.0
        %1928 = vmatpush1.msra.mxu0 0.0
        %1929 = vmatprep.subr.mxu0 0.0
        %1930 = vmatpush1.msra.mxu0 0.0
        %1931 = vmatprep.subr.mxu0 0.0
        %1932 = vmatpush1.msra.mxu0 0.0
        %1933 = vmatprep.subr.mxu0 0.0
        %1934 = vmatpush1.msra.mxu0 0.0
        %1935 = vmatprep.subr.mxu0 0.0
        %1936 = vmatpush1.msra.mxu0 0.0
        %1937 = vmatprep.subr.mxu0 0.0
        %1938 = vmatpush1.msra.mxu0 0.0
        %1939 = vmatprep.subr.mxu0 0.0
        %1940 = vmatpush1.msra.mxu0 0.0
        %1941 = vmatprep.subr.mxu0 0.0
        %1942 = vmatpush1.msra.mxu0 0.0
        %1943 = vmatprep.subr.mxu0 0.0
        %1944 = vmatpush1.msra.mxu0 0.0
        %1945 = vmatprep.subr.mxu0 0.0
        %1946 = vmatpush1.msra.mxu0 0.0
        %1947 = vmatprep.subr.mxu0 0.0
        %1948 = vmatpush1.msra.mxu0 0.0
        %1949 = vmatprep.subr.mxu0 0.0
        %1950 = vmatpush1.msra.mxu0 0.0
        %1951 = vmatprep.subr.mxu0 %v641
        %1952 = vmatpush1.msra.mxu0 %v640
        %1953 = vmatprep.subr.mxu0 %v513
        %1954 = vmatpush1.msra.mxu0 %v512
        %1955 = vmatprep.subr.mxu0 %v385
        %1956 = vmatpush1.msra.mxu0 %v384
        %1957 = vmatprep.subr.mxu0 %v257
        %1958 = vmatpush1.msra.mxu0 %v256
        %1959 = vmatprep.subr.mxu0 0.0
        %1960 = vmatpush2.msra.mxu0 0.0
        %1961 = vmatprep.subr.mxu0 0.0
        %1962 = vmatpush2.msra.mxu0 0.0
        %1963 = vmatprep.subr.mxu0 0.0
        %1964 = vmatpush2.msra.mxu0 0.0
        %1965 = vmatprep.subr.mxu0 0.0
        %1966 = vmatpush2.msra.mxu0 0.0
        %1967 = vmatprep.subr.mxu0 0.0
        %1968 = vmatpush2.msra.mxu0 0.0
        %1969 = vmatprep.subr.mxu0 0.0
        %1970 = vmatpush2.msra.mxu0 0.0
        %1971 = vmatprep.subr.mxu0 0.0
        %1972 = vmatpush2.msra.mxu0 0.0
        %1973 = vmatprep.subr.mxu0 0.0
        %1974 = vmatpush2.msra.mxu0 0.0
        %1975 = vmatprep.subr.mxu0 0.0
        %1976 = vmatpush2.msra.mxu0 0.0
        %1977 = vmatprep.subr.mxu0 0.0
        %1978 = vmatpush2.msra.mxu0 0.0
        %1979 = vmatprep.subr.mxu0 0.0
        %1980 = vmatpush2.msra.mxu0 0.0
        %1981 = vmatprep.subr.mxu0 0.0
        %1982 = vmatpush2.msra.mxu0 0.0
        %1983 = vmatprep.subr.mxu0 0.0
        %1984 = vmatpush2.msra.mxu0 0.0
        %1985 = vmatprep.subr.mxu0 0.0
        %1986 = vmatpush2.msra.mxu0 0.0
        %1987 = vmatprep.subr.mxu0 0.0
        %1988 = vmatpush2.msra.mxu0 0.0
        %1989 = vmatprep.subr.mxu0 0.0
        %1990 = vmatpush2.msra.mxu0 0.0
        %1991 = vmatprep.mubr.f32.mxu0 0.0
        %1992 = vmatmul.mubr.f32.gmra.mxu0 %v1428
        %v1993 = vpop.f32.mrf.mxu0
        %v1994 = vadd.f32 %v845, %v1993
        %v1995 = vpop.f32.mrf.mxu0
        %v1996 = vadd.f32 %v849, %v1995
        %1997 = vdwg.mxu0
        %1998 = vmatprep.subr.mxu0 0.0
        %1999 = vmatpush1.msra.mxu0 0.0
        %2000 = vmatprep.subr.mxu0 0.0
        %2001 = vmatpush1.msra.mxu0 0.0
        %2002 = vmatprep.subr.mxu0 0.0
        %2003 = vmatpush1.msra.mxu0 0.0
        %2004 = vmatprep.subr.mxu0 0.0
        %2005 = vmatpush1.msra.mxu0 0.0
        %2006 = vmatprep.subr.mxu0 0.0
        %2007 = vmatpush1.msra.mxu0 0.0
        %2008 = vmatprep.subr.mxu0 0.0
        %2009 = vmatpush1.msra.mxu0 0.0
        %2010 = vmatprep.subr.mxu0 0.0
        %2011 = vmatpush1.msra.mxu0 0.0
        %2012 = vmatprep.subr.mxu0 0.0
        %2013 = vmatpush1.msra.mxu0 0.0
        %2014 = vmatprep.subr.mxu0 0.0
        %2015 = vmatpush1.msra.mxu0 0.0
        %2016 = vmatprep.subr.mxu0 0.0
        %2017 = vmatpush1.msra.mxu0 0.0
        %2018 = vmatprep.subr.mxu0 0.0
        %2019 = vmatpush1.msra.mxu0 0.0
        %2020 = vmatprep.subr.mxu0 0.0
        %2021 = vmatpush1.msra.mxu0 0.0
        %2022 = vmatprep.subr.mxu0 %v643
        %2023 = vmatpush1.msra.mxu0 %v642
        %2024 = vmatprep.subr.mxu0 %v515
        %2025 = vmatpush1.msra.mxu0 %v514
        %2026 = vmatprep.subr.mxu0 %v387
        %2027 = vmatpush1.msra.mxu0 %v386
        %2028 = vmatprep.subr.mxu0 %v259
        %2029 = vmatpush1.msra.mxu0 %v258
        %2030 = vmatprep.subr.mxu0 0.0
        %2031 = vmatpush2.msra.mxu0 0.0
        %2032 = vmatprep.subr.mxu0 0.0
        %2033 = vmatpush2.msra.mxu0 0.0
        %2034 = vmatprep.subr.mxu0 0.0
        %2035 = vmatpush2.msra.mxu0 0.0
        %2036 = vmatprep.subr.mxu0 0.0
        %2037 = vmatpush2.msra.mxu0 0.0
        %2038 = vmatprep.subr.mxu0 0.0
        %2039 = vmatpush2.msra.mxu0 0.0
        %2040 = vmatprep.subr.mxu0 0.0
        %2041 = vmatpush2.msra.mxu0 0.0
        %2042 = vmatprep.subr.mxu0 0.0
        %2043 = vmatpush2.msra.mxu0 0.0
        %2044 = vmatprep.subr.mxu0 0.0
        %2045 = vmatpush2.msra.mxu0 0.0
        %2046 = vmatprep.subr.mxu0 0.0
        %2047 = vmatpush2.msra.mxu0 0.0
        %2048 = vmatprep.subr.mxu0 0.0
        %2049 = vmatpush2.msra.mxu0 0.0
        %2050 = vmatprep.subr.mxu0 0.0
        %2051 = vmatpush2.msra.mxu0 0.0
        %2052 = vmatprep.subr.mxu0 0.0
        %2053 = vmatpush2.msra.mxu0 0.0
        %2054 = vmatprep.subr.mxu0 0.0
        %2055 = vmatpush2.msra.mxu0 0.0
        %2056 = vmatprep.subr.mxu0 0.0
        %2057 = vmatpush2.msra.mxu0 0.0
        %2058 = vmatprep.subr.mxu0 0.0
        %2059 = vmatpush2.msra.mxu0 0.0
        %2060 = vmatprep.subr.mxu0 0.0
        %2061 = vmatpush2.msra.mxu0 0.0
        %2062 = vmatprep.mubr.f32.mxu0 0.0
        %2063 = vmatmul.mubr.f32.gmra.mxu0 %v1428
        %v2064 = vpop.f32.mrf.mxu0
        %v2065 = vadd.f32 %v853, %v2064
        %v2066 = vpop.f32.mrf.mxu0
        %v2067 = vadd.f32 %v857, %v2066
        %2068 = vdwg.mxu0
        %2069 = vmatprep.subr.mxu0 0.0
        %2070 = vmatpush1.msra.mxu0 0.0
        %2071 = vmatprep.subr.mxu0 0.0
        %2072 = vmatpush1.msra.mxu0 0.0
        %2073 = vmatprep.subr.mxu0 0.0
        %2074 = vmatpush1.msra.mxu0 0.0
        %2075 = vmatprep.subr.mxu0 0.0
        %2076 = vmatpush1.msra.mxu0 0.0
        %2077 = vmatprep.subr.mxu0 0.0
        %2078 = vmatpush1.msra.mxu0 0.0
        %2079 = vmatprep.subr.mxu0 0.0
        %2080 = vmatpush1.msra.mxu0 0.0
        %2081 = vmatprep.subr.mxu0 0.0
        %2082 = vmatpush1.msra.mxu0 0.0
        %2083 = vmatprep.subr.mxu0 0.0
        %2084 = vmatpush1.msra.mxu0 0.0
        %2085 = vmatprep.subr.mxu0 0.0
        %2086 = vmatpush1.msra.mxu0 0.0
        %2087 = vmatprep.subr.mxu0 0.0
        %2088 = vmatpush1.msra.mxu0 0.0
        %2089 = vmatprep.subr.mxu0 0.0
        %2090 = vmatpush1.msra.mxu0 0.0
        %2091 = vmatprep.subr.mxu0 0.0
        %2092 = vmatpush1.msra.mxu0 0.0
        %2093 = vmatprep.subr.mxu0 %v645
        %2094 = vmatpush1.msra.mxu0 %v644
        %2095 = vmatprep.subr.mxu0 %v517
        %2096 = vmatpush1.msra.mxu0 %v516
        %2097 = vmatprep.subr.mxu0 %v389
        %2098 = vmatpush1.msra.mxu0 %v388
        %2099 = vmatprep.subr.mxu0 %v261
        %2100 = vmatpush1.msra.mxu0 %v260
        %2101 = vmatprep.subr.mxu0 0.0
        %2102 = vmatpush2.msra.mxu0 0.0
        %2103 = vmatprep.subr.mxu0 0.0
        %2104 = vmatpush2.msra.mxu0 0.0
        %2105 = vmatprep.subr.mxu0 0.0
        %2106 = vmatpush2.msra.mxu0 0.0
        %2107 = vmatprep.subr.mxu0 0.0
        %2108 = vmatpush2.msra.mxu0 0.0
        %2109 = vmatprep.subr.mxu0 0.0
        %2110 = vmatpush2.msra.mxu0 0.0
        %2111 = vmatprep.subr.mxu0 0.0
        %2112 = vmatpush2.msra.mxu0 0.0
        %2113 = vmatprep.subr.mxu0 0.0
        %2114 = vmatpush2.msra.mxu0 0.0
        %2115 = vmatprep.subr.mxu0 0.0
        %2116 = vmatpush2.msra.mxu0 0.0
        %2117 = vmatprep.subr.mxu0 0.0
        %2118 = vmatpush2.msra.mxu0 0.0
        %2119 = vmatprep.subr.mxu0 0.0
        %2120 = vmatpush2.msra.mxu0 0.0
        %2121 = vmatprep.subr.mxu0 0.0
        %2122 = vmatpush2.msra.mxu0 0.0
        %2123 = vmatprep.subr.mxu0 0.0
        %2124 = vmatpush2.msra.mxu0 0.0
        %2125 = vmatprep.subr.mxu0 0.0
        %2126 = vmatpush2.msra.mxu0 0.0
        %2127 = vmatprep.subr.mxu0 0.0
        %2128 = vmatpush2.msra.mxu0 0.0
        %2129 = vmatprep.subr.mxu0 0.0
        %2130 = vmatpush2.msra.mxu0 0.0
        %2131 = vmatprep.subr.mxu0 0.0
        %2132 = vmatpush2.msra.mxu0 0.0
        %2133 = vmatprep.mubr.f32.mxu0 0.0
        %2134 = vmatmul.mubr.f32.gmra.mxu0 %v1428
        %v2135 = vpop.f32.mrf.mxu0
        %v2136 = vadd.f32 %v861, %v2135
        %v2137 = vpop.f32.mrf.mxu0
        %v2138 = vadd.f32 %v865, %v2137
        %2139 = vdwg.mxu0
        %2140 = vmatprep.subr.mxu0 0.0
        %2141 = vmatpush1.msra.mxu0 0.0
        %2142 = vmatprep.subr.mxu0 0.0
        %2143 = vmatpush1.msra.mxu0 0.0
        %2144 = vmatprep.subr.mxu0 0.0
        %2145 = vmatpush1.msra.mxu0 0.0
        %2146 = vmatprep.subr.mxu0 0.0
        %2147 = vmatpush1.msra.mxu0 0.0
        %2148 = vmatprep.subr.mxu0 0.0
        %2149 = vmatpush1.msra.mxu0 0.0
        %2150 = vmatprep.subr.mxu0 0.0
        %2151 = vmatpush1.msra.mxu0 0.0
        %2152 = vmatprep.subr.mxu0 0.0
        %2153 = vmatpush1.msra.mxu0 0.0
        %2154 = vmatprep.subr.mxu0 0.0
        %2155 = vmatpush1.msra.mxu0 0.0
        %2156 = vmatprep.subr.mxu0 0.0
        %2157 = vmatpush1.msra.mxu0 0.0
        %2158 = vmatprep.subr.mxu0 0.0
        %2159 = vmatpush1.msra.mxu0 0.0
        %2160 = vmatprep.subr.mxu0 0.0
        %2161 = vmatpush1.msra.mxu0 0.0
        %2162 = vmatprep.subr.mxu0 0.0
        %2163 = vmatpush1.msra.mxu0 0.0
        %2164 = vmatprep.subr.mxu0 %v647
        %2165 = vmatpush1.msra.mxu0 %v646
        %2166 = vmatprep.subr.mxu0 %v519
        %2167 = vmatpush1.msra.mxu0 %v518
        %2168 = vmatprep.subr.mxu0 %v391
        %2169 = vmatpush1.msra.mxu0 %v390
        %2170 = vmatprep.subr.mxu0 %v263
        %2171 = vmatpush1.msra.mxu0 %v262
        %2172 = vmatprep.subr.mxu0 0.0
        %2173 = vmatpush2.msra.mxu0 0.0
        %2174 = vmatprep.subr.mxu0 0.0
        %2175 = vmatpush2.msra.mxu0 0.0
        %2176 = vmatprep.subr.mxu0 0.0
        %2177 = vmatpush2.msra.mxu0 0.0
        %2178 = vmatprep.subr.mxu0 0.0
        %2179 = vmatpush2.msra.mxu0 0.0
        %2180 = vmatprep.subr.mxu0 0.0
        %2181 = vmatpush2.msra.mxu0 0.0
        %2182 = vmatprep.subr.mxu0 0.0
        %2183 = vmatpush2.msra.mxu0 0.0
        %2184 = vmatprep.subr.mxu0 0.0
        %2185 = vmatpush2.msra.mxu0 0.0
        %2186 = vmatprep.subr.mxu0 0.0
        %2187 = vmatpush2.msra.mxu0 0.0
        %2188 = vmatprep.subr.mxu0 0.0
        %2189 = vmatpush2.msra.mxu0 0.0
        %2190 = vmatprep.subr.mxu0 0.0
        %2191 = vmatpush2.msra.mxu0 0.0
        %2192 = vmatprep.subr.mxu0 0.0
        %2193 = vmatpush2.msra.mxu0 0.0
        %2194 = vmatprep.subr.mxu0 0.0
        %2195 = vmatpush2.msra.mxu0 0.0
        %2196 = vmatprep.subr.mxu0 0.0
        %2197 = vmatpush2.msra.mxu0 0.0
        %2198 = vmatprep.subr.mxu0 0.0
        %2199 = vmatpush2.msra.mxu0 0.0
        %2200 = vmatprep.subr.mxu0 0.0
        %2201 = vmatpush2.msra.mxu0 0.0
        %2202 = vmatprep.subr.mxu0 0.0
        %2203 = vmatpush2.msra.mxu0 0.0
        %2204 = vmatprep.mubr.f32.mxu0 0.0
        %2205 = vmatmul.mubr.f32.gmra.mxu0 %v1428
        %v2206 = vpop.f32.mrf.mxu0
        %v2207 = vadd.f32 %v869, %v2206
        %v2208 = vpop.f32.mrf.mxu0
        %v2209 = vadd.f32 %v873, %v2208
        %2210 = vdwg.mxu0
        %2211 = vmatprep.subr.mxu0 0.0
        %2212 = vmatpush1.msra.mxu0 0.0
        %2213 = vmatprep.subr.mxu0 0.0
        %2214 = vmatpush1.msra.mxu0 0.0
        %2215 = vmatprep.subr.mxu0 0.0
        %2216 = vmatpush1.msra.mxu0 0.0
        %2217 = vmatprep.subr.mxu0 0.0
        %2218 = vmatpush1.msra.mxu0 0.0
        %2219 = vmatprep.subr.mxu0 0.0
        %2220 = vmatpush1.msra.mxu0 0.0
        %2221 = vmatprep.subr.mxu0 0.0
        %2222 = vmatpush1.msra.mxu0 0.0
        %2223 = vmatprep.subr.mxu0 0.0
        %2224 = vmatpush1.msra.mxu0 0.0
        %2225 = vmatprep.subr.mxu0 0.0
        %2226 = vmatpush1.msra.mxu0 0.0
        %2227 = vmatprep.subr.mxu0 0.0
        %2228 = vmatpush1.msra.mxu0 0.0
        %2229 = vmatprep.subr.mxu0 0.0
        %2230 = vmatpush1.msra.mxu0 0.0
        %2231 = vmatprep.subr.mxu0 0.0
        %2232 = vmatpush1.msra.mxu0 0.0
        %2233 = vmatprep.subr.mxu0 0.0
        %2234 = vmatpush1.msra.mxu0 0.0
        %2235 = vmatprep.subr.mxu0 %v649
        %2236 = vmatpush1.msra.mxu0 %v648
        %2237 = vmatprep.subr.mxu0 %v521
        %2238 = vmatpush1.msra.mxu0 %v520
        %2239 = vmatprep.subr.mxu0 %v393
        %2240 = vmatpush1.msra.mxu0 %v392
        %2241 = vmatprep.subr.mxu0 %v265
        %2242 = vmatpush1.msra.mxu0 %v264
        %2243 = vmatprep.subr.mxu0 0.0
        %2244 = vmatpush2.msra.mxu0 0.0
        %2245 = vmatprep.subr.mxu0 0.0
        %2246 = vmatpush2.msra.mxu0 0.0
        %2247 = vmatprep.subr.mxu0 0.0
        %2248 = vmatpush2.msra.mxu0 0.0
        %2249 = vmatprep.subr.mxu0 0.0
        %2250 = vmatpush2.msra.mxu0 0.0
        %2251 = vmatprep.subr.mxu0 0.0
        %2252 = vmatpush2.msra.mxu0 0.0
        %2253 = vmatprep.subr.mxu0 0.0
        %2254 = vmatpush2.msra.mxu0 0.0
        %2255 = vmatprep.subr.mxu0 0.0
        %2256 = vmatpush2.msra.mxu0 0.0
        %2257 = vmatprep.subr.mxu0 0.0
        %2258 = vmatpush2.msra.mxu0 0.0
        %2259 = vmatprep.subr.mxu0 0.0
        %2260 = vmatpush2.msra.mxu0 0.0
        %2261 = vmatprep.subr.mxu0 0.0
        %2262 = vmatpush2.msra.mxu0 0.0
        %2263 = vmatprep.subr.mxu0 0.0
        %2264 = vmatpush2.msra.mxu0 0.0
        %2265 = vmatprep.subr.mxu0 0.0
        %2266 = vmatpush2.msra.mxu0 0.0
        %2267 = vmatprep.subr.mxu0 0.0
        %2268 = vmatpush2.msra.mxu0 0.0
        %2269 = vmatprep.subr.mxu0 0.0
        %2270 = vmatpush2.msra.mxu0 0.0
        %2271 = vmatprep.subr.mxu0 0.0
        %2272 = vmatpush2.msra.mxu0 0.0
        %2273 = vmatprep.subr.mxu0 0.0
        %2274 = vmatpush2.msra.mxu0 0.0
        %2275 = vmatprep.mubr.f32.mxu0 0.0
        %2276 = vmatmul.mubr.f32.gmra.mxu0 %v1428
        %v2277 = vpop.f32.mrf.mxu0
        %v2278 = vadd.f32 %v877, %v2277
        %v2279 = vpop.f32.mrf.mxu0
        %v2280 = vadd.f32 %v881, %v2279
        %2281 = vdwg.mxu0
        %2282 = vmatprep.subr.mxu0 0.0
        %2283 = vmatpush1.msra.mxu0 0.0
        %2284 = vmatprep.subr.mxu0 0.0
        %2285 = vmatpush1.msra.mxu0 0.0
        %2286 = vmatprep.subr.mxu0 0.0
        %2287 = vmatpush1.msra.mxu0 0.0
        %2288 = vmatprep.subr.mxu0 0.0
        %2289 = vmatpush1.msra.mxu0 0.0
        %2290 = vmatprep.subr.mxu0 0.0
        %2291 = vmatpush1.msra.mxu0 0.0
        %2292 = vmatprep.subr.mxu0 0.0
        %2293 = vmatpush1.msra.mxu0 0.0
        %2294 = vmatprep.subr.mxu0 0.0
        %2295 = vmatpush1.msra.mxu0 0.0
        %2296 = vmatprep.subr.mxu0 0.0
        %2297 = vmatpush1.msra.mxu0 0.0
        %2298 = vmatprep.subr.mxu0 0.0
        %2299 = vmatpush1.msra.mxu0 0.0
        %2300 = vmatprep.subr.mxu0 0.0
        %2301 = vmatpush1.msra.mxu0 0.0
        %2302 = vmatprep.subr.mxu0 0.0
        %2303 = vmatpush1.msra.mxu0 0.0
        %2304 = vmatprep.subr.mxu0 0.0
        %2305 = vmatpush1.msra.mxu0 0.0
        %2306 = vmatprep.subr.mxu0 %v651
        %2307 = vmatpush1.msra.mxu0 %v650
        %2308 = vmatprep.subr.mxu0 %v523
        %2309 = vmatpush1.msra.mxu0 %v522
        %2310 = vmatprep.subr.mxu0 %v395
        %2311 = vmatpush1.msra.mxu0 %v394
        %2312 = vmatprep.subr.mxu0 %v267
        %2313 = vmatpush1.msra.mxu0 %v266
        %2314 = vmatprep.subr.mxu0 0.0
        %2315 = vmatpush2.msra.mxu0 0.0
        %2316 = vmatprep.subr.mxu0 0.0
        %2317 = vmatpush2.msra.mxu0 0.0
        %2318 = vmatprep.subr.mxu0 0.0
        %2319 = vmatpush2.msra.mxu0 0.0
        %2320 = vmatprep.subr.mxu0 0.0
        %2321 = vmatpush2.msra.mxu0 0.0
        %2322 = vmatprep.subr.mxu0 0.0
        %2323 = vmatpush2.msra.mxu0 0.0
        %2324 = vmatprep.subr.mxu0 0.0
        %2325 = vmatpush2.msra.mxu0 0.0
        %2326 = vmatprep.subr.mxu0 0.0
        %2327 = vmatpush2.msra.mxu0 0.0
        %2328 = vmatprep.subr.mxu0 0.0
        %2329 = vmatpush2.msra.mxu0 0.0
        %2330 = vmatprep.subr.mxu0 0.0
        %2331 = vmatpush2.msra.mxu0 0.0
        %2332 = vmatprep.subr.mxu0 0.0
        %2333 = vmatpush2.msra.mxu0 0.0
        %2334 = vmatprep.subr.mxu0 0.0
        %2335 = vmatpush2.msra.mxu0 0.0
        %2336 = vmatprep.subr.mxu0 0.0
        %2337 = vmatpush2.msra.mxu0 0.0
        %2338 = vmatprep.subr.mxu0 0.0
        %2339 = vmatpush2.msra.mxu0 0.0
        %2340 = vmatprep.subr.mxu0 0.0
        %2341 = vmatpush2.msra.mxu0 0.0
        %2342 = vmatprep.subr.mxu0 0.0
        %2343 = vmatpush2.msra.mxu0 0.0
        %2344 = vmatprep.subr.mxu0 0.0
        %2345 = vmatpush2.msra.mxu0 0.0
        %2346 = vmatprep.mubr.f32.mxu0 0.0
        %2347 = vmatmul.mubr.f32.gmra.mxu0 %v1428
        %v2348 = vpop.f32.mrf.mxu0
        %v2349 = vadd.f32 %v885, %v2348
        %v2350 = vpop.f32.mrf.mxu0
        %v2351 = vadd.f32 %v889, %v2350
        %2352 = vdwg.mxu0
        %2353 = vmatprep.subr.mxu0 0.0
        %2354 = vmatpush1.msra.mxu0 0.0
        %2355 = vmatprep.subr.mxu0 0.0
        %2356 = vmatpush1.msra.mxu0 0.0
        %2357 = vmatprep.subr.mxu0 0.0
        %2358 = vmatpush1.msra.mxu0 0.0
        %2359 = vmatprep.subr.mxu0 0.0
        %2360 = vmatpush1.msra.mxu0 0.0
        %2361 = vmatprep.subr.mxu0 0.0
        %2362 = vmatpush1.msra.mxu0 0.0
        %2363 = vmatprep.subr.mxu0 0.0
        %2364 = vmatpush1.msra.mxu0 0.0
        %2365 = vmatprep.subr.mxu0 0.0
        %2366 = vmatpush1.msra.mxu0 0.0
        %2367 = vmatprep.subr.mxu0 0.0
        %2368 = vmatpush1.msra.mxu0 0.0
        %2369 = vmatprep.subr.mxu0 0.0
        %2370 = vmatpush1.msra.mxu0 0.0
        %2371 = vmatprep.subr.mxu0 0.0
        %2372 = vmatpush1.msra.mxu0 0.0
        %2373 = vmatprep.subr.mxu0 0.0
        %2374 = vmatpush1.msra.mxu0 0.0
        %2375 = vmatprep.subr.mxu0 0.0
        %2376 = vmatpush1.msra.mxu0 0.0
        %2377 = vmatprep.subr.mxu0 %v653
        %2378 = vmatpush1.msra.mxu0 %v652
        %2379 = vmatprep.subr.mxu0 %v525
        %2380 = vmatpush1.msra.mxu0 %v524
        %2381 = vmatprep.subr.mxu0 %v397
        %2382 = vmatpush1.msra.mxu0 %v396
        %2383 = vmatprep.subr.mxu0 %v269
        %2384 = vmatpush1.msra.mxu0 %v268
        %2385 = vmatprep.subr.mxu0 0.0
        %2386 = vmatpush2.msra.mxu0 0.0
        %2387 = vmatprep.subr.mxu0 0.0
        %2388 = vmatpush2.msra.mxu0 0.0
        %2389 = vmatprep.subr.mxu0 0.0
        %2390 = vmatpush2.msra.mxu0 0.0
        %2391 = vmatprep.subr.mxu0 0.0
        %2392 = vmatpush2.msra.mxu0 0.0
        %2393 = vmatprep.subr.mxu0 0.0
        %2394 = vmatpush2.msra.mxu0 0.0
        %2395 = vmatprep.subr.mxu0 0.0
        %2396 = vmatpush2.msra.mxu0 0.0
        %2397 = vmatprep.subr.mxu0 0.0
        %2398 = vmatpush2.msra.mxu0 0.0
        %2399 = vmatprep.subr.mxu0 0.0
        %2400 = vmatpush2.msra.mxu0 0.0
        %2401 = vmatprep.subr.mxu0 0.0
        %2402 = vmatpush2.msra.mxu0 0.0
        %2403 = vmatprep.subr.mxu0 0.0
        %2404 = vmatpush2.msra.mxu0 0.0
        %2405 = vmatprep.subr.mxu0 0.0
        %2406 = vmatpush2.msra.mxu0 0.0
        %2407 = vmatprep.subr.mxu0 0.0
        %2408 = vmatpush2.msra.mxu0 0.0
        %2409 = vmatprep.subr.mxu0 0.0
        %2410 = vmatpush2.msra.mxu0 0.0
        %2411 = vmatprep.subr.mxu0 0.0
        %2412 = vmatpush2.msra.mxu0 0.0
        %2413 = vmatprep.subr.mxu0 0.0
        %2414 = vmatpush2.msra.mxu0 0.0
        %2415 = vmatprep.subr.mxu0 0.0
        %2416 = vmatpush2.msra.mxu0 0.0
        %2417 = vmatprep.mubr.f32.mxu0 0.0
        %2418 = vmatmul.mubr.f32.gmra.mxu0 %v1428
        %v2419 = vpop.f32.mrf.mxu0
        %v2420 = vadd.f32 %v893, %v2419
        %v2421 = vpop.f32.mrf.mxu0
        %v2422 = vadd.f32 %v897, %v2421
        %2423 = vdwg.mxu0
        %2424 = vmatprep.subr.mxu0 0.0
        %2425 = vmatpush1.msra.mxu0 0.0
        %2426 = vmatprep.subr.mxu0 0.0
        %2427 = vmatpush1.msra.mxu0 0.0
        %2428 = vmatprep.subr.mxu0 0.0
        %2429 = vmatpush1.msra.mxu0 0.0
        %2430 = vmatprep.subr.mxu0 0.0
        %2431 = vmatpush1.msra.mxu0 0.0
        %2432 = vmatprep.subr.mxu0 0.0
        %2433 = vmatpush1.msra.mxu0 0.0
        %2434 = vmatprep.subr.mxu0 0.0
        %2435 = vmatpush1.msra.mxu0 0.0
        %2436 = vmatprep.subr.mxu0 0.0
        %2437 = vmatpush1.msra.mxu0 0.0
        %2438 = vmatprep.subr.mxu0 0.0
        %2439 = vmatpush1.msra.mxu0 0.0
        %2440 = vmatprep.subr.mxu0 0.0
        %2441 = vmatpush1.msra.mxu0 0.0
        %2442 = vmatprep.subr.mxu0 0.0
        %2443 = vmatpush1.msra.mxu0 0.0
        %2444 = vmatprep.subr.mxu0 0.0
        %2445 = vmatpush1.msra.mxu0 0.0
        %2446 = vmatprep.subr.mxu0 0.0
        %2447 = vmatpush1.msra.mxu0 0.0
        %2448 = vmatprep.subr.mxu0 %v655
        %2449 = vmatpush1.msra.mxu0 %v654
        %2450 = vmatprep.subr.mxu0 %v527
        %2451 = vmatpush1.msra.mxu0 %v526
        %2452 = vmatprep.subr.mxu0 %v399
        %2453 = vmatpush1.msra.mxu0 %v398
        %2454 = vmatprep.subr.mxu0 %v271
        %2455 = vmatpush1.msra.mxu0 %v270
        %2456 = vmatprep.subr.mxu0 0.0
        %2457 = vmatpush2.msra.mxu0 0.0
        %2458 = vmatprep.subr.mxu0 0.0
        %2459 = vmatpush2.msra.mxu0 0.0
        %2460 = vmatprep.subr.mxu0 0.0
        %2461 = vmatpush2.msra.mxu0 0.0
        %2462 = vmatprep.subr.mxu0 0.0
        %2463 = vmatpush2.msra.mxu0 0.0
        %2464 = vmatprep.subr.mxu0 0.0
        %2465 = vmatpush2.msra.mxu0 0.0
        %2466 = vmatprep.subr.mxu0 0.0
        %2467 = vmatpush2.msra.mxu0 0.0
        %2468 = vmatprep.subr.mxu0 0.0
        %2469 = vmatpush2.msra.mxu0 0.0
        %2470 = vmatprep.subr.mxu0 0.0
        %2471 = vmatpush2.msra.mxu0 0.0
        %2472 = vmatprep.subr.mxu0 0.0
        %2473 = vmatpush2.msra.mxu0 0.0
        %2474 = vmatprep.subr.mxu0 0.0
        %2475 = vmatpush2.msra.mxu0 0.0
        %2476 = vmatprep.subr.mxu0 0.0
        %2477 = vmatpush2.msra.mxu0 0.0
        %2478 = vmatprep.subr.mxu0 0.0
        %2479 = vmatpush2.msra.mxu0 0.0
        %2480 = vmatprep.subr.mxu0 0.0
        %2481 = vmatpush2.msra.mxu0 0.0
        %2482 = vmatprep.subr.mxu0 0.0
        %2483 = vmatpush2.msra.mxu0 0.0
        %2484 = vmatprep.subr.mxu0 0.0
        %2485 = vmatpush2.msra.mxu0 0.0
        %2486 = vmatprep.subr.mxu0 0.0
        %2487 = vmatpush2.msra.mxu0 0.0
        %2488 = vmatprep.mubr.f32.mxu0 0.0
        %2489 = vmatmul.mubr.f32.gmra.mxu0 %v1428
        %v2490 = vpop.f32.mrf.mxu0
        %v2491 = vadd.f32 %v901, %v2490
        %v2492 = vpop.f32.mrf.mxu0
        %v2493 = vadd.f32 %v905, %v2492
        %2494 = vdwg.mxu0
        %2495 = vmatprep.subr.mxu0 0.0
        %2496 = vmatpush1.msra.mxu0 0.0
        %2497 = vmatprep.subr.mxu0 0.0
        %2498 = vmatpush1.msra.mxu0 0.0
        %2499 = vmatprep.subr.mxu0 0.0
        %2500 = vmatpush1.msra.mxu0 0.0
        %2501 = vmatprep.subr.mxu0 0.0
        %2502 = vmatpush1.msra.mxu0 0.0
        %2503 = vmatprep.subr.mxu0 0.0
        %2504 = vmatpush1.msra.mxu0 0.0
        %2505 = vmatprep.subr.mxu0 0.0
        %2506 = vmatpush1.msra.mxu0 0.0
        %2507 = vmatprep.subr.mxu0 0.0
        %2508 = vmatpush1.msra.mxu0 0.0
        %2509 = vmatprep.subr.mxu0 0.0
        %2510 = vmatpush1.msra.mxu0 0.0
        %2511 = vmatprep.subr.mxu0 0.0
        %2512 = vmatpush1.msra.mxu0 0.0
        %2513 = vmatprep.subr.mxu0 0.0
        %2514 = vmatpush1.msra.mxu0 0.0
        %2515 = vmatprep.subr.mxu0 0.0
        %2516 = vmatpush1.msra.mxu0 0.0
        %2517 = vmatprep.subr.mxu0 0.0
        %2518 = vmatpush1.msra.mxu0 0.0
        %2519 = vmatprep.subr.mxu0 %v657
        %2520 = vmatpush1.msra.mxu0 %v656
        %2521 = vmatprep.subr.mxu0 %v529
        %2522 = vmatpush1.msra.mxu0 %v528
        %2523 = vmatprep.subr.mxu0 %v401
        %2524 = vmatpush1.msra.mxu0 %v400
        %2525 = vmatprep.subr.mxu0 %v273
        %2526 = vmatpush1.msra.mxu0 %v272
        %2527 = vmatprep.subr.mxu0 0.0
        %2528 = vmatpush2.msra.mxu0 0.0
        %2529 = vmatprep.subr.mxu0 0.0
        %2530 = vmatpush2.msra.mxu0 0.0
        %2531 = vmatprep.subr.mxu0 0.0
        %2532 = vmatpush2.msra.mxu0 0.0
        %2533 = vmatprep.subr.mxu0 0.0
        %2534 = vmatpush2.msra.mxu0 0.0
        %2535 = vmatprep.subr.mxu0 0.0
        %2536 = vmatpush2.msra.mxu0 0.0
        %2537 = vmatprep.subr.mxu0 0.0
        %2538 = vmatpush2.msra.mxu0 0.0
        %2539 = vmatprep.subr.mxu0 0.0
        %2540 = vmatpush2.msra.mxu0 0.0
        %2541 = vmatprep.subr.mxu0 0.0
        %2542 = vmatpush2.msra.mxu0 0.0
        %2543 = vmatprep.subr.mxu0 0.0
        %2544 = vmatpush2.msra.mxu0 0.0
        %2545 = vmatprep.subr.mxu0 0.0
        %2546 = vmatpush2.msra.mxu0 0.0
        %2547 = vmatprep.subr.mxu0 0.0
        %2548 = vmatpush2.msra.mxu0 0.0
        %2549 = vmatprep.subr.mxu0 0.0
        %2550 = vmatpush2.msra.mxu0 0.0
        %2551 = vmatprep.subr.mxu0 0.0
        %2552 = vmatpush2.msra.mxu0 0.0
        %2553 = vmatprep.subr.mxu0 0.0
        %2554 = vmatpush2.msra.mxu0 0.0
        %2555 = vmatprep.subr.mxu0 0.0
        %2556 = vmatpush2.msra.mxu0 0.0
        %2557 = vmatprep.subr.mxu0 0.0
        %2558 = vmatpush2.msra.mxu0 0.0
        %2559 = vmatprep.mubr.f32.mxu0 0.0
        %2560 = vmatmul.mubr.f32.gmra.mxu0 %v1428
        %v2561 = vpop.f32.mrf.mxu0
        %v2562 = vadd.f32 %v909, %v2561
        %v2563 = vpop.f32.mrf.mxu0
        %v2564 = vadd.f32 %v913, %v2563
        %2565 = vdwg.mxu0
        %2566 = vmatprep.subr.mxu0 0.0
        %2567 = vmatpush1.msra.mxu0 0.0
        %2568 = vmatprep.subr.mxu0 0.0
        %2569 = vmatpush1.msra.mxu0 0.0
        %2570 = vmatprep.subr.mxu0 0.0
        %2571 = vmatpush1.msra.mxu0 0.0
        %2572 = vmatprep.subr.mxu0 0.0
        %2573 = vmatpush1.msra.mxu0 0.0
        %2574 = vmatprep.subr.mxu0 0.0
        %2575 = vmatpush1.msra.mxu0 0.0
        %2576 = vmatprep.subr.mxu0 0.0
        %2577 = vmatpush1.msra.mxu0 0.0
        %2578 = vmatprep.subr.mxu0 0.0
        %2579 = vmatpush1.msra.mxu0 0.0
        %2580 = vmatprep.subr.mxu0 0.0
        %2581 = vmatpush1.msra.mxu0 0.0
        %2582 = vmatprep.subr.mxu0 0.0
        %2583 = vmatpush1.msra.mxu0 0.0
        %2584 = vmatprep.subr.mxu0 0.0
        %2585 = vmatpush1.msra.mxu0 0.0
        %2586 = vmatprep.subr.mxu0 0.0
        %2587 = vmatpush1.msra.mxu0 0.0
        %2588 = vmatprep.subr.mxu0 0.0
        %2589 = vmatpush1.msra.mxu0 0.0
        %2590 = vmatprep.subr.mxu0 %v659
        %2591 = vmatpush1.msra.mxu0 %v658
        %2592 = vmatprep.subr.mxu0 %v531
        %2593 = vmatpush1.msra.mxu0 %v530
        %2594 = vmatprep.subr.mxu0 %v403
        %2595 = vmatpush1.msra.mxu0 %v402
        %2596 = vmatprep.subr.mxu0 %v275
        %2597 = vmatpush1.msra.mxu0 %v274
        %2598 = vmatprep.subr.mxu0 0.0
        %2599 = vmatpush2.msra.mxu0 0.0
        %2600 = vmatprep.subr.mxu0 0.0
        %2601 = vmatpush2.msra.mxu0 0.0
        %2602 = vmatprep.subr.mxu0 0.0
        %2603 = vmatpush2.msra.mxu0 0.0
        %2604 = vmatprep.subr.mxu0 0.0
        %2605 = vmatpush2.msra.mxu0 0.0
        %2606 = vmatprep.subr.mxu0 0.0
        %2607 = vmatpush2.msra.mxu0 0.0
        %2608 = vmatprep.subr.mxu0 0.0
        %2609 = vmatpush2.msra.mxu0 0.0
        %2610 = vmatprep.subr.mxu0 0.0
        %2611 = vmatpush2.msra.mxu0 0.0
        %2612 = vmatprep.subr.mxu0 0.0
        %2613 = vmatpush2.msra.mxu0 0.0
        %2614 = vmatprep.subr.mxu0 0.0
        %2615 = vmatpush2.msra.mxu0 0.0
        %2616 = vmatprep.subr.mxu0 0.0
        %2617 = vmatpush2.msra.mxu0 0.0
        %2618 = vmatprep.subr.mxu0 0.0
        %2619 = vmatpush2.msra.mxu0 0.0
        %2620 = vmatprep.subr.mxu0 0.0
        %2621 = vmatpush2.msra.mxu0 0.0
        %2622 = vmatprep.subr.mxu0 0.0
        %2623 = vmatpush2.msra.mxu0 0.0
        %2624 = vmatprep.subr.mxu0 0.0
        %2625 = vmatpush2.msra.mxu0 0.0
        %2626 = vmatprep.subr.mxu0 0.0
        %2627 = vmatpush2.msra.mxu0 0.0
        %2628 = vmatprep.subr.mxu0 0.0
        %2629 = vmatpush2.msra.mxu0 0.0
        %2630 = vmatprep.mubr.f32.mxu0 0.0
        %2631 = vmatmul.mubr.f32.gmra.mxu0 %v1428
        %v2632 = vpop.f32.mrf.mxu0
        %v2633 = vadd.f32 %v917, %v2632
        %v2634 = vpop.f32.mrf.mxu0
        %v2635 = vadd.f32 %v921, %v2634
        %2636 = vdwg.mxu0
        %2637 = vmatprep.subr.mxu0 0.0
        %2638 = vmatpush1.msra.mxu0 0.0
        %2639 = vmatprep.subr.mxu0 0.0
        %2640 = vmatpush1.msra.mxu0 0.0
        %2641 = vmatprep.subr.mxu0 0.0
        %2642 = vmatpush1.msra.mxu0 0.0
        %2643 = vmatprep.subr.mxu0 0.0
        %2644 = vmatpush1.msra.mxu0 0.0
        %2645 = vmatprep.subr.mxu0 0.0
        %2646 = vmatpush1.msra.mxu0 0.0
        %2647 = vmatprep.subr.mxu0 0.0
        %2648 = vmatpush1.msra.mxu0 0.0
        %2649 = vmatprep.subr.mxu0 0.0
        %2650 = vmatpush1.msra.mxu0 0.0
        %2651 = vmatprep.subr.mxu0 0.0
        %2652 = vmatpush1.msra.mxu0 0.0
        %2653 = vmatprep.subr.mxu0 0.0
        %2654 = vmatpush1.msra.mxu0 0.0
        %2655 = vmatprep.subr.mxu0 0.0
        %2656 = vmatpush1.msra.mxu0 0.0
        %2657 = vmatprep.subr.mxu0 0.0
        %2658 = vmatpush1.msra.mxu0 0.0
        %2659 = vmatprep.subr.mxu0 0.0
        %2660 = vmatpush1.msra.mxu0 0.0
        %2661 = vmatprep.subr.mxu0 %v661
        %2662 = vmatpush1.msra.mxu0 %v660
        %2663 = vmatprep.subr.mxu0 %v533
        %2664 = vmatpush1.msra.mxu0 %v532
        %2665 = vmatprep.subr.mxu0 %v405
        %2666 = vmatpush1.msra.mxu0 %v404
        %2667 = vmatprep.subr.mxu0 %v277
        %2668 = vmatpush1.msra.mxu0 %v276
        %2669 = vmatprep.subr.mxu0 0.0
        %2670 = vmatpush2.msra.mxu0 0.0
        %2671 = vmatprep.subr.mxu0 0.0
        %2672 = vmatpush2.msra.mxu0 0.0
        %2673 = vmatprep.subr.mxu0 0.0
        %2674 = vmatpush2.msra.mxu0 0.0
        %2675 = vmatprep.subr.mxu0 0.0
        %2676 = vmatpush2.msra.mxu0 0.0
        %2677 = vmatprep.subr.mxu0 0.0
        %2678 = vmatpush2.msra.mxu0 0.0
        %2679 = vmatprep.subr.mxu0 0.0
        %2680 = vmatpush2.msra.mxu0 0.0
        %2681 = vmatprep.subr.mxu0 0.0
        %2682 = vmatpush2.msra.mxu0 0.0
        %2683 = vmatprep.subr.mxu0 0.0
        %2684 = vmatpush2.msra.mxu0 0.0
        %2685 = vmatprep.subr.mxu0 0.0
        %2686 = vmatpush2.msra.mxu0 0.0
        %2687 = vmatprep.subr.mxu0 0.0
        %2688 = vmatpush2.msra.mxu0 0.0
        %2689 = vmatprep.subr.mxu0 0.0
        %2690 = vmatpush2.msra.mxu0 0.0
        %2691 = vmatprep.subr.mxu0 0.0
        %2692 = vmatpush2.msra.mxu0 0.0
        %2693 = vmatprep.subr.mxu0 0.0
        %2694 = vmatpush2.msra.mxu0 0.0
        %2695 = vmatprep.subr.mxu0 0.0
        %2696 = vmatpush2.msra.mxu0 0.0
        %2697 = vmatprep.subr.mxu0 0.0
        %2698 = vmatpush2.msra.mxu0 0.0
        %2699 = vmatprep.subr.mxu0 0.0
        %2700 = vmatpush2.msra.mxu0 0.0
        %2701 = vmatprep.mubr.f32.mxu0 0.0
        %2702 = vmatmul.mubr.f32.gmra.mxu0 %v1428
        %v2703 = vpop.f32.mrf.mxu0
        %v2704 = vadd.f32 %v925, %v2703
        %v2705 = vpop.f32.mrf.mxu0
        %v2706 = vadd.f32 %v929, %v2705
        %2707 = vdwg.mxu0
        %2708 = vmatprep.subr.mxu0 0.0
        %2709 = vmatpush1.msra.mxu0 0.0
        %2710 = vmatprep.subr.mxu0 0.0
        %2711 = vmatpush1.msra.mxu0 0.0
        %2712 = vmatprep.subr.mxu0 0.0
        %2713 = vmatpush1.msra.mxu0 0.0
        %2714 = vmatprep.subr.mxu0 0.0
        %2715 = vmatpush1.msra.mxu0 0.0
        %2716 = vmatprep.subr.mxu0 0.0
        %2717 = vmatpush1.msra.mxu0 0.0
        %2718 = vmatprep.subr.mxu0 0.0
        %2719 = vmatpush1.msra.mxu0 0.0
        %2720 = vmatprep.subr.mxu0 0.0
        %2721 = vmatpush1.msra.mxu0 0.0
        %2722 = vmatprep.subr.mxu0 0.0
        %2723 = vmatpush1.msra.mxu0 0.0
        %2724 = vmatprep.subr.mxu0 0.0
        %2725 = vmatpush1.msra.mxu0 0.0
        %2726 = vmatprep.subr.mxu0 0.0
        %2727 = vmatpush1.msra.mxu0 0.0
        %2728 = vmatprep.subr.mxu0 0.0
        %2729 = vmatpush1.msra.mxu0 0.0
        %2730 = vmatprep.subr.mxu0 0.0
        %2731 = vmatpush1.msra.mxu0 0.0
        %2732 = vmatprep.subr.mxu0 %v663
        %2733 = vmatpush1.msra.mxu0 %v662
        %2734 = vmatprep.subr.mxu0 %v535
        %2735 = vmatpush1.msra.mxu0 %v534
        %2736 = vmatprep.subr.mxu0 %v407
        %2737 = vmatpush1.msra.mxu0 %v406
        %2738 = vmatprep.subr.mxu0 %v279
        %2739 = vmatpush1.msra.mxu0 %v278
        %2740 = vmatprep.subr.mxu0 0.0
        %2741 = vmatpush2.msra.mxu0 0.0
        %2742 = vmatprep.subr.mxu0 0.0
        %2743 = vmatpush2.msra.mxu0 0.0
        %2744 = vmatprep.subr.mxu0 0.0
        %2745 = vmatpush2.msra.mxu0 0.0
        %2746 = vmatprep.subr.mxu0 0.0
        %2747 = vmatpush2.msra.mxu0 0.0
        %2748 = vmatprep.subr.mxu0 0.0
        %2749 = vmatpush2.msra.mxu0 0.0
        %2750 = vmatprep.subr.mxu0 0.0
        %2751 = vmatpush2.msra.mxu0 0.0
        %2752 = vmatprep.subr.mxu0 0.0
        %2753 = vmatpush2.msra.mxu0 0.0
        %2754 = vmatprep.subr.mxu0 0.0
        %2755 = vmatpush2.msra.mxu0 0.0
        %2756 = vmatprep.subr.mxu0 0.0
        %2757 = vmatpush2.msra.mxu0 0.0
        %2758 = vmatprep.subr.mxu0 0.0
        %2759 = vmatpush2.msra.mxu0 0.0
        %2760 = vmatprep.subr.mxu0 0.0
        %2761 = vmatpush2.msra.mxu0 0.0
        %2762 = vmatprep.subr.mxu0 0.0
        %2763 = vmatpush2.msra.mxu0 0.0
        %2764 = vmatprep.subr.mxu0 0.0
        %2765 = vmatpush2.msra.mxu0 0.0
        %2766 = vmatprep.subr.mxu0 0.0
        %2767 = vmatpush2.msra.mxu0 0.0
        %2768 = vmatprep.subr.mxu0 0.0
        %2769 = vmatpush2.msra.mxu0 0.0
        %2770 = vmatprep.subr.mxu0 0.0
        %2771 = vmatpush2.msra.mxu0 0.0
        %2772 = vmatprep.mubr.f32.mxu0 0.0
        %2773 = vmatmul.mubr.f32.gmra.mxu0 %v1428
        %v2774 = vpop.f32.mrf.mxu0
        %v2775 = vadd.f32 %v933, %v2774
        %v2776 = vpop.f32.mrf.mxu0
        %v2777 = vadd.f32 %v937, %v2776
        %2778 = vdwg.mxu0
        %2779 = vmatprep.subr.mxu0 0.0
        %2780 = vmatpush1.msra.mxu0 0.0
        %2781 = vmatprep.subr.mxu0 0.0
        %2782 = vmatpush1.msra.mxu0 0.0
        %2783 = vmatprep.subr.mxu0 0.0
        %2784 = vmatpush1.msra.mxu0 0.0
        %2785 = vmatprep.subr.mxu0 0.0
        %2786 = vmatpush1.msra.mxu0 0.0
        %2787 = vmatprep.subr.mxu0 0.0
        %2788 = vmatpush1.msra.mxu0 0.0
        %2789 = vmatprep.subr.mxu0 0.0
        %2790 = vmatpush1.msra.mxu0 0.0
        %2791 = vmatprep.subr.mxu0 0.0
        %2792 = vmatpush1.msra.mxu0 0.0
        %2793 = vmatprep.subr.mxu0 0.0
        %2794 = vmatpush1.msra.mxu0 0.0
        %2795 = vmatprep.subr.mxu0 0.0
        %2796 = vmatpush1.msra.mxu0 0.0
        %2797 = vmatprep.subr.mxu0 0.0
        %2798 = vmatpush1.msra.mxu0 0.0
        %2799 = vmatprep.subr.mxu0 0.0
        %2800 = vmatpush1.msra.mxu0 0.0
        %2801 = vmatprep.subr.mxu0 0.0
        %2802 = vmatpush1.msra.mxu0 0.0
        %2803 = vmatprep.subr.mxu0 %v665
        %2804 = vmatpush1.msra.mxu0 %v664
        %2805 = vmatprep.subr.mxu0 %v537
        %2806 = vmatpush1.msra.mxu0 %v536
        %2807 = vmatprep.subr.mxu0 %v409
        %2808 = vmatpush1.msra.mxu0 %v408
        %2809 = vmatprep.subr.mxu0 %v281
        %2810 = vmatpush1.msra.mxu0 %v280
        %2811 = vmatprep.subr.mxu0 0.0
        %2812 = vmatpush2.msra.mxu0 0.0
        %2813 = vmatprep.subr.mxu0 0.0
        %2814 = vmatpush2.msra.mxu0 0.0
        %2815 = vmatprep.subr.mxu0 0.0
        %2816 = vmatpush2.msra.mxu0 0.0
        %2817 = vmatprep.subr.mxu0 0.0
        %2818 = vmatpush2.msra.mxu0 0.0
        %2819 = vmatprep.subr.mxu0 0.0
        %2820 = vmatpush2.msra.mxu0 0.0
        %2821 = vmatprep.subr.mxu0 0.0
        %2822 = vmatpush2.msra.mxu0 0.0
        %2823 = vmatprep.subr.mxu0 0.0
        %2824 = vmatpush2.msra.mxu0 0.0
        %2825 = vmatprep.subr.mxu0 0.0
        %2826 = vmatpush2.msra.mxu0 0.0
        %2827 = vmatprep.subr.mxu0 0.0
        %2828 = vmatpush2.msra.mxu0 0.0
        %2829 = vmatprep.subr.mxu0 0.0
        %2830 = vmatpush2.msra.mxu0 0.0
        %2831 = vmatprep.subr.mxu0 0.0
        %2832 = vmatpush2.msra.mxu0 0.0
        %2833 = vmatprep.subr.mxu0 0.0
        %2834 = vmatpush2.msra.mxu0 0.0
        %2835 = vmatprep.subr.mxu0 0.0
        %2836 = vmatpush2.msra.mxu0 0.0
        %2837 = vmatprep.subr.mxu0 0.0
        %2838 = vmatpush2.msra.mxu0 0.0
        %2839 = vmatprep.subr.mxu0 0.0
        %2840 = vmatpush2.msra.mxu0 0.0
        %2841 = vmatprep.subr.mxu0 0.0
        %2842 = vmatpush2.msra.mxu0 0.0
        %2843 = vmatprep.mubr.f32.mxu0 0.0
        %2844 = vmatmul.mubr.f32.gmra.mxu0 %v1428
        %v2845 = vpop.f32.mrf.mxu0
        %v2846 = vadd.f32 %v941, %v2845
        %v2847 = vpop.f32.mrf.mxu0
        %v2848 = vadd.f32 %v945, %v2847
        %2849 = vdwg.mxu0
        %2850 = vmatprep.subr.mxu0 0.0
        %2851 = vmatpush1.msra.mxu0 0.0
        %2852 = vmatprep.subr.mxu0 0.0
        %2853 = vmatpush1.msra.mxu0 0.0
        %2854 = vmatprep.subr.mxu0 0.0
        %2855 = vmatpush1.msra.mxu0 0.0
        %2856 = vmatprep.subr.mxu0 0.0
        %2857 = vmatpush1.msra.mxu0 0.0
        %2858 = vmatprep.subr.mxu0 0.0
        %2859 = vmatpush1.msra.mxu0 0.0
        %2860 = vmatprep.subr.mxu0 0.0
        %2861 = vmatpush1.msra.mxu0 0.0
        %2862 = vmatprep.subr.mxu0 0.0
        %2863 = vmatpush1.msra.mxu0 0.0
        %2864 = vmatprep.subr.mxu0 0.0
        %2865 = vmatpush1.msra.mxu0 0.0
        %2866 = vmatprep.subr.mxu0 0.0
        %2867 = vmatpush1.msra.mxu0 0.0
        %2868 = vmatprep.subr.mxu0 0.0
        %2869 = vmatpush1.msra.mxu0 0.0
        %2870 = vmatprep.subr.mxu0 0.0
        %2871 = vmatpush1.msra.mxu0 0.0
        %2872 = vmatprep.subr.mxu0 0.0
        %2873 = vmatpush1.msra.mxu0 0.0
        %2874 = vmatprep.subr.mxu0 %v667
        %2875 = vmatpush1.msra.mxu0 %v666
        %2876 = vmatprep.subr.mxu0 %v539
        %2877 = vmatpush1.msra.mxu0 %v538
        %2878 = vmatprep.subr.mxu0 %v411
        %2879 = vmatpush1.msra.mxu0 %v410
        %2880 = vmatprep.subr.mxu0 %v283
        %2881 = vmatpush1.msra.mxu0 %v282
        %2882 = vmatprep.subr.mxu0 0.0
        %2883 = vmatpush2.msra.mxu0 0.0
        %2884 = vmatprep.subr.mxu0 0.0
        %2885 = vmatpush2.msra.mxu0 0.0
        %2886 = vmatprep.subr.mxu0 0.0
        %2887 = vmatpush2.msra.mxu0 0.0
        %2888 = vmatprep.subr.mxu0 0.0
        %2889 = vmatpush2.msra.mxu0 0.0
        %2890 = vmatprep.subr.mxu0 0.0
        %2891 = vmatpush2.msra.mxu0 0.0
        %2892 = vmatprep.subr.mxu0 0.0
        %2893 = vmatpush2.msra.mxu0 0.0
        %2894 = vmatprep.subr.mxu0 0.0
        %2895 = vmatpush2.msra.mxu0 0.0
        %2896 = vmatprep.subr.mxu0 0.0
        %2897 = vmatpush2.msra.mxu0 0.0
        %2898 = vmatprep.subr.mxu0 0.0
        %2899 = vmatpush2.msra.mxu0 0.0
        %2900 = vmatprep.subr.mxu0 0.0
        %2901 = vmatpush2.msra.mxu0 0.0
        %2902 = vmatprep.subr.mxu0 0.0
        %2903 = vmatpush2.msra.mxu0 0.0
        %2904 = vmatprep.subr.mxu0 0.0
        %2905 = vmatpush2.msra.mxu0 0.0
        %2906 = vmatprep.subr.mxu0 0.0
        %2907 = vmatpush2.msra.mxu0 0.0
        %2908 = vmatprep.subr.mxu0 0.0
        %2909 = vmatpush2.msra.mxu0 0.0
        %2910 = vmatprep.subr.mxu0 0.0
        %2911 = vmatpush2.msra.mxu0 0.0
        %2912 = vmatprep.subr.mxu0 0.0
        %2913 = vmatpush2.msra.mxu0 0.0
        %2914 = vmatprep.mubr.f32.mxu0 0.0
        %2915 = vmatmul.mubr.f32.gmra.mxu0 %v1428
        %v2916 = vpop.f32.mrf.mxu0
        %v2917 = vadd.f32 %v949, %v2916
        %v2918 = vpop.f32.mrf.mxu0
        %v2919 = vadd.f32 %v953, %v2918
        %2920 = vdwg.mxu0
        %2921 = vmatprep.subr.mxu0 0.0
        %2922 = vmatpush1.msra.mxu0 0.0
        %2923 = vmatprep.subr.mxu0 0.0
        %2924 = vmatpush1.msra.mxu0 0.0
        %2925 = vmatprep.subr.mxu0 0.0
        %2926 = vmatpush1.msra.mxu0 0.0
        %2927 = vmatprep.subr.mxu0 0.0
        %2928 = vmatpush1.msra.mxu0 0.0
        %2929 = vmatprep.subr.mxu0 0.0
        %2930 = vmatpush1.msra.mxu0 0.0
        %2931 = vmatprep.subr.mxu0 0.0
        %2932 = vmatpush1.msra.mxu0 0.0
        %2933 = vmatprep.subr.mxu0 0.0
        %2934 = vmatpush1.msra.mxu0 0.0
        %2935 = vmatprep.subr.mxu0 0.0
        %2936 = vmatpush1.msra.mxu0 0.0
        %2937 = vmatprep.subr.mxu0 0.0
        %2938 = vmatpush1.msra.mxu0 0.0
        %2939 = vmatprep.subr.mxu0 0.0
        %2940 = vmatpush1.msra.mxu0 0.0
        %2941 = vmatprep.subr.mxu0 0.0
        %2942 = vmatpush1.msra.mxu0 0.0
        %2943 = vmatprep.subr.mxu0 0.0
        %2944 = vmatpush1.msra.mxu0 0.0
        %2945 = vmatprep.subr.mxu0 %v669
        %2946 = vmatpush1.msra.mxu0 %v668
        %2947 = vmatprep.subr.mxu0 %v541
        %2948 = vmatpush1.msra.mxu0 %v540
        %2949 = vmatprep.subr.mxu0 %v413
        %2950 = vmatpush1.msra.mxu0 %v412
        %2951 = vmatprep.subr.mxu0 %v285
        %2952 = vmatpush1.msra.mxu0 %v284
        %2953 = vmatprep.subr.mxu0 0.0
        %2954 = vmatpush2.msra.mxu0 0.0
        %2955 = vmatprep.subr.mxu0 0.0
        %2956 = vmatpush2.msra.mxu0 0.0
        %2957 = vmatprep.subr.mxu0 0.0
        %2958 = vmatpush2.msra.mxu0 0.0
        %2959 = vmatprep.subr.mxu0 0.0
        %2960 = vmatpush2.msra.mxu0 0.0
        %2961 = vmatprep.subr.mxu0 0.0
        %2962 = vmatpush2.msra.mxu0 0.0
        %2963 = vmatprep.subr.mxu0 0.0
        %2964 = vmatpush2.msra.mxu0 0.0
        %2965 = vmatprep.subr.mxu0 0.0
        %2966 = vmatpush2.msra.mxu0 0.0
        %2967 = vmatprep.subr.mxu0 0.0
        %2968 = vmatpush2.msra.mxu0 0.0
        %2969 = vmatprep.subr.mxu0 0.0
        %2970 = vmatpush2.msra.mxu0 0.0
        %2971 = vmatprep.subr.mxu0 0.0
        %2972 = vmatpush2.msra.mxu0 0.0
        %2973 = vmatprep.subr.mxu0 0.0
        %2974 = vmatpush2.msra.mxu0 0.0
        %2975 = vmatprep.subr.mxu0 0.0
        %2976 = vmatpush2.msra.mxu0 0.0
        %2977 = vmatprep.subr.mxu0 0.0
        %2978 = vmatpush2.msra.mxu0 0.0
        %2979 = vmatprep.subr.mxu0 0.0
        %2980 = vmatpush2.msra.mxu0 0.0
        %2981 = vmatprep.subr.mxu0 0.0
        %2982 = vmatpush2.msra.mxu0 0.0
        %2983 = vmatprep.subr.mxu0 0.0
        %2984 = vmatpush2.msra.mxu0 0.0
        %2985 = vmatprep.mubr.f32.mxu0 0.0
        %2986 = vmatmul.mubr.f32.gmra.mxu0 %v1428
        %v2987 = vpop.f32.mrf.mxu0
        %v2988 = vadd.f32 %v957, %v2987
        %v2989 = vpop.f32.mrf.mxu0
        %v2990 = vadd.f32 %v961, %v2989
        %2991 = vdwg.mxu0
        %2992 = vmatprep.subr.mxu0 0.0
        %2993 = vmatpush1.msra.mxu0 0.0
        %2994 = vmatprep.subr.mxu0 0.0
        %2995 = vmatpush1.msra.mxu0 0.0
        %2996 = vmatprep.subr.mxu0 0.0
        %2997 = vmatpush1.msra.mxu0 0.0
        %2998 = vmatprep.subr.mxu0 0.0
        %2999 = vmatpush1.msra.mxu0 0.0
        %3000 = vmatprep.subr.mxu0 0.0
        %3001 = vmatpush1.msra.mxu0 0.0
        %3002 = vmatprep.subr.mxu0 0.0
        %3003 = vmatpush1.msra.mxu0 0.0
        %3004 = vmatprep.subr.mxu0 0.0
        %3005 = vmatpush1.msra.mxu0 0.0
        %3006 = vmatprep.subr.mxu0 0.0
        %3007 = vmatpush1.msra.mxu0 0.0
        %3008 = vmatprep.subr.mxu0 0.0
        %3009 = vmatpush1.msra.mxu0 0.0
        %3010 = vmatprep.subr.mxu0 0.0
        %3011 = vmatpush1.msra.mxu0 0.0
        %3012 = vmatprep.subr.mxu0 0.0
        %3013 = vmatpush1.msra.mxu0 0.0
        %3014 = vmatprep.subr.mxu0 0.0
        %3015 = vmatpush1.msra.mxu0 0.0
        %3016 = vmatprep.subr.mxu0 %v671
        %3017 = vmatpush1.msra.mxu0 %v670
        %3018 = vmatprep.subr.mxu0 %v543
        %3019 = vmatpush1.msra.mxu0 %v542
        %3020 = vmatprep.subr.mxu0 %v415
        %3021 = vmatpush1.msra.mxu0 %v414
        %3022 = vmatprep.subr.mxu0 %v287
        %3023 = vmatpush1.msra.mxu0 %v286
        %3024 = vmatprep.subr.mxu0 0.0
        %3025 = vmatpush2.msra.mxu0 0.0
        %3026 = vmatprep.subr.mxu0 0.0
        %3027 = vmatpush2.msra.mxu0 0.0
        %3028 = vmatprep.subr.mxu0 0.0
        %3029 = vmatpush2.msra.mxu0 0.0
        %3030 = vmatprep.subr.mxu0 0.0
        %3031 = vmatpush2.msra.mxu0 0.0
        %3032 = vmatprep.subr.mxu0 0.0
        %3033 = vmatpush2.msra.mxu0 0.0
        %3034 = vmatprep.subr.mxu0 0.0
        %3035 = vmatpush2.msra.mxu0 0.0
        %3036 = vmatprep.subr.mxu0 0.0
        %3037 = vmatpush2.msra.mxu0 0.0
        %3038 = vmatprep.subr.mxu0 0.0
        %3039 = vmatpush2.msra.mxu0 0.0
        %3040 = vmatprep.subr.mxu0 0.0
        %3041 = vmatpush2.msra.mxu0 0.0
        %3042 = vmatprep.subr.mxu0 0.0
        %3043 = vmatpush2.msra.mxu0 0.0
        %3044 = vmatprep.subr.mxu0 0.0
        %3045 = vmatpush2.msra.mxu0 0.0
        %3046 = vmatprep.subr.mxu0 0.0
        %3047 = vmatpush2.msra.mxu0 0.0
        %3048 = vmatprep.subr.mxu0 0.0
        %3049 = vmatpush2.msra.mxu0 0.0
        %3050 = vmatprep.subr.mxu0 0.0
        %3051 = vmatpush2.msra.mxu0 0.0
        %3052 = vmatprep.subr.mxu0 0.0
        %3053 = vmatpush2.msra.mxu0 0.0
        %3054 = vmatprep.subr.mxu0 0.0
        %3055 = vmatpush2.msra.mxu0 0.0
        %3056 = vmatprep.mubr.f32.mxu0 0.0
        %3057 = vmatmul.mubr.f32.gmra.mxu0 %v1428
        %v3058 = vpop.f32.mrf.mxu0
        %v3059 = vadd.f32 %v965, %v3058
        %v3060 = vpop.f32.mrf.mxu0
        %v3061 = vadd.f32 %v969, %v3060
        %3062 = vdwg.mxu0
        %3063 = vmatprep.subr.mxu0 0.0
        %3064 = vmatpush1.msra.mxu0 0.0
        %3065 = vmatprep.subr.mxu0 0.0
        %3066 = vmatpush1.msra.mxu0 0.0
        %3067 = vmatprep.subr.mxu0 0.0
        %3068 = vmatpush1.msra.mxu0 0.0
        %3069 = vmatprep.subr.mxu0 0.0
        %3070 = vmatpush1.msra.mxu0 0.0
        %3071 = vmatprep.subr.mxu0 0.0
        %3072 = vmatpush1.msra.mxu0 0.0
        %3073 = vmatprep.subr.mxu0 0.0
        %3074 = vmatpush1.msra.mxu0 0.0
        %3075 = vmatprep.subr.mxu0 0.0
        %3076 = vmatpush1.msra.mxu0 0.0
        %3077 = vmatprep.subr.mxu0 0.0
        %3078 = vmatpush1.msra.mxu0 0.0
        %3079 = vmatprep.subr.mxu0 0.0
        %3080 = vmatpush1.msra.mxu0 0.0
        %3081 = vmatprep.subr.mxu0 0.0
        %3082 = vmatpush1.msra.mxu0 0.0
        %3083 = vmatprep.subr.mxu0 0.0
        %3084 = vmatpush1.msra.mxu0 0.0
        %3085 = vmatprep.subr.mxu0 0.0
        %3086 = vmatpush1.msra.mxu0 0.0
        %3087 = vmatprep.subr.mxu0 %v673
        %3088 = vmatpush1.msra.mxu0 %v672
        %3089 = vmatprep.subr.mxu0 %v545
        %3090 = vmatpush1.msra.mxu0 %v544
        %3091 = vmatprep.subr.mxu0 %v417
        %3092 = vmatpush1.msra.mxu0 %v416
        %3093 = vmatprep.subr.mxu0 %v289
        %3094 = vmatpush1.msra.mxu0 %v288
        %3095 = vmatprep.subr.mxu0 0.0
        %3096 = vmatpush2.msra.mxu0 0.0
        %3097 = vmatprep.subr.mxu0 0.0
        %3098 = vmatpush2.msra.mxu0 0.0
        %3099 = vmatprep.subr.mxu0 0.0
        %3100 = vmatpush2.msra.mxu0 0.0
        %3101 = vmatprep.subr.mxu0 0.0
        %3102 = vmatpush2.msra.mxu0 0.0
        %3103 = vmatprep.subr.mxu0 0.0
        %3104 = vmatpush2.msra.mxu0 0.0
        %3105 = vmatprep.subr.mxu0 0.0
        %3106 = vmatpush2.msra.mxu0 0.0
        %3107 = vmatprep.subr.mxu0 0.0
        %3108 = vmatpush2.msra.mxu0 0.0
        %3109 = vmatprep.subr.mxu0 0.0
        %3110 = vmatpush2.msra.mxu0 0.0
        %3111 = vmatprep.subr.mxu0 0.0
        %3112 = vmatpush2.msra.mxu0 0.0
        %3113 = vmatprep.subr.mxu0 0.0
        %3114 = vmatpush2.msra.mxu0 0.0
        %3115 = vmatprep.subr.mxu0 0.0
        %3116 = vmatpush2.msra.mxu0 0.0
        %3117 = vmatprep.subr.mxu0 0.0
        %3118 = vmatpush2.msra.mxu0 0.0
        %3119 = vmatprep.subr.mxu0 0.0
        %3120 = vmatpush2.msra.mxu0 0.0
        %3121 = vmatprep.subr.mxu0 0.0
        %3122 = vmatpush2.msra.mxu0 0.0
        %3123 = vmatprep.subr.mxu0 0.0
        %3124 = vmatpush2.msra.mxu0 0.0
        %3125 = vmatprep.subr.mxu0 0.0
        %3126 = vmatpush2.msra.mxu0 0.0
        %3127 = vmatprep.mubr.f32.mxu0 0.0
        %3128 = vmatmul.mubr.f32.gmra.mxu0 %v1428
        %v3129 = vpop.f32.mrf.mxu0
        %v3130 = vadd.f32 %v973, %v3129
        %v3131 = vpop.f32.mrf.mxu0
        %v3132 = vadd.f32 %v977, %v3131
        %3133 = vdwg.mxu0
        %3134 = vmatprep.subr.mxu0 0.0
        %3135 = vmatpush1.msra.mxu0 0.0
        %3136 = vmatprep.subr.mxu0 0.0
        %3137 = vmatpush1.msra.mxu0 0.0
        %3138 = vmatprep.subr.mxu0 0.0
        %3139 = vmatpush1.msra.mxu0 0.0
        %3140 = vmatprep.subr.mxu0 0.0
        %3141 = vmatpush1.msra.mxu0 0.0
        %3142 = vmatprep.subr.mxu0 0.0
        %3143 = vmatpush1.msra.mxu0 0.0
        %3144 = vmatprep.subr.mxu0 0.0
        %3145 = vmatpush1.msra.mxu0 0.0
        %3146 = vmatprep.subr.mxu0 0.0
        %3147 = vmatpush1.msra.mxu0 0.0
        %3148 = vmatprep.subr.mxu0 0.0
        %3149 = vmatpush1.msra.mxu0 0.0
        %3150 = vmatprep.subr.mxu0 0.0
        %3151 = vmatpush1.msra.mxu0 0.0
        %3152 = vmatprep.subr.mxu0 0.0
        %3153 = vmatpush1.msra.mxu0 0.0
        %3154 = vmatprep.subr.mxu0 0.0
        %3155 = vmatpush1.msra.mxu0 0.0
        %3156 = vmatprep.subr.mxu0 0.0
        %3157 = vmatpush1.msra.mxu0 0.0
        %3158 = vmatprep.subr.mxu0 %v675
        %3159 = vmatpush1.msra.mxu0 %v674
        %3160 = vmatprep.subr.mxu0 %v547
        %3161 = vmatpush1.msra.mxu0 %v546
        %3162 = vmatprep.subr.mxu0 %v419
        %3163 = vmatpush1.msra.mxu0 %v418
        %3164 = vmatprep.subr.mxu0 %v291
        %3165 = vmatpush1.msra.mxu0 %v290
        %3166 = vmatprep.subr.mxu0 0.0
        %3167 = vmatpush2.msra.mxu0 0.0
        %3168 = vmatprep.subr.mxu0 0.0
        %3169 = vmatpush2.msra.mxu0 0.0
        %3170 = vmatprep.subr.mxu0 0.0
        %3171 = vmatpush2.msra.mxu0 0.0
        %3172 = vmatprep.subr.mxu0 0.0
        %3173 = vmatpush2.msra.mxu0 0.0
        %3174 = vmatprep.subr.mxu0 0.0
        %3175 = vmatpush2.msra.mxu0 0.0
        %3176 = vmatprep.subr.mxu0 0.0
        %3177 = vmatpush2.msra.mxu0 0.0
        %3178 = vmatprep.subr.mxu0 0.0
        %3179 = vmatpush2.msra.mxu0 0.0
        %3180 = vmatprep.subr.mxu0 0.0
        %3181 = vmatpush2.msra.mxu0 0.0
        %3182 = vmatprep.subr.mxu0 0.0
        %3183 = vmatpush2.msra.mxu0 0.0
        %3184 = vmatprep.subr.mxu0 0.0
        %3185 = vmatpush2.msra.mxu0 0.0
        %3186 = vmatprep.subr.mxu0 0.0
        %3187 = vmatpush2.msra.mxu0 0.0
        %3188 = vmatprep.subr.mxu0 0.0
        %3189 = vmatpush2.msra.mxu0 0.0
        %3190 = vmatprep.subr.mxu0 0.0
        %3191 = vmatpush2.msra.mxu0 0.0
        %3192 = vmatprep.subr.mxu0 0.0
        %3193 = vmatpush2.msra.mxu0 0.0
        %3194 = vmatprep.subr.mxu0 0.0
        %3195 = vmatpush2.msra.mxu0 0.0
        %3196 = vmatprep.subr.mxu0 0.0
        %3197 = vmatpush2.msra.mxu0 0.0
        %3198 = vmatprep.mubr.f32.mxu0 0.0
        %3199 = vmatmul.mubr.f32.gmra.mxu0 %v1428
        %v3200 = vpop.f32.mrf.mxu0
        %v3201 = vadd.f32 %v981, %v3200
        %v3202 = vpop.f32.mrf.mxu0
        %v3203 = vadd.f32 %v985, %v3202
        %3204 = vdwg.mxu0
        %3205 = vmatprep.subr.mxu0 0.0
        %3206 = vmatpush1.msra.mxu0 0.0
        %3207 = vmatprep.subr.mxu0 0.0
        %3208 = vmatpush1.msra.mxu0 0.0
        %3209 = vmatprep.subr.mxu0 0.0
        %3210 = vmatpush1.msra.mxu0 0.0
        %3211 = vmatprep.subr.mxu0 0.0
        %3212 = vmatpush1.msra.mxu0 0.0
        %3213 = vmatprep.subr.mxu0 0.0
        %3214 = vmatpush1.msra.mxu0 0.0
        %3215 = vmatprep.subr.mxu0 0.0
        %3216 = vmatpush1.msra.mxu0 0.0
        %3217 = vmatprep.subr.mxu0 0.0
        %3218 = vmatpush1.msra.mxu0 0.0
        %3219 = vmatprep.subr.mxu0 0.0
        %3220 = vmatpush1.msra.mxu0 0.0
        %3221 = vmatprep.subr.mxu0 0.0
        %3222 = vmatpush1.msra.mxu0 0.0
        %3223 = vmatprep.subr.mxu0 0.0
        %3224 = vmatpush1.msra.mxu0 0.0
        %3225 = vmatprep.subr.mxu0 0.0
        %3226 = vmatpush1.msra.mxu0 0.0
        %3227 = vmatprep.subr.mxu0 0.0
        %3228 = vmatpush1.msra.mxu0 0.0
        %3229 = vmatprep.subr.mxu0 %v677
        %3230 = vmatpush1.msra.mxu0 %v676
        %3231 = vmatprep.subr.mxu0 %v549
        %3232 = vmatpush1.msra.mxu0 %v548
        %3233 = vmatprep.subr.mxu0 %v421
        %3234 = vmatpush1.msra.mxu0 %v420
        %3235 = vmatprep.subr.mxu0 %v293
        %3236 = vmatpush1.msra.mxu0 %v292
        %3237 = vmatprep.subr.mxu0 0.0
        %3238 = vmatpush2.msra.mxu0 0.0
        %3239 = vmatprep.subr.mxu0 0.0
        %3240 = vmatpush2.msra.mxu0 0.0
        %3241 = vmatprep.subr.mxu0 0.0
        %3242 = vmatpush2.msra.mxu0 0.0
        %3243 = vmatprep.subr.mxu0 0.0
        %3244 = vmatpush2.msra.mxu0 0.0
        %3245 = vmatprep.subr.mxu0 0.0
        %3246 = vmatpush2.msra.mxu0 0.0
        %3247 = vmatprep.subr.mxu0 0.0
        %3248 = vmatpush2.msra.mxu0 0.0
        %3249 = vmatprep.subr.mxu0 0.0
        %3250 = vmatpush2.msra.mxu0 0.0
        %3251 = vmatprep.subr.mxu0 0.0
        %3252 = vmatpush2.msra.mxu0 0.0
        %3253 = vmatprep.subr.mxu0 0.0
        %3254 = vmatpush2.msra.mxu0 0.0
        %3255 = vmatprep.subr.mxu0 0.0
        %3256 = vmatpush2.msra.mxu0 0.0
        %3257 = vmatprep.subr.mxu0 0.0
        %3258 = vmatpush2.msra.mxu0 0.0
        %3259 = vmatprep.subr.mxu0 0.0
        %3260 = vmatpush2.msra.mxu0 0.0
        %3261 = vmatprep.subr.mxu0 0.0
        %3262 = vmatpush2.msra.mxu0 0.0
        %3263 = vmatprep.subr.mxu0 0.0
        %3264 = vmatpush2.msra.mxu0 0.0
        %3265 = vmatprep.subr.mxu0 0.0
        %3266 = vmatpush2.msra.mxu0 0.0
        %3267 = vmatprep.subr.mxu0 0.0
        %3268 = vmatpush2.msra.mxu0 0.0
        %3269 = vmatprep.mubr.f32.mxu0 0.0
        %3270 = vmatmul.mubr.f32.gmra.mxu0 %v1428
        %v3271 = vpop.f32.mrf.mxu0
        %v3272 = vadd.f32 %v989, %v3271
        %v3273 = vpop.f32.mrf.mxu0
        %v3274 = vadd.f32 %v993, %v3273
        %3275 = vdwg.mxu0
        %3276 = vmatprep.subr.mxu0 0.0
        %3277 = vmatpush1.msra.mxu0 0.0
        %3278 = vmatprep.subr.mxu0 0.0
        %3279 = vmatpush1.msra.mxu0 0.0
        %3280 = vmatprep.subr.mxu0 0.0
        %3281 = vmatpush1.msra.mxu0 0.0
        %3282 = vmatprep.subr.mxu0 0.0
        %3283 = vmatpush1.msra.mxu0 0.0
        %3284 = vmatprep.subr.mxu0 0.0
        %3285 = vmatpush1.msra.mxu0 0.0
        %3286 = vmatprep.subr.mxu0 0.0
        %3287 = vmatpush1.msra.mxu0 0.0
        %3288 = vmatprep.subr.mxu0 0.0
        %3289 = vmatpush1.msra.mxu0 0.0
        %3290 = vmatprep.subr.mxu0 0.0
        %3291 = vmatpush1.msra.mxu0 0.0
        %3292 = vmatprep.subr.mxu0 0.0
        %3293 = vmatpush1.msra.mxu0 0.0
        %3294 = vmatprep.subr.mxu0 0.0
        %3295 = vmatpush1.msra.mxu0 0.0
        %3296 = vmatprep.subr.mxu0 0.0
        %3297 = vmatpush1.msra.mxu0 0.0
        %3298 = vmatprep.subr.mxu0 0.0
        %3299 = vmatpush1.msra.mxu0 0.0
        %3300 = vmatprep.subr.mxu0 %v679
        %3301 = vmatpush1.msra.mxu0 %v678
        %3302 = vmatprep.subr.mxu0 %v551
        %3303 = vmatpush1.msra.mxu0 %v550
        %3304 = vmatprep.subr.mxu0 %v423
        %3305 = vmatpush1.msra.mxu0 %v422
        %3306 = vmatprep.subr.mxu0 %v295
        %3307 = vmatpush1.msra.mxu0 %v294
        %3308 = vmatprep.subr.mxu0 0.0
        %3309 = vmatpush2.msra.mxu0 0.0
        %3310 = vmatprep.subr.mxu0 0.0
        %3311 = vmatpush2.msra.mxu0 0.0
        %3312 = vmatprep.subr.mxu0 0.0
        %3313 = vmatpush2.msra.mxu0 0.0
        %3314 = vmatprep.subr.mxu0 0.0
        %3315 = vmatpush2.msra.mxu0 0.0
        %3316 = vmatprep.subr.mxu0 0.0
        %3317 = vmatpush2.msra.mxu0 0.0
        %3318 = vmatprep.subr.mxu0 0.0
        %3319 = vmatpush2.msra.mxu0 0.0
        %3320 = vmatprep.subr.mxu0 0.0
        %3321 = vmatpush2.msra.mxu0 0.0
        %3322 = vmatprep.subr.mxu0 0.0
        %3323 = vmatpush2.msra.mxu0 0.0
        %3324 = vmatprep.subr.mxu0 0.0
        %3325 = vmatpush2.msra.mxu0 0.0
        %3326 = vmatprep.subr.mxu0 0.0
        %3327 = vmatpush2.msra.mxu0 0.0
        %3328 = vmatprep.subr.mxu0 0.0
        %3329 = vmatpush2.msra.mxu0 0.0
        %3330 = vmatprep.subr.mxu0 0.0
        %3331 = vmatpush2.msra.mxu0 0.0
        %3332 = vmatprep.subr.mxu0 0.0
        %3333 = vmatpush2.msra.mxu0 0.0
        %3334 = vmatprep.subr.mxu0 0.0
        %3335 = vmatpush2.msra.mxu0 0.0
        %3336 = vmatprep.subr.mxu0 0.0
        %3337 = vmatpush2.msra.mxu0 0.0
        %3338 = vmatprep.subr.mxu0 0.0
        %3339 = vmatpush2.msra.mxu0 0.0
        %3340 = vmatprep.mubr.f32.mxu0 0.0
        %3341 = vmatmul.mubr.f32.gmra.mxu0 %v1428
        %v3342 = vpop.f32.mrf.mxu0
        %v3343 = vadd.f32 %v997, %v3342
        %v3344 = vpop.f32.mrf.mxu0
        %v3345 = vadd.f32 %v1001, %v3344
        %3346 = vdwg.mxu0
        %3347 = vmatprep.subr.mxu0 0.0
        %3348 = vmatpush1.msra.mxu0 0.0
        %3349 = vmatprep.subr.mxu0 0.0
        %3350 = vmatpush1.msra.mxu0 0.0
        %3351 = vmatprep.subr.mxu0 0.0
        %3352 = vmatpush1.msra.mxu0 0.0
        %3353 = vmatprep.subr.mxu0 0.0
        %3354 = vmatpush1.msra.mxu0 0.0
        %3355 = vmatprep.subr.mxu0 0.0
        %3356 = vmatpush1.msra.mxu0 0.0
        %3357 = vmatprep.subr.mxu0 0.0
        %3358 = vmatpush1.msra.mxu0 0.0
        %3359 = vmatprep.subr.mxu0 0.0
        %3360 = vmatpush1.msra.mxu0 0.0
        %3361 = vmatprep.subr.mxu0 0.0
        %3362 = vmatpush1.msra.mxu0 0.0
        %3363 = vmatprep.subr.mxu0 0.0
        %3364 = vmatpush1.msra.mxu0 0.0
        %3365 = vmatprep.subr.mxu0 0.0
        %3366 = vmatpush1.msra.mxu0 0.0
        %3367 = vmatprep.subr.mxu0 0.0
        %3368 = vmatpush1.msra.mxu0 0.0
        %3369 = vmatprep.subr.mxu0 0.0
        %3370 = vmatpush1.msra.mxu0 0.0
        %3371 = vmatprep.subr.mxu0 %v681
        %3372 = vmatpush1.msra.mxu0 %v680
        %3373 = vmatprep.subr.mxu0 %v553
        %3374 = vmatpush1.msra.mxu0 %v552
        %3375 = vmatprep.subr.mxu0 %v425
        %3376 = vmatpush1.msra.mxu0 %v424
        %3377 = vmatprep.subr.mxu0 %v297
        %3378 = vmatpush1.msra.mxu0 %v296
        %3379 = vmatprep.subr.mxu0 0.0
        %3380 = vmatpush2.msra.mxu0 0.0
        %3381 = vmatprep.subr.mxu0 0.0
        %3382 = vmatpush2.msra.mxu0 0.0
        %3383 = vmatprep.subr.mxu0 0.0
        %3384 = vmatpush2.msra.mxu0 0.0
        %3385 = vmatprep.subr.mxu0 0.0
        %3386 = vmatpush2.msra.mxu0 0.0
        %3387 = vmatprep.subr.mxu0 0.0
        %3388 = vmatpush2.msra.mxu0 0.0
        %3389 = vmatprep.subr.mxu0 0.0
        %3390 = vmatpush2.msra.mxu0 0.0
        %3391 = vmatprep.subr.mxu0 0.0
        %3392 = vmatpush2.msra.mxu0 0.0
        %3393 = vmatprep.subr.mxu0 0.0
        %3394 = vmatpush2.msra.mxu0 0.0
        %3395 = vmatprep.subr.mxu0 0.0
        %3396 = vmatpush2.msra.mxu0 0.0
        %3397 = vmatprep.subr.mxu0 0.0
        %3398 = vmatpush2.msra.mxu0 0.0
        %3399 = vmatprep.subr.mxu0 0.0
        %3400 = vmatpush2.msra.mxu0 0.0
        %3401 = vmatprep.subr.mxu0 0.0
        %3402 = vmatpush2.msra.mxu0 0.0
        %3403 = vmatprep.subr.mxu0 0.0
        %3404 = vmatpush2.msra.mxu0 0.0
        %3405 = vmatprep.subr.mxu0 0.0
        %3406 = vmatpush2.msra.mxu0 0.0
        %3407 = vmatprep.subr.mxu0 0.0
        %3408 = vmatpush2.msra.mxu0 0.0
        %3409 = vmatprep.subr.mxu0 0.0
        %3410 = vmatpush2.msra.mxu0 0.0
        %3411 = vmatprep.mubr.f32.mxu0 0.0
        %3412 = vmatmul.mubr.f32.gmra.mxu0 %v1428
        %v3413 = vpop.f32.mrf.mxu0
        %v3414 = vadd.f32 %v1005, %v3413
        %v3415 = vpop.f32.mrf.mxu0
        %v3416 = vadd.f32 %v1009, %v3415
        %3417 = vdwg.mxu0
        %3418 = vmatprep.subr.mxu0 0.0
        %3419 = vmatpush1.msra.mxu0 0.0
        %3420 = vmatprep.subr.mxu0 0.0
        %3421 = vmatpush1.msra.mxu0 0.0
        %3422 = vmatprep.subr.mxu0 0.0
        %3423 = vmatpush1.msra.mxu0 0.0
        %3424 = vmatprep.subr.mxu0 0.0
        %3425 = vmatpush1.msra.mxu0 0.0
        %3426 = vmatprep.subr.mxu0 0.0
        %3427 = vmatpush1.msra.mxu0 0.0
        %3428 = vmatprep.subr.mxu0 0.0
        %3429 = vmatpush1.msra.mxu0 0.0
        %3430 = vmatprep.subr.mxu0 0.0
        %3431 = vmatpush1.msra.mxu0 0.0
        %3432 = vmatprep.subr.mxu0 0.0
        %3433 = vmatpush1.msra.mxu0 0.0
        %3434 = vmatprep.subr.mxu0 0.0
        %3435 = vmatpush1.msra.mxu0 0.0
        %3436 = vmatprep.subr.mxu0 0.0
        %3437 = vmatpush1.msra.mxu0 0.0
        %3438 = vmatprep.subr.mxu0 0.0
        %3439 = vmatpush1.msra.mxu0 0.0
        %3440 = vmatprep.subr.mxu0 0.0
        %3441 = vmatpush1.msra.mxu0 0.0
        %3442 = vmatprep.subr.mxu0 %v683
        %3443 = vmatpush1.msra.mxu0 %v682
        %3444 = vmatprep.subr.mxu0 %v555
        %3445 = vmatpush1.msra.mxu0 %v554
        %3446 = vmatprep.subr.mxu0 %v427
        %3447 = vmatpush1.msra.mxu0 %v426
        %3448 = vmatprep.subr.mxu0 %v299
        %3449 = vmatpush1.msra.mxu0 %v298
        %3450 = vmatprep.subr.mxu0 0.0
        %3451 = vmatpush2.msra.mxu0 0.0
        %3452 = vmatprep.subr.mxu0 0.0
        %3453 = vmatpush2.msra.mxu0 0.0
        %3454 = vmatprep.subr.mxu0 0.0
        %3455 = vmatpush2.msra.mxu0 0.0
        %3456 = vmatprep.subr.mxu0 0.0
        %3457 = vmatpush2.msra.mxu0 0.0
        %3458 = vmatprep.subr.mxu0 0.0
        %3459 = vmatpush2.msra.mxu0 0.0
        %3460 = vmatprep.subr.mxu0 0.0
        %3461 = vmatpush2.msra.mxu0 0.0
        %3462 = vmatprep.subr.mxu0 0.0
        %3463 = vmatpush2.msra.mxu0 0.0
        %3464 = vmatprep.subr.mxu0 0.0
        %3465 = vmatpush2.msra.mxu0 0.0
        %3466 = vmatprep.subr.mxu0 0.0
        %3467 = vmatpush2.msra.mxu0 0.0
        %3468 = vmatprep.subr.mxu0 0.0
        %3469 = vmatpush2.msra.mxu0 0.0
        %3470 = vmatprep.subr.mxu0 0.0
        %3471 = vmatpush2.msra.mxu0 0.0
        %3472 = vmatprep.subr.mxu0 0.0
        %3473 = vmatpush2.msra.mxu0 0.0
        %3474 = vmatprep.subr.mxu0 0.0
        %3475 = vmatpush2.msra.mxu0 0.0
        %3476 = vmatprep.subr.mxu0 0.0
        %3477 = vmatpush2.msra.mxu0 0.0
        %3478 = vmatprep.subr.mxu0 0.0
        %3479 = vmatpush2.msra.mxu0 0.0
        %3480 = vmatprep.subr.mxu0 0.0
        %3481 = vmatpush2.msra.mxu0 0.0
        %3482 = vmatprep.mubr.f32.mxu0 0.0
        %3483 = vmatmul.mubr.f32.gmra.mxu0 %v1428
        %v3484 = vpop.f32.mrf.mxu0
        %v3485 = vadd.f32 %v1013, %v3484
        %v3486 = vpop.f32.mrf.mxu0
        %v3487 = vadd.f32 %v1017, %v3486
        %3488 = vdwg.mxu0
        %3489 = vmatprep.subr.mxu0 0.0
        %3490 = vmatpush1.msra.mxu0 0.0
        %3491 = vmatprep.subr.mxu0 0.0
        %3492 = vmatpush1.msra.mxu0 0.0
        %3493 = vmatprep.subr.mxu0 0.0
        %3494 = vmatpush1.msra.mxu0 0.0
        %3495 = vmatprep.subr.mxu0 0.0
        %3496 = vmatpush1.msra.mxu0 0.0
        %3497 = vmatprep.subr.mxu0 0.0
        %3498 = vmatpush1.msra.mxu0 0.0
        %3499 = vmatprep.subr.mxu0 0.0
        %3500 = vmatpush1.msra.mxu0 0.0
        %3501 = vmatprep.subr.mxu0 0.0
        %3502 = vmatpush1.msra.mxu0 0.0
        %3503 = vmatprep.subr.mxu0 0.0
        %3504 = vmatpush1.msra.mxu0 0.0
        %3505 = vmatprep.subr.mxu0 0.0
        %3506 = vmatpush1.msra.mxu0 0.0
        %3507 = vmatprep.subr.mxu0 0.0
        %3508 = vmatpush1.msra.mxu0 0.0
        %3509 = vmatprep.subr.mxu0 0.0
        %3510 = vmatpush1.msra.mxu0 0.0
        %3511 = vmatprep.subr.mxu0 0.0
        %3512 = vmatpush1.msra.mxu0 0.0
        %3513 = vmatprep.subr.mxu0 %v685
        %3514 = vmatpush1.msra.mxu0 %v684
        %3515 = vmatprep.subr.mxu0 %v557
        %3516 = vmatpush1.msra.mxu0 %v556
        %3517 = vmatprep.subr.mxu0 %v429
        %3518 = vmatpush1.msra.mxu0 %v428
        %3519 = vmatprep.subr.mxu0 %v301
        %3520 = vmatpush1.msra.mxu0 %v300
        %3521 = vmatprep.subr.mxu0 0.0
        %3522 = vmatpush2.msra.mxu0 0.0
        %3523 = vmatprep.subr.mxu0 0.0
        %3524 = vmatpush2.msra.mxu0 0.0
        %3525 = vmatprep.subr.mxu0 0.0
        %3526 = vmatpush2.msra.mxu0 0.0
        %3527 = vmatprep.subr.mxu0 0.0
        %3528 = vmatpush2.msra.mxu0 0.0
        %3529 = vmatprep.subr.mxu0 0.0
        %3530 = vmatpush2.msra.mxu0 0.0
        %3531 = vmatprep.subr.mxu0 0.0
        %3532 = vmatpush2.msra.mxu0 0.0
        %3533 = vmatprep.subr.mxu0 0.0
        %3534 = vmatpush2.msra.mxu0 0.0
        %3535 = vmatprep.subr.mxu0 0.0
        %3536 = vmatpush2.msra.mxu0 0.0
        %3537 = vmatprep.subr.mxu0 0.0
        %3538 = vmatpush2.msra.mxu0 0.0
        %3539 = vmatprep.subr.mxu0 0.0
        %3540 = vmatpush2.msra.mxu0 0.0
        %3541 = vmatprep.subr.mxu0 0.0
        %3542 = vmatpush2.msra.mxu0 0.0
        %3543 = vmatprep.subr.mxu0 0.0
        %3544 = vmatpush2.msra.mxu0 0.0
        %3545 = vmatprep.subr.mxu0 0.0
        %3546 = vmatpush2.msra.mxu0 0.0
        %3547 = vmatprep.subr.mxu0 0.0
        %3548 = vmatpush2.msra.mxu0 0.0
        %3549 = vmatprep.subr.mxu0 0.0
        %3550 = vmatpush2.msra.mxu0 0.0
        %3551 = vmatprep.subr.mxu0 0.0
        %3552 = vmatpush2.msra.mxu0 0.0
        %3553 = vmatprep.mubr.f32.mxu0 0.0
        %3554 = vmatmul.mubr.f32.gmra.mxu0 %v1428
        %v3555 = vpop.f32.mrf.mxu0
        %v3556 = vadd.f32 %v1021, %v3555
        %v3557 = vpop.f32.mrf.mxu0
        %v3558 = vadd.f32 %v1025, %v3557
        %3559 = vdwg.mxu0
        %3560 = vmatprep.subr.mxu0 0.0
        %3561 = vmatpush1.msra.mxu0 0.0
        %3562 = vmatprep.subr.mxu0 0.0
        %3563 = vmatpush1.msra.mxu0 0.0
        %3564 = vmatprep.subr.mxu0 0.0
        %3565 = vmatpush1.msra.mxu0 0.0
        %3566 = vmatprep.subr.mxu0 0.0
        %3567 = vmatpush1.msra.mxu0 0.0
        %3568 = vmatprep.subr.mxu0 0.0
        %3569 = vmatpush1.msra.mxu0 0.0
        %3570 = vmatprep.subr.mxu0 0.0
        %3571 = vmatpush1.msra.mxu0 0.0
        %3572 = vmatprep.subr.mxu0 0.0
        %3573 = vmatpush1.msra.mxu0 0.0
        %3574 = vmatprep.subr.mxu0 0.0
        %3575 = vmatpush1.msra.mxu0 0.0
        %3576 = vmatprep.subr.mxu0 0.0
        %3577 = vmatpush1.msra.mxu0 0.0
        %3578 = vmatprep.subr.mxu0 0.0
        %3579 = vmatpush1.msra.mxu0 0.0
        %3580 = vmatprep.subr.mxu0 0.0
        %3581 = vmatpush1.msra.mxu0 0.0
        %3582 = vmatprep.subr.mxu0 0.0
        %3583 = vmatpush1.msra.mxu0 0.0
        %3584 = vmatprep.subr.mxu0 %v687
        %3585 = vmatpush1.msra.mxu0 %v686
        %3586 = vmatprep.subr.mxu0 %v559
        %3587 = vmatpush1.msra.mxu0 %v558
        %3588 = vmatprep.subr.mxu0 %v431
        %3589 = vmatpush1.msra.mxu0 %v430
        %3590 = vmatprep.subr.mxu0 %v303
        %3591 = vmatpush1.msra.mxu0 %v302
        %3592 = vmatprep.subr.mxu0 0.0
        %3593 = vmatpush2.msra.mxu0 0.0
        %3594 = vmatprep.subr.mxu0 0.0
        %3595 = vmatpush2.msra.mxu0 0.0
        %3596 = vmatprep.subr.mxu0 0.0
        %3597 = vmatpush2.msra.mxu0 0.0
        %3598 = vmatprep.subr.mxu0 0.0
        %3599 = vmatpush2.msra.mxu0 0.0
        %3600 = vmatprep.subr.mxu0 0.0
        %3601 = vmatpush2.msra.mxu0 0.0
        %3602 = vmatprep.subr.mxu0 0.0
        %3603 = vmatpush2.msra.mxu0 0.0
        %3604 = vmatprep.subr.mxu0 0.0
        %3605 = vmatpush2.msra.mxu0 0.0
        %3606 = vmatprep.subr.mxu0 0.0
        %3607 = vmatpush2.msra.mxu0 0.0
        %3608 = vmatprep.subr.mxu0 0.0
        %3609 = vmatpush2.msra.mxu0 0.0
        %3610 = vmatprep.subr.mxu0 0.0
        %3611 = vmatpush2.msra.mxu0 0.0
        %3612 = vmatprep.subr.mxu0 0.0
        %3613 = vmatpush2.msra.mxu0 0.0
        %3614 = vmatprep.subr.mxu0 0.0
        %3615 = vmatpush2.msra.mxu0 0.0
        %3616 = vmatprep.subr.mxu0 0.0
        %3617 = vmatpush2.msra.mxu0 0.0
        %3618 = vmatprep.subr.mxu0 0.0
        %3619 = vmatpush2.msra.mxu0 0.0
        %3620 = vmatprep.subr.mxu0 0.0
        %3621 = vmatpush2.msra.mxu0 0.0
        %3622 = vmatprep.subr.mxu0 0.0
        %3623 = vmatpush2.msra.mxu0 0.0
        %3624 = vmatprep.mubr.f32.mxu0 0.0
        %3625 = vmatmul.mubr.f32.gmra.mxu0 %v1428
        %v3626 = vpop.f32.mrf.mxu0
        %v3627 = vadd.f32 %v1029, %v3626
        %v3628 = vpop.f32.mrf.mxu0
        %v3629 = vadd.f32 %v1033, %v3628
        %3630 = vdwg.mxu0
        %3631 = vmatprep.subr.mxu0 0.0
        %3632 = vmatpush1.msra.mxu0 0.0
        %3633 = vmatprep.subr.mxu0 0.0
        %3634 = vmatpush1.msra.mxu0 0.0
        %3635 = vmatprep.subr.mxu0 0.0
        %3636 = vmatpush1.msra.mxu0 0.0
        %3637 = vmatprep.subr.mxu0 0.0
        %3638 = vmatpush1.msra.mxu0 0.0
        %3639 = vmatprep.subr.mxu0 0.0
        %3640 = vmatpush1.msra.mxu0 0.0
        %3641 = vmatprep.subr.mxu0 0.0
        %3642 = vmatpush1.msra.mxu0 0.0
        %3643 = vmatprep.subr.mxu0 0.0
        %3644 = vmatpush1.msra.mxu0 0.0
        %3645 = vmatprep.subr.mxu0 0.0
        %3646 = vmatpush1.msra.mxu0 0.0
        %3647 = vmatprep.subr.mxu0 0.0
        %3648 = vmatpush1.msra.mxu0 0.0
        %3649 = vmatprep.subr.mxu0 0.0
        %3650 = vmatpush1.msra.mxu0 0.0
        %3651 = vmatprep.subr.mxu0 0.0
        %3652 = vmatpush1.msra.mxu0 0.0
        %3653 = vmatprep.subr.mxu0 0.0
        %3654 = vmatpush1.msra.mxu0 0.0
        %3655 = vmatprep.subr.mxu0 %v689
        %3656 = vmatpush1.msra.mxu0 %v688
        %3657 = vmatprep.subr.mxu0 %v561
        %3658 = vmatpush1.msra.mxu0 %v560
        %3659 = vmatprep.subr.mxu0 %v433
        %3660 = vmatpush1.msra.mxu0 %v432
        %3661 = vmatprep.subr.mxu0 %v305
        %3662 = vmatpush1.msra.mxu0 %v304
        %3663 = vmatprep.subr.mxu0 0.0
        %3664 = vmatpush2.msra.mxu0 0.0
        %3665 = vmatprep.subr.mxu0 0.0
        %3666 = vmatpush2.msra.mxu0 0.0
        %3667 = vmatprep.subr.mxu0 0.0
        %3668 = vmatpush2.msra.mxu0 0.0
        %3669 = vmatprep.subr.mxu0 0.0
        %3670 = vmatpush2.msra.mxu0 0.0
        %3671 = vmatprep.subr.mxu0 0.0
        %3672 = vmatpush2.msra.mxu0 0.0
        %3673 = vmatprep.subr.mxu0 0.0
        %3674 = vmatpush2.msra.mxu0 0.0
        %3675 = vmatprep.subr.mxu0 0.0
        %3676 = vmatpush2.msra.mxu0 0.0
        %3677 = vmatprep.subr.mxu0 0.0
        %3678 = vmatpush2.msra.mxu0 0.0
        %3679 = vmatprep.subr.mxu0 0.0
        %3680 = vmatpush2.msra.mxu0 0.0
        %3681 = vmatprep.subr.mxu0 0.0
        %3682 = vmatpush2.msra.mxu0 0.0
        %3683 = vmatprep.subr.mxu0 0.0
        %3684 = vmatpush2.msra.mxu0 0.0
        %3685 = vmatprep.subr.mxu0 0.0
        %3686 = vmatpush2.msra.mxu0 0.0
        %3687 = vmatprep.subr.mxu0 0.0
        %3688 = vmatpush2.msra.mxu0 0.0
        %3689 = vmatprep.subr.mxu0 0.0
        %3690 = vmatpush2.msra.mxu0 0.0
        %3691 = vmatprep.subr.mxu0 0.0
        %3692 = vmatpush2.msra.mxu0 0.0
        %3693 = vmatprep.subr.mxu0 0.0
        %3694 = vmatpush2.msra.mxu0 0.0
        %3695 = vmatprep.mubr.f32.mxu0 0.0
        %3696 = vmatmul.mubr.f32.gmra.mxu0 %v1428
        %v3697 = vpop.f32.mrf.mxu0
        %v3698 = vadd.f32 %v1037, %v3697
        %v3699 = vpop.f32.mrf.mxu0
        %v3700 = vadd.f32 %v1041, %v3699
        %3701 = vdwg.mxu0
        %3702 = vmatprep.subr.mxu0 0.0
        %3703 = vmatpush1.msra.mxu0 0.0
        %3704 = vmatprep.subr.mxu0 0.0
        %3705 = vmatpush1.msra.mxu0 0.0
        %3706 = vmatprep.subr.mxu0 0.0
        %3707 = vmatpush1.msra.mxu0 0.0
        %3708 = vmatprep.subr.mxu0 0.0
        %3709 = vmatpush1.msra.mxu0 0.0
        %3710 = vmatprep.subr.mxu0 0.0
        %3711 = vmatpush1.msra.mxu0 0.0
        %3712 = vmatprep.subr.mxu0 0.0
        %3713 = vmatpush1.msra.mxu0 0.0
        %3714 = vmatprep.subr.mxu0 0.0
        %3715 = vmatpush1.msra.mxu0 0.0
        %3716 = vmatprep.subr.mxu0 0.0
        %3717 = vmatpush1.msra.mxu0 0.0
        %3718 = vmatprep.subr.mxu0 0.0
        %3719 = vmatpush1.msra.mxu0 0.0
        %3720 = vmatprep.subr.mxu0 0.0
        %3721 = vmatpush1.msra.mxu0 0.0
        %3722 = vmatprep.subr.mxu0 0.0
        %3723 = vmatpush1.msra.mxu0 0.0
        %3724 = vmatprep.subr.mxu0 0.0
        %3725 = vmatpush1.msra.mxu0 0.0
        %3726 = vmatprep.subr.mxu0 %v691
        %3727 = vmatpush1.msra.mxu0 %v690
        %3728 = vmatprep.subr.mxu0 %v563
        %3729 = vmatpush1.msra.mxu0 %v562
        %3730 = vmatprep.subr.mxu0 %v435
        %3731 = vmatpush1.msra.mxu0 %v434
        %3732 = vmatprep.subr.mxu0 %v307
        %3733 = vmatpush1.msra.mxu0 %v306
        %3734 = vmatprep.subr.mxu0 0.0
        %3735 = vmatpush2.msra.mxu0 0.0
        %3736 = vmatprep.subr.mxu0 0.0
        %3737 = vmatpush2.msra.mxu0 0.0
        %3738 = vmatprep.subr.mxu0 0.0
        %3739 = vmatpush2.msra.mxu0 0.0
        %3740 = vmatprep.subr.mxu0 0.0
        %3741 = vmatpush2.msra.mxu0 0.0
        %3742 = vmatprep.subr.mxu0 0.0
        %3743 = vmatpush2.msra.mxu0 0.0
        %3744 = vmatprep.subr.mxu0 0.0
        %3745 = vmatpush2.msra.mxu0 0.0
        %3746 = vmatprep.subr.mxu0 0.0
        %3747 = vmatpush2.msra.mxu0 0.0
        %3748 = vmatprep.subr.mxu0 0.0
        %3749 = vmatpush2.msra.mxu0 0.0
        %3750 = vmatprep.subr.mxu0 0.0
        %3751 = vmatpush2.msra.mxu0 0.0
        %3752 = vmatprep.subr.mxu0 0.0
        %3753 = vmatpush2.msra.mxu0 0.0
        %3754 = vmatprep.subr.mxu0 0.0
        %3755 = vmatpush2.msra.mxu0 0.0
        %3756 = vmatprep.subr.mxu0 0.0
        %3757 = vmatpush2.msra.mxu0 0.0
        %3758 = vmatprep.subr.mxu0 0.0
        %3759 = vmatpush2.msra.mxu0 0.0
        %3760 = vmatprep.subr.mxu0 0.0
        %3761 = vmatpush2.msra.mxu0 0.0
        %3762 = vmatprep.subr.mxu0 0.0
        %3763 = vmatpush2.msra.mxu0 0.0
        %3764 = vmatprep.subr.mxu0 0.0
        %3765 = vmatpush2.msra.mxu0 0.0
        %3766 = vmatprep.mubr.f32.mxu0 0.0
        %3767 = vmatmul.mubr.f32.gmra.mxu0 %v1428
        %v3768 = vpop.f32.mrf.mxu0
        %v3769 = vadd.f32 %v1045, %v3768
        %v3770 = vpop.f32.mrf.mxu0
        %v3771 = vadd.f32 %v1049, %v3770
        %3772 = vdwg.mxu0
        %3773 = vmatprep.subr.mxu0 0.0
        %3774 = vmatpush1.msra.mxu0 0.0
        %3775 = vmatprep.subr.mxu0 0.0
        %3776 = vmatpush1.msra.mxu0 0.0
        %3777 = vmatprep.subr.mxu0 0.0
        %3778 = vmatpush1.msra.mxu0 0.0
        %3779 = vmatprep.subr.mxu0 0.0
        %3780 = vmatpush1.msra.mxu0 0.0
        %3781 = vmatprep.subr.mxu0 0.0
        %3782 = vmatpush1.msra.mxu0 0.0
        %3783 = vmatprep.subr.mxu0 0.0
        %3784 = vmatpush1.msra.mxu0 0.0
        %3785 = vmatprep.subr.mxu0 0.0
        %3786 = vmatpush1.msra.mxu0 0.0
        %3787 = vmatprep.subr.mxu0 0.0
        %3788 = vmatpush1.msra.mxu0 0.0
        %3789 = vmatprep.subr.mxu0 0.0
        %3790 = vmatpush1.msra.mxu0 0.0
        %3791 = vmatprep.subr.mxu0 0.0
        %3792 = vmatpush1.msra.mxu0 0.0
        %3793 = vmatprep.subr.mxu0 0.0
        %3794 = vmatpush1.msra.mxu0 0.0
        %3795 = vmatprep.subr.mxu0 0.0
        %3796 = vmatpush1.msra.mxu0 0.0
        %3797 = vmatprep.subr.mxu0 %v693
        %3798 = vmatpush1.msra.mxu0 %v692
        %3799 = vmatprep.subr.mxu0 %v565
        %3800 = vmatpush1.msra.mxu0 %v564
        %3801 = vmatprep.subr.mxu0 %v437
        %3802 = vmatpush1.msra.mxu0 %v436
        %3803 = vmatprep.subr.mxu0 %v309
        %3804 = vmatpush1.msra.mxu0 %v308
        %3805 = vmatprep.subr.mxu0 0.0
        %3806 = vmatpush2.msra.mxu0 0.0
        %3807 = vmatprep.subr.mxu0 0.0
        %3808 = vmatpush2.msra.mxu0 0.0
        %3809 = vmatprep.subr.mxu0 0.0
        %3810 = vmatpush2.msra.mxu0 0.0
        %3811 = vmatprep.subr.mxu0 0.0
        %3812 = vmatpush2.msra.mxu0 0.0
        %3813 = vmatprep.subr.mxu0 0.0
        %3814 = vmatpush2.msra.mxu0 0.0
        %3815 = vmatprep.subr.mxu0 0.0
        %3816 = vmatpush2.msra.mxu0 0.0
        %3817 = vmatprep.subr.mxu0 0.0
        %3818 = vmatpush2.msra.mxu0 0.0
        %3819 = vmatprep.subr.mxu0 0.0
        %3820 = vmatpush2.msra.mxu0 0.0
        %3821 = vmatprep.subr.mxu0 0.0
        %3822 = vmatpush2.msra.mxu0 0.0
        %3823 = vmatprep.subr.mxu0 0.0
        %3824 = vmatpush2.msra.mxu0 0.0
        %3825 = vmatprep.subr.mxu0 0.0
        %3826 = vmatpush2.msra.mxu0 0.0
        %3827 = vmatprep.subr.mxu0 0.0
        %3828 = vmatpush2.msra.mxu0 0.0
        %3829 = vmatprep.subr.mxu0 0.0
        %3830 = vmatpush2.msra.mxu0 0.0
        %3831 = vmatprep.subr.mxu0 0.0
        %3832 = vmatpush2.msra.mxu0 0.0
        %3833 = vmatprep.subr.mxu0 0.0
        %3834 = vmatpush2.msra.mxu0 0.0
        %3835 = vmatprep.subr.mxu0 0.0
        %3836 = vmatpush2.msra.mxu0 0.0
        %3837 = vmatprep.mubr.f32.mxu0 0.0
        %3838 = vmatmul.mubr.f32.gmra.mxu0 %v1428
        %v3839 = vpop.f32.mrf.mxu0
        %v3840 = vadd.f32 %v1053, %v3839
        %v3841 = vpop.f32.mrf.mxu0
        %v3842 = vadd.f32 %v1057, %v3841
        %3843 = vdwg.mxu0
        %3844 = vmatprep.subr.mxu0 0.0
        %3845 = vmatpush1.msra.mxu0 0.0
        %3846 = vmatprep.subr.mxu0 0.0
        %3847 = vmatpush1.msra.mxu0 0.0
        %3848 = vmatprep.subr.mxu0 0.0
        %3849 = vmatpush1.msra.mxu0 0.0
        %3850 = vmatprep.subr.mxu0 0.0
        %3851 = vmatpush1.msra.mxu0 0.0
        %3852 = vmatprep.subr.mxu0 0.0
        %3853 = vmatpush1.msra.mxu0 0.0
        %3854 = vmatprep.subr.mxu0 0.0
        %3855 = vmatpush1.msra.mxu0 0.0
        %3856 = vmatprep.subr.mxu0 0.0
        %3857 = vmatpush1.msra.mxu0 0.0
        %3858 = vmatprep.subr.mxu0 0.0
        %3859 = vmatpush1.msra.mxu0 0.0
        %3860 = vmatprep.subr.mxu0 0.0
        %3861 = vmatpush1.msra.mxu0 0.0
        %3862 = vmatprep.subr.mxu0 0.0
        %3863 = vmatpush1.msra.mxu0 0.0
        %3864 = vmatprep.subr.mxu0 0.0
        %3865 = vmatpush1.msra.mxu0 0.0
        %3866 = vmatprep.subr.mxu0 0.0
        %3867 = vmatpush1.msra.mxu0 0.0
        %3868 = vmatprep.subr.mxu0 %v695
        %3869 = vmatpush1.msra.mxu0 %v694
        %3870 = vmatprep.subr.mxu0 %v567
        %3871 = vmatpush1.msra.mxu0 %v566
        %3872 = vmatprep.subr.mxu0 %v439
        %3873 = vmatpush1.msra.mxu0 %v438
        %3874 = vmatprep.subr.mxu0 %v311
        %3875 = vmatpush1.msra.mxu0 %v310
        %3876 = vmatprep.subr.mxu0 0.0
        %3877 = vmatpush2.msra.mxu0 0.0
        %3878 = vmatprep.subr.mxu0 0.0
        %3879 = vmatpush2.msra.mxu0 0.0
        %3880 = vmatprep.subr.mxu0 0.0
        %3881 = vmatpush2.msra.mxu0 0.0
        %3882 = vmatprep.subr.mxu0 0.0
        %3883 = vmatpush2.msra.mxu0 0.0
        %3884 = vmatprep.subr.mxu0 0.0
        %3885 = vmatpush2.msra.mxu0 0.0
        %3886 = vmatprep.subr.mxu0 0.0
        %3887 = vmatpush2.msra.mxu0 0.0
        %3888 = vmatprep.subr.mxu0 0.0
        %3889 = vmatpush2.msra.mxu0 0.0
        %3890 = vmatprep.subr.mxu0 0.0
        %3891 = vmatpush2.msra.mxu0 0.0
        %3892 = vmatprep.subr.mxu0 0.0
        %3893 = vmatpush2.msra.mxu0 0.0
        %3894 = vmatprep.subr.mxu0 0.0
        %3895 = vmatpush2.msra.mxu0 0.0
        %3896 = vmatprep.subr.mxu0 0.0
        %3897 = vmatpush2.msra.mxu0 0.0
        %3898 = vmatprep.subr.mxu0 0.0
        %3899 = vmatpush2.msra.mxu0 0.0
        %3900 = vmatprep.subr.mxu0 0.0
        %3901 = vmatpush2.msra.mxu0 0.0
        %3902 = vmatprep.subr.mxu0 0.0
        %3903 = vmatpush2.msra.mxu0 0.0
        %3904 = vmatprep.subr.mxu0 0.0
        %3905 = vmatpush2.msra.mxu0 0.0
        %3906 = vmatprep.subr.mxu0 0.0
        %3907 = vmatpush2.msra.mxu0 0.0
        %3908 = vmatprep.mubr.f32.mxu0 0.0
        %3909 = vmatmul.mubr.f32.gmra.mxu0 %v1428
        %v3910 = vpop.f32.mrf.mxu0
        %v3911 = vadd.f32 %v1061, %v3910
        %v3912 = vpop.f32.mrf.mxu0
        %v3913 = vadd.f32 %v1065, %v3912
        %3914 = vdwg.mxu0
        %3915 = vmatprep.subr.mxu0 0.0
        %3916 = vmatpush1.msra.mxu0 0.0
        %3917 = vmatprep.subr.mxu0 0.0
        %3918 = vmatpush1.msra.mxu0 0.0
        %3919 = vmatprep.subr.mxu0 0.0
        %3920 = vmatpush1.msra.mxu0 0.0
        %3921 = vmatprep.subr.mxu0 0.0
        %3922 = vmatpush1.msra.mxu0 0.0
        %3923 = vmatprep.subr.mxu0 0.0
        %3924 = vmatpush1.msra.mxu0 0.0
        %3925 = vmatprep.subr.mxu0 0.0
        %3926 = vmatpush1.msra.mxu0 0.0
        %3927 = vmatprep.subr.mxu0 0.0
        %3928 = vmatpush1.msra.mxu0 0.0
        %3929 = vmatprep.subr.mxu0 0.0
        %3930 = vmatpush1.msra.mxu0 0.0
        %3931 = vmatprep.subr.mxu0 0.0
        %3932 = vmatpush1.msra.mxu0 0.0
        %3933 = vmatprep.subr.mxu0 0.0
        %3934 = vmatpush1.msra.mxu0 0.0
        %3935 = vmatprep.subr.mxu0 0.0
        %3936 = vmatpush1.msra.mxu0 0.0
        %3937 = vmatprep.subr.mxu0 0.0
        %3938 = vmatpush1.msra.mxu0 0.0
        %3939 = vmatprep.subr.mxu0 %v697
        %3940 = vmatpush1.msra.mxu0 %v696
        %3941 = vmatprep.subr.mxu0 %v569
        %3942 = vmatpush1.msra.mxu0 %v568
        %3943 = vmatprep.subr.mxu0 %v441
        %3944 = vmatpush1.msra.mxu0 %v440
        %3945 = vmatprep.subr.mxu0 %v313
        %3946 = vmatpush1.msra.mxu0 %v312
        %3947 = vmatprep.subr.mxu0 0.0
        %3948 = vmatpush2.msra.mxu0 0.0
        %3949 = vmatprep.subr.mxu0 0.0
        %3950 = vmatpush2.msra.mxu0 0.0
        %3951 = vmatprep.subr.mxu0 0.0
        %3952 = vmatpush2.msra.mxu0 0.0
        %3953 = vmatprep.subr.mxu0 0.0
        %3954 = vmatpush2.msra.mxu0 0.0
        %3955 = vmatprep.subr.mxu0 0.0
        %3956 = vmatpush2.msra.mxu0 0.0
        %3957 = vmatprep.subr.mxu0 0.0
        %3958 = vmatpush2.msra.mxu0 0.0
        %3959 = vmatprep.subr.mxu0 0.0
        %3960 = vmatpush2.msra.mxu0 0.0
        %3961 = vmatprep.subr.mxu0 0.0
        %3962 = vmatpush2.msra.mxu0 0.0
        %3963 = vmatprep.subr.mxu0 0.0
        %3964 = vmatpush2.msra.mxu0 0.0
        %3965 = vmatprep.subr.mxu0 0.0
        %3966 = vmatpush2.msra.mxu0 0.0
        %3967 = vmatprep.subr.mxu0 0.0
        %3968 = vmatpush2.msra.mxu0 0.0
        %3969 = vmatprep.subr.mxu0 0.0
        %3970 = vmatpush2.msra.mxu0 0.0
        %3971 = vmatprep.subr.mxu0 0.0
        %3972 = vmatpush2.msra.mxu0 0.0
        %3973 = vmatprep.subr.mxu0 0.0
        %3974 = vmatpush2.msra.mxu0 0.0
        %3975 = vmatprep.subr.mxu0 0.0
        %3976 = vmatpush2.msra.mxu0 0.0
        %3977 = vmatprep.subr.mxu0 0.0
        %3978 = vmatpush2.msra.mxu0 0.0
        %3979 = vmatprep.mubr.f32.mxu0 0.0
        %3980 = vmatmul.mubr.f32.gmra.mxu0 %v1428
        %v3981 = vpop.f32.mrf.mxu0
        %v3982 = vadd.f32 %v1069, %v3981
        %v3983 = vpop.f32.mrf.mxu0
        %v3984 = vadd.f32 %v1073, %v3983
        %3985 = vdwg.mxu0
        %3986 = vmatprep.subr.mxu0 0.0
        %3987 = vmatpush1.msra.mxu0 0.0
        %3988 = vmatprep.subr.mxu0 0.0
        %3989 = vmatpush1.msra.mxu0 0.0
        %3990 = vmatprep.subr.mxu0 0.0
        %3991 = vmatpush1.msra.mxu0 0.0
        %3992 = vmatprep.subr.mxu0 0.0
        %3993 = vmatpush1.msra.mxu0 0.0
        %3994 = vmatprep.subr.mxu0 0.0
        %3995 = vmatpush1.msra.mxu0 0.0
        %3996 = vmatprep.subr.mxu0 0.0
        %3997 = vmatpush1.msra.mxu0 0.0
        %3998 = vmatprep.subr.mxu0 0.0
        %3999 = vmatpush1.msra.mxu0 0.0
        %4000 = vmatprep.subr.mxu0 0.0
        %4001 = vmatpush1.msra.mxu0 0.0
        %4002 = vmatprep.subr.mxu0 0.0
        %4003 = vmatpush1.msra.mxu0 0.0
        %4004 = vmatprep.subr.mxu0 0.0
        %4005 = vmatpush1.msra.mxu0 0.0
        %4006 = vmatprep.subr.mxu0 0.0
        %4007 = vmatpush1.msra.mxu0 0.0
        %4008 = vmatprep.subr.mxu0 0.0
        %4009 = vmatpush1.msra.mxu0 0.0
        %4010 = vmatprep.subr.mxu0 %v699
        %4011 = vmatpush1.msra.mxu0 %v698
        %4012 = vmatprep.subr.mxu0 %v571
        %4013 = vmatpush1.msra.mxu0 %v570
        %4014 = vmatprep.subr.mxu0 %v443
        %4015 = vmatpush1.msra.mxu0 %v442
        %4016 = vmatprep.subr.mxu0 %v315
        %4017 = vmatpush1.msra.mxu0 %v314
        %4018 = vmatprep.subr.mxu0 0.0
        %4019 = vmatpush2.msra.mxu0 0.0
        %4020 = vmatprep.subr.mxu0 0.0
        %4021 = vmatpush2.msra.mxu0 0.0
        %4022 = vmatprep.subr.mxu0 0.0
        %4023 = vmatpush2.msra.mxu0 0.0
        %4024 = vmatprep.subr.mxu0 0.0
        %4025 = vmatpush2.msra.mxu0 0.0
        %4026 = vmatprep.subr.mxu0 0.0
        %4027 = vmatpush2.msra.mxu0 0.0
        %4028 = vmatprep.subr.mxu0 0.0
        %4029 = vmatpush2.msra.mxu0 0.0
        %4030 = vmatprep.subr.mxu0 0.0
        %4031 = vmatpush2.msra.mxu0 0.0
        %4032 = vmatprep.subr.mxu0 0.0
        %4033 = vmatpush2.msra.mxu0 0.0
        %4034 = vmatprep.subr.mxu0 0.0
        %4035 = vmatpush2.msra.mxu0 0.0
        %4036 = vmatprep.subr.mxu0 0.0
        %4037 = vmatpush2.msra.mxu0 0.0
        %4038 = vmatprep.subr.mxu0 0.0
        %4039 = vmatpush2.msra.mxu0 0.0
        %4040 = vmatprep.subr.mxu0 0.0
        %4041 = vmatpush2.msra.mxu0 0.0
        %4042 = vmatprep.subr.mxu0 0.0
        %4043 = vmatpush2.msra.mxu0 0.0
        %4044 = vmatprep.subr.mxu0 0.0
        %4045 = vmatpush2.msra.mxu0 0.0
        %4046 = vmatprep.subr.mxu0 0.0
        %4047 = vmatpush2.msra.mxu0 0.0
        %4048 = vmatprep.subr.mxu0 0.0
        %4049 = vmatpush2.msra.mxu0 0.0
        %4050 = vmatprep.mubr.f32.mxu0 0.0
        %4051 = vmatmul.mubr.f32.gmra.mxu0 %v1428
        %v4052 = vpop.f32.mrf.mxu0
        %v4053 = vadd.f32 %v1077, %v4052
        %v4054 = vpop.f32.mrf.mxu0
        %v4055 = vadd.f32 %v1081, %v4054
        %4056 = vdwg.mxu0
        %4057 = vmatprep.subr.mxu0 0.0
        %4058 = vmatpush1.msra.mxu0 0.0
        %4059 = vmatprep.subr.mxu0 0.0
        %4060 = vmatpush1.msra.mxu0 0.0
        %4061 = vmatprep.subr.mxu0 0.0
        %4062 = vmatpush1.msra.mxu0 0.0
        %4063 = vmatprep.subr.mxu0 0.0
        %4064 = vmatpush1.msra.mxu0 0.0
        %4065 = vmatprep.subr.mxu0 0.0
        %4066 = vmatpush1.msra.mxu0 0.0
        %4067 = vmatprep.subr.mxu0 0.0
        %4068 = vmatpush1.msra.mxu0 0.0
        %4069 = vmatprep.subr.mxu0 0.0
        %4070 = vmatpush1.msra.mxu0 0.0
        %4071 = vmatprep.subr.mxu0 0.0
        %4072 = vmatpush1.msra.mxu0 0.0
        %4073 = vmatprep.subr.mxu0 0.0
        %4074 = vmatpush1.msra.mxu0 0.0
        %4075 = vmatprep.subr.mxu0 0.0
        %4076 = vmatpush1.msra.mxu0 0.0
        %4077 = vmatprep.subr.mxu0 0.0
        %4078 = vmatpush1.msra.mxu0 0.0
        %4079 = vmatprep.subr.mxu0 0.0
        %4080 = vmatpush1.msra.mxu0 0.0
        %4081 = vmatprep.subr.mxu0 %v701
        %4082 = vmatpush1.msra.mxu0 %v700
        %4083 = vmatprep.subr.mxu0 %v573
        %4084 = vmatpush1.msra.mxu0 %v572
        %4085 = vmatprep.subr.mxu0 %v445
        %4086 = vmatpush1.msra.mxu0 %v444
        %4087 = vmatprep.subr.mxu0 %v317
        %4088 = vmatpush1.msra.mxu0 %v316
        %4089 = vmatprep.subr.mxu0 0.0
        %4090 = vmatpush2.msra.mxu0 0.0
        %4091 = vmatprep.subr.mxu0 0.0
        %4092 = vmatpush2.msra.mxu0 0.0
        %4093 = vmatprep.subr.mxu0 0.0
        %4094 = vmatpush2.msra.mxu0 0.0
        %4095 = vmatprep.subr.mxu0 0.0
        %4096 = vmatpush2.msra.mxu0 0.0
        %4097 = vmatprep.subr.mxu0 0.0
        %4098 = vmatpush2.msra.mxu0 0.0
        %4099 = vmatprep.subr.mxu0 0.0
        %4100 = vmatpush2.msra.mxu0 0.0
        %4101 = vmatprep.subr.mxu0 0.0
        %4102 = vmatpush2.msra.mxu0 0.0
        %4103 = vmatprep.subr.mxu0 0.0
        %4104 = vmatpush2.msra.mxu0 0.0
        %4105 = vmatprep.subr.mxu0 0.0
        %4106 = vmatpush2.msra.mxu0 0.0
        %4107 = vmatprep.subr.mxu0 0.0
        %4108 = vmatpush2.msra.mxu0 0.0
        %4109 = vmatprep.subr.mxu0 0.0
        %4110 = vmatpush2.msra.mxu0 0.0
        %4111 = vmatprep.subr.mxu0 0.0
        %4112 = vmatpush2.msra.mxu0 0.0
        %4113 = vmatprep.subr.mxu0 0.0
        %4114 = vmatpush2.msra.mxu0 0.0
        %4115 = vmatprep.subr.mxu0 0.0
        %4116 = vmatpush2.msra.mxu0 0.0
        %4117 = vmatprep.subr.mxu0 0.0
        %4118 = vmatpush2.msra.mxu0 0.0
        %4119 = vmatprep.subr.mxu0 0.0
        %4120 = vmatpush2.msra.mxu0 0.0
        %4121 = vmatprep.mubr.f32.mxu0 0.0
        %4122 = vmatmul.mubr.f32.gmra.mxu0 %v1428
        %v4123 = vpop.f32.mrf.mxu0
        %v4124 = vadd.f32 %v1085, %v4123
        %v4125 = vpop.f32.mrf.mxu0
        %v4126 = vadd.f32 %v1089, %v4125
        %4127 = vdwg.mxu0
        %4128 = vmatprep.subr.mxu0 0.0
        %4129 = vmatpush1.msra.mxu0 0.0
        %4130 = vmatprep.subr.mxu0 0.0
        %4131 = vmatpush1.msra.mxu0 0.0
        %4132 = vmatprep.subr.mxu0 0.0
        %4133 = vmatpush1.msra.mxu0 0.0
        %4134 = vmatprep.subr.mxu0 0.0
        %4135 = vmatpush1.msra.mxu0 0.0
        %4136 = vmatprep.subr.mxu0 0.0
        %4137 = vmatpush1.msra.mxu0 0.0
        %4138 = vmatprep.subr.mxu0 0.0
        %4139 = vmatpush1.msra.mxu0 0.0
        %4140 = vmatprep.subr.mxu0 0.0
        %4141 = vmatpush1.msra.mxu0 0.0
        %4142 = vmatprep.subr.mxu0 0.0
        %4143 = vmatpush1.msra.mxu0 0.0
        %4144 = vmatprep.subr.mxu0 0.0
        %4145 = vmatpush1.msra.mxu0 0.0
        %4146 = vmatprep.subr.mxu0 0.0
        %4147 = vmatpush1.msra.mxu0 0.0
        %4148 = vmatprep.subr.mxu0 0.0
        %4149 = vmatpush1.msra.mxu0 0.0
        %4150 = vmatprep.subr.mxu0 0.0
        %4151 = vmatpush1.msra.mxu0 0.0
        %4152 = vmatprep.subr.mxu0 %v703
        %4153 = vmatpush1.msra.mxu0 %v702
        %4154 = vmatprep.subr.mxu0 %v575
        %4155 = vmatpush1.msra.mxu0 %v574
        %4156 = vmatprep.subr.mxu0 %v447
        %4157 = vmatpush1.msra.mxu0 %v446
        %4158 = vmatprep.subr.mxu0 %v319
        %4159 = vmatpush1.msra.mxu0 %v318
        %4160 = vmatprep.subr.mxu0 0.0
        %4161 = vmatpush2.msra.mxu0 0.0
        %4162 = vmatprep.subr.mxu0 0.0
        %4163 = vmatpush2.msra.mxu0 0.0
        %4164 = vmatprep.subr.mxu0 0.0
        %4165 = vmatpush2.msra.mxu0 0.0
        %4166 = vmatprep.subr.mxu0 0.0
        %4167 = vmatpush2.msra.mxu0 0.0
        %4168 = vmatprep.subr.mxu0 0.0
        %4169 = vmatpush2.msra.mxu0 0.0
        %4170 = vmatprep.subr.mxu0 0.0
        %4171 = vmatpush2.msra.mxu0 0.0
        %4172 = vmatprep.subr.mxu0 0.0
        %4173 = vmatpush2.msra.mxu0 0.0
        %4174 = vmatprep.subr.mxu0 0.0
        %4175 = vmatpush2.msra.mxu0 0.0
        %4176 = vmatprep.subr.mxu0 0.0
        %4177 = vmatpush2.msra.mxu0 0.0
        %4178 = vmatprep.subr.mxu0 0.0
        %4179 = vmatpush2.msra.mxu0 0.0
        %4180 = vmatprep.subr.mxu0 0.0
        %4181 = vmatpush2.msra.mxu0 0.0
        %4182 = vmatprep.subr.mxu0 0.0
        %4183 = vmatpush2.msra.mxu0 0.0
        %4184 = vmatprep.subr.mxu0 0.0
        %4185 = vmatpush2.msra.mxu0 0.0
        %4186 = vmatprep.subr.mxu0 0.0
        %4187 = vmatpush2.msra.mxu0 0.0
        %4188 = vmatprep.subr.mxu0 0.0
        %4189 = vmatpush2.msra.mxu0 0.0
        %4190 = vmatprep.subr.mxu0 0.0
        %4191 = vmatpush2.msra.mxu0 0.0
        %4192 = vmatprep.mubr.f32.mxu0 0.0
        %4193 = vmatmul.mubr.f32.gmra.mxu0 %v1428
        %v4194 = vpop.f32.mrf.mxu0
        %v4195 = vadd.f32 %v1093, %v4194
        %v4196 = vpop.f32.mrf.mxu0
        %v4197 = vadd.f32 %v1097, %v4196
        %4198 = vdwg.mxu0
        %4199 = vmatprep.subr.mxu0 0.0
        %4200 = vmatpush1.msra.mxu0 0.0
        %4201 = vmatprep.subr.mxu0 0.0
        %4202 = vmatpush1.msra.mxu0 0.0
        %4203 = vmatprep.subr.mxu0 0.0
        %4204 = vmatpush1.msra.mxu0 0.0
        %4205 = vmatprep.subr.mxu0 0.0
        %4206 = vmatpush1.msra.mxu0 0.0
        %4207 = vmatprep.subr.mxu0 0.0
        %4208 = vmatpush1.msra.mxu0 0.0
        %4209 = vmatprep.subr.mxu0 0.0
        %4210 = vmatpush1.msra.mxu0 0.0
        %4211 = vmatprep.subr.mxu0 0.0
        %4212 = vmatpush1.msra.mxu0 0.0
        %4213 = vmatprep.subr.mxu0 0.0
        %4214 = vmatpush1.msra.mxu0 0.0
        %4215 = vmatprep.subr.mxu0 0.0
        %4216 = vmatpush1.msra.mxu0 0.0
        %4217 = vmatprep.subr.mxu0 0.0
        %4218 = vmatpush1.msra.mxu0 0.0
        %4219 = vmatprep.subr.mxu0 0.0
        %4220 = vmatpush1.msra.mxu0 0.0
        %4221 = vmatprep.subr.mxu0 0.0
        %4222 = vmatpush1.msra.mxu0 0.0
        %4223 = vmatprep.subr.mxu0 %v705
        %4224 = vmatpush1.msra.mxu0 %v704
        %4225 = vmatprep.subr.mxu0 %v577
        %4226 = vmatpush1.msra.mxu0 %v576
        %4227 = vmatprep.subr.mxu0 %v449
        %4228 = vmatpush1.msra.mxu0 %v448
        %4229 = vmatprep.subr.mxu0 %v321
        %4230 = vmatpush1.msra.mxu0 %v320
        %4231 = vmatprep.subr.mxu0 0.0
        %4232 = vmatpush2.msra.mxu0 0.0
        %4233 = vmatprep.subr.mxu0 0.0
        %4234 = vmatpush2.msra.mxu0 0.0
        %4235 = vmatprep.subr.mxu0 0.0
        %4236 = vmatpush2.msra.mxu0 0.0
        %4237 = vmatprep.subr.mxu0 0.0
        %4238 = vmatpush2.msra.mxu0 0.0
        %4239 = vmatprep.subr.mxu0 0.0
        %4240 = vmatpush2.msra.mxu0 0.0
        %4241 = vmatprep.subr.mxu0 0.0
        %4242 = vmatpush2.msra.mxu0 0.0
        %4243 = vmatprep.subr.mxu0 0.0
        %4244 = vmatpush2.msra.mxu0 0.0
        %4245 = vmatprep.subr.mxu0 0.0
        %4246 = vmatpush2.msra.mxu0 0.0
        %4247 = vmatprep.subr.mxu0 0.0
        %4248 = vmatpush2.msra.mxu0 0.0
        %4249 = vmatprep.subr.mxu0 0.0
        %4250 = vmatpush2.msra.mxu0 0.0
        %4251 = vmatprep.subr.mxu0 0.0
        %4252 = vmatpush2.msra.mxu0 0.0
        %4253 = vmatprep.subr.mxu0 0.0
        %4254 = vmatpush2.msra.mxu0 0.0
        %4255 = vmatprep.subr.mxu0 0.0
        %4256 = vmatpush2.msra.mxu0 0.0
        %4257 = vmatprep.subr.mxu0 0.0
        %4258 = vmatpush2.msra.mxu0 0.0
        %4259 = vmatprep.subr.mxu0 0.0
        %4260 = vmatpush2.msra.mxu0 0.0
        %4261 = vmatprep.subr.mxu0 0.0
        %4262 = vmatpush2.msra.mxu0 0.0
        %4263 = vmatprep.mubr.f32.mxu0 0.0
        %4264 = vmatmul.mubr.f32.gmra.mxu0 %v1428
        %v4265 = vpop.f32.mrf.mxu0
        %v4266 = vadd.f32 %v1101, %v4265
        %v4267 = vpop.f32.mrf.mxu0
        %v4268 = vadd.f32 %v1105, %v4267
        %4269 = vdwg.mxu0
        %4270 = vmatprep.subr.mxu0 0.0
        %4271 = vmatpush1.msra.mxu0 0.0
        %4272 = vmatprep.subr.mxu0 0.0
        %4273 = vmatpush1.msra.mxu0 0.0
        %4274 = vmatprep.subr.mxu0 0.0
        %4275 = vmatpush1.msra.mxu0 0.0
        %4276 = vmatprep.subr.mxu0 0.0
        %4277 = vmatpush1.msra.mxu0 0.0
        %4278 = vmatprep.subr.mxu0 0.0
        %4279 = vmatpush1.msra.mxu0 0.0
        %4280 = vmatprep.subr.mxu0 0.0
        %4281 = vmatpush1.msra.mxu0 0.0
        %4282 = vmatprep.subr.mxu0 0.0
        %4283 = vmatpush1.msra.mxu0 0.0
        %4284 = vmatprep.subr.mxu0 0.0
        %4285 = vmatpush1.msra.mxu0 0.0
        %4286 = vmatprep.subr.mxu0 0.0
        %4287 = vmatpush1.msra.mxu0 0.0
        %4288 = vmatprep.subr.mxu0 0.0
        %4289 = vmatpush1.msra.mxu0 0.0
        %4290 = vmatprep.subr.mxu0 0.0
        %4291 = vmatpush1.msra.mxu0 0.0
        %4292 = vmatprep.subr.mxu0 0.0
        %4293 = vmatpush1.msra.mxu0 0.0
        %4294 = vmatprep.subr.mxu0 %v707
        %4295 = vmatpush1.msra.mxu0 %v706
        %4296 = vmatprep.subr.mxu0 %v579
        %4297 = vmatpush1.msra.mxu0 %v578
        %4298 = vmatprep.subr.mxu0 %v451
        %4299 = vmatpush1.msra.mxu0 %v450
        %4300 = vmatprep.subr.mxu0 %v323
        %4301 = vmatpush1.msra.mxu0 %v322
        %4302 = vmatprep.subr.mxu0 0.0
        %4303 = vmatpush2.msra.mxu0 0.0
        %4304 = vmatprep.subr.mxu0 0.0
        %4305 = vmatpush2.msra.mxu0 0.0
        %4306 = vmatprep.subr.mxu0 0.0
        %4307 = vmatpush2.msra.mxu0 0.0
        %4308 = vmatprep.subr.mxu0 0.0
        %4309 = vmatpush2.msra.mxu0 0.0
        %4310 = vmatprep.subr.mxu0 0.0
        %4311 = vmatpush2.msra.mxu0 0.0
        %4312 = vmatprep.subr.mxu0 0.0
        %4313 = vmatpush2.msra.mxu0 0.0
        %4314 = vmatprep.subr.mxu0 0.0
        %4315 = vmatpush2.msra.mxu0 0.0
        %4316 = vmatprep.subr.mxu0 0.0
        %4317 = vmatpush2.msra.mxu0 0.0
        %4318 = vmatprep.subr.mxu0 0.0
        %4319 = vmatpush2.msra.mxu0 0.0
        %4320 = vmatprep.subr.mxu0 0.0
        %4321 = vmatpush2.msra.mxu0 0.0
        %4322 = vmatprep.subr.mxu0 0.0
        %4323 = vmatpush2.msra.mxu0 0.0
        %4324 = vmatprep.subr.mxu0 0.0
        %4325 = vmatpush2.msra.mxu0 0.0
        %4326 = vmatprep.subr.mxu0 0.0
        %4327 = vmatpush2.msra.mxu0 0.0
        %4328 = vmatprep.subr.mxu0 0.0
        %4329 = vmatpush2.msra.mxu0 0.0
        %4330 = vmatprep.subr.mxu0 0.0
        %4331 = vmatpush2.msra.mxu0 0.0
        %4332 = vmatprep.subr.mxu0 0.0
        %4333 = vmatpush2.msra.mxu0 0.0
        %4334 = vmatprep.mubr.f32.mxu0 0.0
        %4335 = vmatmul.mubr.f32.gmra.mxu0 %v1428
        %v4336 = vpop.f32.mrf.mxu0
        %v4337 = vadd.f32 %v1109, %v4336
        %v4338 = vpop.f32.mrf.mxu0
        %v4339 = vadd.f32 %v1113, %v4338
        %4340 = vdwg.mxu0
        %4341 = vmatprep.subr.mxu0 0.0
        %4342 = vmatpush1.msra.mxu0 0.0
        %4343 = vmatprep.subr.mxu0 0.0
        %4344 = vmatpush1.msra.mxu0 0.0
        %4345 = vmatprep.subr.mxu0 0.0
        %4346 = vmatpush1.msra.mxu0 0.0
        %4347 = vmatprep.subr.mxu0 0.0
        %4348 = vmatpush1.msra.mxu0 0.0
        %4349 = vmatprep.subr.mxu0 0.0
        %4350 = vmatpush1.msra.mxu0 0.0
        %4351 = vmatprep.subr.mxu0 0.0
        %4352 = vmatpush1.msra.mxu0 0.0
        %4353 = vmatprep.subr.mxu0 0.0
        %4354 = vmatpush1.msra.mxu0 0.0
        %4355 = vmatprep.subr.mxu0 0.0
        %4356 = vmatpush1.msra.mxu0 0.0
        %4357 = vmatprep.subr.mxu0 0.0
        %4358 = vmatpush1.msra.mxu0 0.0
        %4359 = vmatprep.subr.mxu0 0.0
        %4360 = vmatpush1.msra.mxu0 0.0
        %4361 = vmatprep.subr.mxu0 0.0
        %4362 = vmatpush1.msra.mxu0 0.0
        %4363 = vmatprep.subr.mxu0 0.0
        %4364 = vmatpush1.msra.mxu0 0.0
        %4365 = vmatprep.subr.mxu0 %v709
        %4366 = vmatpush1.msra.mxu0 %v708
        %4367 = vmatprep.subr.mxu0 %v581
        %4368 = vmatpush1.msra.mxu0 %v580
        %4369 = vmatprep.subr.mxu0 %v453
        %4370 = vmatpush1.msra.mxu0 %v452
        %4371 = vmatprep.subr.mxu0 %v325
        %4372 = vmatpush1.msra.mxu0 %v324
        %4373 = vmatprep.subr.mxu0 0.0
        %4374 = vmatpush2.msra.mxu0 0.0
        %4375 = vmatprep.subr.mxu0 0.0
        %4376 = vmatpush2.msra.mxu0 0.0
        %4377 = vmatprep.subr.mxu0 0.0
        %4378 = vmatpush2.msra.mxu0 0.0
        %4379 = vmatprep.subr.mxu0 0.0
        %4380 = vmatpush2.msra.mxu0 0.0
        %4381 = vmatprep.subr.mxu0 0.0
        %4382 = vmatpush2.msra.mxu0 0.0
        %4383 = vmatprep.subr.mxu0 0.0
        %4384 = vmatpush2.msra.mxu0 0.0
        %4385 = vmatprep.subr.mxu0 0.0
        %4386 = vmatpush2.msra.mxu0 0.0
        %4387 = vmatprep.subr.mxu0 0.0
        %4388 = vmatpush2.msra.mxu0 0.0
        %4389 = vmatprep.subr.mxu0 0.0
        %4390 = vmatpush2.msra.mxu0 0.0
        %4391 = vmatprep.subr.mxu0 0.0
        %4392 = vmatpush2.msra.mxu0 0.0
        %4393 = vmatprep.subr.mxu0 0.0
        %4394 = vmatpush2.msra.mxu0 0.0
        %4395 = vmatprep.subr.mxu0 0.0
        %4396 = vmatpush2.msra.mxu0 0.0
        %4397 = vmatprep.subr.mxu0 0.0
        %4398 = vmatpush2.msra.mxu0 0.0
        %4399 = vmatprep.subr.mxu0 0.0
        %4400 = vmatpush2.msra.mxu0 0.0
        %4401 = vmatprep.subr.mxu0 0.0
        %4402 = vmatpush2.msra.mxu0 0.0
        %4403 = vmatprep.subr.mxu0 0.0
        %4404 = vmatpush2.msra.mxu0 0.0
        %4405 = vmatprep.mubr.f32.mxu0 0.0
        %4406 = vmatmul.mubr.f32.gmra.mxu0 %v1428
        %v4407 = vpop.f32.mrf.mxu0
        %v4408 = vadd.f32 %v1117, %v4407
        %v4409 = vpop.f32.mrf.mxu0
        %v4410 = vadd.f32 %v1121, %v4409
        %4411 = vdwg.mxu0
        %4412 = vmatprep.subr.mxu0 0.0
        %4413 = vmatpush1.msra.mxu0 0.0
        %4414 = vmatprep.subr.mxu0 0.0
        %4415 = vmatpush1.msra.mxu0 0.0
        %4416 = vmatprep.subr.mxu0 0.0
        %4417 = vmatpush1.msra.mxu0 0.0
        %4418 = vmatprep.subr.mxu0 0.0
        %4419 = vmatpush1.msra.mxu0 0.0
        %4420 = vmatprep.subr.mxu0 0.0
        %4421 = vmatpush1.msra.mxu0 0.0
        %4422 = vmatprep.subr.mxu0 0.0
        %4423 = vmatpush1.msra.mxu0 0.0
        %4424 = vmatprep.subr.mxu0 0.0
        %4425 = vmatpush1.msra.mxu0 0.0
        %4426 = vmatprep.subr.mxu0 0.0
        %4427 = vmatpush1.msra.mxu0 0.0
        %4428 = vmatprep.subr.mxu0 0.0
        %4429 = vmatpush1.msra.mxu0 0.0
        %4430 = vmatprep.subr.mxu0 0.0
        %4431 = vmatpush1.msra.mxu0 0.0
        %4432 = vmatprep.subr.mxu0 0.0
        %4433 = vmatpush1.msra.mxu0 0.0
        %4434 = vmatprep.subr.mxu0 0.0
        %4435 = vmatpush1.msra.mxu0 0.0
        %4436 = vmatprep.subr.mxu0 %v711
        %4437 = vmatpush1.msra.mxu0 %v710
        %4438 = vmatprep.subr.mxu0 %v583
        %4439 = vmatpush1.msra.mxu0 %v582
        %4440 = vmatprep.subr.mxu0 %v455
        %4441 = vmatpush1.msra.mxu0 %v454
        %4442 = vmatprep.subr.mxu0 %v327
        %4443 = vmatpush1.msra.mxu0 %v326
        %4444 = vmatprep.subr.mxu0 0.0
        %4445 = vmatpush2.msra.mxu0 0.0
        %4446 = vmatprep.subr.mxu0 0.0
        %4447 = vmatpush2.msra.mxu0 0.0
        %4448 = vmatprep.subr.mxu0 0.0
        %4449 = vmatpush2.msra.mxu0 0.0
        %4450 = vmatprep.subr.mxu0 0.0
        %4451 = vmatpush2.msra.mxu0 0.0
        %4452 = vmatprep.subr.mxu0 0.0
        %4453 = vmatpush2.msra.mxu0 0.0
        %4454 = vmatprep.subr.mxu0 0.0
        %4455 = vmatpush2.msra.mxu0 0.0
        %4456 = vmatprep.subr.mxu0 0.0
        %4457 = vmatpush2.msra.mxu0 0.0
        %4458 = vmatprep.subr.mxu0 0.0
        %4459 = vmatpush2.msra.mxu0 0.0
        %4460 = vmatprep.subr.mxu0 0.0
        %4461 = vmatpush2.msra.mxu0 0.0
        %4462 = vmatprep.subr.mxu0 0.0
        %4463 = vmatpush2.msra.mxu0 0.0
        %4464 = vmatprep.subr.mxu0 0.0
        %4465 = vmatpush2.msra.mxu0 0.0
        %4466 = vmatprep.subr.mxu0 0.0
        %4467 = vmatpush2.msra.mxu0 0.0
        %4468 = vmatprep.subr.mxu0 0.0
        %4469 = vmatpush2.msra.mxu0 0.0
        %4470 = vmatprep.subr.mxu0 0.0
        %4471 = vmatpush2.msra.mxu0 0.0
        %4472 = vmatprep.subr.mxu0 0.0
        %4473 = vmatpush2.msra.mxu0 0.0
        %4474 = vmatprep.subr.mxu0 0.0
        %4475 = vmatpush2.msra.mxu0 0.0
        %4476 = vmatprep.mubr.f32.mxu0 0.0
        %4477 = vmatmul.mubr.f32.gmra.mxu0 %v1428
        %v4478 = vpop.f32.mrf.mxu0
        %v4479 = vadd.f32 %v1125, %v4478
        %v4480 = vpop.f32.mrf.mxu0
        %v4481 = vadd.f32 %v1129, %v4480
        %4482 = vdwg.mxu0
        %4483 = vmatprep.subr.mxu0 0.0
        %4484 = vmatpush1.msra.mxu0 0.0
        %4485 = vmatprep.subr.mxu0 0.0
        %4486 = vmatpush1.msra.mxu0 0.0
        %4487 = vmatprep.subr.mxu0 0.0
        %4488 = vmatpush1.msra.mxu0 0.0
        %4489 = vmatprep.subr.mxu0 0.0
        %4490 = vmatpush1.msra.mxu0 0.0
        %4491 = vmatprep.subr.mxu0 0.0
        %4492 = vmatpush1.msra.mxu0 0.0
        %4493 = vmatprep.subr.mxu0 0.0
        %4494 = vmatpush1.msra.mxu0 0.0
        %4495 = vmatprep.subr.mxu0 0.0
        %4496 = vmatpush1.msra.mxu0 0.0
        %4497 = vmatprep.subr.mxu0 0.0
        %4498 = vmatpush1.msra.mxu0 0.0
        %4499 = vmatprep.subr.mxu0 0.0
        %4500 = vmatpush1.msra.mxu0 0.0
        %4501 = vmatprep.subr.mxu0 0.0
        %4502 = vmatpush1.msra.mxu0 0.0
        %4503 = vmatprep.subr.mxu0 0.0
        %4504 = vmatpush1.msra.mxu0 0.0
        %4505 = vmatprep.subr.mxu0 0.0
        %4506 = vmatpush1.msra.mxu0 0.0
        %4507 = vmatprep.subr.mxu0 %v713
        %4508 = vmatpush1.msra.mxu0 %v712
        %4509 = vmatprep.subr.mxu0 %v585
        %4510 = vmatpush1.msra.mxu0 %v584
        %4511 = vmatprep.subr.mxu0 %v457
        %4512 = vmatpush1.msra.mxu0 %v456
        %4513 = vmatprep.subr.mxu0 %v329
        %4514 = vmatpush1.msra.mxu0 %v328
        %4515 = vmatprep.subr.mxu0 0.0
        %4516 = vmatpush2.msra.mxu0 0.0
        %4517 = vmatprep.subr.mxu0 0.0
        %4518 = vmatpush2.msra.mxu0 0.0
        %4519 = vmatprep.subr.mxu0 0.0
        %4520 = vmatpush2.msra.mxu0 0.0
        %4521 = vmatprep.subr.mxu0 0.0
        %4522 = vmatpush2.msra.mxu0 0.0
        %4523 = vmatprep.subr.mxu0 0.0
        %4524 = vmatpush2.msra.mxu0 0.0
        %4525 = vmatprep.subr.mxu0 0.0
        %4526 = vmatpush2.msra.mxu0 0.0
        %4527 = vmatprep.subr.mxu0 0.0
        %4528 = vmatpush2.msra.mxu0 0.0
        %4529 = vmatprep.subr.mxu0 0.0
        %4530 = vmatpush2.msra.mxu0 0.0
        %4531 = vmatprep.subr.mxu0 0.0
        %4532 = vmatpush2.msra.mxu0 0.0
        %4533 = vmatprep.subr.mxu0 0.0
        %4534 = vmatpush2.msra.mxu0 0.0
        %4535 = vmatprep.subr.mxu0 0.0
        %4536 = vmatpush2.msra.mxu0 0.0
        %4537 = vmatprep.subr.mxu0 0.0
        %4538 = vmatpush2.msra.mxu0 0.0
        %4539 = vmatprep.subr.mxu0 0.0
        %4540 = vmatpush2.msra.mxu0 0.0
        %4541 = vmatprep.subr.mxu0 0.0
        %4542 = vmatpush2.msra.mxu0 0.0
        %4543 = vmatprep.subr.mxu0 0.0
        %4544 = vmatpush2.msra.mxu0 0.0
        %4545 = vmatprep.subr.mxu0 0.0
        %4546 = vmatpush2.msra.mxu0 0.0
        %4547 = vmatprep.mubr.f32.mxu0 0.0
        %4548 = vmatmul.mubr.f32.gmra.mxu0 %v1428
        %v4549 = vpop.f32.mrf.mxu0
        %v4550 = vadd.f32 %v1133, %v4549
        %v4551 = vpop.f32.mrf.mxu0
        %v4552 = vadd.f32 %v1137, %v4551
        %4553 = vdwg.mxu0
        %4554 = vmatprep.subr.mxu0 0.0
        %4555 = vmatpush1.msra.mxu0 0.0
        %4556 = vmatprep.subr.mxu0 0.0
        %4557 = vmatpush1.msra.mxu0 0.0
        %4558 = vmatprep.subr.mxu0 0.0
        %4559 = vmatpush1.msra.mxu0 0.0
        %4560 = vmatprep.subr.mxu0 0.0
        %4561 = vmatpush1.msra.mxu0 0.0
        %4562 = vmatprep.subr.mxu0 0.0
        %4563 = vmatpush1.msra.mxu0 0.0
        %4564 = vmatprep.subr.mxu0 0.0
        %4565 = vmatpush1.msra.mxu0 0.0
        %4566 = vmatprep.subr.mxu0 0.0
        %4567 = vmatpush1.msra.mxu0 0.0
        %4568 = vmatprep.subr.mxu0 0.0
        %4569 = vmatpush1.msra.mxu0 0.0
        %4570 = vmatprep.subr.mxu0 0.0
        %4571 = vmatpush1.msra.mxu0 0.0
        %4572 = vmatprep.subr.mxu0 0.0
        %4573 = vmatpush1.msra.mxu0 0.0
        %4574 = vmatprep.subr.mxu0 0.0
        %4575 = vmatpush1.msra.mxu0 0.0
        %4576 = vmatprep.subr.mxu0 0.0
        %4577 = vmatpush1.msra.mxu0 0.0
        %4578 = vmatprep.subr.mxu0 %v715
        %4579 = vmatpush1.msra.mxu0 %v714
        %4580 = vmatprep.subr.mxu0 %v587
        %4581 = vmatpush1.msra.mxu0 %v586
        %4582 = vmatprep.subr.mxu0 %v459
        %4583 = vmatpush1.msra.mxu0 %v458
        %4584 = vmatprep.subr.mxu0 %v331
        %4585 = vmatpush1.msra.mxu0 %v330
        %4586 = vmatprep.subr.mxu0 0.0
        %4587 = vmatpush2.msra.mxu0 0.0
        %4588 = vmatprep.subr.mxu0 0.0
        %4589 = vmatpush2.msra.mxu0 0.0
        %4590 = vmatprep.subr.mxu0 0.0
        %4591 = vmatpush2.msra.mxu0 0.0
        %4592 = vmatprep.subr.mxu0 0.0
        %4593 = vmatpush2.msra.mxu0 0.0
        %4594 = vmatprep.subr.mxu0 0.0
        %4595 = vmatpush2.msra.mxu0 0.0
        %4596 = vmatprep.subr.mxu0 0.0
        %4597 = vmatpush2.msra.mxu0 0.0
        %4598 = vmatprep.subr.mxu0 0.0
        %4599 = vmatpush2.msra.mxu0 0.0
        %4600 = vmatprep.subr.mxu0 0.0
        %4601 = vmatpush2.msra.mxu0 0.0
        %4602 = vmatprep.subr.mxu0 0.0
        %4603 = vmatpush2.msra.mxu0 0.0
        %4604 = vmatprep.subr.mxu0 0.0
        %4605 = vmatpush2.msra.mxu0 0.0
        %4606 = vmatprep.subr.mxu0 0.0
        %4607 = vmatpush2.msra.mxu0 0.0
        %4608 = vmatprep.subr.mxu0 0.0
        %4609 = vmatpush2.msra.mxu0 0.0
        %4610 = vmatprep.subr.mxu0 0.0
        %4611 = vmatpush2.msra.mxu0 0.0
        %4612 = vmatprep.subr.mxu0 0.0
        %4613 = vmatpush2.msra.mxu0 0.0
        %4614 = vmatprep.subr.mxu0 0.0
        %4615 = vmatpush2.msra.mxu0 0.0
        %4616 = vmatprep.subr.mxu0 0.0
        %4617 = vmatpush2.msra.mxu0 0.0
        %4618 = vmatprep.mubr.f32.mxu0 0.0
        %4619 = vmatmul.mubr.f32.gmra.mxu0 %v1428
        %v4620 = vpop.f32.mrf.mxu0
        %v4621 = vadd.f32 %v1141, %v4620
        %v4622 = vpop.f32.mrf.mxu0
        %v4623 = vadd.f32 %v1145, %v4622
        %4624 = vdwg.mxu0
        %4625 = vmatprep.subr.mxu0 0.0
        %4626 = vmatpush1.msra.mxu0 0.0
        %4627 = vmatprep.subr.mxu0 0.0
        %4628 = vmatpush1.msra.mxu0 0.0
        %4629 = vmatprep.subr.mxu0 0.0
        %4630 = vmatpush1.msra.mxu0 0.0
        %4631 = vmatprep.subr.mxu0 0.0
        %4632 = vmatpush1.msra.mxu0 0.0
        %4633 = vmatprep.subr.mxu0 0.0
        %4634 = vmatpush1.msra.mxu0 0.0
        %4635 = vmatprep.subr.mxu0 0.0
        %4636 = vmatpush1.msra.mxu0 0.0
        %4637 = vmatprep.subr.mxu0 0.0
        %4638 = vmatpush1.msra.mxu0 0.0
        %4639 = vmatprep.subr.mxu0 0.0
        %4640 = vmatpush1.msra.mxu0 0.0
        %4641 = vmatprep.subr.mxu0 0.0
        %4642 = vmatpush1.msra.mxu0 0.0
        %4643 = vmatprep.subr.mxu0 0.0
        %4644 = vmatpush1.msra.mxu0 0.0
        %4645 = vmatprep.subr.mxu0 0.0
        %4646 = vmatpush1.msra.mxu0 0.0
        %4647 = vmatprep.subr.mxu0 0.0
        %4648 = vmatpush1.msra.mxu0 0.0
        %4649 = vmatprep.subr.mxu0 %v717
        %4650 = vmatpush1.msra.mxu0 %v716
        %4651 = vmatprep.subr.mxu0 %v589
        %4652 = vmatpush1.msra.mxu0 %v588
        %4653 = vmatprep.subr.mxu0 %v461
        %4654 = vmatpush1.msra.mxu0 %v460
        %4655 = vmatprep.subr.mxu0 %v333
        %4656 = vmatpush1.msra.mxu0 %v332
        %4657 = vmatprep.subr.mxu0 0.0
        %4658 = vmatpush2.msra.mxu0 0.0
        %4659 = vmatprep.subr.mxu0 0.0
        %4660 = vmatpush2.msra.mxu0 0.0
        %4661 = vmatprep.subr.mxu0 0.0
        %4662 = vmatpush2.msra.mxu0 0.0
        %4663 = vmatprep.subr.mxu0 0.0
        %4664 = vmatpush2.msra.mxu0 0.0
        %4665 = vmatprep.subr.mxu0 0.0
        %4666 = vmatpush2.msra.mxu0 0.0
        %4667 = vmatprep.subr.mxu0 0.0
        %4668 = vmatpush2.msra.mxu0 0.0
        %4669 = vmatprep.subr.mxu0 0.0
        %4670 = vmatpush2.msra.mxu0 0.0
        %4671 = vmatprep.subr.mxu0 0.0
        %4672 = vmatpush2.msra.mxu0 0.0
        %4673 = vmatprep.subr.mxu0 0.0
        %4674 = vmatpush2.msra.mxu0 0.0
        %4675 = vmatprep.subr.mxu0 0.0
        %4676 = vmatpush2.msra.mxu0 0.0
        %4677 = vmatprep.subr.mxu0 0.0
        %4678 = vmatpush2.msra.mxu0 0.0
        %4679 = vmatprep.subr.mxu0 0.0
        %4680 = vmatpush2.msra.mxu0 0.0
        %4681 = vmatprep.subr.mxu0 0.0
        %4682 = vmatpush2.msra.mxu0 0.0
        %4683 = vmatprep.subr.mxu0 0.0
        %4684 = vmatpush2.msra.mxu0 0.0
        %4685 = vmatprep.subr.mxu0 0.0
        %4686 = vmatpush2.msra.mxu0 0.0
        %4687 = vmatprep.subr.mxu0 0.0
        %4688 = vmatpush2.msra.mxu0 0.0
        %4689 = vmatprep.mubr.f32.mxu0 0.0
        %4690 = vmatmul.mubr.f32.gmra.mxu0 %v1428
        %v4691 = vpop.f32.mrf.mxu0
        %v4692 = vadd.f32 %v1149, %v4691
        %v4693 = vpop.f32.mrf.mxu0
        %v4694 = vadd.f32 %v1153, %v4693
        %4695 = vdwg.mxu0
        %4696 = vmatprep.subr.mxu0 0.0
        %4697 = vmatpush1.msra.mxu0 0.0
        %4698 = vmatprep.subr.mxu0 0.0
        %4699 = vmatpush1.msra.mxu0 0.0
        %4700 = vmatprep.subr.mxu0 0.0
        %4701 = vmatpush1.msra.mxu0 0.0
        %4702 = vmatprep.subr.mxu0 0.0
        %4703 = vmatpush1.msra.mxu0 0.0
        %4704 = vmatprep.subr.mxu0 0.0
        %4705 = vmatpush1.msra.mxu0 0.0
        %4706 = vmatprep.subr.mxu0 0.0
        %4707 = vmatpush1.msra.mxu0 0.0
        %4708 = vmatprep.subr.mxu0 0.0
        %4709 = vmatpush1.msra.mxu0 0.0
        %4710 = vmatprep.subr.mxu0 0.0
        %4711 = vmatpush1.msra.mxu0 0.0
        %4712 = vmatprep.subr.mxu0 0.0
        %4713 = vmatpush1.msra.mxu0 0.0
        %4714 = vmatprep.subr.mxu0 0.0
        %4715 = vmatpush1.msra.mxu0 0.0
        %4716 = vmatprep.subr.mxu0 0.0
        %4717 = vmatpush1.msra.mxu0 0.0
        %4718 = vmatprep.subr.mxu0 0.0
        %4719 = vmatpush1.msra.mxu0 0.0
        %4720 = vmatprep.subr.mxu0 %v719
        %4721 = vmatpush1.msra.mxu0 %v718
        %4722 = vmatprep.subr.mxu0 %v591
        %4723 = vmatpush1.msra.mxu0 %v590
        %4724 = vmatprep.subr.mxu0 %v463
        %4725 = vmatpush1.msra.mxu0 %v462
        %4726 = vmatprep.subr.mxu0 %v335
        %4727 = vmatpush1.msra.mxu0 %v334
        %4728 = vmatprep.subr.mxu0 0.0
        %4729 = vmatpush2.msra.mxu0 0.0
        %4730 = vmatprep.subr.mxu0 0.0
        %4731 = vmatpush2.msra.mxu0 0.0
        %4732 = vmatprep.subr.mxu0 0.0
        %4733 = vmatpush2.msra.mxu0 0.0
        %4734 = vmatprep.subr.mxu0 0.0
        %4735 = vmatpush2.msra.mxu0 0.0
        %4736 = vmatprep.subr.mxu0 0.0
        %4737 = vmatpush2.msra.mxu0 0.0
        %4738 = vmatprep.subr.mxu0 0.0
        %4739 = vmatpush2.msra.mxu0 0.0
        %4740 = vmatprep.subr.mxu0 0.0
        %4741 = vmatpush2.msra.mxu0 0.0
        %4742 = vmatprep.subr.mxu0 0.0
        %4743 = vmatpush2.msra.mxu0 0.0
        %4744 = vmatprep.subr.mxu0 0.0
        %4745 = vmatpush2.msra.mxu0 0.0
        %4746 = vmatprep.subr.mxu0 0.0
        %4747 = vmatpush2.msra.mxu0 0.0
        %4748 = vmatprep.subr.mxu0 0.0
        %4749 = vmatpush2.msra.mxu0 0.0
        %4750 = vmatprep.subr.mxu0 0.0
        %4751 = vmatpush2.msra.mxu0 0.0
        %4752 = vmatprep.subr.mxu0 0.0
        %4753 = vmatpush2.msra.mxu0 0.0
        %4754 = vmatprep.subr.mxu0 0.0
        %4755 = vmatpush2.msra.mxu0 0.0
        %4756 = vmatprep.subr.mxu0 0.0
        %4757 = vmatpush2.msra.mxu0 0.0
        %4758 = vmatprep.subr.mxu0 0.0
        %4759 = vmatpush2.msra.mxu0 0.0
        %4760 = vmatprep.mubr.f32.mxu0 0.0
        %4761 = vmatmul.mubr.f32.gmra.mxu0 %v1428
        %v4762 = vpop.f32.mrf.mxu0
        %v4763 = vadd.f32 %v1157, %v4762
        %v4764 = vpop.f32.mrf.mxu0
        %v4765 = vadd.f32 %v1161, %v4764
        %4766 = vdwg.mxu0
        %4767 = vmatprep.subr.mxu0 0.0
        %4768 = vmatpush1.msra.mxu0 0.0
        %4769 = vmatprep.subr.mxu0 0.0
        %4770 = vmatpush1.msra.mxu0 0.0
        %4771 = vmatprep.subr.mxu0 0.0
        %4772 = vmatpush1.msra.mxu0 0.0
        %4773 = vmatprep.subr.mxu0 0.0
        %4774 = vmatpush1.msra.mxu0 0.0
        %4775 = vmatprep.subr.mxu0 0.0
        %4776 = vmatpush1.msra.mxu0 0.0
        %4777 = vmatprep.subr.mxu0 0.0
        %4778 = vmatpush1.msra.mxu0 0.0
        %4779 = vmatprep.subr.mxu0 0.0
        %4780 = vmatpush1.msra.mxu0 0.0
        %4781 = vmatprep.subr.mxu0 0.0
        %4782 = vmatpush1.msra.mxu0 0.0
        %4783 = vmatprep.subr.mxu0 0.0
        %4784 = vmatpush1.msra.mxu0 0.0
        %4785 = vmatprep.subr.mxu0 0.0
        %4786 = vmatpush1.msra.mxu0 0.0
        %4787 = vmatprep.subr.mxu0 0.0
        %4788 = vmatpush1.msra.mxu0 0.0
        %4789 = vmatprep.subr.mxu0 0.0
        %4790 = vmatpush1.msra.mxu0 0.0
        %4791 = vmatprep.subr.mxu0 %v721
        %4792 = vmatpush1.msra.mxu0 %v720
        %4793 = vmatprep.subr.mxu0 %v593
        %4794 = vmatpush1.msra.mxu0 %v592
        %4795 = vmatprep.subr.mxu0 %v465
        %4796 = vmatpush1.msra.mxu0 %v464
        %4797 = vmatprep.subr.mxu0 %v337
        %4798 = vmatpush1.msra.mxu0 %v336
        %4799 = vmatprep.subr.mxu0 0.0
        %4800 = vmatpush2.msra.mxu0 0.0
        %4801 = vmatprep.subr.mxu0 0.0
        %4802 = vmatpush2.msra.mxu0 0.0
        %4803 = vmatprep.subr.mxu0 0.0
        %4804 = vmatpush2.msra.mxu0 0.0
        %4805 = vmatprep.subr.mxu0 0.0
        %4806 = vmatpush2.msra.mxu0 0.0
        %4807 = vmatprep.subr.mxu0 0.0
        %4808 = vmatpush2.msra.mxu0 0.0
        %4809 = vmatprep.subr.mxu0 0.0
        %4810 = vmatpush2.msra.mxu0 0.0
        %4811 = vmatprep.subr.mxu0 0.0
        %4812 = vmatpush2.msra.mxu0 0.0
        %4813 = vmatprep.subr.mxu0 0.0
        %4814 = vmatpush2.msra.mxu0 0.0
        %4815 = vmatprep.subr.mxu0 0.0
        %4816 = vmatpush2.msra.mxu0 0.0
        %4817 = vmatprep.subr.mxu0 0.0
        %4818 = vmatpush2.msra.mxu0 0.0
        %4819 = vmatprep.subr.mxu0 0.0
        %4820 = vmatpush2.msra.mxu0 0.0
        %4821 = vmatprep.subr.mxu0 0.0
        %4822 = vmatpush2.msra.mxu0 0.0
        %4823 = vmatprep.subr.mxu0 0.0
        %4824 = vmatpush2.msra.mxu0 0.0
        %4825 = vmatprep.subr.mxu0 0.0
        %4826 = vmatpush2.msra.mxu0 0.0
        %4827 = vmatprep.subr.mxu0 0.0
        %4828 = vmatpush2.msra.mxu0 0.0
        %4829 = vmatprep.subr.mxu0 0.0
        %4830 = vmatpush2.msra.mxu0 0.0
        %4831 = vmatprep.mubr.f32.mxu0 0.0
        %4832 = vmatmul.mubr.f32.gmra.mxu0 %v1428
        %v4833 = vpop.f32.mrf.mxu0
        %v4834 = vadd.f32 %v1165, %v4833
        %v4835 = vpop.f32.mrf.mxu0
        %v4836 = vadd.f32 %v1169, %v4835
        %4837 = vdwg.mxu0
        %4838 = vmatprep.subr.mxu0 0.0
        %4839 = vmatpush1.msra.mxu0 0.0
        %4840 = vmatprep.subr.mxu0 0.0
        %4841 = vmatpush1.msra.mxu0 0.0
        %4842 = vmatprep.subr.mxu0 0.0
        %4843 = vmatpush1.msra.mxu0 0.0
        %4844 = vmatprep.subr.mxu0 0.0
        %4845 = vmatpush1.msra.mxu0 0.0
        %4846 = vmatprep.subr.mxu0 0.0
        %4847 = vmatpush1.msra.mxu0 0.0
        %4848 = vmatprep.subr.mxu0 0.0
        %4849 = vmatpush1.msra.mxu0 0.0
        %4850 = vmatprep.subr.mxu0 0.0
        %4851 = vmatpush1.msra.mxu0 0.0
        %4852 = vmatprep.subr.mxu0 0.0
        %4853 = vmatpush1.msra.mxu0 0.0
        %4854 = vmatprep.subr.mxu0 0.0
        %4855 = vmatpush1.msra.mxu0 0.0
        %4856 = vmatprep.subr.mxu0 0.0
        %4857 = vmatpush1.msra.mxu0 0.0
        %4858 = vmatprep.subr.mxu0 0.0
        %4859 = vmatpush1.msra.mxu0 0.0
        %4860 = vmatprep.subr.mxu0 0.0
        %4861 = vmatpush1.msra.mxu0 0.0
        %4862 = vmatprep.subr.mxu0 %v723
        %4863 = vmatpush1.msra.mxu0 %v722
        %4864 = vmatprep.subr.mxu0 %v595
        %4865 = vmatpush1.msra.mxu0 %v594
        %4866 = vmatprep.subr.mxu0 %v467
        %4867 = vmatpush1.msra.mxu0 %v466
        %4868 = vmatprep.subr.mxu0 %v339
        %4869 = vmatpush1.msra.mxu0 %v338
        %4870 = vmatprep.subr.mxu0 0.0
        %4871 = vmatpush2.msra.mxu0 0.0
        %4872 = vmatprep.subr.mxu0 0.0
        %4873 = vmatpush2.msra.mxu0 0.0
        %4874 = vmatprep.subr.mxu0 0.0
        %4875 = vmatpush2.msra.mxu0 0.0
        %4876 = vmatprep.subr.mxu0 0.0
        %4877 = vmatpush2.msra.mxu0 0.0
        %4878 = vmatprep.subr.mxu0 0.0
        %4879 = vmatpush2.msra.mxu0 0.0
        %4880 = vmatprep.subr.mxu0 0.0
        %4881 = vmatpush2.msra.mxu0 0.0
        %4882 = vmatprep.subr.mxu0 0.0
        %4883 = vmatpush2.msra.mxu0 0.0
        %4884 = vmatprep.subr.mxu0 0.0
        %4885 = vmatpush2.msra.mxu0 0.0
        %4886 = vmatprep.subr.mxu0 0.0
        %4887 = vmatpush2.msra.mxu0 0.0
        %4888 = vmatprep.subr.mxu0 0.0
        %4889 = vmatpush2.msra.mxu0 0.0
        %4890 = vmatprep.subr.mxu0 0.0
        %4891 = vmatpush2.msra.mxu0 0.0
        %4892 = vmatprep.subr.mxu0 0.0
        %4893 = vmatpush2.msra.mxu0 0.0
        %4894 = vmatprep.subr.mxu0 0.0
        %4895 = vmatpush2.msra.mxu0 0.0
        %4896 = vmatprep.subr.mxu0 0.0
        %4897 = vmatpush2.msra.mxu0 0.0
        %4898 = vmatprep.subr.mxu0 0.0
        %4899 = vmatpush2.msra.mxu0 0.0
        %4900 = vmatprep.subr.mxu0 0.0
        %4901 = vmatpush2.msra.mxu0 0.0
        %4902 = vmatprep.mubr.f32.mxu0 0.0
        %4903 = vmatmul.mubr.f32.gmra.mxu0 %v1428
        %v4904 = vpop.f32.mrf.mxu0
        %v4905 = vadd.f32 %v1173, %v4904
        %v4906 = vpop.f32.mrf.mxu0
        %v4907 = vadd.f32 %v1177, %v4906
        %4908 = vdwg.mxu0
        %4909 = vmatprep.subr.mxu0 0.0
        %4910 = vmatpush1.msra.mxu0 0.0
        %4911 = vmatprep.subr.mxu0 0.0
        %4912 = vmatpush1.msra.mxu0 0.0
        %4913 = vmatprep.subr.mxu0 0.0
        %4914 = vmatpush1.msra.mxu0 0.0
        %4915 = vmatprep.subr.mxu0 0.0
        %4916 = vmatpush1.msra.mxu0 0.0
        %4917 = vmatprep.subr.mxu0 0.0
        %4918 = vmatpush1.msra.mxu0 0.0
        %4919 = vmatprep.subr.mxu0 0.0
        %4920 = vmatpush1.msra.mxu0 0.0
        %4921 = vmatprep.subr.mxu0 0.0
        %4922 = vmatpush1.msra.mxu0 0.0
        %4923 = vmatprep.subr.mxu0 0.0
        %4924 = vmatpush1.msra.mxu0 0.0
        %4925 = vmatprep.subr.mxu0 0.0
        %4926 = vmatpush1.msra.mxu0 0.0
        %4927 = vmatprep.subr.mxu0 0.0
        %4928 = vmatpush1.msra.mxu0 0.0
        %4929 = vmatprep.subr.mxu0 0.0
        %4930 = vmatpush1.msra.mxu0 0.0
        %4931 = vmatprep.subr.mxu0 0.0
        %4932 = vmatpush1.msra.mxu0 0.0
        %4933 = vmatprep.subr.mxu0 %v725
        %4934 = vmatpush1.msra.mxu0 %v724
        %4935 = vmatprep.subr.mxu0 %v597
        %4936 = vmatpush1.msra.mxu0 %v596
        %4937 = vmatprep.subr.mxu0 %v469
        %4938 = vmatpush1.msra.mxu0 %v468
        %4939 = vmatprep.subr.mxu0 %v341
        %4940 = vmatpush1.msra.mxu0 %v340
        %4941 = vmatprep.subr.mxu0 0.0
        %4942 = vmatpush2.msra.mxu0 0.0
        %4943 = vmatprep.subr.mxu0 0.0
        %4944 = vmatpush2.msra.mxu0 0.0
        %4945 = vmatprep.subr.mxu0 0.0
        %4946 = vmatpush2.msra.mxu0 0.0
        %4947 = vmatprep.subr.mxu0 0.0
        %4948 = vmatpush2.msra.mxu0 0.0
        %4949 = vmatprep.subr.mxu0 0.0
        %4950 = vmatpush2.msra.mxu0 0.0
        %4951 = vmatprep.subr.mxu0 0.0
        %4952 = vmatpush2.msra.mxu0 0.0
        %4953 = vmatprep.subr.mxu0 0.0
        %4954 = vmatpush2.msra.mxu0 0.0
        %4955 = vmatprep.subr.mxu0 0.0
        %4956 = vmatpush2.msra.mxu0 0.0
        %4957 = vmatprep.subr.mxu0 0.0
        %4958 = vmatpush2.msra.mxu0 0.0
        %4959 = vmatprep.subr.mxu0 0.0
        %4960 = vmatpush2.msra.mxu0 0.0
        %4961 = vmatprep.subr.mxu0 0.0
        %4962 = vmatpush2.msra.mxu0 0.0
        %4963 = vmatprep.subr.mxu0 0.0
        %4964 = vmatpush2.msra.mxu0 0.0
        %4965 = vmatprep.subr.mxu0 0.0
        %4966 = vmatpush2.msra.mxu0 0.0
        %4967 = vmatprep.subr.mxu0 0.0
        %4968 = vmatpush2.msra.mxu0 0.0
        %4969 = vmatprep.subr.mxu0 0.0
        %4970 = vmatpush2.msra.mxu0 0.0
        %4971 = vmatprep.subr.mxu0 0.0
        %4972 = vmatpush2.msra.mxu0 0.0
        %4973 = vmatprep.mubr.f32.mxu0 0.0
        %4974 = vmatmul.mubr.f32.gmra.mxu0 %v1428
        %v4975 = vpop.f32.mrf.mxu0
        %v4976 = vadd.f32 %v1181, %v4975
        %v4977 = vpop.f32.mrf.mxu0
        %v4978 = vadd.f32 %v1185, %v4977
        %4979 = vdwg.mxu0
        %4980 = vmatprep.subr.mxu0 0.0
        %4981 = vmatpush1.msra.mxu0 0.0
        %4982 = vmatprep.subr.mxu0 0.0
        %4983 = vmatpush1.msra.mxu0 0.0
        %4984 = vmatprep.subr.mxu0 0.0
        %4985 = vmatpush1.msra.mxu0 0.0
        %4986 = vmatprep.subr.mxu0 0.0
        %4987 = vmatpush1.msra.mxu0 0.0
        %4988 = vmatprep.subr.mxu0 0.0
        %4989 = vmatpush1.msra.mxu0 0.0
        %4990 = vmatprep.subr.mxu0 0.0
        %4991 = vmatpush1.msra.mxu0 0.0
        %4992 = vmatprep.subr.mxu0 0.0
        %4993 = vmatpush1.msra.mxu0 0.0
        %4994 = vmatprep.subr.mxu0 0.0
        %4995 = vmatpush1.msra.mxu0 0.0
        %4996 = vmatprep.subr.mxu0 0.0
        %4997 = vmatpush1.msra.mxu0 0.0
        %4998 = vmatprep.subr.mxu0 0.0
        %4999 = vmatpush1.msra.mxu0 0.0
        %5000 = vmatprep.subr.mxu0 0.0
        %5001 = vmatpush1.msra.mxu0 0.0
        %5002 = vmatprep.subr.mxu0 0.0
        %5003 = vmatpush1.msra.mxu0 0.0
        %5004 = vmatprep.subr.mxu0 %v727
        %5005 = vmatpush1.msra.mxu0 %v726
        %5006 = vmatprep.subr.mxu0 %v599
        %5007 = vmatpush1.msra.mxu0 %v598
        %5008 = vmatprep.subr.mxu0 %v471
        %5009 = vmatpush1.msra.mxu0 %v470
        %5010 = vmatprep.subr.mxu0 %v343
        %5011 = vmatpush1.msra.mxu0 %v342
        %5012 = vmatprep.subr.mxu0 0.0
        %5013 = vmatpush2.msra.mxu0 0.0
        %5014 = vmatprep.subr.mxu0 0.0
        %5015 = vmatpush2.msra.mxu0 0.0
        %5016 = vmatprep.subr.mxu0 0.0
        %5017 = vmatpush2.msra.mxu0 0.0
        %5018 = vmatprep.subr.mxu0 0.0
        %5019 = vmatpush2.msra.mxu0 0.0
        %5020 = vmatprep.subr.mxu0 0.0
        %5021 = vmatpush2.msra.mxu0 0.0
        %5022 = vmatprep.subr.mxu0 0.0
        %5023 = vmatpush2.msra.mxu0 0.0
        %5024 = vmatprep.subr.mxu0 0.0
        %5025 = vmatpush2.msra.mxu0 0.0
        %5026 = vmatprep.subr.mxu0 0.0
        %5027 = vmatpush2.msra.mxu0 0.0
        %5028 = vmatprep.subr.mxu0 0.0
        %5029 = vmatpush2.msra.mxu0 0.0
        %5030 = vmatprep.subr.mxu0 0.0
        %5031 = vmatpush2.msra.mxu0 0.0
        %5032 = vmatprep.subr.mxu0 0.0
        %5033 = vmatpush2.msra.mxu0 0.0
        %5034 = vmatprep.subr.mxu0 0.0
        %5035 = vmatpush2.msra.mxu0 0.0
        %5036 = vmatprep.subr.mxu0 0.0
        %5037 = vmatpush2.msra.mxu0 0.0
        %5038 = vmatprep.subr.mxu0 0.0
        %5039 = vmatpush2.msra.mxu0 0.0
        %5040 = vmatprep.subr.mxu0 0.0
        %5041 = vmatpush2.msra.mxu0 0.0
        %5042 = vmatprep.subr.mxu0 0.0
        %5043 = vmatpush2.msra.mxu0 0.0
        %5044 = vmatprep.mubr.f32.mxu0 0.0
        %5045 = vmatmul.mubr.f32.gmra.mxu0 %v1428
        %v5046 = vpop.f32.mrf.mxu0
        %v5047 = vadd.f32 %v1189, %v5046
        %v5048 = vpop.f32.mrf.mxu0
        %v5049 = vadd.f32 %v1193, %v5048
        %5050 = vdwg.mxu0
        %5051 = vmatprep.subr.mxu0 0.0
        %5052 = vmatpush1.msra.mxu0 0.0
        %5053 = vmatprep.subr.mxu0 0.0
        %5054 = vmatpush1.msra.mxu0 0.0
        %5055 = vmatprep.subr.mxu0 0.0
        %5056 = vmatpush1.msra.mxu0 0.0
        %5057 = vmatprep.subr.mxu0 0.0
        %5058 = vmatpush1.msra.mxu0 0.0
        %5059 = vmatprep.subr.mxu0 0.0
        %5060 = vmatpush1.msra.mxu0 0.0
        %5061 = vmatprep.subr.mxu0 0.0
        %5062 = vmatpush1.msra.mxu0 0.0
        %5063 = vmatprep.subr.mxu0 0.0
        %5064 = vmatpush1.msra.mxu0 0.0
        %5065 = vmatprep.subr.mxu0 0.0
        %5066 = vmatpush1.msra.mxu0 0.0
        %5067 = vmatprep.subr.mxu0 0.0
        %5068 = vmatpush1.msra.mxu0 0.0
        %5069 = vmatprep.subr.mxu0 0.0
        %5070 = vmatpush1.msra.mxu0 0.0
        %5071 = vmatprep.subr.mxu0 0.0
        %5072 = vmatpush1.msra.mxu0 0.0
        %5073 = vmatprep.subr.mxu0 0.0
        %5074 = vmatpush1.msra.mxu0 0.0
        %5075 = vmatprep.subr.mxu0 %v729
        %5076 = vmatpush1.msra.mxu0 %v728
        %5077 = vmatprep.subr.mxu0 %v601
        %5078 = vmatpush1.msra.mxu0 %v600
        %5079 = vmatprep.subr.mxu0 %v473
        %5080 = vmatpush1.msra.mxu0 %v472
        %5081 = vmatprep.subr.mxu0 %v345
        %5082 = vmatpush1.msra.mxu0 %v344
        %5083 = vmatprep.subr.mxu0 0.0
        %5084 = vmatpush2.msra.mxu0 0.0
        %5085 = vmatprep.subr.mxu0 0.0
        %5086 = vmatpush2.msra.mxu0 0.0
        %5087 = vmatprep.subr.mxu0 0.0
        %5088 = vmatpush2.msra.mxu0 0.0
        %5089 = vmatprep.subr.mxu0 0.0
        %5090 = vmatpush2.msra.mxu0 0.0
        %5091 = vmatprep.subr.mxu0 0.0
        %5092 = vmatpush2.msra.mxu0 0.0
        %5093 = vmatprep.subr.mxu0 0.0
        %5094 = vmatpush2.msra.mxu0 0.0
        %5095 = vmatprep.subr.mxu0 0.0
        %5096 = vmatpush2.msra.mxu0 0.0
        %5097 = vmatprep.subr.mxu0 0.0
        %5098 = vmatpush2.msra.mxu0 0.0
        %5099 = vmatprep.subr.mxu0 0.0
        %5100 = vmatpush2.msra.mxu0 0.0
        %5101 = vmatprep.subr.mxu0 0.0
        %5102 = vmatpush2.msra.mxu0 0.0
        %5103 = vmatprep.subr.mxu0 0.0
        %5104 = vmatpush2.msra.mxu0 0.0
        %5105 = vmatprep.subr.mxu0 0.0
        %5106 = vmatpush2.msra.mxu0 0.0
        %5107 = vmatprep.subr.mxu0 0.0
        %5108 = vmatpush2.msra.mxu0 0.0
        %5109 = vmatprep.subr.mxu0 0.0
        %5110 = vmatpush2.msra.mxu0 0.0
        %5111 = vmatprep.subr.mxu0 0.0
        %5112 = vmatpush2.msra.mxu0 0.0
        %5113 = vmatprep.subr.mxu0 0.0
        %5114 = vmatpush2.msra.mxu0 0.0
        %5115 = vmatprep.mubr.f32.mxu0 0.0
        %5116 = vmatmul.mubr.f32.gmra.mxu0 %v1428
        %v5117 = vpop.f32.mrf.mxu0
        %v5118 = vadd.f32 %v1197, %v5117
        %v5119 = vpop.f32.mrf.mxu0
        %v5120 = vadd.f32 %v1201, %v5119
        %5121 = vdwg.mxu0
        %5122 = vmatprep.subr.mxu0 0.0
        %5123 = vmatpush1.msra.mxu0 0.0
        %5124 = vmatprep.subr.mxu0 0.0
        %5125 = vmatpush1.msra.mxu0 0.0
        %5126 = vmatprep.subr.mxu0 0.0
        %5127 = vmatpush1.msra.mxu0 0.0
        %5128 = vmatprep.subr.mxu0 0.0
        %5129 = vmatpush1.msra.mxu0 0.0
        %5130 = vmatprep.subr.mxu0 0.0
        %5131 = vmatpush1.msra.mxu0 0.0
        %5132 = vmatprep.subr.mxu0 0.0
        %5133 = vmatpush1.msra.mxu0 0.0
        %5134 = vmatprep.subr.mxu0 0.0
        %5135 = vmatpush1.msra.mxu0 0.0
        %5136 = vmatprep.subr.mxu0 0.0
        %5137 = vmatpush1.msra.mxu0 0.0
        %5138 = vmatprep.subr.mxu0 0.0
        %5139 = vmatpush1.msra.mxu0 0.0
        %5140 = vmatprep.subr.mxu0 0.0
        %5141 = vmatpush1.msra.mxu0 0.0
        %5142 = vmatprep.subr.mxu0 0.0
        %5143 = vmatpush1.msra.mxu0 0.0
        %5144 = vmatprep.subr.mxu0 0.0
        %5145 = vmatpush1.msra.mxu0 0.0
        %5146 = vmatprep.subr.mxu0 %v731
        %5147 = vmatpush1.msra.mxu0 %v730
        %5148 = vmatprep.subr.mxu0 %v603
        %5149 = vmatpush1.msra.mxu0 %v602
        %5150 = vmatprep.subr.mxu0 %v475
        %5151 = vmatpush1.msra.mxu0 %v474
        %5152 = vmatprep.subr.mxu0 %v347
        %5153 = vmatpush1.msra.mxu0 %v346
        %5154 = vmatprep.subr.mxu0 0.0
        %5155 = vmatpush2.msra.mxu0 0.0
        %5156 = vmatprep.subr.mxu0 0.0
        %5157 = vmatpush2.msra.mxu0 0.0
        %5158 = vmatprep.subr.mxu0 0.0
        %5159 = vmatpush2.msra.mxu0 0.0
        %5160 = vmatprep.subr.mxu0 0.0
        %5161 = vmatpush2.msra.mxu0 0.0
        %5162 = vmatprep.subr.mxu0 0.0
        %5163 = vmatpush2.msra.mxu0 0.0
        %5164 = vmatprep.subr.mxu0 0.0
        %5165 = vmatpush2.msra.mxu0 0.0
        %5166 = vmatprep.subr.mxu0 0.0
        %5167 = vmatpush2.msra.mxu0 0.0
        %5168 = vmatprep.subr.mxu0 0.0
        %5169 = vmatpush2.msra.mxu0 0.0
        %5170 = vmatprep.subr.mxu0 0.0
        %5171 = vmatpush2.msra.mxu0 0.0
        %5172 = vmatprep.subr.mxu0 0.0
        %5173 = vmatpush2.msra.mxu0 0.0
        %5174 = vmatprep.subr.mxu0 0.0
        %5175 = vmatpush2.msra.mxu0 0.0
        %5176 = vmatprep.subr.mxu0 0.0
        %5177 = vmatpush2.msra.mxu0 0.0
        %5178 = vmatprep.subr.mxu0 0.0
        %5179 = vmatpush2.msra.mxu0 0.0
        %5180 = vmatprep.subr.mxu0 0.0
        %5181 = vmatpush2.msra.mxu0 0.0
        %5182 = vmatprep.subr.mxu0 0.0
        %5183 = vmatpush2.msra.mxu0 0.0
        %5184 = vmatprep.subr.mxu0 0.0
        %5185 = vmatpush2.msra.mxu0 0.0
        %5186 = vmatprep.mubr.f32.mxu0 0.0
        %5187 = vmatmul.mubr.f32.gmra.mxu0 %v1428
        %v5188 = vpop.f32.mrf.mxu0
        %v5189 = vadd.f32 %v1205, %v5188
        %v5190 = vpop.f32.mrf.mxu0
        %v5191 = vadd.f32 %v1209, %v5190
        %5192 = vdwg.mxu0
        %5193 = vmatprep.subr.mxu0 0.0
        %5194 = vmatpush1.msra.mxu0 0.0
        %5195 = vmatprep.subr.mxu0 0.0
        %5196 = vmatpush1.msra.mxu0 0.0
        %5197 = vmatprep.subr.mxu0 0.0
        %5198 = vmatpush1.msra.mxu0 0.0
        %5199 = vmatprep.subr.mxu0 0.0
        %5200 = vmatpush1.msra.mxu0 0.0
        %5201 = vmatprep.subr.mxu0 0.0
        %5202 = vmatpush1.msra.mxu0 0.0
        %5203 = vmatprep.subr.mxu0 0.0
        %5204 = vmatpush1.msra.mxu0 0.0
        %5205 = vmatprep.subr.mxu0 0.0
        %5206 = vmatpush1.msra.mxu0 0.0
        %5207 = vmatprep.subr.mxu0 0.0
        %5208 = vmatpush1.msra.mxu0 0.0
        %5209 = vmatprep.subr.mxu0 0.0
        %5210 = vmatpush1.msra.mxu0 0.0
        %5211 = vmatprep.subr.mxu0 0.0
        %5212 = vmatpush1.msra.mxu0 0.0
        %5213 = vmatprep.subr.mxu0 0.0
        %5214 = vmatpush1.msra.mxu0 0.0
        %5215 = vmatprep.subr.mxu0 0.0
        %5216 = vmatpush1.msra.mxu0 0.0
        %5217 = vmatprep.subr.mxu0 %v733
        %5218 = vmatpush1.msra.mxu0 %v732
        %5219 = vmatprep.subr.mxu0 %v605
        %5220 = vmatpush1.msra.mxu0 %v604
        %5221 = vmatprep.subr.mxu0 %v477
        %5222 = vmatpush1.msra.mxu0 %v476
        %5223 = vmatprep.subr.mxu0 %v349
        %5224 = vmatpush1.msra.mxu0 %v348
        %5225 = vmatprep.subr.mxu0 0.0
        %5226 = vmatpush2.msra.mxu0 0.0
        %5227 = vmatprep.subr.mxu0 0.0
        %5228 = vmatpush2.msra.mxu0 0.0
        %5229 = vmatprep.subr.mxu0 0.0
        %5230 = vmatpush2.msra.mxu0 0.0
        %5231 = vmatprep.subr.mxu0 0.0
        %5232 = vmatpush2.msra.mxu0 0.0
        %5233 = vmatprep.subr.mxu0 0.0
        %5234 = vmatpush2.msra.mxu0 0.0
        %5235 = vmatprep.subr.mxu0 0.0
        %5236 = vmatpush2.msra.mxu0 0.0
        %5237 = vmatprep.subr.mxu0 0.0
        %5238 = vmatpush2.msra.mxu0 0.0
        %5239 = vmatprep.subr.mxu0 0.0
        %5240 = vmatpush2.msra.mxu0 0.0
        %5241 = vmatprep.subr.mxu0 0.0
        %5242 = vmatpush2.msra.mxu0 0.0
        %5243 = vmatprep.subr.mxu0 0.0
        %5244 = vmatpush2.msra.mxu0 0.0
        %5245 = vmatprep.subr.mxu0 0.0
        %5246 = vmatpush2.msra.mxu0 0.0
        %5247 = vmatprep.subr.mxu0 0.0
        %5248 = vmatpush2.msra.mxu0 0.0
        %5249 = vmatprep.subr.mxu0 0.0
        %5250 = vmatpush2.msra.mxu0 0.0
        %5251 = vmatprep.subr.mxu0 0.0
        %5252 = vmatpush2.msra.mxu0 0.0
        %5253 = vmatprep.subr.mxu0 0.0
        %5254 = vmatpush2.msra.mxu0 0.0
        %5255 = vmatprep.subr.mxu0 0.0
        %5256 = vmatpush2.msra.mxu0 0.0
        %5257 = vmatprep.mubr.f32.mxu0 0.0
        %5258 = vmatmul.mubr.f32.gmra.mxu0 %v1428
        %v5259 = vpop.f32.mrf.mxu0
        %v5260 = vadd.f32 %v1213, %v5259
        %v5261 = vpop.f32.mrf.mxu0
        %v5262 = vadd.f32 %v1217, %v5261
        %5263 = vdwg.mxu0
        %5264 = vmatprep.subr.mxu0 0.0
        %5265 = vmatpush1.msra.mxu0 0.0
        %5266 = vmatprep.subr.mxu0 0.0
        %5267 = vmatpush1.msra.mxu0 0.0
        %5268 = vmatprep.subr.mxu0 0.0
        %5269 = vmatpush1.msra.mxu0 0.0
        %5270 = vmatprep.subr.mxu0 0.0
        %5271 = vmatpush1.msra.mxu0 0.0
        %5272 = vmatprep.subr.mxu0 0.0
        %5273 = vmatpush1.msra.mxu0 0.0
        %5274 = vmatprep.subr.mxu0 0.0
        %5275 = vmatpush1.msra.mxu0 0.0
        %5276 = vmatprep.subr.mxu0 0.0
        %5277 = vmatpush1.msra.mxu0 0.0
        %5278 = vmatprep.subr.mxu0 0.0
        %5279 = vmatpush1.msra.mxu0 0.0
        %5280 = vmatprep.subr.mxu0 0.0
        %5281 = vmatpush1.msra.mxu0 0.0
        %5282 = vmatprep.subr.mxu0 0.0
        %5283 = vmatpush1.msra.mxu0 0.0
        %5284 = vmatprep.subr.mxu0 0.0
        %5285 = vmatpush1.msra.mxu0 0.0
        %5286 = vmatprep.subr.mxu0 0.0
        %5287 = vmatpush1.msra.mxu0 0.0
        %5288 = vmatprep.subr.mxu0 %v735
        %5289 = vmatpush1.msra.mxu0 %v734
        %5290 = vmatprep.subr.mxu0 %v607
        %5291 = vmatpush1.msra.mxu0 %v606
        %5292 = vmatprep.subr.mxu0 %v479
        %5293 = vmatpush1.msra.mxu0 %v478
        %5294 = vmatprep.subr.mxu0 %v351
        %5295 = vmatpush1.msra.mxu0 %v350
        %5296 = vmatprep.subr.mxu0 0.0
        %5297 = vmatpush2.msra.mxu0 0.0
        %5298 = vmatprep.subr.mxu0 0.0
        %5299 = vmatpush2.msra.mxu0 0.0
        %5300 = vmatprep.subr.mxu0 0.0
        %5301 = vmatpush2.msra.mxu0 0.0
        %5302 = vmatprep.subr.mxu0 0.0
        %5303 = vmatpush2.msra.mxu0 0.0
        %5304 = vmatprep.subr.mxu0 0.0
        %5305 = vmatpush2.msra.mxu0 0.0
        %5306 = vmatprep.subr.mxu0 0.0
        %5307 = vmatpush2.msra.mxu0 0.0
        %5308 = vmatprep.subr.mxu0 0.0
        %5309 = vmatpush2.msra.mxu0 0.0
        %5310 = vmatprep.subr.mxu0 0.0
        %5311 = vmatpush2.msra.mxu0 0.0
        %5312 = vmatprep.subr.mxu0 0.0
        %5313 = vmatpush2.msra.mxu0 0.0
        %5314 = vmatprep.subr.mxu0 0.0
        %5315 = vmatpush2.msra.mxu0 0.0
        %5316 = vmatprep.subr.mxu0 0.0
        %5317 = vmatpush2.msra.mxu0 0.0
        %5318 = vmatprep.subr.mxu0 0.0
        %5319 = vmatpush2.msra.mxu0 0.0
        %5320 = vmatprep.subr.mxu0 0.0
        %5321 = vmatpush2.msra.mxu0 0.0
        %5322 = vmatprep.subr.mxu0 0.0
        %5323 = vmatpush2.msra.mxu0 0.0
        %5324 = vmatprep.subr.mxu0 0.0
        %5325 = vmatpush2.msra.mxu0 0.0
        %5326 = vmatprep.subr.mxu0 0.0
        %5327 = vmatpush2.msra.mxu0 0.0
        %5328 = vmatprep.mubr.f32.mxu0 0.0
        %5329 = vmatmul.mubr.f32.gmra.mxu0 %v1428
        %v5330 = vpop.f32.mrf.mxu0
        %v5331 = vadd.f32 %v1221, %v5330
        %v5332 = vpop.f32.mrf.mxu0
        %v5333 = vadd.f32 %v1225, %v5332
        %5334 = vdwg.mxu0
        %5335 = vmatprep.subr.mxu0 0.0
        %5336 = vmatpush1.msra.mxu0 0.0
        %5337 = vmatprep.subr.mxu0 0.0
        %5338 = vmatpush1.msra.mxu0 0.0
        %5339 = vmatprep.subr.mxu0 0.0
        %5340 = vmatpush1.msra.mxu0 0.0
        %5341 = vmatprep.subr.mxu0 0.0
        %5342 = vmatpush1.msra.mxu0 0.0
        %5343 = vmatprep.subr.mxu0 0.0
        %5344 = vmatpush1.msra.mxu0 0.0
        %5345 = vmatprep.subr.mxu0 0.0
        %5346 = vmatpush1.msra.mxu0 0.0
        %5347 = vmatprep.subr.mxu0 0.0
        %5348 = vmatpush1.msra.mxu0 0.0
        %5349 = vmatprep.subr.mxu0 0.0
        %5350 = vmatpush1.msra.mxu0 0.0
        %5351 = vmatprep.subr.mxu0 0.0
        %5352 = vmatpush1.msra.mxu0 0.0
        %5353 = vmatprep.subr.mxu0 0.0
        %5354 = vmatpush1.msra.mxu0 0.0
        %5355 = vmatprep.subr.mxu0 0.0
        %5356 = vmatpush1.msra.mxu0 0.0
        %5357 = vmatprep.subr.mxu0 0.0
        %5358 = vmatpush1.msra.mxu0 0.0
        %5359 = vmatprep.subr.mxu0 %v737
        %5360 = vmatpush1.msra.mxu0 %v736
        %5361 = vmatprep.subr.mxu0 %v609
        %5362 = vmatpush1.msra.mxu0 %v608
        %5363 = vmatprep.subr.mxu0 %v481
        %5364 = vmatpush1.msra.mxu0 %v480
        %5365 = vmatprep.subr.mxu0 %v353
        %5366 = vmatpush1.msra.mxu0 %v352
        %5367 = vmatprep.subr.mxu0 0.0
        %5368 = vmatpush2.msra.mxu0 0.0
        %5369 = vmatprep.subr.mxu0 0.0
        %5370 = vmatpush2.msra.mxu0 0.0
        %5371 = vmatprep.subr.mxu0 0.0
        %5372 = vmatpush2.msra.mxu0 0.0
        %5373 = vmatprep.subr.mxu0 0.0
        %5374 = vmatpush2.msra.mxu0 0.0
        %5375 = vmatprep.subr.mxu0 0.0
        %5376 = vmatpush2.msra.mxu0 0.0
        %5377 = vmatprep.subr.mxu0 0.0
        %5378 = vmatpush2.msra.mxu0 0.0
        %5379 = vmatprep.subr.mxu0 0.0
        %5380 = vmatpush2.msra.mxu0 0.0
        %5381 = vmatprep.subr.mxu0 0.0
        %5382 = vmatpush2.msra.mxu0 0.0
        %5383 = vmatprep.subr.mxu0 0.0
        %5384 = vmatpush2.msra.mxu0 0.0
        %5385 = vmatprep.subr.mxu0 0.0
        %5386 = vmatpush2.msra.mxu0 0.0
        %5387 = vmatprep.subr.mxu0 0.0
        %5388 = vmatpush2.msra.mxu0 0.0
        %5389 = vmatprep.subr.mxu0 0.0
        %5390 = vmatpush2.msra.mxu0 0.0
        %5391 = vmatprep.subr.mxu0 0.0
        %5392 = vmatpush2.msra.mxu0 0.0
        %5393 = vmatprep.subr.mxu0 0.0
        %5394 = vmatpush2.msra.mxu0 0.0
        %5395 = vmatprep.subr.mxu0 0.0
        %5396 = vmatpush2.msra.mxu0 0.0
        %5397 = vmatprep.subr.mxu0 0.0
        %5398 = vmatpush2.msra.mxu0 0.0
        %5399 = vmatprep.mubr.f32.mxu0 0.0
        %5400 = vmatmul.mubr.f32.gmra.mxu0 %v1428
        %v5401 = vpop.f32.mrf.mxu0
        %v5402 = vadd.f32 %v1229, %v5401
        %v5403 = vpop.f32.mrf.mxu0
        %v5404 = vadd.f32 %v1233, %v5403
        %5405 = vdwg.mxu0
        %5406 = vmatprep.subr.mxu0 0.0
        %5407 = vmatpush1.msra.mxu0 0.0
        %5408 = vmatprep.subr.mxu0 0.0
        %5409 = vmatpush1.msra.mxu0 0.0
        %5410 = vmatprep.subr.mxu0 0.0
        %5411 = vmatpush1.msra.mxu0 0.0
        %5412 = vmatprep.subr.mxu0 0.0
        %5413 = vmatpush1.msra.mxu0 0.0
        %5414 = vmatprep.subr.mxu0 0.0
        %5415 = vmatpush1.msra.mxu0 0.0
        %5416 = vmatprep.subr.mxu0 0.0
        %5417 = vmatpush1.msra.mxu0 0.0
        %5418 = vmatprep.subr.mxu0 0.0
        %5419 = vmatpush1.msra.mxu0 0.0
        %5420 = vmatprep.subr.mxu0 0.0
        %5421 = vmatpush1.msra.mxu0 0.0
        %5422 = vmatprep.subr.mxu0 0.0
        %5423 = vmatpush1.msra.mxu0 0.0
        %5424 = vmatprep.subr.mxu0 0.0
        %5425 = vmatpush1.msra.mxu0 0.0
        %5426 = vmatprep.subr.mxu0 0.0
        %5427 = vmatpush1.msra.mxu0 0.0
        %5428 = vmatprep.subr.mxu0 0.0
        %5429 = vmatpush1.msra.mxu0 0.0
        %5430 = vmatprep.subr.mxu0 %v739
        %5431 = vmatpush1.msra.mxu0 %v738
        %5432 = vmatprep.subr.mxu0 %v611
        %5433 = vmatpush1.msra.mxu0 %v610
        %5434 = vmatprep.subr.mxu0 %v483
        %5435 = vmatpush1.msra.mxu0 %v482
        %5436 = vmatprep.subr.mxu0 %v355
        %5437 = vmatpush1.msra.mxu0 %v354
        %5438 = vmatprep.subr.mxu0 0.0
        %5439 = vmatpush2.msra.mxu0 0.0
        %5440 = vmatprep.subr.mxu0 0.0
        %5441 = vmatpush2.msra.mxu0 0.0
        %5442 = vmatprep.subr.mxu0 0.0
        %5443 = vmatpush2.msra.mxu0 0.0
        %5444 = vmatprep.subr.mxu0 0.0
        %5445 = vmatpush2.msra.mxu0 0.0
        %5446 = vmatprep.subr.mxu0 0.0
        %5447 = vmatpush2.msra.mxu0 0.0
        %5448 = vmatprep.subr.mxu0 0.0
        %5449 = vmatpush2.msra.mxu0 0.0
        %5450 = vmatprep.subr.mxu0 0.0
        %5451 = vmatpush2.msra.mxu0 0.0
        %5452 = vmatprep.subr.mxu0 0.0
        %5453 = vmatpush2.msra.mxu0 0.0
        %5454 = vmatprep.subr.mxu0 0.0
        %5455 = vmatpush2.msra.mxu0 0.0
        %5456 = vmatprep.subr.mxu0 0.0
        %5457 = vmatpush2.msra.mxu0 0.0
        %5458 = vmatprep.subr.mxu0 0.0
        %5459 = vmatpush2.msra.mxu0 0.0
        %5460 = vmatprep.subr.mxu0 0.0
        %5461 = vmatpush2.msra.mxu0 0.0
        %5462 = vmatprep.subr.mxu0 0.0
        %5463 = vmatpush2.msra.mxu0 0.0
        %5464 = vmatprep.subr.mxu0 0.0
        %5465 = vmatpush2.msra.mxu0 0.0
        %5466 = vmatprep.subr.mxu0 0.0
        %5467 = vmatpush2.msra.mxu0 0.0
        %5468 = vmatprep.subr.mxu0 0.0
        %5469 = vmatpush2.msra.mxu0 0.0
        %5470 = vmatprep.mubr.f32.mxu0 0.0
        %5471 = vmatmul.mubr.f32.gmra.mxu0 %v1428
        %v5472 = vpop.f32.mrf.mxu0
        %v5473 = vadd.f32 %v1237, %v5472
        %v5474 = vpop.f32.mrf.mxu0
        %v5475 = vadd.f32 %v1241, %v5474
        %5476 = vdwg.mxu0
        %5477 = vmatprep.subr.mxu0 0.0
        %5478 = vmatpush1.msra.mxu0 0.0
        %5479 = vmatprep.subr.mxu0 0.0
        %5480 = vmatpush1.msra.mxu0 0.0
        %5481 = vmatprep.subr.mxu0 0.0
        %5482 = vmatpush1.msra.mxu0 0.0
        %5483 = vmatprep.subr.mxu0 0.0
        %5484 = vmatpush1.msra.mxu0 0.0
        %5485 = vmatprep.subr.mxu0 0.0
        %5486 = vmatpush1.msra.mxu0 0.0
        %5487 = vmatprep.subr.mxu0 0.0
        %5488 = vmatpush1.msra.mxu0 0.0
        %5489 = vmatprep.subr.mxu0 0.0
        %5490 = vmatpush1.msra.mxu0 0.0
        %5491 = vmatprep.subr.mxu0 0.0
        %5492 = vmatpush1.msra.mxu0 0.0
        %5493 = vmatprep.subr.mxu0 0.0
        %5494 = vmatpush1.msra.mxu0 0.0
        %5495 = vmatprep.subr.mxu0 0.0
        %5496 = vmatpush1.msra.mxu0 0.0
        %5497 = vmatprep.subr.mxu0 0.0
        %5498 = vmatpush1.msra.mxu0 0.0
        %5499 = vmatprep.subr.mxu0 0.0
        %5500 = vmatpush1.msra.mxu0 0.0
        %5501 = vmatprep.subr.mxu0 %v741
        %5502 = vmatpush1.msra.mxu0 %v740
        %5503 = vmatprep.subr.mxu0 %v613
        %5504 = vmatpush1.msra.mxu0 %v612
        %5505 = vmatprep.subr.mxu0 %v485
        %5506 = vmatpush1.msra.mxu0 %v484
        %5507 = vmatprep.subr.mxu0 %v357
        %5508 = vmatpush1.msra.mxu0 %v356
        %5509 = vmatprep.subr.mxu0 0.0
        %5510 = vmatpush2.msra.mxu0 0.0
        %5511 = vmatprep.subr.mxu0 0.0
        %5512 = vmatpush2.msra.mxu0 0.0
        %5513 = vmatprep.subr.mxu0 0.0
        %5514 = vmatpush2.msra.mxu0 0.0
        %5515 = vmatprep.subr.mxu0 0.0
        %5516 = vmatpush2.msra.mxu0 0.0
        %5517 = vmatprep.subr.mxu0 0.0
        %5518 = vmatpush2.msra.mxu0 0.0
        %5519 = vmatprep.subr.mxu0 0.0
        %5520 = vmatpush2.msra.mxu0 0.0
        %5521 = vmatprep.subr.mxu0 0.0
        %5522 = vmatpush2.msra.mxu0 0.0
        %5523 = vmatprep.subr.mxu0 0.0
        %5524 = vmatpush2.msra.mxu0 0.0
        %5525 = vmatprep.subr.mxu0 0.0
        %5526 = vmatpush2.msra.mxu0 0.0
        %5527 = vmatprep.subr.mxu0 0.0
        %5528 = vmatpush2.msra.mxu0 0.0
        %5529 = vmatprep.subr.mxu0 0.0
        %5530 = vmatpush2.msra.mxu0 0.0
        %5531 = vmatprep.subr.mxu0 0.0
        %5532 = vmatpush2.msra.mxu0 0.0
        %5533 = vmatprep.subr.mxu0 0.0
        %5534 = vmatpush2.msra.mxu0 0.0
        %5535 = vmatprep.subr.mxu0 0.0
        %5536 = vmatpush2.msra.mxu0 0.0
        %5537 = vmatprep.subr.mxu0 0.0
        %5538 = vmatpush2.msra.mxu0 0.0
        %5539 = vmatprep.subr.mxu0 0.0
        %5540 = vmatpush2.msra.mxu0 0.0
        %5541 = vmatprep.mubr.f32.mxu0 0.0
        %5542 = vmatmul.mubr.f32.gmra.mxu0 %v1428
        %v5543 = vpop.f32.mrf.mxu0
        %v5544 = vadd.f32 %v1245, %v5543
        %v5545 = vpop.f32.mrf.mxu0
        %v5546 = vadd.f32 %v1249, %v5545
        %5547 = vdwg.mxu0
        %5548 = vmatprep.subr.mxu0 0.0
        %5549 = vmatpush1.msra.mxu0 0.0
        %5550 = vmatprep.subr.mxu0 0.0
        %5551 = vmatpush1.msra.mxu0 0.0
        %5552 = vmatprep.subr.mxu0 0.0
        %5553 = vmatpush1.msra.mxu0 0.0
        %5554 = vmatprep.subr.mxu0 0.0
        %5555 = vmatpush1.msra.mxu0 0.0
        %5556 = vmatprep.subr.mxu0 0.0
        %5557 = vmatpush1.msra.mxu0 0.0
        %5558 = vmatprep.subr.mxu0 0.0
        %5559 = vmatpush1.msra.mxu0 0.0
        %5560 = vmatprep.subr.mxu0 0.0
        %5561 = vmatpush1.msra.mxu0 0.0
        %5562 = vmatprep.subr.mxu0 0.0
        %5563 = vmatpush1.msra.mxu0 0.0
        %5564 = vmatprep.subr.mxu0 0.0
        %5565 = vmatpush1.msra.mxu0 0.0
        %5566 = vmatprep.subr.mxu0 0.0
        %5567 = vmatpush1.msra.mxu0 0.0
        %5568 = vmatprep.subr.mxu0 0.0
        %5569 = vmatpush1.msra.mxu0 0.0
        %5570 = vmatprep.subr.mxu0 0.0
        %5571 = vmatpush1.msra.mxu0 0.0
        %5572 = vmatprep.subr.mxu0 %v743
        %5573 = vmatpush1.msra.mxu0 %v742
        %5574 = vmatprep.subr.mxu0 %v615
        %5575 = vmatpush1.msra.mxu0 %v614
        %5576 = vmatprep.subr.mxu0 %v487
        %5577 = vmatpush1.msra.mxu0 %v486
        %5578 = vmatprep.subr.mxu0 %v359
        %5579 = vmatpush1.msra.mxu0 %v358
        %5580 = vmatprep.subr.mxu0 0.0
        %5581 = vmatpush2.msra.mxu0 0.0
        %5582 = vmatprep.subr.mxu0 0.0
        %5583 = vmatpush2.msra.mxu0 0.0
        %5584 = vmatprep.subr.mxu0 0.0
        %5585 = vmatpush2.msra.mxu0 0.0
        %5586 = vmatprep.subr.mxu0 0.0
        %5587 = vmatpush2.msra.mxu0 0.0
        %5588 = vmatprep.subr.mxu0 0.0
        %5589 = vmatpush2.msra.mxu0 0.0
        %5590 = vmatprep.subr.mxu0 0.0
        %5591 = vmatpush2.msra.mxu0 0.0
        %5592 = vmatprep.subr.mxu0 0.0
        %5593 = vmatpush2.msra.mxu0 0.0
        %5594 = vmatprep.subr.mxu0 0.0
        %5595 = vmatpush2.msra.mxu0 0.0
        %5596 = vmatprep.subr.mxu0 0.0
        %5597 = vmatpush2.msra.mxu0 0.0
        %5598 = vmatprep.subr.mxu0 0.0
        %5599 = vmatpush2.msra.mxu0 0.0
        %5600 = vmatprep.subr.mxu0 0.0
        %5601 = vmatpush2.msra.mxu0 0.0
        %5602 = vmatprep.subr.mxu0 0.0
        %5603 = vmatpush2.msra.mxu0 0.0
        %5604 = vmatprep.subr.mxu0 0.0
        %5605 = vmatpush2.msra.mxu0 0.0
        %5606 = vmatprep.subr.mxu0 0.0
        %5607 = vmatpush2.msra.mxu0 0.0
        %5608 = vmatprep.subr.mxu0 0.0
        %5609 = vmatpush2.msra.mxu0 0.0
        %5610 = vmatprep.subr.mxu0 0.0
        %5611 = vmatpush2.msra.mxu0 0.0
        %5612 = vmatprep.mubr.f32.mxu0 0.0
        %5613 = vmatmul.mubr.f32.gmra.mxu0 %v1428
        %v5614 = vpop.f32.mrf.mxu0
        %v5615 = vadd.f32 %v1253, %v5614
        %v5616 = vpop.f32.mrf.mxu0
        %v5617 = vadd.f32 %v1257, %v5616
        %5618 = vdwg.mxu0
        %5619 = vmatprep.subr.mxu0 0.0
        %5620 = vmatpush1.msra.mxu0 0.0
        %5621 = vmatprep.subr.mxu0 0.0
        %5622 = vmatpush1.msra.mxu0 0.0
        %5623 = vmatprep.subr.mxu0 0.0
        %5624 = vmatpush1.msra.mxu0 0.0
        %5625 = vmatprep.subr.mxu0 0.0
        %5626 = vmatpush1.msra.mxu0 0.0
        %5627 = vmatprep.subr.mxu0 0.0
        %5628 = vmatpush1.msra.mxu0 0.0
        %5629 = vmatprep.subr.mxu0 0.0
        %5630 = vmatpush1.msra.mxu0 0.0
        %5631 = vmatprep.subr.mxu0 0.0
        %5632 = vmatpush1.msra.mxu0 0.0
        %5633 = vmatprep.subr.mxu0 0.0
        %5634 = vmatpush1.msra.mxu0 0.0
        %5635 = vmatprep.subr.mxu0 0.0
        %5636 = vmatpush1.msra.mxu0 0.0
        %5637 = vmatprep.subr.mxu0 0.0
        %5638 = vmatpush1.msra.mxu0 0.0
        %5639 = vmatprep.subr.mxu0 0.0
        %5640 = vmatpush1.msra.mxu0 0.0
        %5641 = vmatprep.subr.mxu0 0.0
        %5642 = vmatpush1.msra.mxu0 0.0
        %5643 = vmatprep.subr.mxu0 %v745
        %5644 = vmatpush1.msra.mxu0 %v744
        %5645 = vmatprep.subr.mxu0 %v617
        %5646 = vmatpush1.msra.mxu0 %v616
        %5647 = vmatprep.subr.mxu0 %v489
        %5648 = vmatpush1.msra.mxu0 %v488
        %5649 = vmatprep.subr.mxu0 %v361
        %5650 = vmatpush1.msra.mxu0 %v360
        %5651 = vmatprep.subr.mxu0 0.0
        %5652 = vmatpush2.msra.mxu0 0.0
        %5653 = vmatprep.subr.mxu0 0.0
        %5654 = vmatpush2.msra.mxu0 0.0
        %5655 = vmatprep.subr.mxu0 0.0
        %5656 = vmatpush2.msra.mxu0 0.0
        %5657 = vmatprep.subr.mxu0 0.0
        %5658 = vmatpush2.msra.mxu0 0.0
        %5659 = vmatprep.subr.mxu0 0.0
        %5660 = vmatpush2.msra.mxu0 0.0
        %5661 = vmatprep.subr.mxu0 0.0
        %5662 = vmatpush2.msra.mxu0 0.0
        %5663 = vmatprep.subr.mxu0 0.0
        %5664 = vmatpush2.msra.mxu0 0.0
        %5665 = vmatprep.subr.mxu0 0.0
        %5666 = vmatpush2.msra.mxu0 0.0
        %5667 = vmatprep.subr.mxu0 0.0
        %5668 = vmatpush2.msra.mxu0 0.0
        %5669 = vmatprep.subr.mxu0 0.0
        %5670 = vmatpush2.msra.mxu0 0.0
        %5671 = vmatprep.subr.mxu0 0.0
        %5672 = vmatpush2.msra.mxu0 0.0
        %5673 = vmatprep.subr.mxu0 0.0
        %5674 = vmatpush2.msra.mxu0 0.0
        %5675 = vmatprep.subr.mxu0 0.0
        %5676 = vmatpush2.msra.mxu0 0.0
        %5677 = vmatprep.subr.mxu0 0.0
        %5678 = vmatpush2.msra.mxu0 0.0
        %5679 = vmatprep.subr.mxu0 0.0
        %5680 = vmatpush2.msra.mxu0 0.0
        %5681 = vmatprep.subr.mxu0 0.0
        %5682 = vmatpush2.msra.mxu0 0.0
        %5683 = vmatprep.mubr.f32.mxu0 0.0
        %5684 = vmatmul.mubr.f32.gmra.mxu0 %v1428
        %v5685 = vpop.f32.mrf.mxu0
        %v5686 = vadd.f32 %v1261, %v5685
        %v5687 = vpop.f32.mrf.mxu0
        %v5688 = vadd.f32 %v1265, %v5687
        %5689 = vdwg.mxu0
        %5690 = vmatprep.subr.mxu0 0.0
        %5691 = vmatpush1.msra.mxu0 0.0
        %5692 = vmatprep.subr.mxu0 0.0
        %5693 = vmatpush1.msra.mxu0 0.0
        %5694 = vmatprep.subr.mxu0 0.0
        %5695 = vmatpush1.msra.mxu0 0.0
        %5696 = vmatprep.subr.mxu0 0.0
        %5697 = vmatpush1.msra.mxu0 0.0
        %5698 = vmatprep.subr.mxu0 0.0
        %5699 = vmatpush1.msra.mxu0 0.0
        %5700 = vmatprep.subr.mxu0 0.0
        %5701 = vmatpush1.msra.mxu0 0.0
        %5702 = vmatprep.subr.mxu0 0.0
        %5703 = vmatpush1.msra.mxu0 0.0
        %5704 = vmatprep.subr.mxu0 0.0
        %5705 = vmatpush1.msra.mxu0 0.0
        %5706 = vmatprep.subr.mxu0 0.0
        %5707 = vmatpush1.msra.mxu0 0.0
        %5708 = vmatprep.subr.mxu0 0.0
        %5709 = vmatpush1.msra.mxu0 0.0
        %5710 = vmatprep.subr.mxu0 0.0
        %5711 = vmatpush1.msra.mxu0 0.0
        %5712 = vmatprep.subr.mxu0 0.0
        %5713 = vmatpush1.msra.mxu0 0.0
        %5714 = vmatprep.subr.mxu0 %v747
        %5715 = vmatpush1.msra.mxu0 %v746
        %5716 = vmatprep.subr.mxu0 %v619
        %5717 = vmatpush1.msra.mxu0 %v618
        %5718 = vmatprep.subr.mxu0 %v491
        %5719 = vmatpush1.msra.mxu0 %v490
        %5720 = vmatprep.subr.mxu0 %v363
        %5721 = vmatpush1.msra.mxu0 %v362
        %5722 = vmatprep.subr.mxu0 0.0
        %5723 = vmatpush2.msra.mxu0 0.0
        %5724 = vmatprep.subr.mxu0 0.0
        %5725 = vmatpush2.msra.mxu0 0.0
        %5726 = vmatprep.subr.mxu0 0.0
        %5727 = vmatpush2.msra.mxu0 0.0
        %5728 = vmatprep.subr.mxu0 0.0
        %5729 = vmatpush2.msra.mxu0 0.0
        %5730 = vmatprep.subr.mxu0 0.0
        %5731 = vmatpush2.msra.mxu0 0.0
        %5732 = vmatprep.subr.mxu0 0.0
        %5733 = vmatpush2.msra.mxu0 0.0
        %5734 = vmatprep.subr.mxu0 0.0
        %5735 = vmatpush2.msra.mxu0 0.0
        %5736 = vmatprep.subr.mxu0 0.0
        %5737 = vmatpush2.msra.mxu0 0.0
        %5738 = vmatprep.subr.mxu0 0.0
        %5739 = vmatpush2.msra.mxu0 0.0
        %5740 = vmatprep.subr.mxu0 0.0
        %5741 = vmatpush2.msra.mxu0 0.0
        %5742 = vmatprep.subr.mxu0 0.0
        %5743 = vmatpush2.msra.mxu0 0.0
        %5744 = vmatprep.subr.mxu0 0.0
        %5745 = vmatpush2.msra.mxu0 0.0
        %5746 = vmatprep.subr.mxu0 0.0
        %5747 = vmatpush2.msra.mxu0 0.0
        %5748 = vmatprep.subr.mxu0 0.0
        %5749 = vmatpush2.msra.mxu0 0.0
        %5750 = vmatprep.subr.mxu0 0.0
        %5751 = vmatpush2.msra.mxu0 0.0
        %5752 = vmatprep.subr.mxu0 0.0
        %5753 = vmatpush2.msra.mxu0 0.0
        %5754 = vmatprep.mubr.f32.mxu0 0.0
        %5755 = vmatmul.mubr.f32.gmra.mxu0 %v1428
        %v5756 = vpop.f32.mrf.mxu0
        %v5757 = vadd.f32 %v1269, %v5756
        %v5758 = vpop.f32.mrf.mxu0
        %v5759 = vadd.f32 %v1273, %v5758
        %5760 = vdwg.mxu0
        %5761 = vmatprep.subr.mxu0 0.0
        %5762 = vmatpush1.msra.mxu0 0.0
        %5763 = vmatprep.subr.mxu0 0.0
        %5764 = vmatpush1.msra.mxu0 0.0
        %5765 = vmatprep.subr.mxu0 0.0
        %5766 = vmatpush1.msra.mxu0 0.0
        %5767 = vmatprep.subr.mxu0 0.0
        %5768 = vmatpush1.msra.mxu0 0.0
        %5769 = vmatprep.subr.mxu0 0.0
        %5770 = vmatpush1.msra.mxu0 0.0
        %5771 = vmatprep.subr.mxu0 0.0
        %5772 = vmatpush1.msra.mxu0 0.0
        %5773 = vmatprep.subr.mxu0 0.0
        %5774 = vmatpush1.msra.mxu0 0.0
        %5775 = vmatprep.subr.mxu0 0.0
        %5776 = vmatpush1.msra.mxu0 0.0
        %5777 = vmatprep.subr.mxu0 0.0
        %5778 = vmatpush1.msra.mxu0 0.0
        %5779 = vmatprep.subr.mxu0 0.0
        %5780 = vmatpush1.msra.mxu0 0.0
        %5781 = vmatprep.subr.mxu0 0.0
        %5782 = vmatpush1.msra.mxu0 0.0
        %5783 = vmatprep.subr.mxu0 0.0
        %5784 = vmatpush1.msra.mxu0 0.0
        %5785 = vmatprep.subr.mxu0 %v749
        %5786 = vmatpush1.msra.mxu0 %v748
        %5787 = vmatprep.subr.mxu0 %v621
        %5788 = vmatpush1.msra.mxu0 %v620
        %5789 = vmatprep.subr.mxu0 %v493
        %5790 = vmatpush1.msra.mxu0 %v492
        %5791 = vmatprep.subr.mxu0 %v365
        %5792 = vmatpush1.msra.mxu0 %v364
        %5793 = vmatprep.subr.mxu0 0.0
        %5794 = vmatpush2.msra.mxu0 0.0
        %5795 = vmatprep.subr.mxu0 0.0
        %5796 = vmatpush2.msra.mxu0 0.0
        %5797 = vmatprep.subr.mxu0 0.0
        %5798 = vmatpush2.msra.mxu0 0.0
        %5799 = vmatprep.subr.mxu0 0.0
        %5800 = vmatpush2.msra.mxu0 0.0
        %5801 = vmatprep.subr.mxu0 0.0
        %5802 = vmatpush2.msra.mxu0 0.0
        %5803 = vmatprep.subr.mxu0 0.0
        %5804 = vmatpush2.msra.mxu0 0.0
        %5805 = vmatprep.subr.mxu0 0.0
        %5806 = vmatpush2.msra.mxu0 0.0
        %5807 = vmatprep.subr.mxu0 0.0
        %5808 = vmatpush2.msra.mxu0 0.0
        %5809 = vmatprep.subr.mxu0 0.0
        %5810 = vmatpush2.msra.mxu0 0.0
        %5811 = vmatprep.subr.mxu0 0.0
        %5812 = vmatpush2.msra.mxu0 0.0
        %5813 = vmatprep.subr.mxu0 0.0
        %5814 = vmatpush2.msra.mxu0 0.0
        %5815 = vmatprep.subr.mxu0 0.0
        %5816 = vmatpush2.msra.mxu0 0.0
        %5817 = vmatprep.subr.mxu0 0.0
        %5818 = vmatpush2.msra.mxu0 0.0
        %5819 = vmatprep.subr.mxu0 0.0
        %5820 = vmatpush2.msra.mxu0 0.0
        %5821 = vmatprep.subr.mxu0 0.0
        %5822 = vmatpush2.msra.mxu0 0.0
        %5823 = vmatprep.subr.mxu0 0.0
        %5824 = vmatpush2.msra.mxu0 0.0
        %5825 = vmatprep.mubr.f32.mxu0 0.0
        %5826 = vmatmul.mubr.f32.gmra.mxu0 %v1428
        %v5827 = vpop.f32.mrf.mxu0
        %v5828 = vadd.f32 %v1277, %v5827
        %v5829 = vpop.f32.mrf.mxu0
        %v5830 = vadd.f32 %v1281, %v5829
        %5831 = vdwg.mxu0
        %5832 = vmatprep.subr.mxu0 0.0
        %5833 = vmatpush1.msra.mxu0 0.0
        %5834 = vmatprep.subr.mxu0 0.0
        %5835 = vmatpush1.msra.mxu0 0.0
        %5836 = vmatprep.subr.mxu0 0.0
        %5837 = vmatpush1.msra.mxu0 0.0
        %5838 = vmatprep.subr.mxu0 0.0
        %5839 = vmatpush1.msra.mxu0 0.0
        %5840 = vmatprep.subr.mxu0 0.0
        %5841 = vmatpush1.msra.mxu0 0.0
        %5842 = vmatprep.subr.mxu0 0.0
        %5843 = vmatpush1.msra.mxu0 0.0
        %5844 = vmatprep.subr.mxu0 0.0
        %5845 = vmatpush1.msra.mxu0 0.0
        %5846 = vmatprep.subr.mxu0 0.0
        %5847 = vmatpush1.msra.mxu0 0.0
        %5848 = vmatprep.subr.mxu0 0.0
        %5849 = vmatpush1.msra.mxu0 0.0
        %5850 = vmatprep.subr.mxu0 0.0
        %5851 = vmatpush1.msra.mxu0 0.0
        %5852 = vmatprep.subr.mxu0 0.0
        %5853 = vmatpush1.msra.mxu0 0.0
        %5854 = vmatprep.subr.mxu0 0.0
        %5855 = vmatpush1.msra.mxu0 0.0
        %5856 = vmatprep.subr.mxu0 %v751
        %5857 = vmatpush1.msra.mxu0 %v750
        %5858 = vmatprep.subr.mxu0 %v623
        %5859 = vmatpush1.msra.mxu0 %v622
        %5860 = vmatprep.subr.mxu0 %v495
        %5861 = vmatpush1.msra.mxu0 %v494
        %5862 = vmatprep.subr.mxu0 %v367
        %5863 = vmatpush1.msra.mxu0 %v366
        %5864 = vmatprep.subr.mxu0 0.0
        %5865 = vmatpush2.msra.mxu0 0.0
        %5866 = vmatprep.subr.mxu0 0.0
        %5867 = vmatpush2.msra.mxu0 0.0
        %5868 = vmatprep.subr.mxu0 0.0
        %5869 = vmatpush2.msra.mxu0 0.0
        %5870 = vmatprep.subr.mxu0 0.0
        %5871 = vmatpush2.msra.mxu0 0.0
        %5872 = vmatprep.subr.mxu0 0.0
        %5873 = vmatpush2.msra.mxu0 0.0
        %5874 = vmatprep.subr.mxu0 0.0
        %5875 = vmatpush2.msra.mxu0 0.0
        %5876 = vmatprep.subr.mxu0 0.0
        %5877 = vmatpush2.msra.mxu0 0.0
        %5878 = vmatprep.subr.mxu0 0.0
        %5879 = vmatpush2.msra.mxu0 0.0
        %5880 = vmatprep.subr.mxu0 0.0
        %5881 = vmatpush2.msra.mxu0 0.0
        %5882 = vmatprep.subr.mxu0 0.0
        %5883 = vmatpush2.msra.mxu0 0.0
        %5884 = vmatprep.subr.mxu0 0.0
        %5885 = vmatpush2.msra.mxu0 0.0
        %5886 = vmatprep.subr.mxu0 0.0
        %5887 = vmatpush2.msra.mxu0 0.0
        %5888 = vmatprep.subr.mxu0 0.0
        %5889 = vmatpush2.msra.mxu0 0.0
        %5890 = vmatprep.subr.mxu0 0.0
        %5891 = vmatpush2.msra.mxu0 0.0
        %5892 = vmatprep.subr.mxu0 0.0
        %5893 = vmatpush2.msra.mxu0 0.0
        %5894 = vmatprep.subr.mxu0 0.0
        %5895 = vmatpush2.msra.mxu0 0.0
        %5896 = vmatprep.mubr.f32.mxu0 0.0
        %5897 = vmatmul.mubr.f32.gmra.mxu0 %v1428
        %v5898 = vpop.f32.mrf.mxu0
        %v5899 = vadd.f32 %v1285, %v5898
        %v5900 = vpop.f32.mrf.mxu0
        %v5901 = vadd.f32 %v1289, %v5900
        %5902 = vdwg.mxu0
        %5903 = vmatprep.subr.mxu0 0.0
        %5904 = vmatpush1.msra.mxu0 0.0
        %5905 = vmatprep.subr.mxu0 0.0
        %5906 = vmatpush1.msra.mxu0 0.0
        %5907 = vmatprep.subr.mxu0 0.0
        %5908 = vmatpush1.msra.mxu0 0.0
        %5909 = vmatprep.subr.mxu0 0.0
        %5910 = vmatpush1.msra.mxu0 0.0
        %5911 = vmatprep.subr.mxu0 0.0
        %5912 = vmatpush1.msra.mxu0 0.0
        %5913 = vmatprep.subr.mxu0 0.0
        %5914 = vmatpush1.msra.mxu0 0.0
        %5915 = vmatprep.subr.mxu0 0.0
        %5916 = vmatpush1.msra.mxu0 0.0
        %5917 = vmatprep.subr.mxu0 0.0
        %5918 = vmatpush1.msra.mxu0 0.0
        %5919 = vmatprep.subr.mxu0 0.0
        %5920 = vmatpush1.msra.mxu0 0.0
        %5921 = vmatprep.subr.mxu0 0.0
        %5922 = vmatpush1.msra.mxu0 0.0
        %5923 = vmatprep.subr.mxu0 0.0
        %5924 = vmatpush1.msra.mxu0 0.0
        %5925 = vmatprep.subr.mxu0 0.0
        %5926 = vmatpush1.msra.mxu0 0.0
        %5927 = vmatprep.subr.mxu0 %v753
        %5928 = vmatpush1.msra.mxu0 %v752
        %5929 = vmatprep.subr.mxu0 %v625
        %5930 = vmatpush1.msra.mxu0 %v624
        %5931 = vmatprep.subr.mxu0 %v497
        %5932 = vmatpush1.msra.mxu0 %v496
        %5933 = vmatprep.subr.mxu0 %v369
        %5934 = vmatpush1.msra.mxu0 %v368
        %5935 = vmatprep.subr.mxu0 0.0
        %5936 = vmatpush2.msra.mxu0 0.0
        %5937 = vmatprep.subr.mxu0 0.0
        %5938 = vmatpush2.msra.mxu0 0.0
        %5939 = vmatprep.subr.mxu0 0.0
        %5940 = vmatpush2.msra.mxu0 0.0
        %5941 = vmatprep.subr.mxu0 0.0
        %5942 = vmatpush2.msra.mxu0 0.0
        %5943 = vmatprep.subr.mxu0 0.0
        %5944 = vmatpush2.msra.mxu0 0.0
        %5945 = vmatprep.subr.mxu0 0.0
        %5946 = vmatpush2.msra.mxu0 0.0
        %5947 = vmatprep.subr.mxu0 0.0
        %5948 = vmatpush2.msra.mxu0 0.0
        %5949 = vmatprep.subr.mxu0 0.0
        %5950 = vmatpush2.msra.mxu0 0.0
        %5951 = vmatprep.subr.mxu0 0.0
        %5952 = vmatpush2.msra.mxu0 0.0
        %5953 = vmatprep.subr.mxu0 0.0
        %5954 = vmatpush2.msra.mxu0 0.0
        %5955 = vmatprep.subr.mxu0 0.0
        %5956 = vmatpush2.msra.mxu0 0.0
        %5957 = vmatprep.subr.mxu0 0.0
        %5958 = vmatpush2.msra.mxu0 0.0
        %5959 = vmatprep.subr.mxu0 0.0
        %5960 = vmatpush2.msra.mxu0 0.0
        %5961 = vmatprep.subr.mxu0 0.0
        %5962 = vmatpush2.msra.mxu0 0.0
        %5963 = vmatprep.subr.mxu0 0.0
        %5964 = vmatpush2.msra.mxu0 0.0
        %5965 = vmatprep.subr.mxu0 0.0
        %5966 = vmatpush2.msra.mxu0 0.0
        %5967 = vmatprep.mubr.f32.mxu0 0.0
        %5968 = vmatmul.mubr.f32.gmra.mxu0 %v1428
        %v5969 = vpop.f32.mrf.mxu0
        %v5970 = vadd.f32 %v1293, %v5969
        %v5971 = vpop.f32.mrf.mxu0
        %v5972 = vadd.f32 %v1297, %v5971
        %5973 = vdwg.mxu0
        %v6102 = vcombine.low %v1497, %v1499
        %v6103 = vcombine.low %v1568, %v1570
        %v6104 = vcombine.low %v1639, %v1641
        %v6105 = vcombine.low %v1710, %v1712
        %v6107 = vunpack.c.l.s4 1966171168
        %v6108 = vunpack.c.0.s8 %v6107
        %v6109 = vlaneseq
        %v6110 = vshrl.u32 %v6109, 7
        %v6111 = vsub.s32 %v6108, %v6110
        %v6112 = vrot.slane %v6102, %v6111
        %v6114 = vunpack.c.l.s4 1966171168
        %v6115 = vunpack.c.0.s8 %v6114
        %v6116 = vlaneseq
        %v6117 = vshrl.u32 %v6116, 7
        %v6118 = vsub.s32 %v6115, %v6117
        %v6119 = vrot.slane %v6103, %v6118
        %v6121 = vunpack.c.l.s4 1966171168
        %v6122 = vunpack.c.0.s8 %v6121
        %v6123 = vlaneseq
        %v6124 = vshrl.u32 %v6123, 7
        %v6125 = vsub.s32 %v6122, %v6124
        %v6126 = vrot.slane %v6104, %v6125
        %v6128 = vunpack.c.l.s4 1966171168
        %v6129 = vunpack.c.0.s8 %v6128
        %v6130 = vlaneseq
        %v6131 = vshrl.u32 %v6130, 7
        %v6132 = vsub.s32 %v6129, %v6131
        %v6133 = vrot.slane %v6105, %v6132
        %v6134 = vcombine.low %v6112, %v6119
        %v6135 = vcombine.low %v6126, %v6133
        %v6137 = vunpack.c.l.s4 1966171168
        %v6138 = vunpack.c.0.s8 %v6137
        %v6139 = vlaneseq
        %v6140 = vshrl.u32 %v6139, 7
        %v6141 = vsub.s32 %v6138, %v6140
        %v6142 = vrot.slane %v6134, %v6141
        %v6144 = vunpack.c.l.s4 1966171168
        %v6145 = vunpack.c.0.s8 %v6144
        %v6146 = vlaneseq
        %v6147 = vshrl.u32 %v6146, 7
        %v6148 = vsub.s32 %v6145, %v6147
        %v6149 = vrot.slane %v6135, %v6148
        %v6150 = vcombine.low %v6142, %v6149
        %v6151 = vcombine.low %v1781, %v1783
        %v6152 = vcombine.low %v1852, %v1854
        %v6153 = vcombine.low %v1923, %v1925
        %v6154 = vcombine.low %v1994, %v1996
        %v6156 = vunpack.c.l.s4 1966171168
        %v6157 = vunpack.c.0.s8 %v6156
        %v6158 = vlaneseq
        %v6159 = vshrl.u32 %v6158, 7
        %v6160 = vsub.s32 %v6157, %v6159
        %v6161 = vrot.slane %v6151, %v6160
        %v6163 = vunpack.c.l.s4 1966171168
        %v6164 = vunpack.c.0.s8 %v6163
        %v6165 = vlaneseq
        %v6166 = vshrl.u32 %v6165, 7
        %v6167 = vsub.s32 %v6164, %v6166
        %v6168 = vrot.slane %v6152, %v6167
        %v6170 = vunpack.c.l.s4 1966171168
        %v6171 = vunpack.c.0.s8 %v6170
        %v6172 = vlaneseq
        %v6173 = vshrl.u32 %v6172, 7
        %v6174 = vsub.s32 %v6171, %v6173
        %v6175 = vrot.slane %v6153, %v6174
        %v6177 = vunpack.c.l.s4 1966171168
        %v6178 = vunpack.c.0.s8 %v6177
        %v6179 = vlaneseq
        %v6180 = vshrl.u32 %v6179, 7
        %v6181 = vsub.s32 %v6178, %v6180
        %v6182 = vrot.slane %v6154, %v6181
        %v6183 = vcombine.low %v6161, %v6168
        %v6184 = vcombine.low %v6175, %v6182
        %v6186 = vunpack.c.l.s4 1966171168
        %v6187 = vunpack.c.0.s8 %v6186
        %v6188 = vlaneseq
        %v6189 = vshrl.u32 %v6188, 7
        %v6190 = vsub.s32 %v6187, %v6189
        %v6191 = vrot.slane %v6183, %v6190
        %v6193 = vunpack.c.l.s4 1966171168
        %v6194 = vunpack.c.0.s8 %v6193
        %v6195 = vlaneseq
        %v6196 = vshrl.u32 %v6195, 7
        %v6197 = vsub.s32 %v6194, %v6196
        %v6198 = vrot.slane %v6184, %v6197
        %v6199 = vcombine.low %v6191, %v6198
        %v6200 = vcombine.low %v2065, %v2067
        %v6201 = vcombine.low %v2136, %v2138
        %v6202 = vcombine.low %v2207, %v2209
        %v6203 = vcombine.low %v2278, %v2280
        %v6205 = vunpack.c.l.s4 1966171168
        %v6206 = vunpack.c.0.s8 %v6205
        %v6207 = vlaneseq
        %v6208 = vshrl.u32 %v6207, 7
        %v6209 = vsub.s32 %v6206, %v6208
        %v6210 = vrot.slane %v6200, %v6209
        %v6212 = vunpack.c.l.s4 1966171168
        %v6213 = vunpack.c.0.s8 %v6212
        %v6214 = vlaneseq
        %v6215 = vshrl.u32 %v6214, 7
        %v6216 = vsub.s32 %v6213, %v6215
        %v6217 = vrot.slane %v6201, %v6216
        %v6219 = vunpack.c.l.s4 1966171168
        %v6220 = vunpack.c.0.s8 %v6219
        %v6221 = vlaneseq
        %v6222 = vshrl.u32 %v6221, 7
        %v6223 = vsub.s32 %v6220, %v6222
        %v6224 = vrot.slane %v6202, %v6223
        %v6226 = vunpack.c.l.s4 1966171168
        %v6227 = vunpack.c.0.s8 %v6226
        %v6228 = vlaneseq
        %v6229 = vshrl.u32 %v6228, 7
        %v6230 = vsub.s32 %v6227, %v6229
        %v6231 = vrot.slane %v6203, %v6230
        %v6232 = vcombine.low %v6210, %v6217
        %v6233 = vcombine.low %v6224, %v6231
        %v6235 = vunpack.c.l.s4 1966171168
        %v6236 = vunpack.c.0.s8 %v6235
        %v6237 = vlaneseq
        %v6238 = vshrl.u32 %v6237, 7
        %v6239 = vsub.s32 %v6236, %v6238
        %v6240 = vrot.slane %v6232, %v6239
        %v6242 = vunpack.c.l.s4 1966171168
        %v6243 = vunpack.c.0.s8 %v6242
        %v6244 = vlaneseq
        %v6245 = vshrl.u32 %v6244, 7
        %v6246 = vsub.s32 %v6243, %v6245
        %v6247 = vrot.slane %v6233, %v6246
        %v6248 = vcombine.low %v6240, %v6247
        %v6249 = vcombine.low %v2349, %v2351
        %v6250 = vcombine.low %v2420, %v2422
        %v6251 = vcombine.low %v2491, %v2493
        %v6252 = vcombine.low %v2562, %v2564
        %v6254 = vunpack.c.l.s4 1966171168
        %v6255 = vunpack.c.0.s8 %v6254
        %v6256 = vlaneseq
        %v6257 = vshrl.u32 %v6256, 7
        %v6258 = vsub.s32 %v6255, %v6257
        %v6259 = vrot.slane %v6249, %v6258
        %v6261 = vunpack.c.l.s4 1966171168
        %v6262 = vunpack.c.0.s8 %v6261
        %v6263 = vlaneseq
        %v6264 = vshrl.u32 %v6263, 7
        %v6265 = vsub.s32 %v6262, %v6264
        %v6266 = vrot.slane %v6250, %v6265
        %v6268 = vunpack.c.l.s4 1966171168
        %v6269 = vunpack.c.0.s8 %v6268
        %v6270 = vlaneseq
        %v6271 = vshrl.u32 %v6270, 7
        %v6272 = vsub.s32 %v6269, %v6271
        %v6273 = vrot.slane %v6251, %v6272
        %v6275 = vunpack.c.l.s4 1966171168
        %v6276 = vunpack.c.0.s8 %v6275
        %v6277 = vlaneseq
        %v6278 = vshrl.u32 %v6277, 7
        %v6279 = vsub.s32 %v6276, %v6278
        %v6280 = vrot.slane %v6252, %v6279
        %v6281 = vcombine.low %v6259, %v6266
        %v6282 = vcombine.low %v6273, %v6280
        %v6284 = vunpack.c.l.s4 1966171168
        %v6285 = vunpack.c.0.s8 %v6284
        %v6286 = vlaneseq
        %v6287 = vshrl.u32 %v6286, 7
        %v6288 = vsub.s32 %v6285, %v6287
        %v6289 = vrot.slane %v6281, %v6288
        %v6291 = vunpack.c.l.s4 1966171168
        %v6292 = vunpack.c.0.s8 %v6291
        %v6293 = vlaneseq
        %v6294 = vshrl.u32 %v6293, 7
        %v6295 = vsub.s32 %v6292, %v6294
        %v6296 = vrot.slane %v6282, %v6295
        %v6297 = vcombine.low %v6289, %v6296
        %v6298 = vcombine.low %v2633, %v2635
        %v6299 = vcombine.low %v2704, %v2706
        %v6300 = vcombine.low %v2775, %v2777
        %v6301 = vcombine.low %v2846, %v2848
        %v6303 = vunpack.c.l.s4 1966171168
        %v6304 = vunpack.c.0.s8 %v6303
        %v6305 = vlaneseq
        %v6306 = vshrl.u32 %v6305, 7
        %v6307 = vsub.s32 %v6304, %v6306
        %v6308 = vrot.slane %v6298, %v6307
        %v6310 = vunpack.c.l.s4 1966171168
        %v6311 = vunpack.c.0.s8 %v6310
        %v6312 = vlaneseq
        %v6313 = vshrl.u32 %v6312, 7
        %v6314 = vsub.s32 %v6311, %v6313
        %v6315 = vrot.slane %v6299, %v6314
        %v6317 = vunpack.c.l.s4 1966171168
        %v6318 = vunpack.c.0.s8 %v6317
        %v6319 = vlaneseq
        %v6320 = vshrl.u32 %v6319, 7
        %v6321 = vsub.s32 %v6318, %v6320
        %v6322 = vrot.slane %v6300, %v6321
        %v6324 = vunpack.c.l.s4 1966171168
        %v6325 = vunpack.c.0.s8 %v6324
        %v6326 = vlaneseq
        %v6327 = vshrl.u32 %v6326, 7
        %v6328 = vsub.s32 %v6325, %v6327
        %v6329 = vrot.slane %v6301, %v6328
        %v6330 = vcombine.low %v6308, %v6315
        %v6331 = vcombine.low %v6322, %v6329
        %v6333 = vunpack.c.l.s4 1966171168
        %v6334 = vunpack.c.0.s8 %v6333
        %v6335 = vlaneseq
        %v6336 = vshrl.u32 %v6335, 7
        %v6337 = vsub.s32 %v6334, %v6336
        %v6338 = vrot.slane %v6330, %v6337
        %v6340 = vunpack.c.l.s4 1966171168
        %v6341 = vunpack.c.0.s8 %v6340
        %v6342 = vlaneseq
        %v6343 = vshrl.u32 %v6342, 7
        %v6344 = vsub.s32 %v6341, %v6343
        %v6345 = vrot.slane %v6331, %v6344
        %v6346 = vcombine.low %v6338, %v6345
        %v6347 = vcombine.low %v2917, %v2919
        %v6348 = vcombine.low %v2988, %v2990
        %v6349 = vcombine.low %v3059, %v3061
        %v6350 = vcombine.low %v3130, %v3132
        %v6352 = vunpack.c.l.s4 1966171168
        %v6353 = vunpack.c.0.s8 %v6352
        %v6354 = vlaneseq
        %v6355 = vshrl.u32 %v6354, 7
        %v6356 = vsub.s32 %v6353, %v6355
        %v6357 = vrot.slane %v6347, %v6356
        %v6359 = vunpack.c.l.s4 1966171168
        %v6360 = vunpack.c.0.s8 %v6359
        %v6361 = vlaneseq
        %v6362 = vshrl.u32 %v6361, 7
        %v6363 = vsub.s32 %v6360, %v6362
        %v6364 = vrot.slane %v6348, %v6363
        %v6366 = vunpack.c.l.s4 1966171168
        %v6367 = vunpack.c.0.s8 %v6366
        %v6368 = vlaneseq
        %v6369 = vshrl.u32 %v6368, 7
        %v6370 = vsub.s32 %v6367, %v6369
        %v6371 = vrot.slane %v6349, %v6370
        %v6373 = vunpack.c.l.s4 1966171168
        %v6374 = vunpack.c.0.s8 %v6373
        %v6375 = vlaneseq
        %v6376 = vshrl.u32 %v6375, 7
        %v6377 = vsub.s32 %v6374, %v6376
        %v6378 = vrot.slane %v6350, %v6377
        %v6379 = vcombine.low %v6357, %v6364
        %v6380 = vcombine.low %v6371, %v6378
        %v6382 = vunpack.c.l.s4 1966171168
        %v6383 = vunpack.c.0.s8 %v6382
        %v6384 = vlaneseq
        %v6385 = vshrl.u32 %v6384, 7
        %v6386 = vsub.s32 %v6383, %v6385
        %v6387 = vrot.slane %v6379, %v6386
        %v6389 = vunpack.c.l.s4 1966171168
        %v6390 = vunpack.c.0.s8 %v6389
        %v6391 = vlaneseq
        %v6392 = vshrl.u32 %v6391, 7
        %v6393 = vsub.s32 %v6390, %v6392
        %v6394 = vrot.slane %v6380, %v6393
        %v6395 = vcombine.low %v6387, %v6394
        %v6396 = vcombine.low %v3201, %v3203
        %v6397 = vcombine.low %v3272, %v3274
        %v6398 = vcombine.low %v3343, %v3345
        %v6399 = vcombine.low %v3414, %v3416
        %v6401 = vunpack.c.l.s4 1966171168
        %v6402 = vunpack.c.0.s8 %v6401
        %v6403 = vlaneseq
        %v6404 = vshrl.u32 %v6403, 7
        %v6405 = vsub.s32 %v6402, %v6404
        %v6406 = vrot.slane %v6396, %v6405
        %v6408 = vunpack.c.l.s4 1966171168
        %v6409 = vunpack.c.0.s8 %v6408
        %v6410 = vlaneseq
        %v6411 = vshrl.u32 %v6410, 7
        %v6412 = vsub.s32 %v6409, %v6411
        %v6413 = vrot.slane %v6397, %v6412
        %v6415 = vunpack.c.l.s4 1966171168
        %v6416 = vunpack.c.0.s8 %v6415
        %v6417 = vlaneseq
        %v6418 = vshrl.u32 %v6417, 7
        %v6419 = vsub.s32 %v6416, %v6418
        %v6420 = vrot.slane %v6398, %v6419
        %v6422 = vunpack.c.l.s4 1966171168
        %v6423 = vunpack.c.0.s8 %v6422
        %v6424 = vlaneseq
        %v6425 = vshrl.u32 %v6424, 7
        %v6426 = vsub.s32 %v6423, %v6425
        %v6427 = vrot.slane %v6399, %v6426
        %v6428 = vcombine.low %v6406, %v6413
        %v6429 = vcombine.low %v6420, %v6427
        %v6431 = vunpack.c.l.s4 1966171168
        %v6432 = vunpack.c.0.s8 %v6431
        %v6433 = vlaneseq
        %v6434 = vshrl.u32 %v6433, 7
        %v6435 = vsub.s32 %v6432, %v6434
        %v6436 = vrot.slane %v6428, %v6435
        %v6438 = vunpack.c.l.s4 1966171168
        %v6439 = vunpack.c.0.s8 %v6438
        %v6440 = vlaneseq
        %v6441 = vshrl.u32 %v6440, 7
        %v6442 = vsub.s32 %v6439, %v6441
        %v6443 = vrot.slane %v6429, %v6442
        %v6444 = vcombine.low %v6436, %v6443
        %v6445 = vcombine.low %v3485, %v3487
        %v6446 = vcombine.low %v3556, %v3558
        %v6447 = vcombine.low %v3627, %v3629
        %v6448 = vcombine.low %v3698, %v3700
        %v6450 = vunpack.c.l.s4 1966171168
        %v6451 = vunpack.c.0.s8 %v6450
        %v6452 = vlaneseq
        %v6453 = vshrl.u32 %v6452, 7
        %v6454 = vsub.s32 %v6451, %v6453
        %v6455 = vrot.slane %v6445, %v6454
        %v6457 = vunpack.c.l.s4 1966171168
        %v6458 = vunpack.c.0.s8 %v6457
        %v6459 = vlaneseq
        %v6460 = vshrl.u32 %v6459, 7
        %v6461 = vsub.s32 %v6458, %v6460
        %v6462 = vrot.slane %v6446, %v6461
        %v6464 = vunpack.c.l.s4 1966171168
        %v6465 = vunpack.c.0.s8 %v6464
        %v6466 = vlaneseq
        %v6467 = vshrl.u32 %v6466, 7
        %v6468 = vsub.s32 %v6465, %v6467
        %v6469 = vrot.slane %v6447, %v6468
        %v6471 = vunpack.c.l.s4 1966171168
        %v6472 = vunpack.c.0.s8 %v6471
        %v6473 = vlaneseq
        %v6474 = vshrl.u32 %v6473, 7
        %v6475 = vsub.s32 %v6472, %v6474
        %v6476 = vrot.slane %v6448, %v6475
        %v6477 = vcombine.low %v6455, %v6462
        %v6478 = vcombine.low %v6469, %v6476
        %v6480 = vunpack.c.l.s4 1966171168
        %v6481 = vunpack.c.0.s8 %v6480
        %v6482 = vlaneseq
        %v6483 = vshrl.u32 %v6482, 7
        %v6484 = vsub.s32 %v6481, %v6483
        %v6485 = vrot.slane %v6477, %v6484
        %v6487 = vunpack.c.l.s4 1966171168
        %v6488 = vunpack.c.0.s8 %v6487
        %v6489 = vlaneseq
        %v6490 = vshrl.u32 %v6489, 7
        %v6491 = vsub.s32 %v6488, %v6490
        %v6492 = vrot.slane %v6478, %v6491
        %v6493 = vcombine.low %v6485, %v6492
        %v6494 = vcombine.low %v3769, %v3771
        %v6495 = vcombine.low %v3840, %v3842
        %v6496 = vcombine.low %v3911, %v3913
        %v6497 = vcombine.low %v3982, %v3984
        %v6499 = vunpack.c.l.s4 1966171168
        %v6500 = vunpack.c.0.s8 %v6499
        %v6501 = vlaneseq
        %v6502 = vshrl.u32 %v6501, 7
        %v6503 = vsub.s32 %v6500, %v6502
        %v6504 = vrot.slane %v6494, %v6503
        %v6506 = vunpack.c.l.s4 1966171168
        %v6507 = vunpack.c.0.s8 %v6506
        %v6508 = vlaneseq
        %v6509 = vshrl.u32 %v6508, 7
        %v6510 = vsub.s32 %v6507, %v6509
        %v6511 = vrot.slane %v6495, %v6510
        %v6513 = vunpack.c.l.s4 1966171168
        %v6514 = vunpack.c.0.s8 %v6513
        %v6515 = vlaneseq
        %v6516 = vshrl.u32 %v6515, 7
        %v6517 = vsub.s32 %v6514, %v6516
        %v6518 = vrot.slane %v6496, %v6517
        %v6520 = vunpack.c.l.s4 1966171168
        %v6521 = vunpack.c.0.s8 %v6520
        %v6522 = vlaneseq
        %v6523 = vshrl.u32 %v6522, 7
        %v6524 = vsub.s32 %v6521, %v6523
        %v6525 = vrot.slane %v6497, %v6524
        %v6526 = vcombine.low %v6504, %v6511
        %v6527 = vcombine.low %v6518, %v6525
        %v6529 = vunpack.c.l.s4 1966171168
        %v6530 = vunpack.c.0.s8 %v6529
        %v6531 = vlaneseq
        %v6532 = vshrl.u32 %v6531, 7
        %v6533 = vsub.s32 %v6530, %v6532
        %v6534 = vrot.slane %v6526, %v6533
        %v6536 = vunpack.c.l.s4 1966171168
        %v6537 = vunpack.c.0.s8 %v6536
        %v6538 = vlaneseq
        %v6539 = vshrl.u32 %v6538, 7
        %v6540 = vsub.s32 %v6537, %v6539
        %v6541 = vrot.slane %v6527, %v6540
        %v6542 = vcombine.low %v6534, %v6541
        %v6543 = vcombine.low %v4053, %v4055
        %v6544 = vcombine.low %v4124, %v4126
        %v6545 = vcombine.low %v4195, %v4197
        %v6546 = vcombine.low %v4266, %v4268
        %v6548 = vunpack.c.l.s4 1966171168
        %v6549 = vunpack.c.0.s8 %v6548
        %v6550 = vlaneseq
        %v6551 = vshrl.u32 %v6550, 7
        %v6552 = vsub.s32 %v6549, %v6551
        %v6553 = vrot.slane %v6543, %v6552
        %v6555 = vunpack.c.l.s4 1966171168
        %v6556 = vunpack.c.0.s8 %v6555
        %v6557 = vlaneseq
        %v6558 = vshrl.u32 %v6557, 7
        %v6559 = vsub.s32 %v6556, %v6558
        %v6560 = vrot.slane %v6544, %v6559
        %v6562 = vunpack.c.l.s4 1966171168
        %v6563 = vunpack.c.0.s8 %v6562
        %v6564 = vlaneseq
        %v6565 = vshrl.u32 %v6564, 7
        %v6566 = vsub.s32 %v6563, %v6565
        %v6567 = vrot.slane %v6545, %v6566
        %v6569 = vunpack.c.l.s4 1966171168
        %v6570 = vunpack.c.0.s8 %v6569
        %v6571 = vlaneseq
        %v6572 = vshrl.u32 %v6571, 7
        %v6573 = vsub.s32 %v6570, %v6572
        %v6574 = vrot.slane %v6546, %v6573
        %v6575 = vcombine.low %v6553, %v6560
        %v6576 = vcombine.low %v6567, %v6574
        %v6578 = vunpack.c.l.s4 1966171168
        %v6579 = vunpack.c.0.s8 %v6578
        %v6580 = vlaneseq
        %v6581 = vshrl.u32 %v6580, 7
        %v6582 = vsub.s32 %v6579, %v6581
        %v6583 = vrot.slane %v6575, %v6582
        %v6585 = vunpack.c.l.s4 1966171168
        %v6586 = vunpack.c.0.s8 %v6585
        %v6587 = vlaneseq
        %v6588 = vshrl.u32 %v6587, 7
        %v6589 = vsub.s32 %v6586, %v6588
        %v6590 = vrot.slane %v6576, %v6589
        %v6591 = vcombine.low %v6583, %v6590
        %v6592 = vcombine.low %v4337, %v4339
        %v6593 = vcombine.low %v4408, %v4410
        %v6594 = vcombine.low %v4479, %v4481
        %v6595 = vcombine.low %v4550, %v4552
        %v6597 = vunpack.c.l.s4 1966171168
        %v6598 = vunpack.c.0.s8 %v6597
        %v6599 = vlaneseq
        %v6600 = vshrl.u32 %v6599, 7
        %v6601 = vsub.s32 %v6598, %v6600
        %v6602 = vrot.slane %v6592, %v6601
        %v6604 = vunpack.c.l.s4 1966171168
        %v6605 = vunpack.c.0.s8 %v6604
        %v6606 = vlaneseq
        %v6607 = vshrl.u32 %v6606, 7
        %v6608 = vsub.s32 %v6605, %v6607
        %v6609 = vrot.slane %v6593, %v6608
        %v6611 = vunpack.c.l.s4 1966171168
        %v6612 = vunpack.c.0.s8 %v6611
        %v6613 = vlaneseq
        %v6614 = vshrl.u32 %v6613, 7
        %v6615 = vsub.s32 %v6612, %v6614
        %v6616 = vrot.slane %v6594, %v6615
        %v6618 = vunpack.c.l.s4 1966171168
        %v6619 = vunpack.c.0.s8 %v6618
        %v6620 = vlaneseq
        %v6621 = vshrl.u32 %v6620, 7
        %v6622 = vsub.s32 %v6619, %v6621
        %v6623 = vrot.slane %v6595, %v6622
        %v6624 = vcombine.low %v6602, %v6609
        %v6625 = vcombine.low %v6616, %v6623
        %v6627 = vunpack.c.l.s4 1966171168
        %v6628 = vunpack.c.0.s8 %v6627
        %v6629 = vlaneseq
        %v6630 = vshrl.u32 %v6629, 7
        %v6631 = vsub.s32 %v6628, %v6630
        %v6632 = vrot.slane %v6624, %v6631
        %v6634 = vunpack.c.l.s4 1966171168
        %v6635 = vunpack.c.0.s8 %v6634
        %v6636 = vlaneseq
        %v6637 = vshrl.u32 %v6636, 7
        %v6638 = vsub.s32 %v6635, %v6637
        %v6639 = vrot.slane %v6625, %v6638
        %v6640 = vcombine.low %v6632, %v6639
        %v6641 = vcombine.low %v4621, %v4623
        %v6642 = vcombine.low %v4692, %v4694
        %v6643 = vcombine.low %v4763, %v4765
        %v6644 = vcombine.low %v4834, %v4836
        %v6646 = vunpack.c.l.s4 1966171168
        %v6647 = vunpack.c.0.s8 %v6646
        %v6648 = vlaneseq
        %v6649 = vshrl.u32 %v6648, 7
        %v6650 = vsub.s32 %v6647, %v6649
        %v6651 = vrot.slane %v6641, %v6650
        %v6653 = vunpack.c.l.s4 1966171168
        %v6654 = vunpack.c.0.s8 %v6653
        %v6655 = vlaneseq
        %v6656 = vshrl.u32 %v6655, 7
        %v6657 = vsub.s32 %v6654, %v6656
        %v6658 = vrot.slane %v6642, %v6657
        %v6660 = vunpack.c.l.s4 1966171168
        %v6661 = vunpack.c.0.s8 %v6660
        %v6662 = vlaneseq
        %v6663 = vshrl.u32 %v6662, 7
        %v6664 = vsub.s32 %v6661, %v6663
        %v6665 = vrot.slane %v6643, %v6664
        %v6667 = vunpack.c.l.s4 1966171168
        %v6668 = vunpack.c.0.s8 %v6667
        %v6669 = vlaneseq
        %v6670 = vshrl.u32 %v6669, 7
        %v6671 = vsub.s32 %v6668, %v6670
        %v6672 = vrot.slane %v6644, %v6671
        %v6673 = vcombine.low %v6651, %v6658
        %v6674 = vcombine.low %v6665, %v6672
        %v6676 = vunpack.c.l.s4 1966171168
        %v6677 = vunpack.c.0.s8 %v6676
        %v6678 = vlaneseq
        %v6679 = vshrl.u32 %v6678, 7
        %v6680 = vsub.s32 %v6677, %v6679
        %v6681 = vrot.slane %v6673, %v6680
        %v6683 = vunpack.c.l.s4 1966171168
        %v6684 = vunpack.c.0.s8 %v6683
        %v6685 = vlaneseq
        %v6686 = vshrl.u32 %v6685, 7
        %v6687 = vsub.s32 %v6684, %v6686
        %v6688 = vrot.slane %v6674, %v6687
        %v6689 = vcombine.low %v6681, %v6688
        %v6690 = vcombine.low %v4905, %v4907
        %v6691 = vcombine.low %v4976, %v4978
        %v6692 = vcombine.low %v5047, %v5049
        %v6693 = vcombine.low %v5118, %v5120
        %v6695 = vunpack.c.l.s4 1966171168
        %v6696 = vunpack.c.0.s8 %v6695
        %v6697 = vlaneseq
        %v6698 = vshrl.u32 %v6697, 7
        %v6699 = vsub.s32 %v6696, %v6698
        %v6700 = vrot.slane %v6690, %v6699
        %v6702 = vunpack.c.l.s4 1966171168
        %v6703 = vunpack.c.0.s8 %v6702
        %v6704 = vlaneseq
        %v6705 = vshrl.u32 %v6704, 7
        %v6706 = vsub.s32 %v6703, %v6705
        %v6707 = vrot.slane %v6691, %v6706
        %v6709 = vunpack.c.l.s4 1966171168
        %v6710 = vunpack.c.0.s8 %v6709
        %v6711 = vlaneseq
        %v6712 = vshrl.u32 %v6711, 7
        %v6713 = vsub.s32 %v6710, %v6712
        %v6714 = vrot.slane %v6692, %v6713
        %v6716 = vunpack.c.l.s4 1966171168
        %v6717 = vunpack.c.0.s8 %v6716
        %v6718 = vlaneseq
        %v6719 = vshrl.u32 %v6718, 7
        %v6720 = vsub.s32 %v6717, %v6719
        %v6721 = vrot.slane %v6693, %v6720
        %v6722 = vcombine.low %v6700, %v6707
        %v6723 = vcombine.low %v6714, %v6721
        %v6725 = vunpack.c.l.s4 1966171168
        %v6726 = vunpack.c.0.s8 %v6725
        %v6727 = vlaneseq
        %v6728 = vshrl.u32 %v6727, 7
        %v6729 = vsub.s32 %v6726, %v6728
        %v6730 = vrot.slane %v6722, %v6729
        %v6732 = vunpack.c.l.s4 1966171168
        %v6733 = vunpack.c.0.s8 %v6732
        %v6734 = vlaneseq
        %v6735 = vshrl.u32 %v6734, 7
        %v6736 = vsub.s32 %v6733, %v6735
        %v6737 = vrot.slane %v6723, %v6736
        %v6738 = vcombine.low %v6730, %v6737
        %v6739 = vcombine.low %v5189, %v5191
        %v6740 = vcombine.low %v5260, %v5262
        %v6741 = vcombine.low %v5331, %v5333
        %v6742 = vcombine.low %v5402, %v5404
        %v6744 = vunpack.c.l.s4 1966171168
        %v6745 = vunpack.c.0.s8 %v6744
        %v6746 = vlaneseq
        %v6747 = vshrl.u32 %v6746, 7
        %v6748 = vsub.s32 %v6745, %v6747
        %v6749 = vrot.slane %v6739, %v6748
        %v6751 = vunpack.c.l.s4 1966171168
        %v6752 = vunpack.c.0.s8 %v6751
        %v6753 = vlaneseq
        %v6754 = vshrl.u32 %v6753, 7
        %v6755 = vsub.s32 %v6752, %v6754
        %v6756 = vrot.slane %v6740, %v6755
        %v6758 = vunpack.c.l.s4 1966171168
        %v6759 = vunpack.c.0.s8 %v6758
        %v6760 = vlaneseq
        %v6761 = vshrl.u32 %v6760, 7
        %v6762 = vsub.s32 %v6759, %v6761
        %v6763 = vrot.slane %v6741, %v6762
        %v6765 = vunpack.c.l.s4 1966171168
        %v6766 = vunpack.c.0.s8 %v6765
        %v6767 = vlaneseq
        %v6768 = vshrl.u32 %v6767, 7
        %v6769 = vsub.s32 %v6766, %v6768
        %v6770 = vrot.slane %v6742, %v6769
        %v6771 = vcombine.low %v6749, %v6756
        %v6772 = vcombine.low %v6763, %v6770
        %v6774 = vunpack.c.l.s4 1966171168
        %v6775 = vunpack.c.0.s8 %v6774
        %v6776 = vlaneseq
        %v6777 = vshrl.u32 %v6776, 7
        %v6778 = vsub.s32 %v6775, %v6777
        %v6779 = vrot.slane %v6771, %v6778
        %v6781 = vunpack.c.l.s4 1966171168
        %v6782 = vunpack.c.0.s8 %v6781
        %v6783 = vlaneseq
        %v6784 = vshrl.u32 %v6783, 7
        %v6785 = vsub.s32 %v6782, %v6784
        %v6786 = vrot.slane %v6772, %v6785
        %v6787 = vcombine.low %v6779, %v6786
        %v6788 = vcombine.low %v5473, %v5475
        %v6789 = vcombine.low %v5544, %v5546
        %v6790 = vcombine.low %v5615, %v5617
        %v6791 = vcombine.low %v5686, %v5688
        %v6793 = vunpack.c.l.s4 1966171168
        %v6794 = vunpack.c.0.s8 %v6793
        %v6795 = vlaneseq
        %v6796 = vshrl.u32 %v6795, 7
        %v6797 = vsub.s32 %v6794, %v6796
        %v6798 = vrot.slane %v6788, %v6797
        %v6800 = vunpack.c.l.s4 1966171168
        %v6801 = vunpack.c.0.s8 %v6800
        %v6802 = vlaneseq
        %v6803 = vshrl.u32 %v6802, 7
        %v6804 = vsub.s32 %v6801, %v6803
        %v6805 = vrot.slane %v6789, %v6804
        %v6807 = vunpack.c.l.s4 1966171168
        %v6808 = vunpack.c.0.s8 %v6807
        %v6809 = vlaneseq
        %v6810 = vshrl.u32 %v6809, 7
        %v6811 = vsub.s32 %v6808, %v6810
        %v6812 = vrot.slane %v6790, %v6811
        %v6814 = vunpack.c.l.s4 1966171168
        %v6815 = vunpack.c.0.s8 %v6814
        %v6816 = vlaneseq
        %v6817 = vshrl.u32 %v6816, 7
        %v6818 = vsub.s32 %v6815, %v6817
        %v6819 = vrot.slane %v6791, %v6818
        %v6820 = vcombine.low %v6798, %v6805
        %v6821 = vcombine.low %v6812, %v6819
        %v6823 = vunpack.c.l.s4 1966171168
        %v6824 = vunpack.c.0.s8 %v6823
        %v6825 = vlaneseq
        %v6826 = vshrl.u32 %v6825, 7
        %v6827 = vsub.s32 %v6824, %v6826
        %v6828 = vrot.slane %v6820, %v6827
        %v6830 = vunpack.c.l.s4 1966171168
        %v6831 = vunpack.c.0.s8 %v6830
        %v6832 = vlaneseq
        %v6833 = vshrl.u32 %v6832, 7
        %v6834 = vsub.s32 %v6831, %v6833
        %v6835 = vrot.slane %v6821, %v6834
        %v6836 = vcombine.low %v6828, %v6835
        %v6837 = vcombine.low %v5757, %v5759
        %v6838 = vcombine.low %v5828, %v5830
        %v6839 = vcombine.low %v5899, %v5901
        %v6840 = vcombine.low %v5970, %v5972
        %v6842 = vunpack.c.l.s4 1966171168
        %v6843 = vunpack.c.0.s8 %v6842
        %v6844 = vlaneseq
        %v6845 = vshrl.u32 %v6844, 7
        %v6846 = vsub.s32 %v6843, %v6845
        %v6847 = vrot.slane %v6837, %v6846
        %v6849 = vunpack.c.l.s4 1966171168
        %v6850 = vunpack.c.0.s8 %v6849
        %v6851 = vlaneseq
        %v6852 = vshrl.u32 %v6851, 7
        %v6853 = vsub.s32 %v6850, %v6852
        %v6854 = vrot.slane %v6838, %v6853
        %v6856 = vunpack.c.l.s4 1966171168
        %v6857 = vunpack.c.0.s8 %v6856
        %v6858 = vlaneseq
        %v6859 = vshrl.u32 %v6858, 7
        %v6860 = vsub.s32 %v6857, %v6859
        %v6861 = vrot.slane %v6839, %v6860
        %v6863 = vunpack.c.l.s4 1966171168
        %v6864 = vunpack.c.0.s8 %v6863
        %v6865 = vlaneseq
        %v6866 = vshrl.u32 %v6865, 7
        %v6867 = vsub.s32 %v6864, %v6866
        %v6868 = vrot.slane %v6840, %v6867
        %v6869 = vcombine.low %v6847, %v6854
        %v6870 = vcombine.low %v6861, %v6868
        %v6872 = vunpack.c.l.s4 1966171168
        %v6873 = vunpack.c.0.s8 %v6872
        %v6874 = vlaneseq
        %v6875 = vshrl.u32 %v6874, 7
        %v6876 = vsub.s32 %v6873, %v6875
        %v6877 = vrot.slane %v6869, %v6876
        %v6879 = vunpack.c.l.s4 1966171168
        %v6880 = vunpack.c.0.s8 %v6879
        %v6881 = vlaneseq
        %v6882 = vshrl.u32 %v6881, 7
        %v6883 = vsub.s32 %v6880, %v6882
        %v6884 = vrot.slane %v6870, %v6883
        %v6885 = vcombine.low %v6877, %v6884
        %6902 = vst [vmem:[%s217] sm:$0xff] %v6150
        %6903 = vst [vmem:[%s217 + $0x8] sm:$0xff] %v6199
        %6904 = vst [vmem:[%s217 + $0x10] sm:$0xff] %v6248
        %6905 = vst [vmem:[%s217 + $0x18] sm:$0xff] %v6297
        %6906 = vst [vmem:[%s217 + $0x20] sm:$0xff] %v6346
        %6907 = vst [vmem:[%s217 + $0x28] sm:$0xff] %v6395
        %6908 = vst [vmem:[%s217 + $0x30] sm:$0xff] %v6444
        %6909 = vst [vmem:[%s217 + $0x38] sm:$0xff] %v6493
        %6910 = vst [vmem:[%s217 + $0x40] sm:$0xff] %v6542
        %6911 = vst [vmem:[%s217 + $0x48] sm:$0xff] %v6591
        %6912 = vst [vmem:[%s217 + $0x50] sm:$0xff] %v6640
        %6913 = vst [vmem:[%s217 + $0x58] sm:$0xff] %v6689
        %6914 = vst [vmem:[%s217 + $0x60] sm:$0xff] %v6738
        %6915 = vst [vmem:[%s217 + $0x68] sm:$0xff] %v6787
        %6916 = vst [vmem:[%s217 + $0x70] sm:$0xff] %v6836
        %6917 = vst [vmem:[%s217 + $0x78] sm:$0xff] %v6885
        %s6918 = sand.u32 %s98, 1
        %s6919 = sand.u32 %s98, 1
        %s6920 = smul.addr %s6919, 128
        %s6921 = scalar_lea.vmem [#allocation4], %s6920
        // Predicated region
        $region37: #{rnn_forward.4} parent=31 // pred_check
          %p6922 = pneg %p108
        $region38: #{rnn_forward.4} parent=31 // pred_check_branch
          %6924 = sbr.rel (%p6922) target = $region40
        $region39: #{rnn_forward.4} parent=31 // pred_region
          %s6925 = smul.u32 128, %s17
          %s6926 = ssub.s32 916, %s6925
          %p6927 = scmp.lt.s32.totalorder %s6926, 128
          %s6928 = scalar_select %p6927, %s6926, 128
          %s6929 = smul.u32 16, %s6928
          %p6930 = scmp.ne.s32.totalorder 0, %s6929
          %s6931 = scalar_lea.vmem %s3, %s6925
          // Predicated region
          $region41: #{rnn_forward.4} parent=39 // pred_check
            %p6932 = pneg %p6930
          $region42: #{rnn_forward.4} parent=39 // pred_check_branch
            %6934 = sbr.rel (%p6932) target = $region44
          $region43: #{rnn_forward.4} parent=39 // pred_region
            %p6935 = scmp.lt.u32.totalorder %s6928, 8
            %p6936 = pneg %p6935
            // Predicated region
            $region45: #{rnn_forward.4} parent=43 // pred_check
              _
            $region46: #{rnn_forward.4} parent=43 // pred_check_branch
              %6938 = sbr.rel (%p6935) target = $region48
            $region47: #{rnn_forward.4} parent=43 // pred_region
              %s6954 = sand.u32 %s6928, 7
              %p6955 = scmp.eq.s32.totalorder %s6954, 0
              // Predicated region
              $region60: #{rnn_forward.4} parent=47 // pred_check
                %p6956 = pneg %p6955
              $region61: #{rnn_forward.4} parent=47 // pred_check_branch
                %6958 = sbr.rel (%p6956) target = $region63
              $region62: #{rnn_forward.4} parent=47 // pred_region
                %s6959 = sshrl.u32 %s6928, 3
                %s6960 = sshrl.u32 %s6959, 6
                // While loop
                $region64: #{rnn_forward.4} parent=62 // loop_pre_header
                  _
                $region65: #{rnn_forward.4} parent=62 // loop_header
                  %s6964 = sphi 0, %s6966
                  %p6965 = scmp.ge.s32.totalorder %s6964, %s6960
                  %s6969 = sphi 0, %s7102
                  %s6970 = sphi %s6921, %s7105
                  %s6971 = sphi %s6931, %s7106
                $region66: #{rnn_forward.4} parent=62 // loop_header_branch
                  %6968 = sbr.rel (%p6965) target = $region70
                $region67: #{rnn_forward.4} parent=62 // loop_body
                  %v6972 = vld [vmem:[%s6970] sm:$0xff]
                  %6973 = vst [vmem:[%s6971] sm:$0xff] %v6972
                  %v6974 = vld [vmem:[%s6970 + $0x8] sm:$0xff]
                  %6975 = vst [vmem:[%s6971 + $0x8] sm:$0xff] %v6974
                  %v6976 = vld [vmem:[%s6970 + $0x10] sm:$0xff]
                  %6977 = vst [vmem:[%s6971 + $0x10] sm:$0xff] %v6976
                  %v6978 = vld [vmem:[%s6970 + $0x18] sm:$0xff]
                  %6979 = vst [vmem:[%s6971 + $0x18] sm:$0xff] %v6978
                  %v6980 = vld [vmem:[%s6970 + $0x20] sm:$0xff]
                  %6981 = vst [vmem:[%s6971 + $0x20] sm:$0xff] %v6980
                  %v6982 = vld [vmem:[%s6970 + $0x28] sm:$0xff]
                  %6983 = vst [vmem:[%s6971 + $0x28] sm:$0xff] %v6982
                  %v6984 = vld [vmem:[%s6970 + $0x30] sm:$0xff]
                  %6985 = vst [vmem:[%s6971 + $0x30] sm:$0xff] %v6984
                  %v6986 = vld [vmem:[%s6970 + $0x38] sm:$0xff]
                  %6987 = vst [vmem:[%s6971 + $0x38] sm:$0xff] %v6986
                  %v6988 = vld [vmem:[%s6970 + $0x40] sm:$0xff]
                  %6989 = vst [vmem:[%s6971 + $0x40] sm:$0xff] %v6988
                  %v6990 = vld [vmem:[%s6970 + $0x48] sm:$0xff]
                  %6991 = vst [vmem:[%s6971 + $0x48] sm:$0xff] %v6990
                  %v6992 = vld [vmem:[%s6970 + $0x50] sm:$0xff]
                  %6993 = vst [vmem:[%s6971 + $0x50] sm:$0xff] %v6992
                  %v6994 = vld [vmem:[%s6970 + $0x58] sm:$0xff]
                  %6995 = vst [vmem:[%s6971 + $0x58] sm:$0xff] %v6994
                  %v6996 = vld [vmem:[%s6970 + $0x60] sm:$0xff]
                  %6997 = vst [vmem:[%s6971 + $0x60] sm:$0xff] %v6996
                  %v6998 = vld [vmem:[%s6970 + $0x68] sm:$0xff]
                  %6999 = vst [vmem:[%s6971 + $0x68] sm:$0xff] %v6998
                  %v7000 = vld [vmem:[%s6970 + $0x70] sm:$0xff]
                  %7001 = vst [vmem:[%s6971 + $0x70] sm:$0xff] %v7000
                  %v7002 = vld [vmem:[%s6970 + $0x78] sm:$0xff]
                  %7003 = vst [vmem:[%s6971 + $0x78] sm:$0xff] %v7002
                  %v7004 = vld [vmem:[%s6970 + $0x80] sm:$0xff]
                  %7005 = vst [vmem:[%s6971 + $0x80] sm:$0xff] %v7004
                  %v7006 = vld [vmem:[%s6970 + $0x88] sm:$0xff]
                  %7007 = vst [vmem:[%s6971 + $0x88] sm:$0xff] %v7006
                  %v7008 = vld [vmem:[%s6970 + $0x90] sm:$0xff]
                  %7009 = vst [vmem:[%s6971 + $0x90] sm:$0xff] %v7008
                  %v7010 = vld [vmem:[%s6970 + $0x98] sm:$0xff]
                  %7011 = vst [vmem:[%s6971 + $0x98] sm:$0xff] %v7010
                  %v7012 = vld [vmem:[%s6970 + $0xa0] sm:$0xff]
                  %7013 = vst [vmem:[%s6971 + $0xa0] sm:$0xff] %v7012
                  %v7014 = vld [vmem:[%s6970 + $0xa8] sm:$0xff]
                  %7015 = vst [vmem:[%s6971 + $0xa8] sm:$0xff] %v7014
                  %v7016 = vld [vmem:[%s6970 + $0xb0] sm:$0xff]
                  %7017 = vst [vmem:[%s6971 + $0xb0] sm:$0xff] %v7016
                  %v7018 = vld [vmem:[%s6970 + $0xb8] sm:$0xff]
                  %7019 = vst [vmem:[%s6971 + $0xb8] sm:$0xff] %v7018
                  %v7020 = vld [vmem:[%s6970 + $0xc0] sm:$0xff]
                  %7021 = vst [vmem:[%s6971 + $0xc0] sm:$0xff] %v7020
                  %v7022 = vld [vmem:[%s6970 + $0xc8] sm:$0xff]
                  %7023 = vst [vmem:[%s6971 + $0xc8] sm:$0xff] %v7022
                  %v7024 = vld [vmem:[%s6970 + $0xd0] sm:$0xff]
                  %7025 = vst [vmem:[%s6971 + $0xd0] sm:$0xff] %v7024
                  %v7026 = vld [vmem:[%s6970 + $0xd8] sm:$0xff]
                  %7027 = vst [vmem:[%s6971 + $0xd8] sm:$0xff] %v7026
                  %v7028 = vld [vmem:[%s6970 + $0xe0] sm:$0xff]
                  %7029 = vst [vmem:[%s6971 + $0xe0] sm:$0xff] %v7028
                  %v7030 = vld [vmem:[%s6970 + $0xe8] sm:$0xff]
                  %7031 = vst [vmem:[%s6971 + $0xe8] sm:$0xff] %v7030
                  %v7032 = vld [vmem:[%s6970 + $0xf0] sm:$0xff]
                  %7033 = vst [vmem:[%s6971 + $0xf0] sm:$0xff] %v7032
                  %v7034 = vld [vmem:[%s6970 + $0xf8] sm:$0xff]
                  %7035 = vst [vmem:[%s6971 + $0xf8] sm:$0xff] %v7034
                  %v7036 = vld [vmem:[%s6970 + $0x100] sm:$0xff]
                  %7037 = vst [vmem:[%s6971 + $0x100] sm:$0xff] %v7036
                  %v7038 = vld [vmem:[%s6970 + $0x108] sm:$0xff]
                  %7039 = vst [vmem:[%s6971 + $0x108] sm:$0xff] %v7038
                  %v7040 = vld [vmem:[%s6970 + $0x110] sm:$0xff]
                  %7041 = vst [vmem:[%s6971 + $0x110] sm:$0xff] %v7040
                  %v7042 = vld [vmem:[%s6970 + $0x118] sm:$0xff]
                  %7043 = vst [vmem:[%s6971 + $0x118] sm:$0xff] %v7042
                  %v7044 = vld [vmem:[%s6970 + $0x120] sm:$0xff]
                  %7045 = vst [vmem:[%s6971 + $0x120] sm:$0xff] %v7044
                  %v7046 = vld [vmem:[%s6970 + $0x128] sm:$0xff]
                  %7047 = vst [vmem:[%s6971 + $0x128] sm:$0xff] %v7046
                  %v7048 = vld [vmem:[%s6970 + $0x130] sm:$0xff]
                  %7049 = vst [vmem:[%s6971 + $0x130] sm:$0xff] %v7048
                  %v7050 = vld [vmem:[%s6970 + $0x138] sm:$0xff]
                  %7051 = vst [vmem:[%s6971 + $0x138] sm:$0xff] %v7050
                  %v7052 = vld [vmem:[%s6970 + $0x140] sm:$0xff]
                  %7053 = vst [vmem:[%s6971 + $0x140] sm:$0xff] %v7052
                  %v7054 = vld [vmem:[%s6970 + $0x148] sm:$0xff]
                  %7055 = vst [vmem:[%s6971 + $0x148] sm:$0xff] %v7054
                  %v7056 = vld [vmem:[%s6970 + $0x150] sm:$0xff]
                  %7057 = vst [vmem:[%s6971 + $0x150] sm:$0xff] %v7056
                  %v7058 = vld [vmem:[%s6970 + $0x158] sm:$0xff]
                  %7059 = vst [vmem:[%s6971 + $0x158] sm:$0xff] %v7058
                  %v7060 = vld [vmem:[%s6970 + $0x160] sm:$0xff]
                  %7061 = vst [vmem:[%s6971 + $0x160] sm:$0xff] %v7060
                  %v7062 = vld [vmem:[%s6970 + $0x168] sm:$0xff]
                  %7063 = vst [vmem:[%s6971 + $0x168] sm:$0xff] %v7062
                  %v7064 = vld [vmem:[%s6970 + $0x170] sm:$0xff]
                  %7065 = vst [vmem:[%s6971 + $0x170] sm:$0xff] %v7064
                  %v7066 = vld [vmem:[%s6970 + $0x178] sm:$0xff]
                  %7067 = vst [vmem:[%s6971 + $0x178] sm:$0xff] %v7066
                  %v7068 = vld [vmem:[%s6970 + $0x180] sm:$0xff]
                  %7069 = vst [vmem:[%s6971 + $0x180] sm:$0xff] %v7068
                  %v7070 = vld [vmem:[%s6970 + $0x188] sm:$0xff]
                  %7071 = vst [vmem:[%s6971 + $0x188] sm:$0xff] %v7070
                  %v7072 = vld [vmem:[%s6970 + $0x190] sm:$0xff]
                  %7073 = vst [vmem:[%s6971 + $0x190] sm:$0xff] %v7072
                  %v7074 = vld [vmem:[%s6970 + $0x198] sm:$0xff]
                  %7075 = vst [vmem:[%s6971 + $0x198] sm:$0xff] %v7074
                  %v7076 = vld [vmem:[%s6970 + $0x1a0] sm:$0xff]
                  %7077 = vst [vmem:[%s6971 + $0x1a0] sm:$0xff] %v7076
                  %v7078 = vld [vmem:[%s6970 + $0x1a8] sm:$0xff]
                  %7079 = vst [vmem:[%s6971 + $0x1a8] sm:$0xff] %v7078
                  %v7080 = vld [vmem:[%s6970 + $0x1b0] sm:$0xff]
                  %7081 = vst [vmem:[%s6971 + $0x1b0] sm:$0xff] %v7080
                  %v7082 = vld [vmem:[%s6970 + $0x1b8] sm:$0xff]
                  %7083 = vst [vmem:[%s6971 + $0x1b8] sm:$0xff] %v7082
                  %v7084 = vld [vmem:[%s6970 + $0x1c0] sm:$0xff]
                  %7085 = vst [vmem:[%s6971 + $0x1c0] sm:$0xff] %v7084
                  %v7086 = vld [vmem:[%s6970 + $0x1c8] sm:$0xff]
                  %7087 = vst [vmem:[%s6971 + $0x1c8] sm:$0xff] %v7086
                  %v7088 = vld [vmem:[%s6970 + $0x1d0] sm:$0xff]
                  %7089 = vst [vmem:[%s6971 + $0x1d0] sm:$0xff] %v7088
                  %v7090 = vld [vmem:[%s6970 + $0x1d8] sm:$0xff]
                  %7091 = vst [vmem:[%s6971 + $0x1d8] sm:$0xff] %v7090
                  %v7092 = vld [vmem:[%s6970 + $0x1e0] sm:$0xff]
                  %7093 = vst [vmem:[%s6971 + $0x1e0] sm:$0xff] %v7092
                  %v7094 = vld [vmem:[%s6970 + $0x1e8] sm:$0xff]
                  %7095 = vst [vmem:[%s6971 + $0x1e8] sm:$0xff] %v7094
                  %v7096 = vld [vmem:[%s6970 + $0x1f0] sm:$0xff]
                  %7097 = vst [vmem:[%s6971 + $0x1f0] sm:$0xff] %v7096
                  %v7098 = vld [vmem:[%s6970 + $0x1f8] sm:$0xff]
                  %7099 = vst [vmem:[%s6971 + $0x1f8] sm:$0xff] %v7098
                  %s7100 = sadd.s32 1, %s6969
                  %p7101 = scmp.ge.s32.totalorder %s7100, %s6960
                  %s7102 = scalar_select %p7101, 0, %s7100
                  %s7103 = smul.u32 %s7102, 512
                  %s7104 = smul.u32 %s7102, 512
                  %s7105 = scalar_lea.vmem %s6921, %s7103 [#allocation4]
                  %s7106 = scalar_lea.vmem %s6931, %s7104
                $region68: #{rnn_forward.4} parent=62 // loop_footer
                  %s6966 = sadd.s32 %s6964, 1
                $region69: #{rnn_forward.4} parent=62 // loop_footer_branch
                  %6963 = sbr.rel target = $region65
                $region70: #{rnn_forward.4} parent=62 // loop_exit
                  _
                %s7107 = sshrl.u32 %s6959, 6
                %s7108 = sand.u32 %s6959, 63
                %s7109 = smul.u32 %s7107, 64
                %s7110 = smul.u32 128, %s7109
                %s7111 = sshra.s32 %s7110, 4
                %s7112 = scalar_lea.vmem %s6921, %s7111 [#allocation4]
                %s7113 = smul.u32 128, %s7109
                %s7114 = sshra.s32 %s7113, 4
                %s7115 = scalar_lea.vmem %s6931, %s7114
                // While loop
                $region71: #{rnn_forward.4} parent=62 // loop_pre_header
                  _
                $region72: #{rnn_forward.4} parent=62 // loop_header
                  %s7119 = sphi 0, %s7121
                  %p7120 = scmp.ge.s32.totalorder %s7119, %s7108
                  %s7124 = sphi 0, %s7131
                  %s7125 = sphi %s7112, %s7134
                  %s7126 = sphi %s7115, %s7135
                $region73: #{rnn_forward.4} parent=62 // loop_header_branch
                  %7123 = sbr.rel (%p7120) target = $region77
                $region74: #{rnn_forward.4} parent=62 // loop_body
                  %v7127 = vld [vmem:[%s7125] sm:$0xff]
                  %7128 = vst [vmem:[%s7126] sm:$0xff] %v7127
                  %s7129 = sadd.s32 1, %s7124
                  %p7130 = scmp.ge.s32.totalorder %s7129, %s7108
                  %s7131 = scalar_select %p7130, 0, %s7129
                  %s7132 = smul.u32 %s7131, 8
                  %s7133 = smul.u32 %s7131, 8
                  %s7134 = scalar_lea.vmem %s7112, %s7132 [#allocation4]
                  %s7135 = scalar_lea.vmem %s7115, %s7133
                $region75: #{rnn_forward.4} parent=62 // loop_footer
                  %s7121 = sadd.s32 %s7119, 1
                $region76: #{rnn_forward.4} parent=62 // loop_footer_branch
                  %7118 = sbr.rel target = $region72
                $region77: #{rnn_forward.4} parent=62 // loop_exit
                  _
              $region63: #{rnn_forward.4} parent=47 // pred_fallthru
                _
              %p7136 = pneg %p6955
              // Predicated region
              $region78: #{rnn_forward.4} parent=47 // pred_check
                _
              $region79: #{rnn_forward.4} parent=47 // pred_check_branch
                %7138 = sbr.rel (%p6955) target = $region81
              $region80: #{rnn_forward.4} parent=47 // pred_region
                %s7139 = sand.u32 %s6928, 7
                %s7140 = ssub.s32 %s6928, %s7139
                %s7141 = scalar_lea.vmem %s6921, %s7140 [#allocation4]
                %s7142 = ssub.s32 %s6928, %s7139
                %s7143 = scalar_lea.vmem %s6931, %s7142
                %s7144 = sshrl.u32 %s6928, 3
                %s7145 = sshrl.u32 %s7144, 6
                // While loop
                $region82: #{rnn_forward.4} parent=80 // loop_pre_header
                  _
                $region83: #{rnn_forward.4} parent=80 // loop_header
                  %s7149 = sphi 0, %s7151
                  %p7150 = scmp.ge.s32.totalorder %s7149, %s7145
                  %s7154 = sphi 0, %s7287
                  %s7155 = sphi %s6921, %s7290
                  %s7156 = sphi %s6931, %s7291
                $region84: #{rnn_forward.4} parent=80 // loop_header_branch
                  %7153 = sbr.rel (%p7150) target = $region88
                $region85: #{rnn_forward.4} parent=80 // loop_body
                  %v7157 = vld [vmem:[%s7155] sm:$0xff]
                  %7158 = vst [vmem:[%s7156] sm:$0xff] %v7157
                  %v7159 = vld [vmem:[%s7155 + $0x8] sm:$0xff]
                  %7160 = vst [vmem:[%s7156 + $0x8] sm:$0xff] %v7159
                  %v7161 = vld [vmem:[%s7155 + $0x10] sm:$0xff]
                  %7162 = vst [vmem:[%s7156 + $0x10] sm:$0xff] %v7161
                  %v7163 = vld [vmem:[%s7155 + $0x18] sm:$0xff]
                  %7164 = vst [vmem:[%s7156 + $0x18] sm:$0xff] %v7163
                  %v7165 = vld [vmem:[%s7155 + $0x20] sm:$0xff]
                  %7166 = vst [vmem:[%s7156 + $0x20] sm:$0xff] %v7165
                  %v7167 = vld [vmem:[%s7155 + $0x28] sm:$0xff]
                  %7168 = vst [vmem:[%s7156 + $0x28] sm:$0xff] %v7167
                  %v7169 = vld [vmem:[%s7155 + $0x30] sm:$0xff]
                  %7170 = vst [vmem:[%s7156 + $0x30] sm:$0xff] %v7169
                  %v7171 = vld [vmem:[%s7155 + $0x38] sm:$0xff]
                  %7172 = vst [vmem:[%s7156 + $0x38] sm:$0xff] %v7171
                  %v7173 = vld [vmem:[%s7155 + $0x40] sm:$0xff]
                  %7174 = vst [vmem:[%s7156 + $0x40] sm:$0xff] %v7173
                  %v7175 = vld [vmem:[%s7155 + $0x48] sm:$0xff]
                  %7176 = vst [vmem:[%s7156 + $0x48] sm:$0xff] %v7175
                  %v7177 = vld [vmem:[%s7155 + $0x50] sm:$0xff]
                  %7178 = vst [vmem:[%s7156 + $0x50] sm:$0xff] %v7177
                  %v7179 = vld [vmem:[%s7155 + $0x58] sm:$0xff]
                  %7180 = vst [vmem:[%s7156 + $0x58] sm:$0xff] %v7179
                  %v7181 = vld [vmem:[%s7155 + $0x60] sm:$0xff]
                  %7182 = vst [vmem:[%s7156 + $0x60] sm:$0xff] %v7181
                  %v7183 = vld [vmem:[%s7155 + $0x68] sm:$0xff]
                  %7184 = vst [vmem:[%s7156 + $0x68] sm:$0xff] %v7183
                  %v7185 = vld [vmem:[%s7155 + $0x70] sm:$0xff]
                  %7186 = vst [vmem:[%s7156 + $0x70] sm:$0xff] %v7185
                  %v7187 = vld [vmem:[%s7155 + $0x78] sm:$0xff]
                  %7188 = vst [vmem:[%s7156 + $0x78] sm:$0xff] %v7187
                  %v7189 = vld [vmem:[%s7155 + $0x80] sm:$0xff]
                  %7190 = vst [vmem:[%s7156 + $0x80] sm:$0xff] %v7189
                  %v7191 = vld [vmem:[%s7155 + $0x88] sm:$0xff]
                  %7192 = vst [vmem:[%s7156 + $0x88] sm:$0xff] %v7191
                  %v7193 = vld [vmem:[%s7155 + $0x90] sm:$0xff]
                  %7194 = vst [vmem:[%s7156 + $0x90] sm:$0xff] %v7193
                  %v7195 = vld [vmem:[%s7155 + $0x98] sm:$0xff]
                  %7196 = vst [vmem:[%s7156 + $0x98] sm:$0xff] %v7195
                  %v7197 = vld [vmem:[%s7155 + $0xa0] sm:$0xff]
                  %7198 = vst [vmem:[%s7156 + $0xa0] sm:$0xff] %v7197
                  %v7199 = vld [vmem:[%s7155 + $0xa8] sm:$0xff]
                  %7200 = vst [vmem:[%s7156 + $0xa8] sm:$0xff] %v7199
                  %v7201 = vld [vmem:[%s7155 + $0xb0] sm:$0xff]
                  %7202 = vst [vmem:[%s7156 + $0xb0] sm:$0xff] %v7201
                  %v7203 = vld [vmem:[%s7155 + $0xb8] sm:$0xff]
                  %7204 = vst [vmem:[%s7156 + $0xb8] sm:$0xff] %v7203
                  %v7205 = vld [vmem:[%s7155 + $0xc0] sm:$0xff]
                  %7206 = vst [vmem:[%s7156 + $0xc0] sm:$0xff] %v7205
                  %v7207 = vld [vmem:[%s7155 + $0xc8] sm:$0xff]
                  %7208 = vst [vmem:[%s7156 + $0xc8] sm:$0xff] %v7207
                  %v7209 = vld [vmem:[%s7155 + $0xd0] sm:$0xff]
                  %7210 = vst [vmem:[%s7156 + $0xd0] sm:$0xff] %v7209
                  %v7211 = vld [vmem:[%s7155 + $0xd8] sm:$0xff]
                  %7212 = vst [vmem:[%s7156 + $0xd8] sm:$0xff] %v7211
                  %v7213 = vld [vmem:[%s7155 + $0xe0] sm:$0xff]
                  %7214 = vst [vmem:[%s7156 + $0xe0] sm:$0xff] %v7213
                  %v7215 = vld [vmem:[%s7155 + $0xe8] sm:$0xff]
                  %7216 = vst [vmem:[%s7156 + $0xe8] sm:$0xff] %v7215
                  %v7217 = vld [vmem:[%s7155 + $0xf0] sm:$0xff]
                  %7218 = vst [vmem:[%s7156 + $0xf0] sm:$0xff] %v7217
                  %v7219 = vld [vmem:[%s7155 + $0xf8] sm:$0xff]
                  %7220 = vst [vmem:[%s7156 + $0xf8] sm:$0xff] %v7219
                  %v7221 = vld [vmem:[%s7155 + $0x100] sm:$0xff]
                  %7222 = vst [vmem:[%s7156 + $0x100] sm:$0xff] %v7221
                  %v7223 = vld [vmem:[%s7155 + $0x108] sm:$0xff]
                  %7224 = vst [vmem:[%s7156 + $0x108] sm:$0xff] %v7223
                  %v7225 = vld [vmem:[%s7155 + $0x110] sm:$0xff]
                  %7226 = vst [vmem:[%s7156 + $0x110] sm:$0xff] %v7225
                  %v7227 = vld [vmem:[%s7155 + $0x118] sm:$0xff]
                  %7228 = vst [vmem:[%s7156 + $0x118] sm:$0xff] %v7227
                  %v7229 = vld [vmem:[%s7155 + $0x120] sm:$0xff]
                  %7230 = vst [vmem:[%s7156 + $0x120] sm:$0xff] %v7229
                  %v7231 = vld [vmem:[%s7155 + $0x128] sm:$0xff]
                  %7232 = vst [vmem:[%s7156 + $0x128] sm:$0xff] %v7231
                  %v7233 = vld [vmem:[%s7155 + $0x130] sm:$0xff]
                  %7234 = vst [vmem:[%s7156 + $0x130] sm:$0xff] %v7233
                  %v7235 = vld [vmem:[%s7155 + $0x138] sm:$0xff]
                  %7236 = vst [vmem:[%s7156 + $0x138] sm:$0xff] %v7235
                  %v7237 = vld [vmem:[%s7155 + $0x140] sm:$0xff]
                  %7238 = vst [vmem:[%s7156 + $0x140] sm:$0xff] %v7237
                  %v7239 = vld [vmem:[%s7155 + $0x148] sm:$0xff]
                  %7240 = vst [vmem:[%s7156 + $0x148] sm:$0xff] %v7239
                  %v7241 = vld [vmem:[%s7155 + $0x150] sm:$0xff]
                  %7242 = vst [vmem:[%s7156 + $0x150] sm:$0xff] %v7241
                  %v7243 = vld [vmem:[%s7155 + $0x158] sm:$0xff]
                  %7244 = vst [vmem:[%s7156 + $0x158] sm:$0xff] %v7243
                  %v7245 = vld [vmem:[%s7155 + $0x160] sm:$0xff]
                  %7246 = vst [vmem:[%s7156 + $0x160] sm:$0xff] %v7245
                  %v7247 = vld [vmem:[%s7155 + $0x168] sm:$0xff]
                  %7248 = vst [vmem:[%s7156 + $0x168] sm:$0xff] %v7247
                  %v7249 = vld [vmem:[%s7155 + $0x170] sm:$0xff]
                  %7250 = vst [vmem:[%s7156 + $0x170] sm:$0xff] %v7249
                  %v7251 = vld [vmem:[%s7155 + $0x178] sm:$0xff]
                  %7252 = vst [vmem:[%s7156 + $0x178] sm:$0xff] %v7251
                  %v7253 = vld [vmem:[%s7155 + $0x180] sm:$0xff]
                  %7254 = vst [vmem:[%s7156 + $0x180] sm:$0xff] %v7253
                  %v7255 = vld [vmem:[%s7155 + $0x188] sm:$0xff]
                  %7256 = vst [vmem:[%s7156 + $0x188] sm:$0xff] %v7255
                  %v7257 = vld [vmem:[%s7155 + $0x190] sm:$0xff]
                  %7258 = vst [vmem:[%s7156 + $0x190] sm:$0xff] %v7257
                  %v7259 = vld [vmem:[%s7155 + $0x198] sm:$0xff]
                  %7260 = vst [vmem:[%s7156 + $0x198] sm:$0xff] %v7259
                  %v7261 = vld [vmem:[%s7155 + $0x1a0] sm:$0xff]
                  %7262 = vst [vmem:[%s7156 + $0x1a0] sm:$0xff] %v7261
                  %v7263 = vld [vmem:[%s7155 + $0x1a8] sm:$0xff]
                  %7264 = vst [vmem:[%s7156 + $0x1a8] sm:$0xff] %v7263
                  %v7265 = vld [vmem:[%s7155 + $0x1b0] sm:$0xff]
                  %7266 = vst [vmem:[%s7156 + $0x1b0] sm:$0xff] %v7265
                  %v7267 = vld [vmem:[%s7155 + $0x1b8] sm:$0xff]
                  %7268 = vst [vmem:[%s7156 + $0x1b8] sm:$0xff] %v7267
                  %v7269 = vld [vmem:[%s7155 + $0x1c0] sm:$0xff]
                  %7270 = vst [vmem:[%s7156 + $0x1c0] sm:$0xff] %v7269
                  %v7271 = vld [vmem:[%s7155 + $0x1c8] sm:$0xff]
                  %7272 = vst [vmem:[%s7156 + $0x1c8] sm:$0xff] %v7271
                  %v7273 = vld [vmem:[%s7155 + $0x1d0] sm:$0xff]
                  %7274 = vst [vmem:[%s7156 + $0x1d0] sm:$0xff] %v7273
                  %v7275 = vld [vmem:[%s7155 + $0x1d8] sm:$0xff]
                  %7276 = vst [vmem:[%s7156 + $0x1d8] sm:$0xff] %v7275
                  %v7277 = vld [vmem:[%s7155 + $0x1e0] sm:$0xff]
                  %7278 = vst [vmem:[%s7156 + $0x1e0] sm:$0xff] %v7277
                  %v7279 = vld [vmem:[%s7155 + $0x1e8] sm:$0xff]
                  %7280 = vst [vmem:[%s7156 + $0x1e8] sm:$0xff] %v7279
                  %v7281 = vld [vmem:[%s7155 + $0x1f0] sm:$0xff]
                  %7282 = vst [vmem:[%s7156 + $0x1f0] sm:$0xff] %v7281
                  %v7283 = vld [vmem:[%s7155 + $0x1f8] sm:$0xff]
                  %7284 = vst [vmem:[%s7156 + $0x1f8] sm:$0xff] %v7283
                  %s7285 = sadd.s32 1, %s7154
                  %p7286 = scmp.ge.s32.totalorder %s7285, %s7145
                  %s7287 = scalar_select %p7286, 0, %s7285
                  %s7288 = smul.u32 %s7287, 512
                  %s7289 = smul.u32 %s7287, 512
                  %s7290 = scalar_lea.vmem %s6921, %s7288 [#allocation4]
                  %s7291 = scalar_lea.vmem %s6931, %s7289
                $region86: #{rnn_forward.4} parent=80 // loop_footer
                  %s7151 = sadd.s32 %s7149, 1
                $region87: #{rnn_forward.4} parent=80 // loop_footer_branch
                  %7148 = sbr.rel target = $region83
                $region88: #{rnn_forward.4} parent=80 // loop_exit
                  _
                %s7292 = sshrl.u32 %s7144, 6
                %s7293 = sand.u32 %s7144, 63
                %s7294 = smul.u32 %s7292, 64
                %s7295 = smul.u32 128, %s7294
                %s7296 = sshra.s32 %s7295, 4
                %s7297 = scalar_lea.vmem %s6921, %s7296 [#allocation4]
                %s7298 = smul.u32 128, %s7294
                %s7299 = sshra.s32 %s7298, 4
                %s7300 = scalar_lea.vmem %s6931, %s7299
                // While loop
                $region89: #{rnn_forward.4} parent=80 // loop_pre_header
                  _
                $region90: #{rnn_forward.4} parent=80 // loop_header
                  %s7304 = sphi 0, %s7306
                  %p7305 = scmp.ge.s32.totalorder %s7304, %s7293
                  %s7309 = sphi 0, %s7316
                  %s7310 = sphi %s7297, %s7319
                  %s7311 = sphi %s7300, %s7320
                $region91: #{rnn_forward.4} parent=80 // loop_header_branch
                  %7308 = sbr.rel (%p7305) target = $region95
                $region92: #{rnn_forward.4} parent=80 // loop_body
                  %v7312 = vld [vmem:[%s7310] sm:$0xff]
                  %7313 = vst [vmem:[%s7311] sm:$0xff] %v7312
                  %s7314 = sadd.s32 1, %s7309
                  %p7315 = scmp.ge.s32.totalorder %s7314, %s7293
                  %s7316 = scalar_select %p7315, 0, %s7314
                  %s7317 = smul.u32 %s7316, 8
                  %s7318 = smul.u32 %s7316, 8
                  %s7319 = scalar_lea.vmem %s7297, %s7317 [#allocation4]
                  %s7320 = scalar_lea.vmem %s7300, %s7318
                $region93: #{rnn_forward.4} parent=80 // loop_footer
                  %s7306 = sadd.s32 %s7304, 1
                $region94: #{rnn_forward.4} parent=80 // loop_footer_branch
                  %7303 = sbr.rel target = $region90
                $region95: #{rnn_forward.4} parent=80 // loop_exit
                  _
                %s7321 = sshll.u32 1, %s7139
                %s7322 = ssub.s32 %s7321, 1
                loop: start=0, step=1, limit=1
                $region96: #{rnn_forward.4} parent=80 // loop_pre_header
                  _
                $region97: #{rnn_forward.4} parent=80 // loop_header
                  %s7324 = sphi 0, %s7328
                  %p7325 = scmp.ge.s32.totalorder %s7324, 1
                  %s7329 = sphi %s7141, %s7141
                  %s7330 = sphi %s7143, %s7143
                $region98: #{rnn_forward.4} parent=80 // loop_header_branch
                  %7327 = sbr.rel (%p7325) target = $region102
                $region99: #{rnn_forward.4} parent=80 // loop_body
                  %v7331 = vld [vmem:[%s7329] sm:%s7322]
                  %7332 = vst [vmem:[%s7330] sm:%s7322] %v7331
                $region100: #{rnn_forward.4} parent=80 // loop_footer
                  %s7328 = sadd.s32 1, %s7324
                $region101: #{rnn_forward.4} parent=80 // loop_footer_branch
                  %7323 = sbr.rel target = $region97
                $region102: #{rnn_forward.4} parent=80 // loop_exit
                  _
              $region81: #{rnn_forward.4} parent=47 // pred_fallthru
                _
            $region48: #{rnn_forward.4} parent=43 // pred_fallthru
              _
            // Predicated region
            $region49: #{rnn_forward.4} parent=43 // pred_check
              %p6939 = pneg %p6935
            $region50: #{rnn_forward.4} parent=43 // pred_check_branch
              %6941 = sbr.rel (%p6939) target = $region52
            $region51: #{rnn_forward.4} parent=43 // pred_region
              %s6942 = sshll.u32 1, %s6928
              %s6943 = ssub.s32 %s6942, 1
              loop: start=0, step=1, limit=1
              $region53: #{rnn_forward.4} parent=51 // loop_pre_header
                _
              $region54: #{rnn_forward.4} parent=51 // loop_header
                %s6945 = sphi 0, %s6949
                %p6946 = scmp.ge.s32.totalorder %s6945, 1
                %s6950 = sphi %s6921, %s6921
                %s6951 = sphi %s6931, %s6931
              $region55: #{rnn_forward.4} parent=51 // loop_header_branch
                %6948 = sbr.rel (%p6946) target = $region59
              $region56: #{rnn_forward.4} parent=51 // loop_body
                %v6952 = vld [vmem:[%s6950] sm:%s6943]
                %6953 = vst [vmem:[%s6951] sm:%s6943] %v6952
              $region57: #{rnn_forward.4} parent=51 // loop_footer
                %s6949 = sadd.s32 1, %s6945
              $region58: #{rnn_forward.4} parent=51 // loop_footer_branch
                %6944 = sbr.rel target = $region54
              $region59: #{rnn_forward.4} parent=51 // loop_exit
                _
            $region52: #{rnn_forward.4} parent=43 // pred_fallthru
              _
          $region44: #{rnn_forward.4} parent=39 // pred_fallthru
            _
          %7333 = vnop
        $region40: #{rnn_forward.4} parent=31 // pred_fallthru
          _
      $region32: #{rnn_forward.4} parent=5 // pred_fallthru
        _
      %p7334 = scmp.le.s32.totalorder 2, %s12
      // Predicated region
      $region103: #{rnn_forward.4} parent=5 // pred_check
        %p7335 = pneg %p7334
      $region104: #{rnn_forward.4} parent=5 // pred_check_branch
        %7337 = sbr.rel (%p7335) target = $region106
      $region105: #{rnn_forward.4} parent=5 // pred_region
        %s7338 = ssub.s32 %s12, 2
        // Predicated region
        $region107: #{rnn_forward.4} parent=105 // pred_check
          %p7339 = pneg %p114
        $region108: #{rnn_forward.4} parent=105 // pred_check_branch
          %7341 = sbr.rel (%p7339) target = $region110
        $region109: #{rnn_forward.4} parent=105 // pred_region
          %s7342 = sand.u32 %s99, 1
          %s7343 = sand.u32 %s99, 1
          %s7344 = smul.addr %s7343, 128
          %s7345 = scalar_lea.vmem [#allocation4], %s7344
        $region110: #{rnn_forward.4} parent=105 // pred_fallthru
          _
      $region106: #{rnn_forward.4} parent=5 // pred_fallthru
        _
    $region6: #{rnn_forward.4} parent=1 // loop_footer
      %s16 = sadd.s32 1, %s12
    $region7: #{rnn_forward.4} parent=1 // loop_footer_branch
      %11 = sbr.rel target = $region3
    $region8: #{rnn_forward.4} parent=1 // loop_exit
      _
    %7346 = vsyncpa [#allocation3], 1
    %s7347 = scalar_lea.sflag [#allocation3], 1
    %7348 = vsyncpa %s7347, 1

</llo_original>
